<compile_context>
chip_gen: v6e
topology: v6e:2x2x1
jax: 0.10.0
libtpu: 0.0.40
codegen_flags: <defaults>
</compile_context>

<pallas_src>
import functools

import jax
import jax.numpy as jnp
from jax import lax
from jax.experimental import pallas as pl
from jax.experimental.pallas import tpu as pltpu

EPS = 1e-5
LANE = 128


def _round_up(v, m):
    return (v + m - 1) // m * m


# ----------------------------------------------------------------------------
# Pallas kernel: fused implicit-GEMM conv (kxk) + folded-BN + (residual) + ReLU
# ----------------------------------------------------------------------------
def _conv_bn_act_kernel(*refs, n_slabs, tap_slab, tap_start, n_rows,
                        apply_relu, has_residual):
    slab_refs = refs[:n_slabs]                    # each (Hs*Ws, C)   bf16
    w_ref = refs[n_slabs]                         # (k*k, C, Pp)      bf16
    b_ref = refs[n_slabs + 1]                     # (1, Pp)           f32
    res_ref = refs[n_slabs + 2] if has_residual else None
    out_ref = refs[-1]                            # (n_rows, Pp)

    pp = w_ref.shape[-1]
    acc = jnp.zeros((n_rows, pp), jnp.float32)
    for t in range(len(tap_slab)):                # static, unrolled tap loop
        a = slab_refs[tap_slab[t]][pl.ds(tap_start[t], n_rows), :]   # (n_rows, C)
        acc = acc + jnp.dot(a, w_ref[t], preferred_element_type=jnp.float32)

    y = acc + b_ref[...]                          # folded-BN bias, f32 epilogue
    if has_residual:
        y = y + res_ref[...].astype(jnp.float32)
    if apply_relu:
        y = jnp.maximum(y, 0.0)
    out_ref[...] = y.astype(out_ref.dtype)


# ----------------------------------------------------------------------------
# Wrapper: conv2d (no bias) + eval-mode BN + optional residual + optional ReLU
# ----------------------------------------------------------------------------
def conv2d_bn_act(x_nhwc, w_oihw, bn, *, stride, pad, residual=None,
                  apply_relu=False, out_dtype=jnp.float32):
    """x: (N,H,W,C); w: (O,I=C,k,k); residual (optional): (N,Ho,Wo,Pp) f32.

    Returns (N, Ho, Wo, Pp) in out_dtype, Pp = round_up(O, 128) (lane-dense,
    extra channels are exactly zero)."""
    gamma, beta, mean, var = bn
    N, H, W, C = x_nhwc.shape
    O, I, kh, kw = w_oihw.shape
    assert I == C and kh == kw
    k, s = kh, stride
    Ho = (H + 2 * pad - k) // s + 1
    Wo = (W + 2 * pad - k) // s + 1
    Pp = _round_up(O, LANE)

    # Fold eval-mode BN scale into the weights; only the bias stays in the epilogue.
    scale = gamma / jnp.sqrt(var + EPS)
    bias = beta - mean * scale
    wmat = jnp.transpose(w_oihw, (2, 3, 1, 0)).reshape(k * k, C, O)
    wmat = wmat * scale[None, None, :]
    wmat = jnp.pad(wmat, ((0, 0), (0, 0), (0, Pp - O))).astype(jnp.bfloat16)
    bias_p = jnp.pad(bias, (0, Pp - O)).reshape(1, Pp).astype(jnp.float32)

    # Spatial pad + stride-parity split (kernel then only needs unit-stride,
    # statically offset, contiguous row windows).
    off = (k - 1) // s
    Hs, Ws = Ho + off, Wo + off
    Hp, Wp = max(H + 2 * pad, Hs * s), max(W + 2 * pad, Ws * s)
    xp = jnp.pad(x_nhwc.astype(jnp.bfloat16),
                 ((0, 0), (pad, Hp - H - pad), (pad, Wp - W - pad), (0, 0)))

    taps = [((dy % s) * s + (dx % s), (dy // s) * Ws + (dx // s))
            for dy in range(k) for dx in range(k)]
    used = sorted({si for si, _ in taps})
    slabs = [xp[:, p // s::s, p % s::s, :][:, :Hs, :Ws, :].reshape(N, Hs * Ws, C)
             for p in used]
    tap_slab = tuple(used.index(si) for si, _ in taps)
    tap_start = tuple(st for _, st in taps)

    n_rows = (Ho - 1) * Ws + Wo          # Ws-strided flat output rows per image

    in_arrays = list(slabs) + [wmat, bias_p]
    in_specs = ([pl.BlockSpec((None, Hs * Ws, C), lambda n: (n, 0, 0))
                 for _ in slabs]
                + [pl.BlockSpec((k * k, C, Pp), lambda n: (0, 0, 0)),
                   pl.BlockSpec((1, Pp), lambda n: (0, 0))])
    has_res = residual is not None
    if has_res:
        assert residual.shape == (N, Ho, Wo, Pp)
        res_flat = jnp.pad(residual.astype(jnp.float32),
                           ((0, 0), (0, 0), (0, Ws - Wo), (0, 0)))
        res_flat = res_flat.reshape(N, Ho * Ws, Pp)[:, :n_rows, :]
        in_arrays.append(res_flat)
        in_specs.append(pl.BlockSpec((None, n_rows, Pp), lambda n: (n, 0, 0)))

    kernel = functools.partial(
        _conv_bn_act_kernel, n_slabs=len(slabs), tap_slab=tap_slab,
        tap_start=tap_start, n_rows=n_rows, apply_relu=apply_relu,
        has_residual=has_res)

    out_flat = pl.pallas_call(
        kernel,
        out_shape=jax.ShapeDtypeStruct((N, n_rows, Pp), out_dtype),
        grid=(N,),
        in_specs=in_specs,
        out_specs=pl.BlockSpec((None, n_rows, Pp), lambda n: (n, 0, 0)),
        compiler_params=pltpu.CompilerParams(
            dimension_semantics=("parallel",),
            vmem_limit_bytes=48 * 1024 * 1024),
    )(*in_arrays)

    # Un-stride the flat rows -> (N, Ho, Wo, Pp).
    out = jnp.pad(out_flat, ((0, 0), (0, Ho * Ws - n_rows), (0, 0)))
    return out.reshape(N, Ho, Ws, Pp)[:, :, :Wo, :]


# ----------------------------------------------------------------------------
# BasicBlock forward (Pallas path)
# ----------------------------------------------------------------------------
def basic_block_pallas(x_nchw, params, stride):
    x = jnp.transpose(x_nchw, (0, 2, 3, 1)).astype(jnp.float32)     # NCHW -> NHWC
    N, H, W, Cin = x.shape
    planes = params["w1"].shape[0]
    Pp = _round_up(planes, LANE)

    # conv1 (3x3, stride) + bn1 + relu -> bf16 activation for the next GEMM
    y1 = conv2d_bn_act(x, params["w1"], params["bn1"], stride=stride, pad=1,
                       apply_relu=True, out_dtype=jnp.bfloat16)     # (N,Ho,Wo,Pp)

    # residual path (f32, channel-padded to Pp; padded channels are zero)
    if stride == 1:
        assert Cin == planes, "identity shortcut needs in_planes == planes"
        res = jnp.pad(x, ((0, 0), (0, 0), (0, 0), (0, Pp - Cin)))
    else:
        res = conv2d_bn_act(x, params["wd"], params["bnd"], stride=stride, pad=0,
                            apply_relu=False, out_dtype=jnp.float32)

    # conv2 (3x3, stride 1) + bn2 + residual add + relu (single fused kernel)
    w2 = jnp.pad(params["w2"], ((0, 0), (0, Pp - planes), (0, 0), (0, 0)))
    out = conv2d_bn_act(y1, w2, params["bn2"], stride=1, pad=1,
                        residual=res, apply_relu=True, out_dtype=jnp.float32)
    out = out[..., :planes]                                         # drop lane padding
    return jnp.transpose(out, (0, 3, 1, 2))                         # NHWC -> NCHW


# ----------------------------------------------------------------------------
# Parameter construction (deterministic, synthetic)
# ----------------------------------------------------------------------------
def init_params(key, in_planes, planes, stride):
    ks = jax.random.split(key, 16)
    p = {
        "w1": jax.random.normal(ks[0], (planes, in_planes, 3, 3), jnp.float32) * 0.1,
        "w2": jax.random.normal(ks[1], (planes, planes, 3, 3), jnp.float32) * 0.1,
        "bn1": (jax.random.uniform(ks[2], (planes,), minval=0.5, maxval=1.5),
                jax.random.normal(ks[3], (planes,)) * 0.1,
                jax.random.normal(ks[4], (planes,)) * 0.1,
                jax.random.uniform(ks[5], (planes,), minval=0.5, maxval=1.5)),
        "bn2": (jax.random.uniform(ks[6], (planes,), minval=0.5, maxval=1.5),
                jax.random.normal(ks[7], (planes,)) * 0.1,
                jax.random.normal(ks[8], (planes,)) * 0.1,
                jax.random.uniform(ks[9], (planes,), minval=0.5, maxval=1.5)),
    }
    if stride != 1:
        p["wd"] = jax.random.normal(ks[10], (planes, in_planes, 1, 1), jnp.float32) * 0.1
        p["bnd"] = (jax.random.uniform(ks[11], (planes,), minval=0.5, maxval=1.5),
                    jax.random.normal(ks[12], (planes,)) * 0.1,
                    jax.random.normal(ks[13], (planes,)) * 0.1,
                    jax.random.uniform(ks[14], (planes,), minval=0.5, maxval=1.5))
    return p


# ----------------------------------------------------------------------------
# Pure-JAX reference (f32) for correctness checking
# ----------------------------------------------------------------------------
def basic_block_ref(x_nchw, params, stride):
    def conv(x, w, s, pad):
        return lax.conv_general_dilated(
            x, w, (s, s), [(pad, pad), (pad, pad)],
            dimension_numbers=("NCHW", "OIHW", "NCHW"))

    def bn(x, bnp):
        g, b, m, v = bnp
        g, b, m, v = [t.reshape(1, -1, 1, 1) for t in (g, b, m, v)]
        return (x - m) / jnp.sqrt(v + EPS) * g + b

    x = x_nchw.astype(jnp.float32)
    y = jnp.maximum(bn(conv(x, params["w1"], stride, 1), params["bn1"]), 0.0)
    y = bn(conv(y, params["w2"], 1, 1), params["bn2"])
    if stride == 1:
        r = x
    else:
        r = bn(conv(x, params["wd"], stride, 0), params["bnd"])
    return jnp.maximum(r + y, 0.0)


# ----------------------------------------------------------------------------
if __name__ == "__main__":
    key = jax.random.PRNGKey(0)
    k_x1, k_x2, k_p1, k_p2 = jax.random.split(key, 4)
    fwd = jax.jit(basic_block_pallas, static_argnums=(2,))

    # Case A: stride=1 (identity shortcut; in_planes == planes)
    in_a, planes_a, stride_a = 8, 8, 1
    x_a = jax.random.normal(k_x1, (2, in_a, 16, 16), jnp.float32)
    p_a = init_params(k_p1, in_a, planes_a, stride_a)
    out_a = jax.block_until_ready(fwd(x_a, p_a, stride_a))
    ref_a = basic_block_ref(x_a, p_a, stride_a)
    assert out_a.shape == (2, planes_a, 16, 16)
    # bf16 GEMM operands -> looser tolerance than pure-f32 (review note)
    assert jnp.allclose(out_a, ref_a, atol=0.1, rtol=0.1), \
        float(jnp.max(jnp.abs(out_a - ref_a)))

    # Case B: stride=2 (conv1x1 + BN downsample shortcut)
    in_b, planes_b, stride_b = 4, 8, 2
    x_b = jax.random.normal(k_x2, (2, in_b, 16, 16), jnp.float32)
    p_b = init_params(k_p2, in_b, planes_b, stride_b)
    out_b = jax.block_until_ready(fwd(x_b, p_b, stride_b))
    ref_b = basic_block_ref(x_b, p_b, stride_b)
    assert out_b.shape == (2, planes_b, 8, 8)
    assert jnp.allclose(out_b, ref_b, atol=0.1, rtol=0.1), \
        float(jnp.max(jnp.abs(out_b - ref_b)))

    print("KERNEL_OK")
</pallas_src>

<mosaic_0001>
module attributes {stable_mosaic.version = 11 : i64} {
  func.func @_conv_bn_act_kernel(%arg0: i32, %arg1: memref<1x324x8xbf16, #tpu.memory_space<vmem>>, %arg2: memref<9x8x128xbf16, #tpu.memory_space<vmem>>, %arg3: memref<1x128xf32, #tpu.memory_space<vmem>>, %arg4: memref<1x286x128xbf16, #tpu.memory_space<vmem>>) attributes {dimension_semantics = [#tpu.dimension_semantics<parallel>], iteration_bounds = array<i64: 2>, scalar_prefetch = 0 : i64, scratch_operands = 0 : i64, tpu.core_type = #tpu.core_type<tc>, window_params = [{transform_indices = @transform_0, window_bounds = array<i64: 1, 324, 8>}, {pipeline_mode = #tpu.pipeline_mode<synchronous>, transform_indices = @transform_1, window_bounds = array<i64: 9, 8, 128>}, {pipeline_mode = #tpu.pipeline_mode<synchronous>, transform_indices = @transform_2, window_bounds = array<i64: 1, 128>}, {transform_indices = @transform_3, window_bounds = array<i64: 1, 286, 128>}]} {
    %cst = arith.constant 0.000000e+00 : f32
    %0 = vector.broadcast %cst : f32 to vector<286x128xf32>
    %c0 = arith.constant 0 : index
    %c0_0 = arith.constant 0 : index
    %c0_1 = arith.constant 0 : index
    %1 = vector.load %arg1[%c0, %c0_0, %c0_1] : memref<1x324x8xbf16, #tpu.memory_space<vmem>>, vector<1x286x8xbf16>
    %2 = vector.shape_cast %1 : vector<1x286x8xbf16> to vector<286x8xbf16>
    %c0_2 = arith.constant 0 : index
    %c0_3 = arith.constant 0 : index
    %c0_4 = arith.constant 0 : index
    %3 = vector.load %arg2[%c0_2, %c0_3, %c0_4] : memref<9x8x128xbf16, #tpu.memory_space<vmem>>, vector<1x8x128xbf16>
    %4 = vector.shape_cast %3 : vector<1x8x128xbf16> to vector<8x128xbf16>
    %cst_5 = arith.constant dense<0.000000e+00> : vector<286x128xf32>
    %5 = tpu.matmul %2, %4, %cst_5 {dimension_numbers = #tpu.dot_dimension_numbers<[1], [0], [0], [1], [0, 0, 1, 1], [], []>} : vector<286x8xbf16>, vector<8x128xbf16>, vector<286x128xf32> -> vector<286x128xf32>
    %6 = arith.addf %0, %5 : vector<286x128xf32>
    %c0_6 = arith.constant 0 : index
    %c1 = arith.constant 1 : index
    %c0_7 = arith.constant 0 : index
    %7 = vector.load %arg1[%c0_6, %c1, %c0_7] : memref<1x324x8xbf16, #tpu.memory_space<vmem>>, vector<1x286x8xbf16>
    %8 = vector.shape_cast %7 : vector<1x286x8xbf16> to vector<286x8xbf16>
    %c1_8 = arith.constant 1 : index
    %c0_9 = arith.constant 0 : index
    %c0_10 = arith.constant 0 : index
    %9 = vector.load %arg2[%c1_8, %c0_9, %c0_10] : memref<9x8x128xbf16, #tpu.memory_space<vmem>>, vector<1x8x128xbf16>
    %10 = vector.shape_cast %9 : vector<1x8x128xbf16> to vector<8x128xbf16>
    %cst_11 = arith.constant dense<0.000000e+00> : vector<286x128xf32>
    %11 = tpu.matmul %8, %10, %cst_11 {dimension_numbers = #tpu.dot_dimension_numbers<[1], [0], [0], [1], [0, 0, 1, 1], [], []>} : vector<286x8xbf16>, vector<8x128xbf16>, vector<286x128xf32> -> vector<286x128xf32>
    %12 = arith.addf %6, %11 : vector<286x128xf32>
    %c0_12 = arith.constant 0 : index
    %c2 = arith.constant 2 : index
    %c0_13 = arith.constant 0 : index
    %13 = vector.load %arg1[%c0_12, %c2, %c0_13] : memref<1x324x8xbf16, #tpu.memory_space<vmem>>, vector<1x286x8xbf16>
    %14 = vector.shape_cast %13 : vector<1x286x8xbf16> to vector<286x8xbf16>
    %c2_14 = arith.constant 2 : index
    %c0_15 = arith.constant 0 : index
    %c0_16 = arith.constant 0 : index
    %15 = vector.load %arg2[%c2_14, %c0_15, %c0_16] : memref<9x8x128xbf16, #tpu.memory_space<vmem>>, vector<1x8x128xbf16>
    %16 = vector.shape_cast %15 : vector<1x8x128xbf16> to vector<8x128xbf16>
    %cst_17 = arith.constant dense<0.000000e+00> : vector<286x128xf32>
    %17 = tpu.matmul %14, %16, %cst_17 {dimension_numbers = #tpu.dot_dimension_numbers<[1], [0], [0], [1], [0, 0, 1, 1], [], []>} : vector<286x8xbf16>, vector<8x128xbf16>, vector<286x128xf32> -> vector<286x128xf32>
    %18 = arith.addf %12, %17 : vector<286x128xf32>
    %c0_18 = arith.constant 0 : index
    %c18 = arith.constant 18 : index
    %c0_19 = arith.constant 0 : index
    %19 = vector.load %arg1[%c0_18, %c18, %c0_19] : memref<1x324x8xbf16, #tpu.memory_space<vmem>>, vector<1x286x8xbf16>
    %20 = vector.shape_cast %19 : vector<1x286x8xbf16> to vector<286x8xbf16>
    %c3 = arith.constant 3 : index
    %c0_20 = arith.constant 0 : index
    %c0_21 = arith.constant 0 : index
    %21 = vector.load %arg2[%c3, %c0_20, %c0_21] : memref<9x8x128xbf16, #tpu.memory_space<vmem>>, vector<1x8x128xbf16>
    %22 = vector.shape_cast %21 : vector<1x8x128xbf16> to vector<8x128xbf16>
    %cst_22 = arith.constant dense<0.000000e+00> : vector<286x128xf32>
    %23 = tpu.matmul %20, %22, %cst_22 {dimension_numbers = #tpu.dot_dimension_numbers<[1], [0], [0], [1], [0, 0, 1, 1], [], []>} : vector<286x8xbf16>, vector<8x128xbf16>, vector<286x128xf32> -> vector<286x128xf32>
    %24 = arith.addf %18, %23 : vector<286x128xf32>
    %c0_23 = arith.constant 0 : index
    %c19 = arith.constant 19 : index
    %c0_24 = arith.constant 0 : index
    %25 = vector.load %arg1[%c0_23, %c19, %c0_24] : memref<1x324x8xbf16, #tpu.memory_space<vmem>>, vector<1x286x8xbf16>
    %26 = vector.shape_cast %25 : vector<1x286x8xbf16> to vector<286x8xbf16>
    %c4 = arith.constant 4 : index
    %c0_25 = arith.constant 0 : index
    %c0_26 = arith.constant 0 : index
    %27 = vector.load %arg2[%c4, %c0_25, %c0_26] : memref<9x8x128xbf16, #tpu.memory_space<vmem>>, vector<1x8x128xbf16>
    %28 = vector.shape_cast %27 : vector<1x8x128xbf16> to vector<8x128xbf16>
    %cst_27 = arith.constant dense<0.000000e+00> : vector<286x128xf32>
    %29 = tpu.matmul %26, %28, %cst_27 {dimension_numbers = #tpu.dot_dimension_numbers<[1], [0], [0], [1], [0, 0, 1, 1], [], []>} : vector<286x8xbf16>, vector<8x128xbf16>, vector<286x128xf32> -> vector<286x128xf32>
    %30 = arith.addf %24, %29 : vector<286x128xf32>
    %c0_28 = arith.constant 0 : index
    %c20 = arith.constant 20 : index
    %c0_29 = arith.constant 0 : index
    %31 = vector.load %arg1[%c0_28, %c20, %c0_29] : memref<1x324x8xbf16, #tpu.memory_space<vmem>>, vector<1x286x8xbf16>
    %32 = vector.shape_cast %31 : vector<1x286x8xbf16> to vector<286x8xbf16>
    %c5 = arith.constant 5 : index
    %c0_30 = arith.constant 0 : index
    %c0_31 = arith.constant 0 : index
    %33 = vector.load %arg2[%c5, %c0_30, %c0_31] : memref<9x8x128xbf16, #tpu.memory_space<vmem>>, vector<1x8x128xbf16>
    %34 = vector.shape_cast %33 : vector<1x8x128xbf16> to vector<8x128xbf16>
    %cst_32 = arith.constant dense<0.000000e+00> : vector<286x128xf32>
    %35 = tpu.matmul %32, %34, %cst_32 {dimension_numbers = #tpu.dot_dimension_numbers<[1], [0], [0], [1], [0, 0, 1, 1], [], []>} : vector<286x8xbf16>, vector<8x128xbf16>, vector<286x128xf32> -> vector<286x128xf32>
    %36 = arith.addf %30, %35 : vector<286x128xf32>
    %c0_33 = arith.constant 0 : index
    %c36 = arith.constant 36 : index
    %c0_34 = arith.constant 0 : index
    %37 = vector.load %arg1[%c0_33, %c36, %c0_34] : memref<1x324x8xbf16, #tpu.memory_space<vmem>>, vector<1x286x8xbf16>
    %38 = vector.shape_cast %37 : vector<1x286x8xbf16> to vector<286x8xbf16>
    %c6 = arith.constant 6 : index
    %c0_35 = arith.constant 0 : index
    %c0_36 = arith.constant 0 : index
    %39 = vector.load %arg2[%c6, %c0_35, %c0_36] : memref<9x8x128xbf16, #tpu.memory_space<vmem>>, vector<1x8x128xbf16>
    %40 = vector.shape_cast %39 : vector<1x8x128xbf16> to vector<8x128xbf16>
    %cst_37 = arith.constant dense<0.000000e+00> : vector<286x128xf32>
    %41 = tpu.matmul %38, %40, %cst_37 {dimension_numbers = #tpu.dot_dimension_numbers<[1], [0], [0], [1], [0, 0, 1, 1], [], []>} : vector<286x8xbf16>, vector<8x128xbf16>, vector<286x128xf32> -> vector<286x128xf32>
    %42 = arith.addf %36, %41 : vector<286x128xf32>
    %c0_38 = arith.constant 0 : index
    %c37 = arith.constant 37 : index
    %c0_39 = arith.constant 0 : index
    %43 = vector.load %arg1[%c0_38, %c37, %c0_39] : memref<1x324x8xbf16, #tpu.memory_space<vmem>>, vector<1x286x8xbf16>
    %44 = vector.shape_cast %43 : vector<1x286x8xbf16> to vector<286x8xbf16>
    %c7 = arith.constant 7 : index
    %c0_40 = arith.constant 0 : index
    %c0_41 = arith.constant 0 : index
    %45 = vector.load %arg2[%c7, %c0_40, %c0_41] : memref<9x8x128xbf16, #tpu.memory_space<vmem>>, vector<1x8x128xbf16>
    %46 = vector.shape_cast %45 : vector<1x8x128xbf16> to vector<8x128xbf16>
    %cst_42 = arith.constant dense<0.000000e+00> : vector<286x128xf32>
    %47 = tpu.matmul %44, %46, %cst_42 {dimension_numbers = #tpu.dot_dimension_numbers<[1], [0], [0], [1], [0, 0, 1, 1], [], []>} : vector<286x8xbf16>, vector<8x128xbf16>, vector<286x128xf32> -> vector<286x128xf32>
    %48 = arith.addf %42, %47 : vector<286x128xf32>
    %c0_43 = arith.constant 0 : index
    %c38 = arith.constant 38 : index
    %c0_44 = arith.constant 0 : index
    %49 = vector.load %arg1[%c0_43, %c38, %c0_44] : memref<1x324x8xbf16, #tpu.memory_space<vmem>>, vector<1x286x8xbf16>
    %50 = vector.shape_cast %49 : vector<1x286x8xbf16> to vector<286x8xbf16>
    %c8 = arith.constant 8 : index
    %c0_45 = arith.constant 0 : index
    %c0_46 = arith.constant 0 : index
    %51 = vector.load %arg2[%c8, %c0_45, %c0_46] : memref<9x8x128xbf16, #tpu.memory_space<vmem>>, vector<1x8x128xbf16>
    %52 = vector.shape_cast %51 : vector<1x8x128xbf16> to vector<8x128xbf16>
    %cst_47 = arith.constant dense<0.000000e+00> : vector<286x128xf32>
    %53 = tpu.matmul %50, %52, %cst_47 {dimension_numbers = #tpu.dot_dimension_numbers<[1], [0], [0], [1], [0, 0, 1, 1], [], []>} : vector<286x8xbf16>, vector<8x128xbf16>, vector<286x128xf32> -> vector<286x128xf32>
    %54 = arith.addf %48, %53 : vector<286x128xf32>
    %c0_48 = arith.constant 0 : index
    %c0_49 = arith.constant 0 : index
    %55 = vector.load %arg3[%c0_48, %c0_49] : memref<1x128xf32, #tpu.memory_space<vmem>>, vector<1x128xf32>
    %56 = vector.broadcast %55 : vector<1x128xf32> to vector<286x128xf32>
    %57 = arith.addf %54, %56 : vector<286x128xf32>
    %cst_50 = arith.constant 0.000000e+00 : f32
    %58 = vector.broadcast %cst_50 : f32 to vector<286x128xf32>
    %59 = arith.maximumf %57, %58 : vector<286x128xf32>
    %60 = arith.truncf %59 : vector<286x128xf32> to vector<286x128xbf16>
    %c0_51 = arith.constant 0 : index
    %c0_52 = arith.constant 0 : index
    %c0_53 = arith.constant 0 : index
    %61 = vector.load %arg4[%c0_51, %c0_52, %c0_53] : memref<1x286x128xbf16, #tpu.memory_space<vmem>>, vector<1x286x128xbf16>
    %62 = vector.shape_cast %61 : vector<1x286x128xbf16> to vector<286x128xbf16>
    %63 = vector.shape_cast %60 : vector<286x128xbf16> to vector<1x286x128xbf16>
    tpu.vector_store %arg4[%c0_51, %c0_52, %c0_53], %63 {strides = array<i32>} : memref<1x286x128xbf16, #tpu.memory_space<vmem>>, vector<1x286x128xbf16>,
    return
  }
  func.func @transform_0(%arg0: i32) -> (i32, i32, i32) {
    %c0_i32 = arith.constant 0 : i32
    %c0_i32_0 = arith.constant 0 : i32
    %c0_i32_1 = arith.constant 0 : i32
    return %arg0, %c0_i32, %c0_i32_0 : i32, i32, i32
  }
  func.func @transform_1(%arg0: i32) -> (i32, i32, i32) {
    %c0_i32 = arith.constant 0 : i32
    %c0_i32_0 = arith.constant 0 : i32
    %c0_i32_1 = arith.constant 0 : i32
    %c0_i32_2 = arith.constant 0 : i32
    return %c0_i32, %c0_i32_0, %c0_i32_1 : i32, i32, i32
  }
  func.func @transform_2(%arg0: i32) -> (i32, i32) {
    %c0_i32 = arith.constant 0 : i32
    %c0_i32_0 = arith.constant 0 : i32
    %c0_i32_1 = arith.constant 0 : i32
    return %c0_i32, %c0_i32_0 : i32, i32
  }
  func.func @transform_3(%arg0: i32) -> (i32, i32, i32) {
    %c0_i32 = arith.constant 0 : i32
    %c0_i32_0 = arith.constant 0 : i32
    %c0_i32_1 = arith.constant 0 : i32
    return %arg0, %c0_i32, %c0_i32_0 : i32, i32, i32
  }
}

module attributes {stable_mosaic.version = 11 : i64} {
  func.func @_conv_bn_act_kernel(%arg0: i32, %arg1: memref<1x324x128xbf16, #tpu.memory_space<vmem>>, %arg2: memref<9x128x128xbf16, #tpu.memory_space<vmem>>, %arg3: memref<1x128xf32, #tpu.memory_space<vmem>>, %arg4: memref<1x286x128xf32, #tpu.memory_space<vmem>>, %arg5: memref<1x286x128xf32, #tpu.memory_space<vmem>>) attributes {dimension_semantics = [#tpu.dimension_semantics<parallel>], iteration_bounds = array<i64: 2>, scalar_prefetch = 0 : i64, scratch_operands = 0 : i64, tpu.core_type = #tpu.core_type<tc>, window_params = [{transform_indices = @transform_0, window_bounds = array<i64: 1, 324, 128>}, {pipeline_mode = #tpu.pipeline_mode<synchronous>, transform_indices = @transform_1, window_bounds = array<i64: 9, 128, 128>}, {pipeline_mode = #tpu.pipeline_mode<synchronous>, transform_indices = @transform_2, window_bounds = array<i64: 1, 128>}, {transform_indices = @transform_3, window_bounds = array<i64: 1, 286, 128>}, {transform_indices = @transform_4, window_bounds = array<i64: 1, 286, 128>}]} {
    %cst = arith.constant 0.000000e+00 : f32
    %0 = vector.broadcast %cst : f32 to vector<286x128xf32>
    %c0 = arith.constant 0 : index
    %c0_0 = arith.constant 0 : index
    %c0_1 = arith.constant 0 : index
    %1 = vector.load %arg1[%c0, %c0_0, %c0_1] : memref<1x324x128xbf16, #tpu.memory_space<vmem>>, vector<1x286x128xbf16>
    %2 = vector.shape_cast %1 : vector<1x286x128xbf16> to vector<286x128xbf16>
    %c0_2 = arith.constant 0 : index
    %c0_3 = arith.constant 0 : index
    %c0_4 = arith.constant 0 : index
    %3 = vector.load %arg2[%c0_2, %c0_3, %c0_4] : memref<9x128x128xbf16, #tpu.memory_space<vmem>>, vector<1x128x128xbf16>
    %4 = vector.shape_cast %3 : vector<1x128x128xbf16> to vector<128x128xbf16>
    %cst_5 = arith.constant dense<0.000000e+00> : vector<286x128xf32>
    %5 = tpu.matmul %2, %4, %cst_5 {dimension_numbers = #tpu.dot_dimension_numbers<[1], [0], [0], [1], [0, 0, 1, 1], [], []>} : vector<286x128xbf16>, vector<128x128xbf16>, vector<286x128xf32> -> vector<286x128xf32>
    %6 = arith.addf %0, %5 : vector<286x128xf32>
    %c0_6 = arith.constant 0 : index
    %c1 = arith.constant 1 : index
    %c0_7 = arith.constant 0 : index
    %7 = vector.load %arg1[%c0_6, %c1, %c0_7] : memref<1x324x128xbf16, #tpu.memory_space<vmem>>, vector<1x286x128xbf16>
    %8 = vector.shape_cast %7 : vector<1x286x128xbf16> to vector<286x128xbf16>
    %c1_8 = arith.constant 1 : index
    %c0_9 = arith.constant 0 : index
    %c0_10 = arith.constant 0 : index
    %9 = vector.load %arg2[%c1_8, %c0_9, %c0_10] : memref<9x128x128xbf16, #tpu.memory_space<vmem>>, vector<1x128x128xbf16>
    %10 = vector.shape_cast %9 : vector<1x128x128xbf16> to vector<128x128xbf16>
    %cst_11 = arith.constant dense<0.000000e+00> : vector<286x128xf32>
    %11 = tpu.matmul %8, %10, %cst_11 {dimension_numbers = #tpu.dot_dimension_numbers<[1], [0], [0], [1], [0, 0, 1, 1], [], []>} : vector<286x128xbf16>, vector<128x128xbf16>, vector<286x128xf32> -> vector<286x128xf32>
    %12 = arith.addf %6, %11 : vector<286x128xf32>
    %c0_12 = arith.constant 0 : index
    %c2 = arith.constant 2 : index
    %c0_13 = arith.constant 0 : index
    %13 = vector.load %arg1[%c0_12, %c2, %c0_13] : memref<1x324x128xbf16, #tpu.memory_space<vmem>>, vector<1x286x128xbf16>
    %14 = vector.shape_cast %13 : vector<1x286x128xbf16> to vector<286x128xbf16>
    %c2_14 = arith.constant 2 : index
    %c0_15 = arith.constant 0 : index
    %c0_16 = arith.constant 0 : index
    %15 = vector.load %arg2[%c2_14, %c0_15, %c0_16] : memref<9x128x128xbf16, #tpu.memory_space<vmem>>, vector<1x128x128xbf16>
    %16 = vector.shape_cast %15 : vector<1x128x128xbf16> to vector<128x128xbf16>
    %cst_17 = arith.constant dense<0.000000e+00> : vector<286x128xf32>
    %17 = tpu.matmul %14, %16, %cst_17 {dimension_numbers = #tpu.dot_dimension_numbers<[1], [0], [0], [1], [0, 0, 1, 1], [], []>} : vector<286x128xbf16>, vector<128x128xbf16>, vector<286x128xf32> -> vector<286x128xf32>
    %18 = arith.addf %12, %17 : vector<286x128xf32>
    %c0_18 = arith.constant 0 : index
    %c18 = arith.constant 18 : index
    %c0_19 = arith.constant 0 : index
    %19 = vector.load %arg1[%c0_18, %c18, %c0_19] : memref<1x324x128xbf16, #tpu.memory_space<vmem>>, vector<1x286x128xbf16>
    %20 = vector.shape_cast %19 : vector<1x286x128xbf16> to vector<286x128xbf16>
    %c3 = arith.constant 3 : index
    %c0_20 = arith.constant 0 : index
    %c0_21 = arith.constant 0 : index
    %21 = vector.load %arg2[%c3, %c0_20, %c0_21] : memref<9x128x128xbf16, #tpu.memory_space<vmem>>, vector<1x128x128xbf16>
    %22 = vector.shape_cast %21 : vector<1x128x128xbf16> to vector<128x128xbf16>
    %cst_22 = arith.constant dense<0.000000e+00> : vector<286x128xf32>
    %23 = tpu.matmul %20, %22, %cst_22 {dimension_numbers = #tpu.dot_dimension_numbers<[1], [0], [0], [1], [0, 0, 1, 1], [], []>} : vector<286x128xbf16>, vector<128x128xbf16>, vector<286x128xf32> -> vector<286x128xf32>
    %24 = arith.addf %18, %23 : vector<286x128xf32>
    %c0_23 = arith.constant 0 : index
    %c19 = arith.constant 19 : index
    %c0_24 = arith.constant 0 : index
    %25 = vector.load %arg1[%c0_23, %c19, %c0_24] : memref<1x324x128xbf16, #tpu.memory_space<vmem>>, vector<1x286x128xbf16>
    %26 = vector.shape_cast %25 : vector<1x286x128xbf16> to vector<286x128xbf16>
    %c4 = arith.constant 4 : index
    %c0_25 = arith.constant 0 : index
    %c0_26 = arith.constant 0 : index
    %27 = vector.load %arg2[%c4, %c0_25, %c0_26] : memref<9x128x128xbf16, #tpu.memory_space<vmem>>, vector<1x128x128xbf16>
    %28 = vector.shape_cast %27 : vector<1x128x128xbf16> to vector<128x128xbf16>
    %cst_27 = arith.constant dense<0.000000e+00> : vector<286x128xf32>
    %29 = tpu.matmul %26, %28, %cst_27 {dimension_numbers = #tpu.dot_dimension_numbers<[1], [0], [0], [1], [0, 0, 1, 1], [], []>} : vector<286x128xbf16>, vector<128x128xbf16>, vector<286x128xf32> -> vector<286x128xf32>
    %30 = arith.addf %24, %29 : vector<286x128xf32>
    %c0_28 = arith.constant 0 : index
    %c20 = arith.constant 20 : index
    %c0_29 = arith.constant 0 : index
    %31 = vector.load %arg1[%c0_28, %c20, %c0_29] : memref<1x324x128xbf16, #tpu.memory_space<vmem>>, vector<1x286x128xbf16>
    %32 = vector.shape_cast %31 : vector<1x286x128xbf16> to vector<286x128xbf16>
    %c5 = arith.constant 5 : index
    %c0_30 = arith.constant 0 : index
    %c0_31 = arith.constant 0 : index
    %33 = vector.load %arg2[%c5, %c0_30, %c0_31] : memref<9x128x128xbf16, #tpu.memory_space<vmem>>, vector<1x128x128xbf16>
    %34 = vector.shape_cast %33 : vector<1x128x128xbf16> to vector<128x128xbf16>
    %cst_32 = arith.constant dense<0.000000e+00> : vector<286x128xf32>
    %35 = tpu.matmul %32, %34, %cst_32 {dimension_numbers = #tpu.dot_dimension_numbers<[1], [0], [0], [1], [0, 0, 1, 1], [], []>} : vector<286x128xbf16>, vector<128x128xbf16>, vector<286x128xf32> -> vector<286x128xf32>
    %36 = arith.addf %30, %35 : vector<286x128xf32>
    %c0_33 = arith.constant 0 : index
    %c36 = arith.constant 36 : index
    %c0_34 = arith.constant 0 : index
    %37 = vector.load %arg1[%c0_33, %c36, %c0_34] : memref<1x324x128xbf16, #tpu.memory_space<vmem>>, vector<1x286x128xbf16>
    %38 = vector.shape_cast %37 : vector<1x286x128xbf16> to vector<286x128xbf16>
    %c6 = arith.constant 6 : index
    %c0_35 = arith.constant 0 : index
    %c0_36 = arith.constant 0 : index
    %39 = vector.load %arg2[%c6, %c0_35, %c0_36] : memref<9x128x128xbf16, #tpu.memory_space<vmem>>, vector<1x128x128xbf16>
    %40 = vector.shape_cast %39 : vector<1x128x128xbf16> to vector<128x128xbf16>
    %cst_37 = arith.constant dense<0.000000e+00> : vector<286x128xf32>
    %41 = tpu.matmul %38, %40, %cst_37 {dimension_numbers = #tpu.dot_dimension_numbers<[1], [0], [0], [1], [0, 0, 1, 1], [], []>} : vector<286x128xbf16>, vector<128x128xbf16>, vector<286x128xf32> -> vector<286x128xf32>
    %42 = arith.addf %36, %41 : vector<286x128xf32>
    %c0_38 = arith.constant 0 : index
    %c37 = arith.constant 37 : index
    %c0_39 = arith.constant 0 : index
    %43 = vector.load %arg1[%c0_38, %c37, %c0_39] : memref<1x324x128xbf16, #tpu.memory_space<vmem>>, vector<1x286x128xbf16>
    %44 = vector.shape_cast %43 : vector<1x286x128xbf16> to vector<286x128xbf16>
    %c7 = arith.constant 7 : index
    %c0_40 = arith.constant 0 : index
    %c0_41 = arith.constant 0 : index
    %45 = vector.load %arg2[%c7, %c0_40, %c0_41] : memref<9x128x128xbf16, #tpu.memory_space<vmem>>, vector<1x128x128xbf16>
    %46 = vector.shape_cast %45 : vector<1x128x128xbf16> to vector<128x128xbf16>
    %cst_42 = arith.constant dense<0.000000e+00> : vector<286x128xf32>
    %47 = tpu.matmul %44, %46, %cst_42 {dimension_numbers = #tpu.dot_dimension_numbers<[1], [0], [0], [1], [0, 0, 1, 1], [], []>} : vector<286x128xbf16>, vector<128x128xbf16>, vector<286x128xf32> -> vector<286x128xf32>
    %48 = arith.addf %42, %47 : vector<286x128xf32>
    %c0_43 = arith.constant 0 : index
    %c38 = arith.constant 38 : index
    %c0_44 = arith.constant 0 : index
    %49 = vector.load %arg1[%c0_43, %c38, %c0_44] : memref<1x324x128xbf16, #tpu.memory_space<vmem>>, vector<1x286x128xbf16>
    %50 = vector.shape_cast %49 : vector<1x286x128xbf16> to vector<286x128xbf16>
    %c8 = arith.constant 8 : index
    %c0_45 = arith.constant 0 : index
    %c0_46 = arith.constant 0 : index
    %51 = vector.load %arg2[%c8, %c0_45, %c0_46] : memref<9x128x128xbf16, #tpu.memory_space<vmem>>, vector<1x128x128xbf16>
    %52 = vector.shape_cast %51 : vector<1x128x128xbf16> to vector<128x128xbf16>
    %cst_47 = arith.constant dense<0.000000e+00> : vector<286x128xf32>
    %53 = tpu.matmul %50, %52, %cst_47 {dimension_numbers = #tpu.dot_dimension_numbers<[1], [0], [0], [1], [0, 0, 1, 1], [], []>} : vector<286x128xbf16>, vector<128x128xbf16>, vector<286x128xf32> -> vector<286x128xf32>
    %54 = arith.addf %48, %53 : vector<286x128xf32>
    %c0_48 = arith.constant 0 : index
    %c0_49 = arith.constant 0 : index
    %55 = vector.load %arg3[%c0_48, %c0_49] : memref<1x128xf32, #tpu.memory_space<vmem>>, vector<1x128xf32>
    %56 = vector.broadcast %55 : vector<1x128xf32> to vector<286x128xf32>
    %57 = arith.addf %54, %56 : vector<286x128xf32>
    %c0_50 = arith.constant 0 : index
    %c0_51 = arith.constant 0 : index
    %c0_52 = arith.constant 0 : index
    %58 = vector.load %arg4[%c0_50, %c0_51, %c0_52] : memref<1x286x128xf32, #tpu.memory_space<vmem>>, vector<1x286x128xf32>
    %59 = vector.shape_cast %58 : vector<1x286x128xf32> to vector<286x128xf32>
    %60 = arith.addf %57, %59 : vector<286x128xf32>
    %cst_53 = arith.constant 0.000000e+00 : f32
    %61 = vector.broadcast %cst_53 : f32 to vector<286x128xf32>
    %62 = arith.maximumf %60, %61 : vector<286x128xf32>
    %c0_54 = arith.constant 0 : index
    %c0_55 = arith.constant 0 : index
    %c0_56 = arith.constant 0 : index
    %63 = vector.load %arg5[%c0_54, %c0_55, %c0_56] : memref<1x286x128xf32, #tpu.memory_space<vmem>>, vector<1x286x128xf32>
    %64 = vector.shape_cast %63 : vector<1x286x128xf32> to vector<286x128xf32>
    %65 = vector.shape_cast %62 : vector<286x128xf32> to vector<1x286x128xf32>
    tpu.vector_store %arg5[%c0_54, %c0_55, %c0_56], %65 {strides = array<i32>} : memref<1x286x128xf32, #tpu.memory_space<vmem>>, vector<1x286x128xf32>,
    return
  }
  func.func @transform_0(%arg0: i32) -> (i32, i32, i32) {
    %c0_i32 = arith.constant 0 : i32
    %c0_i32_0 = arith.constant 0 : i32
    %c0_i32_1 = arith.constant 0 : i32
    return %arg0, %c0_i32, %c0_i32_0 : i32, i32, i32
  }
  func.func @transform_1(%arg0: i32) -> (i32, i32, i32) {
    %c0_i32 = arith.constant 0 : i32
    %c0_i32_0 = arith.constant 0 : i32
    %c0_i32_1 = arith.constant 0 : i32
    %c0_i32_2 = arith.constant 0 : i32
    return %c0_i32, %c0_i32_0, %c0_i32_1 : i32, i32, i32
  }
  func.func @transform_2(%arg0: i32) -> (i32, i32) {
    %c0_i32 = arith.constant 0 : i32
    %c0_i32_0 = arith.constant 0 : i32
    %c0_i32_1 = arith.constant 0 : i32
    return %c0_i32, %c0_i32_0 : i32, i32
  }
  func.func @transform_3(%arg0: i32) -> (i32, i32, i32) {
    %c0_i32 = arith.constant 0 : i32
    %c0_i32_0 = arith.constant 0 : i32
    %c0_i32_1 = arith.constant 0 : i32
    return %arg0, %c0_i32, %c0_i32_0 : i32, i32, i32
  }
  func.func @transform_4(%arg0: i32) -> (i32, i32, i32) {
    %c0_i32 = arith.constant 0 : i32
    %c0_i32_0 = arith.constant 0 : i32
    %c0_i32_1 = arith.constant 0 : i32
    return %arg0, %c0_i32, %c0_i32_0 : i32, i32, i32
  }
}

</mosaic_0001>

<llo_original>
// kernel: basic_block_pallas.2
$region0: #{basic_block_pallas.2}
  #allocation0 [shape = 'u32[]', space=smem, size = 0x4, offset = 0x4, fixed_abs, tag = 'smem constant byte address 0x4 - core index']
  #allocation1 [shape = 'u32[144,128]{1,0:T(1,128)}', space=vmem, size = 0x12000, scoped, tag = 'internal scratch']
  %s0 = inlined_call_operand.vmem [shape: bf16[2,324,8], index: 0, kind: input, shape index: {}]
  %s1 = inlined_call_operand.vmem [shape: bf16[9,8,128], index: 1, kind: input, shape index: {}]
  %s2 = inlined_call_operand.vmem [shape: f32[1,128], index: 2, kind: input, shape index: {}]
  %s3 = inlined_call_operand.vmem [shape: bf16[2,286,128], index: 3, kind: output, shape index: {}]
  %s4 = sld [smem:[#allocation0]]
  $region45: #{basic_block_pallas.2} parent=0
    _
  %s6 = ssub.s32 1, %s4
  %s7 = scalar_select 0, %s6, %s4
  loop: start=0, step=1, limit=4
  $region2: #{basic_block_pallas.2} parent=0 // loop_pre_header
    _
  $region3: #{basic_block_pallas.2} parent=0 // loop_header
    %s9 = sphi 0, %s13
    %p10 = scmp.ge.s32.totalorder %s9, 4
    %s19 = sphi 0, %s21
    %s22 = sphi 0, %s19
    %s23 = sphi 0, %s22
    %s39 = sphi 0, %s23
    %s43 = sphi 0, %s43
    %s45 = sphi 0, %s43
    %s46 = sphi 0, %s45
    %s60 = sphi 0, %s46
    %s64 = sphi 0, %s64
    %s66 = sphi 0, %s64
    %s67 = sphi 0, %s66
    %s81 = sphi 0, %s67
    %s87 = sphi 0, %s89
    %s90 = sphi 0, %s87
    %s91 = sphi 0, %s90
    %s107 = sphi 0, %s91
  $region4: #{basic_block_pallas.2} parent=0 // loop_header_branch
    %12 = sbr.rel (%p10) target = $region8
  $region5: #{basic_block_pallas.2} parent=0 // loop_body
    %s14 = ssub.s32 %s9, 1
    %s15 = ssub.s32 %s9, 2
    %s16 = sadd.s32 %s9, 1
    %s17 = ssub.s32 %s9, %s16
    %p18 = scmp.eq.s32.totalorder %s17, 0
    %s20 = sadd.s32 %s19, 1
    %s21 = scalar_select %p18, %s19, %s20
    %p24 = pneg %p18
    %p25 = scmp.eq.s32.totalorder %s9, 1
    %p26 = por %p24, %p25
    %p27 = scmp.ne.s32.totalorder %s19, %s22
    %p28 = scmp.eq.s32.totalorder %s9, 0
    %p29 = por %p27, %p28
    %p30 = scmp.ne.s32.totalorder %s19, %s22
    %p31 = scmp.eq.s32.totalorder %s14, 1
    %p32 = por %p30, %p31
    %p33 = scmp.ne.s32.totalorder %s22, %s23
    %p34 = scmp.eq.s32.totalorder %s14, 0
    %p35 = por %p33, %p34
    %p36 = scmp.ne.s32.totalorder %s22, %s23
    %p37 = scmp.eq.s32.totalorder %s15, 1
    %p38 = por %p36, %p37
    %p40 = scmp.ne.s32.totalorder %s23, %s39
    %p41 = scmp.eq.s32.totalorder %s15, 0
    %p42 = por %p40, %p41
    %s44 = sadd.s32 %s43, 1
    %p47 = scmp.eq.s32.totalorder %s9, 1
    %p48 = scmp.ne.s32.totalorder %s43, %s45
    %p49 = scmp.eq.s32.totalorder %s9, 0
    %p50 = por %p48, %p49
    %p51 = scmp.ne.s32.totalorder %s43, %s45
    %p52 = scmp.eq.s32.totalorder %s14, 1
    %p53 = por %p51, %p52
    %p54 = scmp.ne.s32.totalorder %s45, %s46
    %p55 = scmp.eq.s32.totalorder %s14, 0
    %p56 = por %p54, %p55
    %p57 = scmp.ne.s32.totalorder %s45, %s46
    %p58 = scmp.eq.s32.totalorder %s15, 1
    %p59 = por %p57, %p58
    %p61 = scmp.ne.s32.totalorder %s46, %s60
    %p62 = scmp.eq.s32.totalorder %s15, 0
    %p63 = por %p61, %p62
    %s65 = sadd.s32 %s64, 1
    %p68 = scmp.eq.s32.totalorder %s9, 1
    %p69 = scmp.ne.s32.totalorder %s64, %s66
    %p70 = scmp.eq.s32.totalorder %s9, 0
    %p71 = por %p69, %p70
    %p72 = scmp.ne.s32.totalorder %s64, %s66
    %p73 = scmp.eq.s32.totalorder %s14, 1
    %p74 = por %p72, %p73
    %p75 = scmp.ne.s32.totalorder %s66, %s67
    %p76 = scmp.eq.s32.totalorder %s14, 0
    %p77 = por %p75, %p76
    %p78 = scmp.ne.s32.totalorder %s66, %s67
    %p79 = scmp.eq.s32.totalorder %s15, 1
    %p80 = por %p78, %p79
    %p82 = scmp.ne.s32.totalorder %s67, %s81
    %p83 = scmp.eq.s32.totalorder %s15, 0
    %p84 = por %p82, %p83
    %s85 = ssub.s32 %s9, %s16
    %p86 = scmp.eq.s32.totalorder %s85, 0
    %s88 = sadd.s32 %s87, 1
    %s89 = scalar_select %p86, %s87, %s88
    %p92 = pneg %p86
    %p93 = scmp.eq.s32.totalorder %s9, 1
    %p94 = por %p92, %p93
    %p95 = scmp.ne.s32.totalorder %s87, %s90
    %p96 = scmp.eq.s32.totalorder %s9, 0
    %p97 = por %p95, %p96
    %p98 = scmp.ne.s32.totalorder %s87, %s90
    %p99 = scmp.eq.s32.totalorder %s14, 1
    %p100 = por %p98, %p99
    %p101 = scmp.ne.s32.totalorder %s90, %s91
    %p102 = scmp.eq.s32.totalorder %s14, 0
    %p103 = por %p101, %p102
    %p104 = scmp.ne.s32.totalorder %s90, %s91
    %p105 = scmp.eq.s32.totalorder %s15, 1
    %p106 = por %p104, %p105
    %p108 = scmp.ne.s32.totalorder %s91, %s107
    %p109 = scmp.eq.s32.totalorder %s15, 0
    %p110 = por %p108, %p109
    %p111 = scmp.le.s32.totalorder 1, %s9
    %p112 = scmp.lt.s32.totalorder %s9, 3
    %p113 = pnand %p111, %p112
    %p114 = pneg %p113
    // Predicated region
    $region9: #{basic_block_pallas.2} parent=5 // pred_check
      _
    $region10: #{basic_block_pallas.2} parent=5 // pred_check_branch
      %116 = sbr.rel (%p113) target = $region12
    $region11: #{basic_block_pallas.2} parent=5 // pred_region
      %s117 = ssub.s32 %s9, 1
      // Predicated region
      $region13: #{basic_block_pallas.2} parent=11 // pred_check
        %p118 = pneg %p56
      $region14: #{basic_block_pallas.2} parent=11 // pred_check_branch
        %120 = sbr.rel (%p118) target = $region16
      $region15: #{basic_block_pallas.2} parent=11 // pred_region
        _
      $region16: #{basic_block_pallas.2} parent=11 // pred_fallthru
        _
      // Predicated region
      $region17: #{basic_block_pallas.2} parent=11 // pred_check
        %p121 = pneg %p77
      $region18: #{basic_block_pallas.2} parent=11 // pred_check_branch
        %123 = sbr.rel (%p121) target = $region20
      $region19: #{basic_block_pallas.2} parent=11 // pred_region
        _
      $region20: #{basic_block_pallas.2} parent=11 // pred_fallthru
        _
    $region12: #{basic_block_pallas.2} parent=5 // pred_fallthru
      _
    %p124 = scmp.lt.s32.totalorder %s9, 2
    // Predicated region
    $region21: #{basic_block_pallas.2} parent=5 // pred_check
      %p125 = pneg %p124
    $region22: #{basic_block_pallas.2} parent=5 // pred_check_branch
      %127 = sbr.rel (%p125) target = $region24
    $region23: #{basic_block_pallas.2} parent=5 // pred_region
      // Predicated region
      $region25: #{basic_block_pallas.2} parent=23 // pred_check
        %p128 = pneg %p29
      $region26: #{basic_block_pallas.2} parent=23 // pred_check_branch
        %130 = sbr.rel (%p128) target = $region28
      $region27: #{basic_block_pallas.2} parent=23 // pred_region
        %p131 = scmp.lt.s32.totalorder %s9, 1
        %s132 = scalar_select %p131, %s9, 1
        %s133 = smul.addr %s132, 41
        %s134 = smul.addr %s133, 4
        %s135 = scalar_lea.vmem %s0, %s134
      $region28: #{basic_block_pallas.2} parent=23 // pred_fallthru
        _
    $region24: #{basic_block_pallas.2} parent=5 // pred_fallthru
      _
    %p136 = scmp.le.s32.totalorder 1, %s9
    %p137 = scmp.lt.s32.totalorder %s9, 3
    %p138 = pnand %p136, %p137
    %p139 = pneg %p138
    // Predicated region
    $region29: #{basic_block_pallas.2} parent=5 // pred_check
      _
    $region30: #{basic_block_pallas.2} parent=5 // pred_check_branch
      %141 = sbr.rel (%p138) target = $region32
    $region31: #{basic_block_pallas.2} parent=5 // pred_region
      %s142 = ssub.s32 %s9, 1
      %p143 = scmp.lt.s32.totalorder %s14, 1
      %s144 = scalar_select %p143, %s14, 1
      %s145 = smul.addr %s144, 41
      %s146 = smul.addr %s145, 4
      %s147 = scalar_lea.vmem %s0, %s146
      %p148 = pneg %p35
      %p149 = pneg %p32
      %p150 = pneg %p56
      %p151 = pneg %p53
      %p152 = pneg %p77
      %p153 = pneg %p74
      %p154 = pneg %p103
      %p155 = pneg %p100
      %p156 = scmp.lt.s32.totalorder %s14, 1
      %s157 = scalar_select %p156, %s14, 1
      %s158 = smul.addr %s157, 36
      %s159 = smul.addr %s158, 4
      %s160 = scalar_lea.vmem %s3, %s159
      %p161 = scmp.lt.s32.totalorder %s14, 1
      %s162 = scalar_select %p161, %s14, 1
      %s163 = smul.addr %s162, 41
      %s164 = smul.addr %s163, 4
      %s165 = scalar_lea.vmem %s0, %s164
      %p166 = scmp.lt.s32.totalorder %s14, 1
      %s167 = scalar_select %p166, %s14, 1
      %s168 = smul.addr %s167, 36
      %s169 = smul.addr %s168, 4
      %s170 = scalar_lea.vmem %s3, %s169
      %v172 = vld [vmem:[%s165] sm:$0xf]
      %v173 = vld [vmem:[%s165 + $0x4] sm:$0xf]
      %v174 = vld [vmem:[%s165 + $0x8] sm:$0xf]
      %v175 = vld [vmem:[%s165 + $0xc] sm:$0xf]
      %v176 = vld [vmem:[%s165 + $0x10] sm:$0xf]
      %v177 = vld [vmem:[%s165 + $0x14] sm:$0xf]
      %v178 = vld [vmem:[%s165 + $0x18] sm:$0xf]
      %v179 = vld [vmem:[%s165 + $0x1c] sm:$0xf]
      %v180 = vld [vmem:[%s165 + $0x20] sm:$0xf]
      %v181 = vld [vmem:[%s165 + $0x24] sm:$0xf]
      %v182 = vld [vmem:[%s165 + $0x28] sm:$0xf]
      %v183 = vld [vmem:[%s165 + $0x2c] sm:$0xf]
      %v184 = vld [vmem:[%s165 + $0x30] sm:$0xf]
      %v185 = vld [vmem:[%s165 + $0x34] sm:$0xf]
      %v186 = vld [vmem:[%s165 + $0x38] sm:$0xf]
      %v187 = vld [vmem:[%s165 + $0x3c] sm:$0xf]
      %v188 = vld [vmem:[%s165 + $0x40] sm:$0xf]
      %v189 = vld [vmem:[%s165 + $0x44] sm:$0xf]
      %v190 = vld [vmem:[%s165 + $0x48] sm:$0xf]
      %v191 = vld [vmem:[%s165 + $0x4c] sm:$0xf]
      %v192 = vld [vmem:[%s165 + $0x50] sm:$0xf]
      %v193 = vld [vmem:[%s165 + $0x54] sm:$0xf]
      %v194 = vld [vmem:[%s165 + $0x58] sm:$0xf]
      %v195 = vld [vmem:[%s165 + $0x5c] sm:$0xf]
      %v196 = vld [vmem:[%s165 + $0x60] sm:$0xf]
      %v197 = vld [vmem:[%s165 + $0x64] sm:$0xf]
      %v198 = vld [vmem:[%s165 + $0x68] sm:$0xf]
      %v199 = vld [vmem:[%s165 + $0x6c] sm:$0xf]
      %v200 = vld [vmem:[%s165 + $0x70] sm:$0xf]
      %v201 = vld [vmem:[%s165 + $0x74] sm:$0xf]
      %v202 = vld [vmem:[%s165 + $0x78] sm:$0xf]
      %v203 = vld [vmem:[%s165 + $0x7c] sm:$0xf]
      %v204 = vld [vmem:[%s165 + $0x80] sm:$0xf]
      %v205 = vld [vmem:[%s165 + $0x84] sm:$0xf]
      %v206 = vld [vmem:[%s165 + $0x88] sm:$0xf]
      %v207 = vld [vmem:[%s165 + $0x8c] sm:$0x7]
      %v208 = vld [vmem:[%s1] sm:$0xf]
      %v209 = vld [vmem:[%s165 + $0x8c] sm:$0xf]
      %s210 = scalar_lea.vmem %s1, 4
      %v211 = vld [vmem:[%s210] sm:$0xf]
      %v248 = vunpack.c.l.b16 %v172
      %v249 = vunpack.c.l.b16 %v173
      %v250 = vunpack.c.l.b16 %v174
      %v251 = vunpack.c.l.b16 %v175
      %v252 = vunpack.c.l.b16 %v176
      %v253 = vunpack.c.l.b16 %v177
      %v254 = vunpack.c.l.b16 %v178
      %v255 = vunpack.c.l.b16 %v179
      %v256 = vunpack.c.l.b16 %v180
      %v257 = vunpack.c.l.b16 %v181
      %v258 = vunpack.c.l.b16 %v182
      %v259 = vunpack.c.l.b16 %v183
      %v260 = vunpack.c.l.b16 %v184
      %v261 = vunpack.c.l.b16 %v185
      %v262 = vunpack.c.l.b16 %v186
      %v263 = vunpack.c.l.b16 %v187
      %v264 = vunpack.c.l.b16 %v188
      %v265 = vunpack.c.l.b16 %v189
      %v266 = vunpack.c.l.b16 %v190
      %v267 = vunpack.c.l.b16 %v191
      %v268 = vunpack.c.l.b16 %v192
      %v269 = vunpack.c.l.b16 %v193
      %v270 = vunpack.c.l.b16 %v194
      %v271 = vunpack.c.l.b16 %v195
      %v272 = vunpack.c.l.b16 %v196
      %v273 = vunpack.c.l.b16 %v197
      %v274 = vunpack.c.l.b16 %v198
      %v275 = vunpack.c.l.b16 %v199
      %v276 = vunpack.c.l.b16 %v200
      %v277 = vunpack.c.l.b16 %v201
      %v278 = vunpack.c.l.b16 %v202
      %v279 = vunpack.c.l.b16 %v203
      %v280 = vunpack.c.l.b16 %v204
      %v281 = vunpack.c.l.b16 %v205
      %v282 = vunpack.c.l.b16 %v206
      %v283 = vunpack.c.l.b16 %v209
      %v284 = vpack.c.b16 %v249, %v248
      %v285 = vpack.c.b16 %v251, %v250
      %v286 = vpack.c.b16 %v253, %v252
      %v287 = vpack.c.b16 %v255, %v254
      %v288 = vpack.c.b16 %v257, %v256
      %v289 = vpack.c.b16 %v259, %v258
      %v290 = vpack.c.b16 %v261, %v260
      %v291 = vpack.c.b16 %v263, %v262
      %v292 = vpack.c.b16 %v265, %v264
      %v293 = vpack.c.b16 %v267, %v266
      %v294 = vpack.c.b16 %v269, %v268
      %v295 = vpack.c.b16 %v271, %v270
      %v296 = vpack.c.b16 %v273, %v272
      %v297 = vpack.c.b16 %v275, %v274
      %v298 = vpack.c.b16 %v277, %v276
      %v299 = vpack.c.b16 %v279, %v278
      %v300 = vpack.c.b16 %v281, %v280
      %v301 = vpack.c.b16 %v283, %v282
      %vm302 = vsmask.f32 7424
      %v304 = vshrl.u32 %v284, 16
      %v306 = vshll.u32 %v284, 16
      %v308 = vrot.slane %v306, 1
      %v309 = vor.u32 %v304, %v308
      %v311 = vshll.u32 %v285, 16
      %v313 = vrot.slane %v311, 1
      %v314 = vsel %vm302, %v309, %v313
      %v315 = vshrl.u32 %v285, 16
      %v317 = vor.u32 %v315, %v313
      %v319 = vshll.u32 %v286, 16
      %v321 = vrot.slane %v319, 1
      %v322 = vsel %vm302, %v317, %v321
      %v323 = vshrl.u32 %v286, 16
      %v325 = vor.u32 %v323, %v321
      %v327 = vshll.u32 %v287, 16
      %v329 = vrot.slane %v327, 1
      %v330 = vsel %vm302, %v325, %v329
      %v331 = vshrl.u32 %v287, 16
      %v333 = vor.u32 %v331, %v329
      %v335 = vshll.u32 %v288, 16
      %v337 = vrot.slane %v335, 1
      %v338 = vsel %vm302, %v333, %v337
      %v339 = vshrl.u32 %v288, 16
      %v341 = vor.u32 %v339, %v337
      %v343 = vshll.u32 %v289, 16
      %v345 = vrot.slane %v343, 1
      %v346 = vsel %vm302, %v341, %v345
      %v347 = vshrl.u32 %v289, 16
      %v349 = vor.u32 %v347, %v345
      %v351 = vshll.u32 %v290, 16
      %v353 = vrot.slane %v351, 1
      %v354 = vsel %vm302, %v349, %v353
      %v355 = vshrl.u32 %v290, 16
      %v357 = vor.u32 %v355, %v353
      %v359 = vshll.u32 %v291, 16
      %v361 = vrot.slane %v359, 1
      %v362 = vsel %vm302, %v357, %v361
      %v363 = vshrl.u32 %v291, 16
      %v365 = vor.u32 %v363, %v361
      %v367 = vshll.u32 %v292, 16
      %v369 = vrot.slane %v367, 1
      %v370 = vsel %vm302, %v365, %v369
      %v371 = vshrl.u32 %v292, 16
      %v373 = vor.u32 %v371, %v369
      %v375 = vshll.u32 %v293, 16
      %v377 = vrot.slane %v375, 1
      %v378 = vsel %vm302, %v373, %v377
      %v379 = vshrl.u32 %v293, 16
      %v381 = vor.u32 %v379, %v377
      %v383 = vshll.u32 %v294, 16
      %v385 = vrot.slane %v383, 1
      %v386 = vsel %vm302, %v381, %v385
      %v387 = vshrl.u32 %v294, 16
      %v389 = vor.u32 %v387, %v385
      %v391 = vshll.u32 %v295, 16
      %v393 = vrot.slane %v391, 1
      %v394 = vsel %vm302, %v389, %v393
      %v395 = vshrl.u32 %v295, 16
      %v397 = vor.u32 %v395, %v393
      %v399 = vshll.u32 %v296, 16
      %v401 = vrot.slane %v399, 1
      %v402 = vsel %vm302, %v397, %v401
      %v403 = vshrl.u32 %v296, 16
      %v405 = vor.u32 %v403, %v401
      %v407 = vshll.u32 %v297, 16
      %v409 = vrot.slane %v407, 1
      %v410 = vsel %vm302, %v405, %v409
      %v411 = vshrl.u32 %v297, 16
      %v413 = vor.u32 %v411, %v409
      %v415 = vshll.u32 %v298, 16
      %v417 = vrot.slane %v415, 1
      %v418 = vsel %vm302, %v413, %v417
      %v419 = vshrl.u32 %v298, 16
      %v421 = vor.u32 %v419, %v417
      %v423 = vshll.u32 %v299, 16
      %v425 = vrot.slane %v423, 1
      %v426 = vsel %vm302, %v421, %v425
      %v427 = vshrl.u32 %v299, 16
      %v429 = vor.u32 %v427, %v425
      %v431 = vshll.u32 %v300, 16
      %v433 = vrot.slane %v431, 1
      %v434 = vsel %vm302, %v429, %v433
      %v435 = vshrl.u32 %v300, 16
      %v437 = vor.u32 %v435, %v433
      %v439 = vshll.u32 %v301, 16
      %v441 = vrot.slane %v439, 1
      %v442 = vsel %vm302, %v437, %v441
      %v443 = vshrl.u32 %v301, 16
      %v445 = vor.u32 %v443, %v441
      %vm446 = vcmask 64512
      %v448 = vsel %vm446, %v314, 0
      %v451 = vsel %vm446, %v322, 0
      %v454 = vsel %vm446, %v330, 0
      %v457 = vsel %vm446, %v338, 0
      %v460 = vsel %vm446, %v346, 0
      %v463 = vsel %vm446, %v354, 0
      %v466 = vsel %vm446, %v362, 0
      %v469 = vsel %vm446, %v370, 0
      %v472 = vsel %vm446, %v378, 0
      %v475 = vsel %vm446, %v386, 0
      %v478 = vsel %vm446, %v394, 0
      %v481 = vsel %vm446, %v402, 0
      %v484 = vsel %vm446, %v410, 0
      %v487 = vsel %vm446, %v418, 0
      %v490 = vsel %vm446, %v426, 0
      %v493 = vsel %vm446, %v434, 0
      %v496 = vsel %vm446, %v442, 0
      %v499 = vsel %vm446, %v445, 0
      %vm501 = vcmask 1043456
      %v503 = vsel %vm501, %v211, 0
      %505 = vmatprep.subr.bf16.mxu0 0
      %506 = vmatpush1.bf16.msra.mxu0 0
      %507 = vmatprep.subr.bf16.mxu0 0
      %508 = vmatpush1.bf16.msra.mxu0 0
      %509 = vmatprep.subr.bf16.mxu0 0
      %510 = vmatpush1.bf16.msra.mxu0 0
      %511 = vmatprep.subr.bf16.mxu0 0
      %512 = vmatpush1.bf16.msra.mxu0 0
      %513 = vmatprep.subr.bf16.mxu0 0
      %514 = vmatpush1.bf16.msra.mxu0 0
      %515 = vmatprep.subr.bf16.mxu0 0
      %516 = vmatpush1.bf16.msra.mxu0 0
      %517 = vmatprep.subr.bf16.mxu0 0
      %518 = vmatpush1.bf16.msra.mxu0 0
      %519 = vmatprep.subr.bf16.mxu0 0
      %520 = vmatpush1.bf16.msra.mxu0 %v503
      %521 = vmatprep.subr.bf16.mxu0 0
      %522 = vmatpush2.bf16.msra.mxu0 0
      %523 = vmatprep.subr.bf16.mxu0 0
      %524 = vmatpush2.bf16.msra.mxu0 0
      %525 = vmatprep.subr.bf16.mxu0 0
      %526 = vmatpush2.bf16.msra.mxu0 0
      %527 = vmatprep.subr.bf16.mxu0 0
      %528 = vmatpush2.bf16.msra.mxu0 0
      %529 = vmatprep.subr.bf16.mxu0 0
      %530 = vmatpush2.bf16.msra.mxu0 0
      %531 = vmatprep.subr.bf16.mxu0 0
      %532 = vmatpush2.bf16.msra.mxu0 0
      %533 = vmatprep.subr.bf16.mxu0 0
      %534 = vmatpush2.bf16.msra.mxu0 0
      %535 = vmatprep.subr.bf16.mxu0 0
      %536 = vmatpush2.bf16.msra.mxu0 0
      %537 = vmatprep.mubr.bf16.mxu0 0
      %538 = vmatmul.mubr.bf16.gmra.mxu0 %v448
      %v539 = vpop.f32.mrf.mxu0
      %v540 = vadd.f32 0.0, %v539
      %v541 = vpop.f32.mrf.mxu0
      %v542 = vpop.f32.mrf.mxu0
      %v543 = vadd.f32 0.0, %v542
      %v544 = vpop.f32.mrf.mxu0
      %545 = vmatprep.mubr.bf16.mxu0 0
      %546 = vmatmul.mubr.bf16.gmra.mxu0 %v451
      %v547 = vpop.f32.mrf.mxu0
      %v548 = vadd.f32 0.0, %v547
      %v549 = vpop.f32.mrf.mxu0
      %v550 = vpop.f32.mrf.mxu0
      %v551 = vadd.f32 0.0, %v550
      %v552 = vpop.f32.mrf.mxu0
      %553 = vmatprep.mubr.bf16.mxu0 0
      %554 = vmatmul.mubr.bf16.gmra.mxu0 %v454
      %v555 = vpop.f32.mrf.mxu0
      %v556 = vadd.f32 0.0, %v555
      %v557 = vpop.f32.mrf.mxu0
      %v558 = vpop.f32.mrf.mxu0
      %v559 = vadd.f32 0.0, %v558
      %v560 = vpop.f32.mrf.mxu0
      %561 = vmatprep.mubr.bf16.mxu0 0
      %562 = vmatmul.mubr.bf16.gmra.mxu0 %v457
      %v563 = vpop.f32.mrf.mxu0
      %v564 = vadd.f32 0.0, %v563
      %v565 = vpop.f32.mrf.mxu0
      %v566 = vpop.f32.mrf.mxu0
      %v567 = vadd.f32 0.0, %v566
      %v568 = vpop.f32.mrf.mxu0
      %569 = vmatprep.mubr.bf16.mxu0 0
      %570 = vmatmul.mubr.bf16.gmra.mxu0 %v460
      %v571 = vpop.f32.mrf.mxu0
      %v572 = vadd.f32 0.0, %v571
      %v573 = vpop.f32.mrf.mxu0
      %v574 = vpop.f32.mrf.mxu0
      %v575 = vadd.f32 0.0, %v574
      %v576 = vpop.f32.mrf.mxu0
      %577 = vmatprep.mubr.bf16.mxu0 0
      %578 = vmatmul.mubr.bf16.gmra.mxu0 %v463
      %v579 = vpop.f32.mrf.mxu0
      %v580 = vadd.f32 0.0, %v579
      %v581 = vpop.f32.mrf.mxu0
      %v582 = vpop.f32.mrf.mxu0
      %v583 = vadd.f32 0.0, %v582
      %v584 = vpop.f32.mrf.mxu0
      %585 = vmatprep.mubr.bf16.mxu0 0
      %586 = vmatmul.mubr.bf16.gmra.mxu0 %v466
      %v587 = vpop.f32.mrf.mxu0
      %v588 = vadd.f32 0.0, %v587
      %v589 = vpop.f32.mrf.mxu0
      %v590 = vpop.f32.mrf.mxu0
      %v591 = vadd.f32 0.0, %v590
      %v592 = vpop.f32.mrf.mxu0
      %593 = vmatprep.mubr.bf16.mxu0 0
      %594 = vmatmul.mubr.bf16.gmra.mxu0 %v469
      %v595 = vpop.f32.mrf.mxu0
      %v596 = vadd.f32 0.0, %v595
      %v597 = vpop.f32.mrf.mxu0
      %v598 = vpop.f32.mrf.mxu0
      %v599 = vadd.f32 0.0, %v598
      %v600 = vpop.f32.mrf.mxu0
      %601 = vmatprep.mubr.bf16.mxu0 0
      %602 = vmatmul.mubr.bf16.gmra.mxu0 %v472
      %v603 = vpop.f32.mrf.mxu0
      %v604 = vadd.f32 0.0, %v603
      %v605 = vpop.f32.mrf.mxu0
      %v606 = vpop.f32.mrf.mxu0
      %v607 = vadd.f32 0.0, %v606
      %v608 = vpop.f32.mrf.mxu0
      %609 = vmatprep.mubr.bf16.mxu0 0
      %610 = vmatmul.mubr.bf16.gmra.mxu0 %v475
      %v611 = vpop.f32.mrf.mxu0
      %v612 = vadd.f32 0.0, %v611
      %v613 = vpop.f32.mrf.mxu0
      %v614 = vpop.f32.mrf.mxu0
      %v615 = vadd.f32 0.0, %v614
      %v616 = vpop.f32.mrf.mxu0
      %617 = vmatprep.mubr.bf16.mxu0 0
      %618 = vmatmul.mubr.bf16.gmra.mxu0 %v478
      %v619 = vpop.f32.mrf.mxu0
      %v620 = vadd.f32 0.0, %v619
      %v621 = vpop.f32.mrf.mxu0
      %v622 = vpop.f32.mrf.mxu0
      %v623 = vadd.f32 0.0, %v622
      %v624 = vpop.f32.mrf.mxu0
      %625 = vmatprep.mubr.bf16.mxu0 0
      %626 = vmatmul.mubr.bf16.gmra.mxu0 %v481
      %v627 = vpop.f32.mrf.mxu0
      %v628 = vadd.f32 0.0, %v627
      %v629 = vpop.f32.mrf.mxu0
      %v630 = vpop.f32.mrf.mxu0
      %v631 = vadd.f32 0.0, %v630
      %v632 = vpop.f32.mrf.mxu0
      %633 = vmatprep.mubr.bf16.mxu0 0
      %634 = vmatmul.mubr.bf16.gmra.mxu0 %v484
      %v635 = vpop.f32.mrf.mxu0
      %v636 = vadd.f32 0.0, %v635
      %v637 = vpop.f32.mrf.mxu0
      %v638 = vpop.f32.mrf.mxu0
      %v639 = vadd.f32 0.0, %v638
      %v640 = vpop.f32.mrf.mxu0
      %641 = vmatprep.mubr.bf16.mxu0 0
      %642 = vmatmul.mubr.bf16.gmra.mxu0 %v487
      %v643 = vpop.f32.mrf.mxu0
      %v644 = vadd.f32 0.0, %v643
      %v645 = vpop.f32.mrf.mxu0
      %v646 = vpop.f32.mrf.mxu0
      %v647 = vadd.f32 0.0, %v646
      %v648 = vpop.f32.mrf.mxu0
      %649 = vmatprep.mubr.bf16.mxu0 0
      %650 = vmatmul.mubr.bf16.gmra.mxu0 %v490
      %v651 = vpop.f32.mrf.mxu0
      %v652 = vadd.f32 0.0, %v651
      %v653 = vpop.f32.mrf.mxu0
      %v654 = vpop.f32.mrf.mxu0
      %v655 = vadd.f32 0.0, %v654
      %v656 = vpop.f32.mrf.mxu0
      %657 = vmatprep.mubr.bf16.mxu0 0
      %658 = vmatmul.mubr.bf16.gmra.mxu0 %v493
      %v659 = vpop.f32.mrf.mxu0
      %v660 = vadd.f32 0.0, %v659
      %v661 = vpop.f32.mrf.mxu0
      %v662 = vpop.f32.mrf.mxu0
      %v663 = vadd.f32 0.0, %v662
      %v664 = vpop.f32.mrf.mxu0
      %665 = vmatprep.mubr.bf16.mxu0 0
      %666 = vmatmul.mubr.bf16.gmra.mxu0 %v496
      %v667 = vpop.f32.mrf.mxu0
      %v668 = vadd.f32 0.0, %v667
      %v669 = vpop.f32.mrf.mxu0
      %v670 = vpop.f32.mrf.mxu0
      %v671 = vadd.f32 0.0, %v670
      %v672 = vpop.f32.mrf.mxu0
      %673 = vmatprep.mubr.bf16.mxu0 0
      %674 = vmatmul.mubr.bf16.gmra.mxu0 %v499
      %v675 = vpop.f32.mrf.mxu0
      %v676 = vadd.f32 0.0, %v675
      %v677 = vpop.f32.mrf.mxu0
      %v678 = vpop.f32.mrf.mxu0
      %v679 = vadd.f32 0.0, %v678
      %v680 = vpop.f32.mrf.mxu0
      %681 = vdwg.mxu0
      %v683 = vunpack.c.l.b16 %v207
      %v684 = vpack.c.b16 %v683, %v282
      %v685 = vsel %vm446, %v284, 0
      %v687 = vsel %vm446, %v285, 0
      %v689 = vsel %vm446, %v286, 0
      %v691 = vsel %vm446, %v287, 0
      %v693 = vsel %vm446, %v288, 0
      %v695 = vsel %vm446, %v289, 0
      %v697 = vsel %vm446, %v290, 0
      %v699 = vsel %vm446, %v291, 0
      %v701 = vsel %vm446, %v292, 0
      %v703 = vsel %vm446, %v293, 0
      %v705 = vsel %vm446, %v294, 0
      %v707 = vsel %vm446, %v295, 0
      %v709 = vsel %vm446, %v296, 0
      %v711 = vsel %vm446, %v297, 0
      %v713 = vsel %vm446, %v298, 0
      %v715 = vsel %vm446, %v299, 0
      %v717 = vsel %vm446, %v300, 0
      %v720 = vsel %vm446, %v684, 0
      %v723 = vsel %vm501, %v208, 0
      %725 = vmatprep.subr.bf16.mxu0 0
      %726 = vmatpush1.bf16.msra.mxu0 0
      %727 = vmatprep.subr.bf16.mxu0 0
      %728 = vmatpush1.bf16.msra.mxu0 0
      %729 = vmatprep.subr.bf16.mxu0 0
      %730 = vmatpush1.bf16.msra.mxu0 0
      %731 = vmatprep.subr.bf16.mxu0 0
      %732 = vmatpush1.bf16.msra.mxu0 0
      %733 = vmatprep.subr.bf16.mxu0 0
      %734 = vmatpush1.bf16.msra.mxu0 0
      %735 = vmatprep.subr.bf16.mxu0 0
      %736 = vmatpush1.bf16.msra.mxu0 0
      %737 = vmatprep.subr.bf16.mxu0 0
      %738 = vmatpush1.bf16.msra.mxu0 0
      %739 = vmatprep.subr.bf16.mxu0 0
      %740 = vmatpush1.bf16.msra.mxu0 %v723
      %741 = vmatprep.subr.bf16.mxu0 0
      %742 = vmatpush2.bf16.msra.mxu0 0
      %743 = vmatprep.subr.bf16.mxu0 0
      %744 = vmatpush2.bf16.msra.mxu0 0
      %745 = vmatprep.subr.bf16.mxu0 0
      %746 = vmatpush2.bf16.msra.mxu0 0
      %747 = vmatprep.subr.bf16.mxu0 0
      %748 = vmatpush2.bf16.msra.mxu0 0
      %749 = vmatprep.subr.bf16.mxu0 0
      %750 = vmatpush2.bf16.msra.mxu0 0
      %751 = vmatprep.subr.bf16.mxu0 0
      %752 = vmatpush2.bf16.msra.mxu0 0
      %753 = vmatprep.subr.bf16.mxu0 0
      %754 = vmatpush2.bf16.msra.mxu0 0
      %755 = vmatprep.subr.bf16.mxu0 0
      %756 = vmatpush2.bf16.msra.mxu0 0
      %757 = vmatprep.mubr.bf16.mxu0 0
      %758 = vmatmul.mubr.bf16.gmra.mxu0 %v685
      %v759 = vpop.f32.mrf.mxu0
      %v760 = vadd.f32 %v540, %v759
      %v761 = vpop.f32.mrf.mxu0
      %v762 = vpop.f32.mrf.mxu0
      %v763 = vadd.f32 %v543, %v762
      %v764 = vpop.f32.mrf.mxu0
      %765 = vmatprep.mubr.bf16.mxu0 0
      %766 = vmatmul.mubr.bf16.gmra.mxu0 %v687
      %v767 = vpop.f32.mrf.mxu0
      %v768 = vadd.f32 %v548, %v767
      %v769 = vpop.f32.mrf.mxu0
      %v770 = vpop.f32.mrf.mxu0
      %v771 = vadd.f32 %v551, %v770
      %v772 = vpop.f32.mrf.mxu0
      %773 = vmatprep.mubr.bf16.mxu0 0
      %774 = vmatmul.mubr.bf16.gmra.mxu0 %v689
      %v775 = vpop.f32.mrf.mxu0
      %v776 = vadd.f32 %v556, %v775
      %v777 = vpop.f32.mrf.mxu0
      %v778 = vpop.f32.mrf.mxu0
      %v779 = vadd.f32 %v559, %v778
      %v780 = vpop.f32.mrf.mxu0
      %781 = vmatprep.mubr.bf16.mxu0 0
      %782 = vmatmul.mubr.bf16.gmra.mxu0 %v691
      %v783 = vpop.f32.mrf.mxu0
      %v784 = vadd.f32 %v564, %v783
      %v785 = vpop.f32.mrf.mxu0
      %v786 = vpop.f32.mrf.mxu0
      %v787 = vadd.f32 %v567, %v786
      %v788 = vpop.f32.mrf.mxu0
      %789 = vmatprep.mubr.bf16.mxu0 0
      %790 = vmatmul.mubr.bf16.gmra.mxu0 %v693
      %v791 = vpop.f32.mrf.mxu0
      %v792 = vadd.f32 %v572, %v791
      %v793 = vpop.f32.mrf.mxu0
      %v794 = vpop.f32.mrf.mxu0
      %v795 = vadd.f32 %v575, %v794
      %v796 = vpop.f32.mrf.mxu0
      %797 = vmatprep.mubr.bf16.mxu0 0
      %798 = vmatmul.mubr.bf16.gmra.mxu0 %v695
      %v799 = vpop.f32.mrf.mxu0
      %v800 = vadd.f32 %v580, %v799
      %v801 = vpop.f32.mrf.mxu0
      %v802 = vpop.f32.mrf.mxu0
      %v803 = vadd.f32 %v583, %v802
      %v804 = vpop.f32.mrf.mxu0
      %805 = vmatprep.mubr.bf16.mxu0 0
      %806 = vmatmul.mubr.bf16.gmra.mxu0 %v697
      %v807 = vpop.f32.mrf.mxu0
      %v808 = vadd.f32 %v588, %v807
      %v809 = vpop.f32.mrf.mxu0
      %v810 = vpop.f32.mrf.mxu0
      %v811 = vadd.f32 %v591, %v810
      %v812 = vpop.f32.mrf.mxu0
      %813 = vmatprep.mubr.bf16.mxu0 0
      %814 = vmatmul.mubr.bf16.gmra.mxu0 %v699
      %v815 = vpop.f32.mrf.mxu0
      %v816 = vadd.f32 %v596, %v815
      %v817 = vpop.f32.mrf.mxu0
      %v818 = vpop.f32.mrf.mxu0
      %v819 = vadd.f32 %v599, %v818
      %v820 = vpop.f32.mrf.mxu0
      %821 = vmatprep.mubr.bf16.mxu0 0
      %822 = vmatmul.mubr.bf16.gmra.mxu0 %v701
      %v823 = vpop.f32.mrf.mxu0
      %v824 = vadd.f32 %v604, %v823
      %v825 = vpop.f32.mrf.mxu0
      %v826 = vpop.f32.mrf.mxu0
      %v827 = vadd.f32 %v607, %v826
      %v828 = vpop.f32.mrf.mxu0
      %829 = vmatprep.mubr.bf16.mxu0 0
      %830 = vmatmul.mubr.bf16.gmra.mxu0 %v703
      %v831 = vpop.f32.mrf.mxu0
      %v832 = vadd.f32 %v612, %v831
      %v833 = vpop.f32.mrf.mxu0
      %v834 = vpop.f32.mrf.mxu0
      %v835 = vadd.f32 %v615, %v834
      %v836 = vpop.f32.mrf.mxu0
      %837 = vmatprep.mubr.bf16.mxu0 0
      %838 = vmatmul.mubr.bf16.gmra.mxu0 %v705
      %v839 = vpop.f32.mrf.mxu0
      %v840 = vadd.f32 %v620, %v839
      %v841 = vpop.f32.mrf.mxu0
      %v842 = vpop.f32.mrf.mxu0
      %v843 = vadd.f32 %v623, %v842
      %v844 = vpop.f32.mrf.mxu0
      %845 = vmatprep.mubr.bf16.mxu0 0
      %846 = vmatmul.mubr.bf16.gmra.mxu0 %v707
      %v847 = vpop.f32.mrf.mxu0
      %v848 = vadd.f32 %v628, %v847
      %v849 = vpop.f32.mrf.mxu0
      %v850 = vpop.f32.mrf.mxu0
      %v851 = vadd.f32 %v631, %v850
      %v852 = vpop.f32.mrf.mxu0
      %853 = vmatprep.mubr.bf16.mxu0 0
      %854 = vmatmul.mubr.bf16.gmra.mxu0 %v709
      %v855 = vpop.f32.mrf.mxu0
      %v856 = vadd.f32 %v636, %v855
      %v857 = vpop.f32.mrf.mxu0
      %v858 = vpop.f32.mrf.mxu0
      %v859 = vadd.f32 %v639, %v858
      %v860 = vpop.f32.mrf.mxu0
      %861 = vmatprep.mubr.bf16.mxu0 0
      %862 = vmatmul.mubr.bf16.gmra.mxu0 %v711
      %v863 = vpop.f32.mrf.mxu0
      %v864 = vadd.f32 %v644, %v863
      %v865 = vpop.f32.mrf.mxu0
      %v866 = vpop.f32.mrf.mxu0
      %v867 = vadd.f32 %v647, %v866
      %v868 = vpop.f32.mrf.mxu0
      %869 = vmatprep.mubr.bf16.mxu0 0
      %870 = vmatmul.mubr.bf16.gmra.mxu0 %v713
      %v871 = vpop.f32.mrf.mxu0
      %v872 = vadd.f32 %v652, %v871
      %v873 = vpop.f32.mrf.mxu0
      %v874 = vpop.f32.mrf.mxu0
      %v875 = vadd.f32 %v655, %v874
      %v876 = vpop.f32.mrf.mxu0
      %877 = vmatprep.mubr.bf16.mxu0 0
      %878 = vmatmul.mubr.bf16.gmra.mxu0 %v715
      %v879 = vpop.f32.mrf.mxu0
      %v880 = vadd.f32 %v660, %v879
      %v881 = vpop.f32.mrf.mxu0
      %v882 = vpop.f32.mrf.mxu0
      %v883 = vadd.f32 %v663, %v882
      %v884 = vpop.f32.mrf.mxu0
      %885 = vmatprep.mubr.bf16.mxu0 0
      %886 = vmatmul.mubr.bf16.gmra.mxu0 %v717
      %v887 = vpop.f32.mrf.mxu0
      %v888 = vadd.f32 %v668, %v887
      %v889 = vpop.f32.mrf.mxu0
      %v890 = vpop.f32.mrf.mxu0
      %v891 = vadd.f32 %v671, %v890
      %v892 = vpop.f32.mrf.mxu0
      %893 = vmatprep.mubr.bf16.mxu0 0
      %894 = vmatmul.mubr.bf16.gmra.mxu0 %v720
      %v895 = vpop.f32.mrf.mxu0
      %v896 = vadd.f32 %v676, %v895
      %v897 = vpop.f32.mrf.mxu0
      %v898 = vpop.f32.mrf.mxu0
      %v899 = vadd.f32 %v679, %v898
      %v900 = vpop.f32.mrf.mxu0
      %901 = vdwg.mxu0
      %v902 = vld [vmem:[%s165] sm:$0xe]
      %s903 = scalar_lea.vmem %s1, 8
      %v904 = vld [vmem:[%s903] sm:$0xf]
      %v906 = vunpack.c.l.b16 %v902
      %v907 = vpack.c.b16 %v249, %v906
      %vm908 = vcmask 1046528
      %v909 = vrot.slane %v907, 1
      %v910 = vrot.slane %v285, 1
      %v911 = vsel %vm908, %v909, %v910
      %v912 = vrot.slane %v286, 1
      %v913 = vsel %vm908, %v910, %v912
      %v914 = vrot.slane %v287, 1
      %v915 = vsel %vm908, %v912, %v914
      %v916 = vrot.slane %v288, 1
      %v917 = vsel %vm908, %v914, %v916
      %v918 = vrot.slane %v289, 1
      %v919 = vsel %vm908, %v916, %v918
      %v920 = vrot.slane %v290, 1
      %v921 = vsel %vm908, %v918, %v920
      %v922 = vrot.slane %v291, 1
      %v923 = vsel %vm908, %v920, %v922
      %v924 = vrot.slane %v292, 1
      %v925 = vsel %vm908, %v922, %v924
      %v926 = vrot.slane %v293, 1
      %v927 = vsel %vm908, %v924, %v926
      %v928 = vrot.slane %v294, 1
      %v929 = vsel %vm908, %v926, %v928
      %v930 = vrot.slane %v295, 1
      %v931 = vsel %vm908, %v928, %v930
      %v932 = vrot.slane %v296, 1
      %v933 = vsel %vm908, %v930, %v932
      %v934 = vrot.slane %v297, 1
      %v935 = vsel %vm908, %v932, %v934
      %v936 = vrot.slane %v298, 1
      %v937 = vsel %vm908, %v934, %v936
      %v938 = vrot.slane %v299, 1
      %v939 = vsel %vm908, %v936, %v938
      %v940 = vrot.slane %v300, 1
      %v941 = vsel %vm908, %v938, %v940
      %v942 = vrot.slane %v301, 1
      %v943 = vsel %vm908, %v940, %v942
      %v945 = vsel %vm446, %v911, 0
      %v948 = vsel %vm446, %v913, 0
      %v951 = vsel %vm446, %v915, 0
      %v954 = vsel %vm446, %v917, 0
      %v957 = vsel %vm446, %v919, 0
      %v960 = vsel %vm446, %v921, 0
      %v963 = vsel %vm446, %v923, 0
      %v966 = vsel %vm446, %v925, 0
      %v969 = vsel %vm446, %v927, 0
      %v972 = vsel %vm446, %v929, 0
      %v975 = vsel %vm446, %v931, 0
      %v978 = vsel %vm446, %v933, 0
      %v981 = vsel %vm446, %v935, 0
      %v984 = vsel %vm446, %v937, 0
      %v987 = vsel %vm446, %v939, 0
      %v990 = vsel %vm446, %v941, 0
      %v993 = vsel %vm446, %v943, 0
      %v996 = vsel %vm446, %v942, 0
      %v999 = vsel %vm501, %v904, 0
      %1001 = vmatprep.subr.bf16.mxu0 0
      %1002 = vmatpush1.bf16.msra.mxu0 0
      %1003 = vmatprep.subr.bf16.mxu0 0
      %1004 = vmatpush1.bf16.msra.mxu0 0
      %1005 = vmatprep.subr.bf16.mxu0 0
      %1006 = vmatpush1.bf16.msra.mxu0 0
      %1007 = vmatprep.subr.bf16.mxu0 0
      %1008 = vmatpush1.bf16.msra.mxu0 0
      %1009 = vmatprep.subr.bf16.mxu0 0
      %1010 = vmatpush1.bf16.msra.mxu0 0
      %1011 = vmatprep.subr.bf16.mxu0 0
      %1012 = vmatpush1.bf16.msra.mxu0 0
      %1013 = vmatprep.subr.bf16.mxu0 0
      %1014 = vmatpush1.bf16.msra.mxu0 0
      %1015 = vmatprep.subr.bf16.mxu0 0
      %1016 = vmatpush1.bf16.msra.mxu0 %v999
      %1017 = vmatprep.subr.bf16.mxu0 0
      %1018 = vmatpush2.bf16.msra.mxu0 0
      %1019 = vmatprep.subr.bf16.mxu0 0
      %1020 = vmatpush2.bf16.msra.mxu0 0
      %1021 = vmatprep.subr.bf16.mxu0 0
      %1022 = vmatpush2.bf16.msra.mxu0 0
      %1023 = vmatprep.subr.bf16.mxu0 0
      %1024 = vmatpush2.bf16.msra.mxu0 0
      %1025 = vmatprep.subr.bf16.mxu0 0
      %1026 = vmatpush2.bf16.msra.mxu0 0
      %1027 = vmatprep.subr.bf16.mxu0 0
      %1028 = vmatpush2.bf16.msra.mxu0 0
      %1029 = vmatprep.subr.bf16.mxu0 0
      %1030 = vmatpush2.bf16.msra.mxu0 0
      %1031 = vmatprep.subr.bf16.mxu0 0
      %1032 = vmatpush2.bf16.msra.mxu0 0
      %1033 = vmatprep.mubr.bf16.mxu0 0
      %1034 = vmatmul.mubr.bf16.gmra.mxu0 %v945
      %v1035 = vpop.f32.mrf.mxu0
      %v1036 = vadd.f32 0.0, %v1035
      %v1037 = vpop.f32.mrf.mxu0
      %v1038 = vpop.f32.mrf.mxu0
      %v1039 = vadd.f32 0.0, %v1038
      %v1040 = vpop.f32.mrf.mxu0
      %1041 = vmatprep.mubr.bf16.mxu0 0
      %1042 = vmatmul.mubr.bf16.gmra.mxu0 %v948
      %v1043 = vpop.f32.mrf.mxu0
      %v1044 = vadd.f32 0.0, %v1043
      %v1045 = vpop.f32.mrf.mxu0
      %v1046 = vpop.f32.mrf.mxu0
      %v1047 = vadd.f32 0.0, %v1046
      %v1048 = vpop.f32.mrf.mxu0
      %1049 = vmatprep.mubr.bf16.mxu0 0
      %1050 = vmatmul.mubr.bf16.gmra.mxu0 %v951
      %v1051 = vpop.f32.mrf.mxu0
      %v1052 = vadd.f32 0.0, %v1051
      %v1053 = vpop.f32.mrf.mxu0
      %v1054 = vpop.f32.mrf.mxu0
      %v1055 = vadd.f32 0.0, %v1054
      %v1056 = vpop.f32.mrf.mxu0
      %1057 = vmatprep.mubr.bf16.mxu0 0
      %1058 = vmatmul.mubr.bf16.gmra.mxu0 %v954
      %v1059 = vpop.f32.mrf.mxu0
      %v1060 = vadd.f32 0.0, %v1059
      %v1061 = vpop.f32.mrf.mxu0
      %v1062 = vpop.f32.mrf.mxu0
      %v1063 = vadd.f32 0.0, %v1062
      %v1064 = vpop.f32.mrf.mxu0
      %1065 = vmatprep.mubr.bf16.mxu0 0
      %1066 = vmatmul.mubr.bf16.gmra.mxu0 %v957
      %v1067 = vpop.f32.mrf.mxu0
      %v1068 = vadd.f32 0.0, %v1067
      %v1069 = vpop.f32.mrf.mxu0
      %v1070 = vpop.f32.mrf.mxu0
      %v1071 = vadd.f32 0.0, %v1070
      %v1072 = vpop.f32.mrf.mxu0
      %1073 = vmatprep.mubr.bf16.mxu0 0
      %1074 = vmatmul.mubr.bf16.gmra.mxu0 %v960
      %v1075 = vpop.f32.mrf.mxu0
      %v1076 = vadd.f32 0.0, %v1075
      %v1077 = vpop.f32.mrf.mxu0
      %v1078 = vpop.f32.mrf.mxu0
      %v1079 = vadd.f32 0.0, %v1078
      %v1080 = vpop.f32.mrf.mxu0
      %1081 = vmatprep.mubr.bf16.mxu0 0
      %1082 = vmatmul.mubr.bf16.gmra.mxu0 %v963
      %v1083 = vpop.f32.mrf.mxu0
      %v1084 = vadd.f32 0.0, %v1083
      %v1085 = vpop.f32.mrf.mxu0
      %v1086 = vpop.f32.mrf.mxu0
      %v1087 = vadd.f32 0.0, %v1086
      %v1088 = vpop.f32.mrf.mxu0
      %1089 = vmatprep.mubr.bf16.mxu0 0
      %1090 = vmatmul.mubr.bf16.gmra.mxu0 %v966
      %v1091 = vpop.f32.mrf.mxu0
      %v1092 = vadd.f32 0.0, %v1091
      %v1093 = vpop.f32.mrf.mxu0
      %v1094 = vpop.f32.mrf.mxu0
      %v1095 = vadd.f32 0.0, %v1094
      %v1096 = vpop.f32.mrf.mxu0
      %1097 = vmatprep.mubr.bf16.mxu0 0
      %1098 = vmatmul.mubr.bf16.gmra.mxu0 %v969
      %v1099 = vpop.f32.mrf.mxu0
      %v1100 = vadd.f32 0.0, %v1099
      %v1101 = vpop.f32.mrf.mxu0
      %v1102 = vpop.f32.mrf.mxu0
      %v1103 = vadd.f32 0.0, %v1102
      %v1104 = vpop.f32.mrf.mxu0
      %1105 = vmatprep.mubr.bf16.mxu0 0
      %1106 = vmatmul.mubr.bf16.gmra.mxu0 %v972
      %v1107 = vpop.f32.mrf.mxu0
      %v1108 = vadd.f32 0.0, %v1107
      %v1109 = vpop.f32.mrf.mxu0
      %v1110 = vpop.f32.mrf.mxu0
      %v1111 = vadd.f32 0.0, %v1110
      %v1112 = vpop.f32.mrf.mxu0
      %1113 = vmatprep.mubr.bf16.mxu0 0
      %1114 = vmatmul.mubr.bf16.gmra.mxu0 %v975
      %v1115 = vpop.f32.mrf.mxu0
      %v1116 = vadd.f32 0.0, %v1115
      %v1117 = vpop.f32.mrf.mxu0
      %v1118 = vpop.f32.mrf.mxu0
      %v1119 = vadd.f32 0.0, %v1118
      %v1120 = vpop.f32.mrf.mxu0
      %1121 = vmatprep.mubr.bf16.mxu0 0
      %1122 = vmatmul.mubr.bf16.gmra.mxu0 %v978
      %v1123 = vpop.f32.mrf.mxu0
      %v1124 = vadd.f32 0.0, %v1123
      %v1125 = vpop.f32.mrf.mxu0
      %v1126 = vpop.f32.mrf.mxu0
      %v1127 = vadd.f32 0.0, %v1126
      %v1128 = vpop.f32.mrf.mxu0
      %1129 = vmatprep.mubr.bf16.mxu0 0
      %1130 = vmatmul.mubr.bf16.gmra.mxu0 %v981
      %v1131 = vpop.f32.mrf.mxu0
      %v1132 = vadd.f32 0.0, %v1131
      %v1133 = vpop.f32.mrf.mxu0
      %v1134 = vpop.f32.mrf.mxu0
      %v1135 = vadd.f32 0.0, %v1134
      %v1136 = vpop.f32.mrf.mxu0
      %1137 = vmatprep.mubr.bf16.mxu0 0
      %1138 = vmatmul.mubr.bf16.gmra.mxu0 %v984
      %v1139 = vpop.f32.mrf.mxu0
      %v1140 = vadd.f32 0.0, %v1139
      %v1141 = vpop.f32.mrf.mxu0
      %v1142 = vpop.f32.mrf.mxu0
      %v1143 = vadd.f32 0.0, %v1142
      %v1144 = vpop.f32.mrf.mxu0
      %1145 = vmatprep.mubr.bf16.mxu0 0
      %1146 = vmatmul.mubr.bf16.gmra.mxu0 %v987
      %v1147 = vpop.f32.mrf.mxu0
      %v1148 = vadd.f32 0.0, %v1147
      %v1149 = vpop.f32.mrf.mxu0
      %v1150 = vpop.f32.mrf.mxu0
      %v1151 = vadd.f32 0.0, %v1150
      %v1152 = vpop.f32.mrf.mxu0
      %1153 = vmatprep.mubr.bf16.mxu0 0
      %1154 = vmatmul.mubr.bf16.gmra.mxu0 %v990
      %v1155 = vpop.f32.mrf.mxu0
      %v1156 = vadd.f32 0.0, %v1155
      %v1157 = vpop.f32.mrf.mxu0
      %v1158 = vpop.f32.mrf.mxu0
      %v1159 = vadd.f32 0.0, %v1158
      %v1160 = vpop.f32.mrf.mxu0
      %1161 = vmatprep.mubr.bf16.mxu0 0
      %1162 = vmatmul.mubr.bf16.gmra.mxu0 %v993
      %v1163 = vpop.f32.mrf.mxu0
      %v1164 = vadd.f32 0.0, %v1163
      %v1165 = vpop.f32.mrf.mxu0
      %v1166 = vpop.f32.mrf.mxu0
      %v1167 = vadd.f32 0.0, %v1166
      %v1168 = vpop.f32.mrf.mxu0
      %1169 = vmatprep.mubr.bf16.mxu0 0
      %1170 = vmatmul.mubr.bf16.gmra.mxu0 %v996
      %v1171 = vpop.f32.mrf.mxu0
      %v1172 = vadd.f32 0.0, %v1171
      %v1173 = vpop.f32.mrf.mxu0
      %v1174 = vpop.f32.mrf.mxu0
      %v1175 = vadd.f32 0.0, %v1174
      %v1176 = vpop.f32.mrf.mxu0
      %1177 = vdwg.mxu0
      %v1178 = vadd.f32 %v760, %v1036
      %v1179 = vadd.f32 %v763, %v1039
      %v1180 = vadd.f32 %v768, %v1044
      %v1181 = vadd.f32 %v771, %v1047
      %v1182 = vadd.f32 %v776, %v1052
      %v1183 = vadd.f32 %v779, %v1055
      %v1184 = vadd.f32 %v784, %v1060
      %v1185 = vadd.f32 %v787, %v1063
      %v1186 = vadd.f32 %v792, %v1068
      %v1187 = vadd.f32 %v795, %v1071
      %v1188 = vadd.f32 %v800, %v1076
      %v1189 = vadd.f32 %v803, %v1079
      %v1190 = vadd.f32 %v808, %v1084
      %v1191 = vadd.f32 %v811, %v1087
      %v1192 = vadd.f32 %v816, %v1092
      %v1193 = vadd.f32 %v819, %v1095
      %v1194 = vadd.f32 %v824, %v1100
      %v1195 = vadd.f32 %v827, %v1103
      %v1196 = vadd.f32 %v832, %v1108
      %v1197 = vadd.f32 %v835, %v1111
      %v1198 = vadd.f32 %v840, %v1116
      %v1199 = vadd.f32 %v843, %v1119
      %v1200 = vadd.f32 %v848, %v1124
      %v1201 = vadd.f32 %v851, %v1127
      %v1202 = vadd.f32 %v856, %v1132
      %v1203 = vadd.f32 %v859, %v1135
      %v1204 = vadd.f32 %v864, %v1140
      %v1205 = vadd.f32 %v867, %v1143
      %v1206 = vadd.f32 %v872, %v1148
      %v1207 = vadd.f32 %v875, %v1151
      %v1208 = vadd.f32 %v880, %v1156
      %v1209 = vadd.f32 %v883, %v1159
      %v1210 = vadd.f32 %v888, %v1164
      %v1211 = vadd.f32 %v891, %v1167
      %v1212 = vadd.f32 %v896, %v1172
      %v1213 = vadd.f32 %v899, %v1175
      %v1214 = vld [vmem:[%s165 + $0x8] sm:$0xe]
      %v1215 = vld [vmem:[%s165 + $0xc] sm:$0xf]
      %v1216 = vld [vmem:[%s165 + $0x10] sm:$0xf]
      %v1217 = vld [vmem:[%s165 + $0x14] sm:$0xf]
      %v1218 = vld [vmem:[%s165 + $0x18] sm:$0xf]
      %v1219 = vld [vmem:[%s165 + $0x1c] sm:$0xf]
      %v1220 = vld [vmem:[%s165 + $0x20] sm:$0xf]
      %v1221 = vld [vmem:[%s165 + $0x24] sm:$0xf]
      %v1222 = vld [vmem:[%s165 + $0x28] sm:$0xf]
      %v1223 = vld [vmem:[%s165 + $0x2c] sm:$0xf]
      %v1224 = vld [vmem:[%s165 + $0x30] sm:$0xf]
      %v1225 = vld [vmem:[%s165 + $0x34] sm:$0xf]
      %v1226 = vld [vmem:[%s165 + $0x38] sm:$0xf]
      %v1227 = vld [vmem:[%s165 + $0x3c] sm:$0xf]
      %v1228 = vld [vmem:[%s165 + $0x40] sm:$0xf]
      %v1229 = vld [vmem:[%s165 + $0x44] sm:$0xf]
      %v1230 = vld [vmem:[%s165 + $0x48] sm:$0xf]
      %v1231 = vld [vmem:[%s165 + $0x4c] sm:$0xf]
      %v1232 = vld [vmem:[%s165 + $0x50] sm:$0xf]
      %v1233 = vld [vmem:[%s165 + $0x54] sm:$0xf]
      %v1234 = vld [vmem:[%s165 + $0x58] sm:$0xf]
      %v1235 = vld [vmem:[%s165 + $0x5c] sm:$0xf]
      %v1236 = vld [vmem:[%s165 + $0x60] sm:$0xf]
      %v1237 = vld [vmem:[%s165 + $0x64] sm:$0xf]
      %v1238 = vld [vmem:[%s165 + $0x68] sm:$0xf]
      %v1239 = vld [vmem:[%s165 + $0x6c] sm:$0xf]
      %v1240 = vld [vmem:[%s165 + $0x70] sm:$0xf]
      %v1241 = vld [vmem:[%s165 + $0x74] sm:$0xf]
      %v1242 = vld [vmem:[%s165 + $0x78] sm:$0xf]
      %v1243 = vld [vmem:[%s165 + $0x7c] sm:$0xf]
      %v1244 = vld [vmem:[%s165 + $0x80] sm:$0xf]
      %v1245 = vld [vmem:[%s165 + $0x84] sm:$0xf]
      %v1246 = vld [vmem:[%s165 + $0x88] sm:$0xf]
      %v1247 = vld [vmem:[%s165 + $0x8c] sm:$0xf]
      %v1248 = vld [vmem:[%s165 + $0x90] sm:$0xf]
      %v1249 = vld [vmem:[%s165 + $0x94] sm:$0xf]
      %s1250 = scalar_lea.vmem %s1, 12
      %v1251 = vld [vmem:[%s1250] sm:$0xf]
      %v1288 = vunpack.c.l.b16 %v1214
      %v1289 = vunpack.c.l.b16 %v1215
      %v1290 = vunpack.c.l.b16 %v1216
      %v1291 = vunpack.c.l.b16 %v1217
      %v1292 = vunpack.c.l.b16 %v1218
      %v1293 = vunpack.c.l.b16 %v1219
      %v1294 = vunpack.c.l.b16 %v1220
      %v1295 = vunpack.c.l.b16 %v1221
      %v1296 = vunpack.c.l.b16 %v1222
      %v1297 = vunpack.c.l.b16 %v1223
      %v1298 = vunpack.c.l.b16 %v1224
      %v1299 = vunpack.c.l.b16 %v1225
      %v1300 = vunpack.c.l.b16 %v1226
      %v1301 = vunpack.c.l.b16 %v1227
      %v1302 = vunpack.c.l.b16 %v1228
      %v1303 = vunpack.c.l.b16 %v1229
      %v1304 = vunpack.c.l.b16 %v1230
      %v1305 = vunpack.c.l.b16 %v1231
      %v1306 = vunpack.c.l.b16 %v1232
      %v1307 = vunpack.c.l.b16 %v1233
      %v1308 = vunpack.c.l.b16 %v1234
      %v1309 = vunpack.c.l.b16 %v1235
      %v1310 = vunpack.c.l.b16 %v1236
      %v1311 = vunpack.c.l.b16 %v1237
      %v1312 = vunpack.c.l.b16 %v1238
      %v1313 = vunpack.c.l.b16 %v1239
      %v1314 = vunpack.c.l.b16 %v1240
      %v1315 = vunpack.c.l.b16 %v1241
      %v1316 = vunpack.c.l.b16 %v1242
      %v1317 = vunpack.c.l.b16 %v1243
      %v1318 = vunpack.c.l.b16 %v1244
      %v1319 = vunpack.c.l.b16 %v1245
      %v1320 = vunpack.c.l.b16 %v1246
      %v1321 = vunpack.c.l.b16 %v1247
      %v1322 = vunpack.c.l.b16 %v1248
      %v1323 = vunpack.c.l.b16 %v1249
      %v1324 = vpack.c.b16 %v1289, %v1288
      %v1325 = vpack.c.b16 %v1291, %v1290
      %v1326 = vpack.c.b16 %v1293, %v1292
      %v1327 = vpack.c.b16 %v1295, %v1294
      %v1328 = vpack.c.b16 %v1297, %v1296
      %v1329 = vpack.c.b16 %v1299, %v1298
      %v1330 = vpack.c.b16 %v1301, %v1300
      %v1331 = vpack.c.b16 %v1303, %v1302
      %v1332 = vpack.c.b16 %v1305, %v1304
      %v1333 = vpack.c.b16 %v1307, %v1306
      %v1334 = vpack.c.b16 %v1309, %v1308
      %v1335 = vpack.c.b16 %v1311, %v1310
      %v1336 = vpack.c.b16 %v1313, %v1312
      %v1337 = vpack.c.b16 %v1315, %v1314
      %v1338 = vpack.c.b16 %v1317, %v1316
      %v1339 = vpack.c.b16 %v1319, %v1318
      %v1340 = vpack.c.b16 %v1321, %v1320
      %v1341 = vpack.c.b16 %v1323, %v1322
      %v1342 = vrot.slane %v1324, 1
      %v1343 = vrot.slane %v1325, 1
      %v1344 = vsel %vm908, %v1342, %v1343
      %v1345 = vrot.slane %v1326, 1
      %v1346 = vsel %vm908, %v1343, %v1345
      %v1347 = vrot.slane %v1327, 1
      %v1348 = vsel %vm908, %v1345, %v1347
      %v1349 = vrot.slane %v1328, 1
      %v1350 = vsel %vm908, %v1347, %v1349
      %v1351 = vrot.slane %v1329, 1
      %v1352 = vsel %vm908, %v1349, %v1351
      %v1353 = vrot.slane %v1330, 1
      %v1354 = vsel %vm908, %v1351, %v1353
      %v1355 = vrot.slane %v1331, 1
      %v1356 = vsel %vm908, %v1353, %v1355
      %v1357 = vrot.slane %v1332, 1
      %v1358 = vsel %vm908, %v1355, %v1357
      %v1359 = vrot.slane %v1333, 1
      %v1360 = vsel %vm908, %v1357, %v1359
      %v1361 = vrot.slane %v1334, 1
      %v1362 = vsel %vm908, %v1359, %v1361
      %v1363 = vrot.slane %v1335, 1
      %v1364 = vsel %vm908, %v1361, %v1363
      %v1365 = vrot.slane %v1336, 1
      %v1366 = vsel %vm908, %v1363, %v1365
      %v1367 = vrot.slane %v1337, 1
      %v1368 = vsel %vm908, %v1365, %v1367
      %v1369 = vrot.slane %v1338, 1
      %v1370 = vsel %vm908, %v1367, %v1369
      %v1371 = vrot.slane %v1339, 1
      %v1372 = vsel %vm908, %v1369, %v1371
      %v1373 = vrot.slane %v1340, 1
      %v1374 = vsel %vm908, %v1371, %v1373
      %v1375 = vrot.slane %v1341, 1
      %v1376 = vsel %vm908, %v1373, %v1375
      %v1378 = vsel %vm446, %v1344, 0
      %v1381 = vsel %vm446, %v1346, 0
      %v1384 = vsel %vm446, %v1348, 0
      %v1387 = vsel %vm446, %v1350, 0
      %v1390 = vsel %vm446, %v1352, 0
      %v1393 = vsel %vm446, %v1354, 0
      %v1396 = vsel %vm446, %v1356, 0
      %v1399 = vsel %vm446, %v1358, 0
      %v1402 = vsel %vm446, %v1360, 0
      %v1405 = vsel %vm446, %v1362, 0
      %v1408 = vsel %vm446, %v1364, 0
      %v1411 = vsel %vm446, %v1366, 0
      %v1414 = vsel %vm446, %v1368, 0
      %v1417 = vsel %vm446, %v1370, 0
      %v1420 = vsel %vm446, %v1372, 0
      %v1423 = vsel %vm446, %v1374, 0
      %v1426 = vsel %vm446, %v1376, 0
      %v1429 = vsel %vm446, %v1375, 0
      %v1432 = vsel %vm501, %v1251, 0
      %1434 = vmatprep.subr.bf16.mxu0 0
      %1435 = vmatpush1.bf16.msra.mxu0 0
      %1436 = vmatprep.subr.bf16.mxu0 0
      %1437 = vmatpush1.bf16.msra.mxu0 0
      %1438 = vmatprep.subr.bf16.mxu0 0
      %1439 = vmatpush1.bf16.msra.mxu0 0
      %1440 = vmatprep.subr.bf16.mxu0 0
      %1441 = vmatpush1.bf16.msra.mxu0 0
      %1442 = vmatprep.subr.bf16.mxu0 0
      %1443 = vmatpush1.bf16.msra.mxu0 0
      %1444 = vmatprep.subr.bf16.mxu0 0
      %1445 = vmatpush1.bf16.msra.mxu0 0
      %1446 = vmatprep.subr.bf16.mxu0 0
      %1447 = vmatpush1.bf16.msra.mxu0 0
      %1448 = vmatprep.subr.bf16.mxu0 0
      %1449 = vmatpush1.bf16.msra.mxu0 %v1432
      %1450 = vmatprep.subr.bf16.mxu0 0
      %1451 = vmatpush2.bf16.msra.mxu0 0
      %1452 = vmatprep.subr.bf16.mxu0 0
      %1453 = vmatpush2.bf16.msra.mxu0 0
      %1454 = vmatprep.subr.bf16.mxu0 0
      %1455 = vmatpush2.bf16.msra.mxu0 0
      %1456 = vmatprep.subr.bf16.mxu0 0
      %1457 = vmatpush2.bf16.msra.mxu0 0
      %1458 = vmatprep.subr.bf16.mxu0 0
      %1459 = vmatpush2.bf16.msra.mxu0 0
      %1460 = vmatprep.subr.bf16.mxu0 0
      %1461 = vmatpush2.bf16.msra.mxu0 0
      %1462 = vmatprep.subr.bf16.mxu0 0
      %1463 = vmatpush2.bf16.msra.mxu0 0
      %1464 = vmatprep.subr.bf16.mxu0 0
      %1465 = vmatpush2.bf16.msra.mxu0 0
      %1466 = vmatprep.mubr.bf16.mxu0 0
      %1467 = vmatmul.mubr.bf16.gmra.mxu0 %v1378
      %v1468 = vpop.f32.mrf.mxu0
      %v1469 = vadd.f32 0.0, %v1468
      %v1470 = vpop.f32.mrf.mxu0
      %v1471 = vpop.f32.mrf.mxu0
      %v1472 = vadd.f32 0.0, %v1471
      %v1473 = vpop.f32.mrf.mxu0
      %1474 = vmatprep.mubr.bf16.mxu0 0
      %1475 = vmatmul.mubr.bf16.gmra.mxu0 %v1381
      %v1476 = vpop.f32.mrf.mxu0
      %v1477 = vadd.f32 0.0, %v1476
      %v1478 = vpop.f32.mrf.mxu0
      %v1479 = vpop.f32.mrf.mxu0
      %v1480 = vadd.f32 0.0, %v1479
      %v1481 = vpop.f32.mrf.mxu0
      %1482 = vmatprep.mubr.bf16.mxu0 0
      %1483 = vmatmul.mubr.bf16.gmra.mxu0 %v1384
      %v1484 = vpop.f32.mrf.mxu0
      %v1485 = vadd.f32 0.0, %v1484
      %v1486 = vpop.f32.mrf.mxu0
      %v1487 = vpop.f32.mrf.mxu0
      %v1488 = vadd.f32 0.0, %v1487
      %v1489 = vpop.f32.mrf.mxu0
      %1490 = vmatprep.mubr.bf16.mxu0 0
      %1491 = vmatmul.mubr.bf16.gmra.mxu0 %v1387
      %v1492 = vpop.f32.mrf.mxu0
      %v1493 = vadd.f32 0.0, %v1492
      %v1494 = vpop.f32.mrf.mxu0
      %v1495 = vpop.f32.mrf.mxu0
      %v1496 = vadd.f32 0.0, %v1495
      %v1497 = vpop.f32.mrf.mxu0
      %1498 = vmatprep.mubr.bf16.mxu0 0
      %1499 = vmatmul.mubr.bf16.gmra.mxu0 %v1390
      %v1500 = vpop.f32.mrf.mxu0
      %v1501 = vadd.f32 0.0, %v1500
      %v1502 = vpop.f32.mrf.mxu0
      %v1503 = vpop.f32.mrf.mxu0
      %v1504 = vadd.f32 0.0, %v1503
      %v1505 = vpop.f32.mrf.mxu0
      %1506 = vmatprep.mubr.bf16.mxu0 0
      %1507 = vmatmul.mubr.bf16.gmra.mxu0 %v1393
      %v1508 = vpop.f32.mrf.mxu0
      %v1509 = vadd.f32 0.0, %v1508
      %v1510 = vpop.f32.mrf.mxu0
      %v1511 = vpop.f32.mrf.mxu0
      %v1512 = vadd.f32 0.0, %v1511
      %v1513 = vpop.f32.mrf.mxu0
      %1514 = vmatprep.mubr.bf16.mxu0 0
      %1515 = vmatmul.mubr.bf16.gmra.mxu0 %v1396
      %v1516 = vpop.f32.mrf.mxu0
      %v1517 = vadd.f32 0.0, %v1516
      %v1518 = vpop.f32.mrf.mxu0
      %v1519 = vpop.f32.mrf.mxu0
      %v1520 = vadd.f32 0.0, %v1519
      %v1521 = vpop.f32.mrf.mxu0
      %1522 = vmatprep.mubr.bf16.mxu0 0
      %1523 = vmatmul.mubr.bf16.gmra.mxu0 %v1399
      %v1524 = vpop.f32.mrf.mxu0
      %v1525 = vadd.f32 0.0, %v1524
      %v1526 = vpop.f32.mrf.mxu0
      %v1527 = vpop.f32.mrf.mxu0
      %v1528 = vadd.f32 0.0, %v1527
      %v1529 = vpop.f32.mrf.mxu0
      %1530 = vmatprep.mubr.bf16.mxu0 0
      %1531 = vmatmul.mubr.bf16.gmra.mxu0 %v1402
      %v1532 = vpop.f32.mrf.mxu0
      %v1533 = vadd.f32 0.0, %v1532
      %v1534 = vpop.f32.mrf.mxu0
      %v1535 = vpop.f32.mrf.mxu0
      %v1536 = vadd.f32 0.0, %v1535
      %v1537 = vpop.f32.mrf.mxu0
      %1538 = vmatprep.mubr.bf16.mxu0 0
      %1539 = vmatmul.mubr.bf16.gmra.mxu0 %v1405
      %v1540 = vpop.f32.mrf.mxu0
      %v1541 = vadd.f32 0.0, %v1540
      %v1542 = vpop.f32.mrf.mxu0
      %v1543 = vpop.f32.mrf.mxu0
      %v1544 = vadd.f32 0.0, %v1543
      %v1545 = vpop.f32.mrf.mxu0
      %1546 = vmatprep.mubr.bf16.mxu0 0
      %1547 = vmatmul.mubr.bf16.gmra.mxu0 %v1408
      %v1548 = vpop.f32.mrf.mxu0
      %v1549 = vadd.f32 0.0, %v1548
      %v1550 = vpop.f32.mrf.mxu0
      %v1551 = vpop.f32.mrf.mxu0
      %v1552 = vadd.f32 0.0, %v1551
      %v1553 = vpop.f32.mrf.mxu0
      %1554 = vmatprep.mubr.bf16.mxu0 0
      %1555 = vmatmul.mubr.bf16.gmra.mxu0 %v1411
      %v1556 = vpop.f32.mrf.mxu0
      %v1557 = vadd.f32 0.0, %v1556
      %v1558 = vpop.f32.mrf.mxu0
      %v1559 = vpop.f32.mrf.mxu0
      %v1560 = vadd.f32 0.0, %v1559
      %v1561 = vpop.f32.mrf.mxu0
      %1562 = vmatprep.mubr.bf16.mxu0 0
      %1563 = vmatmul.mubr.bf16.gmra.mxu0 %v1414
      %v1564 = vpop.f32.mrf.mxu0
      %v1565 = vadd.f32 0.0, %v1564
      %v1566 = vpop.f32.mrf.mxu0
      %v1567 = vpop.f32.mrf.mxu0
      %v1568 = vadd.f32 0.0, %v1567
      %v1569 = vpop.f32.mrf.mxu0
      %1570 = vmatprep.mubr.bf16.mxu0 0
      %1571 = vmatmul.mubr.bf16.gmra.mxu0 %v1417
      %v1572 = vpop.f32.mrf.mxu0
      %v1573 = vadd.f32 0.0, %v1572
      %v1574 = vpop.f32.mrf.mxu0
      %v1575 = vpop.f32.mrf.mxu0
      %v1576 = vadd.f32 0.0, %v1575
      %v1577 = vpop.f32.mrf.mxu0
      %1578 = vmatprep.mubr.bf16.mxu0 0
      %1579 = vmatmul.mubr.bf16.gmra.mxu0 %v1420
      %v1580 = vpop.f32.mrf.mxu0
      %v1581 = vadd.f32 0.0, %v1580
      %v1582 = vpop.f32.mrf.mxu0
      %v1583 = vpop.f32.mrf.mxu0
      %v1584 = vadd.f32 0.0, %v1583
      %v1585 = vpop.f32.mrf.mxu0
      %1586 = vmatprep.mubr.bf16.mxu0 0
      %1587 = vmatmul.mubr.bf16.gmra.mxu0 %v1423
      %v1588 = vpop.f32.mrf.mxu0
      %v1589 = vadd.f32 0.0, %v1588
      %v1590 = vpop.f32.mrf.mxu0
      %v1591 = vpop.f32.mrf.mxu0
      %v1592 = vadd.f32 0.0, %v1591
      %v1593 = vpop.f32.mrf.mxu0
      %1594 = vmatprep.mubr.bf16.mxu0 0
      %1595 = vmatmul.mubr.bf16.gmra.mxu0 %v1426
      %v1596 = vpop.f32.mrf.mxu0
      %v1597 = vadd.f32 0.0, %v1596
      %v1598 = vpop.f32.mrf.mxu0
      %v1599 = vpop.f32.mrf.mxu0
      %v1600 = vadd.f32 0.0, %v1599
      %v1601 = vpop.f32.mrf.mxu0
      %1602 = vmatprep.mubr.bf16.mxu0 0
      %1603 = vmatmul.mubr.bf16.gmra.mxu0 %v1429
      %v1604 = vpop.f32.mrf.mxu0
      %v1605 = vadd.f32 0.0, %v1604
      %v1606 = vpop.f32.mrf.mxu0
      %v1607 = vpop.f32.mrf.mxu0
      %v1608 = vadd.f32 0.0, %v1607
      %v1609 = vpop.f32.mrf.mxu0
      %1610 = vdwg.mxu0
      %v1611 = vadd.f32 %v1178, %v1469
      %v1612 = vadd.f32 %v1179, %v1472
      %v1613 = vadd.f32 %v1180, %v1477
      %v1614 = vadd.f32 %v1181, %v1480
      %v1615 = vadd.f32 %v1182, %v1485
      %v1616 = vadd.f32 %v1183, %v1488
      %v1617 = vadd.f32 %v1184, %v1493
      %v1618 = vadd.f32 %v1185, %v1496
      %v1619 = vadd.f32 %v1186, %v1501
      %v1620 = vadd.f32 %v1187, %v1504
      %v1621 = vadd.f32 %v1188, %v1509
      %v1622 = vadd.f32 %v1189, %v1512
      %v1623 = vadd.f32 %v1190, %v1517
      %v1624 = vadd.f32 %v1191, %v1520
      %v1625 = vadd.f32 %v1192, %v1525
      %v1626 = vadd.f32 %v1193, %v1528
      %v1627 = vadd.f32 %v1194, %v1533
      %v1628 = vadd.f32 %v1195, %v1536
      %v1629 = vadd.f32 %v1196, %v1541
      %v1630 = vadd.f32 %v1197, %v1544
      %v1631 = vadd.f32 %v1198, %v1549
      %v1632 = vadd.f32 %v1199, %v1552
      %v1633 = vadd.f32 %v1200, %v1557
      %v1634 = vadd.f32 %v1201, %v1560
      %v1635 = vadd.f32 %v1202, %v1565
      %v1636 = vadd.f32 %v1203, %v1568
      %v1637 = vadd.f32 %v1204, %v1573
      %v1638 = vadd.f32 %v1205, %v1576
      %v1639 = vadd.f32 %v1206, %v1581
      %v1640 = vadd.f32 %v1207, %v1584
      %v1641 = vadd.f32 %v1208, %v1589
      %v1642 = vadd.f32 %v1209, %v1592
      %v1643 = vadd.f32 %v1210, %v1597
      %v1644 = vadd.f32 %v1211, %v1600
      %v1645 = vadd.f32 %v1212, %v1605
      %v1646 = vadd.f32 %v1213, %v1608
      %v1647 = vld [vmem:[%s165 + $0x8] sm:$0xe]
      %v1648 = vld [vmem:[%s165 + $0xc] sm:$0xf]
      %v1649 = vld [vmem:[%s165 + $0x10] sm:$0xf]
      %v1650 = vld [vmem:[%s165 + $0x14] sm:$0xf]
      %v1651 = vld [vmem:[%s165 + $0x18] sm:$0xf]
      %v1652 = vld [vmem:[%s165 + $0x1c] sm:$0xf]
      %v1653 = vld [vmem:[%s165 + $0x20] sm:$0xf]
      %v1654 = vld [vmem:[%s165 + $0x24] sm:$0xf]
      %v1655 = vld [vmem:[%s165 + $0x28] sm:$0xf]
      %v1656 = vld [vmem:[%s165 + $0x2c] sm:$0xf]
      %v1657 = vld [vmem:[%s165 + $0x30] sm:$0xf]
      %v1658 = vld [vmem:[%s165 + $0x34] sm:$0xf]
      %v1659 = vld [vmem:[%s165 + $0x38] sm:$0xf]
      %v1660 = vld [vmem:[%s165 + $0x3c] sm:$0xf]
      %v1661 = vld [vmem:[%s165 + $0x40] sm:$0xf]
      %v1662 = vld [vmem:[%s165 + $0x44] sm:$0xf]
      %v1663 = vld [vmem:[%s165 + $0x48] sm:$0xf]
      %v1664 = vld [vmem:[%s165 + $0x4c] sm:$0xf]
      %v1665 = vld [vmem:[%s165 + $0x50] sm:$0xf]
      %v1666 = vld [vmem:[%s165 + $0x54] sm:$0xf]
      %v1667 = vld [vmem:[%s165 + $0x58] sm:$0xf]
      %v1668 = vld [vmem:[%s165 + $0x5c] sm:$0xf]
      %v1669 = vld [vmem:[%s165 + $0x60] sm:$0xf]
      %v1670 = vld [vmem:[%s165 + $0x64] sm:$0xf]
      %v1671 = vld [vmem:[%s165 + $0x68] sm:$0xf]
      %v1672 = vld [vmem:[%s165 + $0x6c] sm:$0xf]
      %v1673 = vld [vmem:[%s165 + $0x70] sm:$0xf]
      %v1674 = vld [vmem:[%s165 + $0x74] sm:$0xf]
      %v1675 = vld [vmem:[%s165 + $0x78] sm:$0xf]
      %v1676 = vld [vmem:[%s165 + $0x7c] sm:$0xf]
      %v1677 = vld [vmem:[%s165 + $0x80] sm:$0xf]
      %v1678 = vld [vmem:[%s165 + $0x84] sm:$0xf]
      %v1679 = vld [vmem:[%s165 + $0x88] sm:$0xf]
      %v1680 = vld [vmem:[%s165 + $0x8c] sm:$0xf]
      %v1681 = vld [vmem:[%s165 + $0x90] sm:$0xf]
      %v1682 = vld [vmem:[%s165 + $0x94] sm:$0xf]
      %v1683 = vld [vmem:[%s165 + $0x98] sm:$0x1]
      %s1684 = scalar_lea.vmem %s1, 16
      %v1685 = vld [vmem:[%s1684] sm:$0xf]
      %v1723 = vunpack.c.l.b16 %v1647
      %v1724 = vunpack.c.l.b16 %v1648
      %v1725 = vunpack.c.l.b16 %v1649
      %v1726 = vunpack.c.l.b16 %v1650
      %v1727 = vunpack.c.l.b16 %v1651
      %v1728 = vunpack.c.l.b16 %v1652
      %v1729 = vunpack.c.l.b16 %v1653
      %v1730 = vunpack.c.l.b16 %v1654
      %v1731 = vunpack.c.l.b16 %v1655
      %v1732 = vunpack.c.l.b16 %v1656
      %v1733 = vunpack.c.l.b16 %v1657
      %v1734 = vunpack.c.l.b16 %v1658
      %v1735 = vunpack.c.l.b16 %v1659
      %v1736 = vunpack.c.l.b16 %v1660
      %v1737 = vunpack.c.l.b16 %v1661
      %v1738 = vunpack.c.l.b16 %v1662
      %v1739 = vunpack.c.l.b16 %v1663
      %v1740 = vunpack.c.l.b16 %v1664
      %v1741 = vunpack.c.l.b16 %v1665
      %v1742 = vunpack.c.l.b16 %v1666
      %v1743 = vunpack.c.l.b16 %v1667
      %v1744 = vunpack.c.l.b16 %v1668
      %v1745 = vunpack.c.l.b16 %v1669
      %v1746 = vunpack.c.l.b16 %v1670
      %v1747 = vunpack.c.l.b16 %v1671
      %v1748 = vunpack.c.l.b16 %v1672
      %v1749 = vunpack.c.l.b16 %v1673
      %v1750 = vunpack.c.l.b16 %v1674
      %v1751 = vunpack.c.l.b16 %v1675
      %v1752 = vunpack.c.l.b16 %v1676
      %v1753 = vunpack.c.l.b16 %v1677
      %v1754 = vunpack.c.l.b16 %v1678
      %v1755 = vunpack.c.l.b16 %v1679
      %v1756 = vunpack.c.l.b16 %v1680
      %v1757 = vunpack.c.l.b16 %v1681
      %v1758 = vunpack.c.l.b16 %v1682
      %v1759 = vunpack.c.l.b16 %v1683
      %v1760 = vpack.c.b16 %v1724, %v1723
      %v1761 = vpack.c.b16 %v1726, %v1725
      %v1762 = vpack.c.b16 %v1728, %v1727
      %v1763 = vpack.c.b16 %v1730, %v1729
      %v1764 = vpack.c.b16 %v1732, %v1731
      %v1765 = vpack.c.b16 %v1734, %v1733
      %v1766 = vpack.c.b16 %v1736, %v1735
      %v1767 = vpack.c.b16 %v1738, %v1737
      %v1768 = vpack.c.b16 %v1740, %v1739
      %v1769 = vpack.c.b16 %v1742, %v1741
      %v1770 = vpack.c.b16 %v1744, %v1743
      %v1771 = vpack.c.b16 %v1746, %v1745
      %v1772 = vpack.c.b16 %v1748, %v1747
      %v1773 = vpack.c.b16 %v1750, %v1749
      %v1774 = vpack.c.b16 %v1752, %v1751
      %v1775 = vpack.c.b16 %v1754, %v1753
      %v1776 = vpack.c.b16 %v1756, %v1755
      %v1777 = vpack.c.b16 %v1758, %v1757
      %v1778 = vpack.c.b16 %v1759, %v1759
      %vm1779 = vsmask.f32 6400
      %v1781 = vshrl.u32 %v1760, 16
      %v1783 = vrot.slane %v1781, 1
      %v1784 = vshll.u32 %v1760, 16
      %v1786 = vrot.slane %v1784, 2
      %v1787 = vor.u32 %v1783, %v1786
      %v1789 = vshrl.u32 %v1761, 16
      %v1791 = vrot.slane %v1789, 1
      %v1792 = vshll.u32 %v1761, 16
      %v1794 = vrot.slane %v1792, 2
      %v1795 = vor.u32 %v1791, %v1794
      %v1796 = vsel %vm1779, %v1787, %v1795
      %v1798 = vshrl.u32 %v1762, 16
      %v1800 = vrot.slane %v1798, 1
      %v1801 = vshll.u32 %v1762, 16
      %v1803 = vrot.slane %v1801, 2
      %v1804 = vor.u32 %v1800, %v1803
      %v1805 = vsel %vm1779, %v1795, %v1804
      %v1807 = vshrl.u32 %v1763, 16
      %v1809 = vrot.slane %v1807, 1
      %v1810 = vshll.u32 %v1763, 16
      %v1812 = vrot.slane %v1810, 2
      %v1813 = vor.u32 %v1809, %v1812
      %v1814 = vsel %vm1779, %v1804, %v1813
      %v1816 = vshrl.u32 %v1764, 16
      %v1818 = vrot.slane %v1816, 1
      %v1819 = vshll.u32 %v1764, 16
      %v1821 = vrot.slane %v1819, 2
      %v1822 = vor.u32 %v1818, %v1821
      %v1823 = vsel %vm1779, %v1813, %v1822
      %v1825 = vshrl.u32 %v1765, 16
      %v1827 = vrot.slane %v1825, 1
      %v1828 = vshll.u32 %v1765, 16
      %v1830 = vrot.slane %v1828, 2
      %v1831 = vor.u32 %v1827, %v1830
      %v1832 = vsel %vm1779, %v1822, %v1831
      %v1834 = vshrl.u32 %v1766, 16
      %v1836 = vrot.slane %v1834, 1
      %v1837 = vshll.u32 %v1766, 16
      %v1839 = vrot.slane %v1837, 2
      %v1840 = vor.u32 %v1836, %v1839
      %v1841 = vsel %vm1779, %v1831, %v1840
      %v1843 = vshrl.u32 %v1767, 16
      %v1845 = vrot.slane %v1843, 1
      %v1846 = vshll.u32 %v1767, 16
      %v1848 = vrot.slane %v1846, 2
      %v1849 = vor.u32 %v1845, %v1848
      %v1850 = vsel %vm1779, %v1840, %v1849
      %v1852 = vshrl.u32 %v1768, 16
      %v1854 = vrot.slane %v1852, 1
      %v1855 = vshll.u32 %v1768, 16
      %v1857 = vrot.slane %v1855, 2
      %v1858 = vor.u32 %v1854, %v1857
      %v1859 = vsel %vm1779, %v1849, %v1858
      %v1861 = vshrl.u32 %v1769, 16
      %v1863 = vrot.slane %v1861, 1
      %v1864 = vshll.u32 %v1769, 16
      %v1866 = vrot.slane %v1864, 2
      %v1867 = vor.u32 %v1863, %v1866
      %v1868 = vsel %vm1779, %v1858, %v1867
      %v1870 = vshrl.u32 %v1770, 16
      %v1872 = vrot.slane %v1870, 1
      %v1873 = vshll.u32 %v1770, 16
      %v1875 = vrot.slane %v1873, 2
      %v1876 = vor.u32 %v1872, %v1875
      %v1877 = vsel %vm1779, %v1867, %v1876
      %v1879 = vshrl.u32 %v1771, 16
      %v1881 = vrot.slane %v1879, 1
      %v1882 = vshll.u32 %v1771, 16
      %v1884 = vrot.slane %v1882, 2
      %v1885 = vor.u32 %v1881, %v1884
      %v1886 = vsel %vm1779, %v1876, %v1885
      %v1888 = vshrl.u32 %v1772, 16
      %v1890 = vrot.slane %v1888, 1
      %v1891 = vshll.u32 %v1772, 16
      %v1893 = vrot.slane %v1891, 2
      %v1894 = vor.u32 %v1890, %v1893
      %v1895 = vsel %vm1779, %v1885, %v1894
      %v1897 = vshrl.u32 %v1773, 16
      %v1899 = vrot.slane %v1897, 1
      %v1900 = vshll.u32 %v1773, 16
      %v1902 = vrot.slane %v1900, 2
      %v1903 = vor.u32 %v1899, %v1902
      %v1904 = vsel %vm1779, %v1894, %v1903
      %v1906 = vshrl.u32 %v1774, 16
      %v1908 = vrot.slane %v1906, 1
      %v1909 = vshll.u32 %v1774, 16
      %v1911 = vrot.slane %v1909, 2
      %v1912 = vor.u32 %v1908, %v1911
      %v1913 = vsel %vm1779, %v1903, %v1912
      %v1915 = vshrl.u32 %v1775, 16
      %v1917 = vrot.slane %v1915, 1
      %v1918 = vshll.u32 %v1775, 16
      %v1920 = vrot.slane %v1918, 2
      %v1921 = vor.u32 %v1917, %v1920
      %v1922 = vsel %vm1779, %v1912, %v1921
      %v1924 = vshrl.u32 %v1776, 16
      %v1926 = vrot.slane %v1924, 1
      %v1927 = vshll.u32 %v1776, 16
      %v1929 = vrot.slane %v1927, 2
      %v1930 = vor.u32 %v1926, %v1929
      %v1931 = vsel %vm1779, %v1921, %v1930
      %v1933 = vshrl.u32 %v1777, 16
      %v1935 = vrot.slane %v1933, 1
      %v1936 = vshll.u32 %v1777, 16
      %v1938 = vrot.slane %v1936, 2
      %v1939 = vor.u32 %v1935, %v1938
      %v1940 = vsel %vm1779, %v1930, %v1939
      %v1942 = vshll.u32 %v1778, 16
      %v1944 = vrot.slane %v1942, 2
      %v1945 = vsel %vm1779, %v1939, %v1944
      %v1947 = vsel %vm446, %v1796, 0
      %v1950 = vsel %vm446, %v1805, 0
      %v1953 = vsel %vm446, %v1814, 0
      %v1956 = vsel %vm446, %v1823, 0
      %v1959 = vsel %vm446, %v1832, 0
      %v1962 = vsel %vm446, %v1841, 0
      %v1965 = vsel %vm446, %v1850, 0
      %v1968 = vsel %vm446, %v1859, 0
      %v1971 = vsel %vm446, %v1868, 0
      %v1974 = vsel %vm446, %v1877, 0
      %v1977 = vsel %vm446, %v1886, 0
      %v1980 = vsel %vm446, %v1895, 0
      %v1983 = vsel %vm446, %v1904, 0
      %v1986 = vsel %vm446, %v1913, 0
      %v1989 = vsel %vm446, %v1922, 0
      %v1992 = vsel %vm446, %v1931, 0
      %v1995 = vsel %vm446, %v1940, 0
      %v1998 = vsel %vm446, %v1945, 0
      %v2001 = vsel %vm501, %v1685, 0
      %2003 = vmatprep.subr.bf16.mxu0 0
      %2004 = vmatpush1.bf16.msra.mxu0 0
      %2005 = vmatprep.subr.bf16.mxu0 0
      %2006 = vmatpush1.bf16.msra.mxu0 0
      %2007 = vmatprep.subr.bf16.mxu0 0
      %2008 = vmatpush1.bf16.msra.mxu0 0
      %2009 = vmatprep.subr.bf16.mxu0 0
      %2010 = vmatpush1.bf16.msra.mxu0 0
      %2011 = vmatprep.subr.bf16.mxu0 0
      %2012 = vmatpush1.bf16.msra.mxu0 0
      %2013 = vmatprep.subr.bf16.mxu0 0
      %2014 = vmatpush1.bf16.msra.mxu0 0
      %2015 = vmatprep.subr.bf16.mxu0 0
      %2016 = vmatpush1.bf16.msra.mxu0 0
      %2017 = vmatprep.subr.bf16.mxu0 0
      %2018 = vmatpush1.bf16.msra.mxu0 %v2001
      %2019 = vmatprep.subr.bf16.mxu0 0
      %2020 = vmatpush2.bf16.msra.mxu0 0
      %2021 = vmatprep.subr.bf16.mxu0 0
      %2022 = vmatpush2.bf16.msra.mxu0 0
      %2023 = vmatprep.subr.bf16.mxu0 0
      %2024 = vmatpush2.bf16.msra.mxu0 0
      %2025 = vmatprep.subr.bf16.mxu0 0
      %2026 = vmatpush2.bf16.msra.mxu0 0
      %2027 = vmatprep.subr.bf16.mxu0 0
      %2028 = vmatpush2.bf16.msra.mxu0 0
      %2029 = vmatprep.subr.bf16.mxu0 0
      %2030 = vmatpush2.bf16.msra.mxu0 0
      %2031 = vmatprep.subr.bf16.mxu0 0
      %2032 = vmatpush2.bf16.msra.mxu0 0
      %2033 = vmatprep.subr.bf16.mxu0 0
      %2034 = vmatpush2.bf16.msra.mxu0 0
      %2035 = vmatprep.mubr.bf16.mxu0 0
      %2036 = vmatmul.mubr.bf16.gmra.mxu0 %v1947
      %v2037 = vpop.f32.mrf.mxu0
      %v2038 = vadd.f32 0.0, %v2037
      %v2039 = vpop.f32.mrf.mxu0
      %v2040 = vpop.f32.mrf.mxu0
      %v2041 = vadd.f32 0.0, %v2040
      %v2042 = vpop.f32.mrf.mxu0
      %2043 = vmatprep.mubr.bf16.mxu0 0
      %2044 = vmatmul.mubr.bf16.gmra.mxu0 %v1950
      %v2045 = vpop.f32.mrf.mxu0
      %v2046 = vadd.f32 0.0, %v2045
      %v2047 = vpop.f32.mrf.mxu0
      %v2048 = vpop.f32.mrf.mxu0
      %v2049 = vadd.f32 0.0, %v2048
      %v2050 = vpop.f32.mrf.mxu0
      %2051 = vmatprep.mubr.bf16.mxu0 0
      %2052 = vmatmul.mubr.bf16.gmra.mxu0 %v1953
      %v2053 = vpop.f32.mrf.mxu0
      %v2054 = vadd.f32 0.0, %v2053
      %v2055 = vpop.f32.mrf.mxu0
      %v2056 = vpop.f32.mrf.mxu0
      %v2057 = vadd.f32 0.0, %v2056
      %v2058 = vpop.f32.mrf.mxu0
      %2059 = vmatprep.mubr.bf16.mxu0 0
      %2060 = vmatmul.mubr.bf16.gmra.mxu0 %v1956
      %v2061 = vpop.f32.mrf.mxu0
      %v2062 = vadd.f32 0.0, %v2061
      %v2063 = vpop.f32.mrf.mxu0
      %v2064 = vpop.f32.mrf.mxu0
      %v2065 = vadd.f32 0.0, %v2064
      %v2066 = vpop.f32.mrf.mxu0
      %2067 = vmatprep.mubr.bf16.mxu0 0
      %2068 = vmatmul.mubr.bf16.gmra.mxu0 %v1959
      %v2069 = vpop.f32.mrf.mxu0
      %v2070 = vadd.f32 0.0, %v2069
      %v2071 = vpop.f32.mrf.mxu0
      %v2072 = vpop.f32.mrf.mxu0
      %v2073 = vadd.f32 0.0, %v2072
      %v2074 = vpop.f32.mrf.mxu0
      %2075 = vmatprep.mubr.bf16.mxu0 0
      %2076 = vmatmul.mubr.bf16.gmra.mxu0 %v1962
      %v2077 = vpop.f32.mrf.mxu0
      %v2078 = vadd.f32 0.0, %v2077
      %v2079 = vpop.f32.mrf.mxu0
      %v2080 = vpop.f32.mrf.mxu0
      %v2081 = vadd.f32 0.0, %v2080
      %v2082 = vpop.f32.mrf.mxu0
      %2083 = vmatprep.mubr.bf16.mxu0 0
      %2084 = vmatmul.mubr.bf16.gmra.mxu0 %v1965
      %v2085 = vpop.f32.mrf.mxu0
      %v2086 = vadd.f32 0.0, %v2085
      %v2087 = vpop.f32.mrf.mxu0
      %v2088 = vpop.f32.mrf.mxu0
      %v2089 = vadd.f32 0.0, %v2088
      %v2090 = vpop.f32.mrf.mxu0
      %2091 = vmatprep.mubr.bf16.mxu0 0
      %2092 = vmatmul.mubr.bf16.gmra.mxu0 %v1968
      %v2093 = vpop.f32.mrf.mxu0
      %v2094 = vadd.f32 0.0, %v2093
      %v2095 = vpop.f32.mrf.mxu0
      %v2096 = vpop.f32.mrf.mxu0
      %v2097 = vadd.f32 0.0, %v2096
      %v2098 = vpop.f32.mrf.mxu0
      %2099 = vmatprep.mubr.bf16.mxu0 0
      %2100 = vmatmul.mubr.bf16.gmra.mxu0 %v1971
      %v2101 = vpop.f32.mrf.mxu0
      %v2102 = vadd.f32 0.0, %v2101
      %v2103 = vpop.f32.mrf.mxu0
      %v2104 = vpop.f32.mrf.mxu0
      %v2105 = vadd.f32 0.0, %v2104
      %v2106 = vpop.f32.mrf.mxu0
      %2107 = vmatprep.mubr.bf16.mxu0 0
      %2108 = vmatmul.mubr.bf16.gmra.mxu0 %v1974
      %v2109 = vpop.f32.mrf.mxu0
      %v2110 = vadd.f32 0.0, %v2109
      %v2111 = vpop.f32.mrf.mxu0
      %v2112 = vpop.f32.mrf.mxu0
      %v2113 = vadd.f32 0.0, %v2112
      %v2114 = vpop.f32.mrf.mxu0
      %2115 = vmatprep.mubr.bf16.mxu0 0
      %2116 = vmatmul.mubr.bf16.gmra.mxu0 %v1977
      %v2117 = vpop.f32.mrf.mxu0
      %v2118 = vadd.f32 0.0, %v2117
      %v2119 = vpop.f32.mrf.mxu0
      %v2120 = vpop.f32.mrf.mxu0
      %v2121 = vadd.f32 0.0, %v2120
      %v2122 = vpop.f32.mrf.mxu0
      %2123 = vmatprep.mubr.bf16.mxu0 0
      %2124 = vmatmul.mubr.bf16.gmra.mxu0 %v1980
      %v2125 = vpop.f32.mrf.mxu0
      %v2126 = vadd.f32 0.0, %v2125
      %v2127 = vpop.f32.mrf.mxu0
      %v2128 = vpop.f32.mrf.mxu0
      %v2129 = vadd.f32 0.0, %v2128
      %v2130 = vpop.f32.mrf.mxu0
      %2131 = vmatprep.mubr.bf16.mxu0 0
      %2132 = vmatmul.mubr.bf16.gmra.mxu0 %v1983
      %v2133 = vpop.f32.mrf.mxu0
      %v2134 = vadd.f32 0.0, %v2133
      %v2135 = vpop.f32.mrf.mxu0
      %v2136 = vpop.f32.mrf.mxu0
      %v2137 = vadd.f32 0.0, %v2136
      %v2138 = vpop.f32.mrf.mxu0
      %2139 = vmatprep.mubr.bf16.mxu0 0
      %2140 = vmatmul.mubr.bf16.gmra.mxu0 %v1986
      %v2141 = vpop.f32.mrf.mxu0
      %v2142 = vadd.f32 0.0, %v2141
      %v2143 = vpop.f32.mrf.mxu0
      %v2144 = vpop.f32.mrf.mxu0
      %v2145 = vadd.f32 0.0, %v2144
      %v2146 = vpop.f32.mrf.mxu0
      %2147 = vmatprep.mubr.bf16.mxu0 0
      %2148 = vmatmul.mubr.bf16.gmra.mxu0 %v1989
      %v2149 = vpop.f32.mrf.mxu0
      %v2150 = vadd.f32 0.0, %v2149
      %v2151 = vpop.f32.mrf.mxu0
      %v2152 = vpop.f32.mrf.mxu0
      %v2153 = vadd.f32 0.0, %v2152
      %v2154 = vpop.f32.mrf.mxu0
      %2155 = vmatprep.mubr.bf16.mxu0 0
      %2156 = vmatmul.mubr.bf16.gmra.mxu0 %v1992
      %v2157 = vpop.f32.mrf.mxu0
      %v2158 = vadd.f32 0.0, %v2157
      %v2159 = vpop.f32.mrf.mxu0
      %v2160 = vpop.f32.mrf.mxu0
      %v2161 = vadd.f32 0.0, %v2160
      %v2162 = vpop.f32.mrf.mxu0
      %2163 = vmatprep.mubr.bf16.mxu0 0
      %2164 = vmatmul.mubr.bf16.gmra.mxu0 %v1995
      %v2165 = vpop.f32.mrf.mxu0
      %v2166 = vadd.f32 0.0, %v2165
      %v2167 = vpop.f32.mrf.mxu0
      %v2168 = vpop.f32.mrf.mxu0
      %v2169 = vadd.f32 0.0, %v2168
      %v2170 = vpop.f32.mrf.mxu0
      %2171 = vmatprep.mubr.bf16.mxu0 0
      %2172 = vmatmul.mubr.bf16.gmra.mxu0 %v1998
      %v2173 = vpop.f32.mrf.mxu0
      %v2174 = vadd.f32 0.0, %v2173
      %v2175 = vpop.f32.mrf.mxu0
      %v2176 = vpop.f32.mrf.mxu0
      %v2177 = vadd.f32 0.0, %v2176
      %v2178 = vpop.f32.mrf.mxu0
      %2179 = vdwg.mxu0
      %v2180 = vadd.f32 %v1611, %v2038
      %v2181 = vadd.f32 %v1612, %v2041
      %v2182 = vadd.f32 %v1613, %v2046
      %v2183 = vadd.f32 %v1614, %v2049
      %v2184 = vadd.f32 %v1615, %v2054
      %v2185 = vadd.f32 %v1616, %v2057
      %v2186 = vadd.f32 %v1617, %v2062
      %v2187 = vadd.f32 %v1618, %v2065
      %v2188 = vadd.f32 %v1619, %v2070
      %v2189 = vadd.f32 %v1620, %v2073
      %v2190 = vadd.f32 %v1621, %v2078
      %v2191 = vadd.f32 %v1622, %v2081
      %v2192 = vadd.f32 %v1623, %v2086
      %v2193 = vadd.f32 %v1624, %v2089
      %v2194 = vadd.f32 %v1625, %v2094
      %v2195 = vadd.f32 %v1626, %v2097
      %v2196 = vadd.f32 %v1627, %v2102
      %v2197 = vadd.f32 %v1628, %v2105
      %v2198 = vadd.f32 %v1629, %v2110
      %v2199 = vadd.f32 %v1630, %v2113
      %v2200 = vadd.f32 %v1631, %v2118
      %v2201 = vadd.f32 %v1632, %v2121
      %v2202 = vadd.f32 %v1633, %v2126
      %v2203 = vadd.f32 %v1634, %v2129
      %v2204 = vadd.f32 %v1635, %v2134
      %v2205 = vadd.f32 %v1636, %v2137
      %v2206 = vadd.f32 %v1637, %v2142
      %v2207 = vadd.f32 %v1638, %v2145
      %v2208 = vadd.f32 %v1639, %v2150
      %v2209 = vadd.f32 %v1640, %v2153
      %v2210 = vadd.f32 %v1641, %v2158
      %v2211 = vadd.f32 %v1642, %v2161
      %v2212 = vadd.f32 %v1643, %v2166
      %v2213 = vadd.f32 %v1644, %v2169
      %v2214 = vadd.f32 %v1645, %v2174
      %v2215 = vadd.f32 %v1646, %v2177
      %v2216 = vld [vmem:[%s165 + $0x8] sm:$0xc]
      %s2217 = scalar_lea.vmem %s1, 20
      %v2218 = vld [vmem:[%s2217] sm:$0xf]
      %v2220 = vunpack.c.l.b16 %v2216
      %v2221 = vpack.c.b16 %v1724, %v2220
      %vm2222 = vcmask 1045504
      %v2223 = vrot.slane %v2221, 2
      %v2224 = vrot.slane %v1761, 2
      %v2225 = vsel %vm2222, %v2223, %v2224
      %v2226 = vrot.slane %v1762, 2
      %v2227 = vsel %vm2222, %v2224, %v2226
      %v2228 = vrot.slane %v1763, 2
      %v2229 = vsel %vm2222, %v2226, %v2228
      %v2230 = vrot.slane %v1764, 2
      %v2231 = vsel %vm2222, %v2228, %v2230
      %v2232 = vrot.slane %v1765, 2
      %v2233 = vsel %vm2222, %v2230, %v2232
      %v2234 = vrot.slane %v1766, 2
      %v2235 = vsel %vm2222, %v2232, %v2234
      %v2236 = vrot.slane %v1767, 2
      %v2237 = vsel %vm2222, %v2234, %v2236
      %v2238 = vrot.slane %v1768, 2
      %v2239 = vsel %vm2222, %v2236, %v2238
      %v2240 = vrot.slane %v1769, 2
      %v2241 = vsel %vm2222, %v2238, %v2240
      %v2242 = vrot.slane %v1770, 2
      %v2243 = vsel %vm2222, %v2240, %v2242
      %v2244 = vrot.slane %v1771, 2
      %v2245 = vsel %vm2222, %v2242, %v2244
      %v2246 = vrot.slane %v1772, 2
      %v2247 = vsel %vm2222, %v2244, %v2246
      %v2248 = vrot.slane %v1773, 2
      %v2249 = vsel %vm2222, %v2246, %v2248
      %v2250 = vrot.slane %v1774, 2
      %v2251 = vsel %vm2222, %v2248, %v2250
      %v2252 = vrot.slane %v1775, 2
      %v2253 = vsel %vm2222, %v2250, %v2252
      %v2254 = vrot.slane %v1776, 2
      %v2255 = vsel %vm2222, %v2252, %v2254
      %v2256 = vrot.slane %v1777, 2
      %v2257 = vsel %vm2222, %v2254, %v2256
      %v2258 = vrot.slane %v1778, 2
      %v2259 = vsel %vm2222, %v2256, %v2258
      %v2261 = vsel %vm446, %v2225, 0
      %v2264 = vsel %vm446, %v2227, 0
      %v2267 = vsel %vm446, %v2229, 0
      %v2270 = vsel %vm446, %v2231, 0
      %v2273 = vsel %vm446, %v2233, 0
      %v2276 = vsel %vm446, %v2235, 0
      %v2279 = vsel %vm446, %v2237, 0
      %v2282 = vsel %vm446, %v2239, 0
      %v2285 = vsel %vm446, %v2241, 0
      %v2288 = vsel %vm446, %v2243, 0
      %v2291 = vsel %vm446, %v2245, 0
      %v2294 = vsel %vm446, %v2247, 0
      %v2297 = vsel %vm446, %v2249, 0
      %v2300 = vsel %vm446, %v2251, 0
      %v2303 = vsel %vm446, %v2253, 0
      %v2306 = vsel %vm446, %v2255, 0
      %v2309 = vsel %vm446, %v2257, 0
      %v2312 = vsel %vm446, %v2259, 0
      %v2315 = vsel %vm501, %v2218, 0
      %2317 = vmatprep.subr.bf16.mxu0 0
      %2318 = vmatpush1.bf16.msra.mxu0 0
      %2319 = vmatprep.subr.bf16.mxu0 0
      %2320 = vmatpush1.bf16.msra.mxu0 0
      %2321 = vmatprep.subr.bf16.mxu0 0
      %2322 = vmatpush1.bf16.msra.mxu0 0
      %2323 = vmatprep.subr.bf16.mxu0 0
      %2324 = vmatpush1.bf16.msra.mxu0 0
      %2325 = vmatprep.subr.bf16.mxu0 0
      %2326 = vmatpush1.bf16.msra.mxu0 0
      %2327 = vmatprep.subr.bf16.mxu0 0
      %2328 = vmatpush1.bf16.msra.mxu0 0
      %2329 = vmatprep.subr.bf16.mxu0 0
      %2330 = vmatpush1.bf16.msra.mxu0 0
      %2331 = vmatprep.subr.bf16.mxu0 0
      %2332 = vmatpush1.bf16.msra.mxu0 %v2315
      %2333 = vmatprep.subr.bf16.mxu0 0
      %2334 = vmatpush2.bf16.msra.mxu0 0
      %2335 = vmatprep.subr.bf16.mxu0 0
      %2336 = vmatpush2.bf16.msra.mxu0 0
      %2337 = vmatprep.subr.bf16.mxu0 0
      %2338 = vmatpush2.bf16.msra.mxu0 0
      %2339 = vmatprep.subr.bf16.mxu0 0
      %2340 = vmatpush2.bf16.msra.mxu0 0
      %2341 = vmatprep.subr.bf16.mxu0 0
      %2342 = vmatpush2.bf16.msra.mxu0 0
      %2343 = vmatprep.subr.bf16.mxu0 0
      %2344 = vmatpush2.bf16.msra.mxu0 0
      %2345 = vmatprep.subr.bf16.mxu0 0
      %2346 = vmatpush2.bf16.msra.mxu0 0
      %2347 = vmatprep.subr.bf16.mxu0 0
      %2348 = vmatpush2.bf16.msra.mxu0 0
      %2349 = vmatprep.mubr.bf16.mxu0 0
      %2350 = vmatmul.mubr.bf16.gmra.mxu0 %v2261
      %v2351 = vpop.f32.mrf.mxu0
      %v2352 = vadd.f32 0.0, %v2351
      %v2353 = vpop.f32.mrf.mxu0
      %v2354 = vpop.f32.mrf.mxu0
      %v2355 = vadd.f32 0.0, %v2354
      %v2356 = vpop.f32.mrf.mxu0
      %2357 = vmatprep.mubr.bf16.mxu0 0
      %2358 = vmatmul.mubr.bf16.gmra.mxu0 %v2264
      %v2359 = vpop.f32.mrf.mxu0
      %v2360 = vadd.f32 0.0, %v2359
      %v2361 = vpop.f32.mrf.mxu0
      %v2362 = vpop.f32.mrf.mxu0
      %v2363 = vadd.f32 0.0, %v2362
      %v2364 = vpop.f32.mrf.mxu0
      %2365 = vmatprep.mubr.bf16.mxu0 0
      %2366 = vmatmul.mubr.bf16.gmra.mxu0 %v2267
      %v2367 = vpop.f32.mrf.mxu0
      %v2368 = vadd.f32 0.0, %v2367
      %v2369 = vpop.f32.mrf.mxu0
      %v2370 = vpop.f32.mrf.mxu0
      %v2371 = vadd.f32 0.0, %v2370
      %v2372 = vpop.f32.mrf.mxu0
      %2373 = vmatprep.mubr.bf16.mxu0 0
      %2374 = vmatmul.mubr.bf16.gmra.mxu0 %v2270
      %v2375 = vpop.f32.mrf.mxu0
      %v2376 = vadd.f32 0.0, %v2375
      %v2377 = vpop.f32.mrf.mxu0
      %v2378 = vpop.f32.mrf.mxu0
      %v2379 = vadd.f32 0.0, %v2378
      %v2380 = vpop.f32.mrf.mxu0
      %2381 = vmatprep.mubr.bf16.mxu0 0
      %2382 = vmatmul.mubr.bf16.gmra.mxu0 %v2273
      %v2383 = vpop.f32.mrf.mxu0
      %v2384 = vadd.f32 0.0, %v2383
      %v2385 = vpop.f32.mrf.mxu0
      %v2386 = vpop.f32.mrf.mxu0
      %v2387 = vadd.f32 0.0, %v2386
      %v2388 = vpop.f32.mrf.mxu0
      %2389 = vmatprep.mubr.bf16.mxu0 0
      %2390 = vmatmul.mubr.bf16.gmra.mxu0 %v2276
      %v2391 = vpop.f32.mrf.mxu0
      %v2392 = vadd.f32 0.0, %v2391
      %v2393 = vpop.f32.mrf.mxu0
      %v2394 = vpop.f32.mrf.mxu0
      %v2395 = vadd.f32 0.0, %v2394
      %v2396 = vpop.f32.mrf.mxu0
      %2397 = vmatprep.mubr.bf16.mxu0 0
      %2398 = vmatmul.mubr.bf16.gmra.mxu0 %v2279
      %v2399 = vpop.f32.mrf.mxu0
      %v2400 = vadd.f32 0.0, %v2399
      %v2401 = vpop.f32.mrf.mxu0
      %v2402 = vpop.f32.mrf.mxu0
      %v2403 = vadd.f32 0.0, %v2402
      %v2404 = vpop.f32.mrf.mxu0
      %2405 = vmatprep.mubr.bf16.mxu0 0
      %2406 = vmatmul.mubr.bf16.gmra.mxu0 %v2282
      %v2407 = vpop.f32.mrf.mxu0
      %v2408 = vadd.f32 0.0, %v2407
      %v2409 = vpop.f32.mrf.mxu0
      %v2410 = vpop.f32.mrf.mxu0
      %v2411 = vadd.f32 0.0, %v2410
      %v2412 = vpop.f32.mrf.mxu0
      %2413 = vmatprep.mubr.bf16.mxu0 0
      %2414 = vmatmul.mubr.bf16.gmra.mxu0 %v2285
      %v2415 = vpop.f32.mrf.mxu0
      %v2416 = vadd.f32 0.0, %v2415
      %v2417 = vpop.f32.mrf.mxu0
      %v2418 = vpop.f32.mrf.mxu0
      %v2419 = vadd.f32 0.0, %v2418
      %v2420 = vpop.f32.mrf.mxu0
      %2421 = vmatprep.mubr.bf16.mxu0 0
      %2422 = vmatmul.mubr.bf16.gmra.mxu0 %v2288
      %v2423 = vpop.f32.mrf.mxu0
      %v2424 = vadd.f32 0.0, %v2423
      %v2425 = vpop.f32.mrf.mxu0
      %v2426 = vpop.f32.mrf.mxu0
      %v2427 = vadd.f32 0.0, %v2426
      %v2428 = vpop.f32.mrf.mxu0
      %2429 = vmatprep.mubr.bf16.mxu0 0
      %2430 = vmatmul.mubr.bf16.gmra.mxu0 %v2291
      %v2431 = vpop.f32.mrf.mxu0
      %v2432 = vadd.f32 0.0, %v2431
      %v2433 = vpop.f32.mrf.mxu0
      %v2434 = vpop.f32.mrf.mxu0
      %v2435 = vadd.f32 0.0, %v2434
      %v2436 = vpop.f32.mrf.mxu0
      %2437 = vmatprep.mubr.bf16.mxu0 0
      %2438 = vmatmul.mubr.bf16.gmra.mxu0 %v2294
      %v2439 = vpop.f32.mrf.mxu0
      %v2440 = vadd.f32 0.0, %v2439
      %v2441 = vpop.f32.mrf.mxu0
      %v2442 = vpop.f32.mrf.mxu0
      %v2443 = vadd.f32 0.0, %v2442
      %v2444 = vpop.f32.mrf.mxu0
      %2445 = vmatprep.mubr.bf16.mxu0 0
      %2446 = vmatmul.mubr.bf16.gmra.mxu0 %v2297
      %v2447 = vpop.f32.mrf.mxu0
      %v2448 = vadd.f32 0.0, %v2447
      %v2449 = vpop.f32.mrf.mxu0
      %v2450 = vpop.f32.mrf.mxu0
      %v2451 = vadd.f32 0.0, %v2450
      %v2452 = vpop.f32.mrf.mxu0
      %2453 = vmatprep.mubr.bf16.mxu0 0
      %2454 = vmatmul.mubr.bf16.gmra.mxu0 %v2300
      %v2455 = vpop.f32.mrf.mxu0
      %v2456 = vadd.f32 0.0, %v2455
      %v2457 = vpop.f32.mrf.mxu0
      %v2458 = vpop.f32.mrf.mxu0
      %v2459 = vadd.f32 0.0, %v2458
      %v2460 = vpop.f32.mrf.mxu0
      %2461 = vmatprep.mubr.bf16.mxu0 0
      %2462 = vmatmul.mubr.bf16.gmra.mxu0 %v2303
      %v2463 = vpop.f32.mrf.mxu0
      %v2464 = vadd.f32 0.0, %v2463
      %v2465 = vpop.f32.mrf.mxu0
      %v2466 = vpop.f32.mrf.mxu0
      %v2467 = vadd.f32 0.0, %v2466
      %v2468 = vpop.f32.mrf.mxu0
      %2469 = vmatprep.mubr.bf16.mxu0 0
      %2470 = vmatmul.mubr.bf16.gmra.mxu0 %v2306
      %v2471 = vpop.f32.mrf.mxu0
      %v2472 = vadd.f32 0.0, %v2471
      %v2473 = vpop.f32.mrf.mxu0
      %v2474 = vpop.f32.mrf.mxu0
      %v2475 = vadd.f32 0.0, %v2474
      %v2476 = vpop.f32.mrf.mxu0
      %2477 = vmatprep.mubr.bf16.mxu0 0
      %2478 = vmatmul.mubr.bf16.gmra.mxu0 %v2309
      %v2479 = vpop.f32.mrf.mxu0
      %v2480 = vadd.f32 0.0, %v2479
      %v2481 = vpop.f32.mrf.mxu0
      %v2482 = vpop.f32.mrf.mxu0
      %v2483 = vadd.f32 0.0, %v2482
      %v2484 = vpop.f32.mrf.mxu0
      %2485 = vmatprep.mubr.bf16.mxu0 0
      %2486 = vmatmul.mubr.bf16.gmra.mxu0 %v2312
      %v2487 = vpop.f32.mrf.mxu0
      %v2488 = vadd.f32 0.0, %v2487
      %v2489 = vpop.f32.mrf.mxu0
      %v2490 = vpop.f32.mrf.mxu0
      %v2491 = vadd.f32 0.0, %v2490
      %v2492 = vpop.f32.mrf.mxu0
      %2493 = vdwg.mxu0
      %v2494 = vadd.f32 %v2180, %v2352
      %v2495 = vadd.f32 %v2181, %v2355
      %v2496 = vadd.f32 %v2182, %v2360
      %v2497 = vadd.f32 %v2183, %v2363
      %v2498 = vadd.f32 %v2184, %v2368
      %v2499 = vadd.f32 %v2185, %v2371
      %v2500 = vadd.f32 %v2186, %v2376
      %v2501 = vadd.f32 %v2187, %v2379
      %v2502 = vadd.f32 %v2188, %v2384
      %v2503 = vadd.f32 %v2189, %v2387
      %v2504 = vadd.f32 %v2190, %v2392
      %v2505 = vadd.f32 %v2191, %v2395
      %v2506 = vadd.f32 %v2192, %v2400
      %v2507 = vadd.f32 %v2193, %v2403
      %v2508 = vadd.f32 %v2194, %v2408
      %v2509 = vadd.f32 %v2195, %v2411
      %v2510 = vadd.f32 %v2196, %v2416
      %v2511 = vadd.f32 %v2197, %v2419
      %v2512 = vadd.f32 %v2198, %v2424
      %v2513 = vadd.f32 %v2199, %v2427
      %v2514 = vadd.f32 %v2200, %v2432
      %v2515 = vadd.f32 %v2201, %v2435
      %v2516 = vadd.f32 %v2202, %v2440
      %v2517 = vadd.f32 %v2203, %v2443
      %v2518 = vadd.f32 %v2204, %v2448
      %v2519 = vadd.f32 %v2205, %v2451
      %v2520 = vadd.f32 %v2206, %v2456
      %v2521 = vadd.f32 %v2207, %v2459
      %v2522 = vadd.f32 %v2208, %v2464
      %v2523 = vadd.f32 %v2209, %v2467
      %v2524 = vadd.f32 %v2210, %v2472
      %v2525 = vadd.f32 %v2211, %v2475
      %v2526 = vadd.f32 %v2212, %v2480
      %v2527 = vadd.f32 %v2213, %v2483
      %v2528 = vadd.f32 %v2214, %v2488
      %v2529 = vadd.f32 %v2215, %v2491
      %v2530 = vld [vmem:[%s165 + $0x10] sm:$0xc]
      %v2531 = vld [vmem:[%s165 + $0x14] sm:$0xf]
      %v2532 = vld [vmem:[%s165 + $0x18] sm:$0xf]
      %v2533 = vld [vmem:[%s165 + $0x1c] sm:$0xf]
      %v2534 = vld [vmem:[%s165 + $0x20] sm:$0xf]
      %v2535 = vld [vmem:[%s165 + $0x24] sm:$0xf]
      %v2536 = vld [vmem:[%s165 + $0x28] sm:$0xf]
      %v2537 = vld [vmem:[%s165 + $0x2c] sm:$0xf]
      %v2538 = vld [vmem:[%s165 + $0x30] sm:$0xf]
      %v2539 = vld [vmem:[%s165 + $0x34] sm:$0xf]
      %v2540 = vld [vmem:[%s165 + $0x38] sm:$0xf]
      %v2541 = vld [vmem:[%s165 + $0x3c] sm:$0xf]
      %v2542 = vld [vmem:[%s165 + $0x40] sm:$0xf]
      %v2543 = vld [vmem:[%s165 + $0x44] sm:$0xf]
      %v2544 = vld [vmem:[%s165 + $0x48] sm:$0xf]
      %v2545 = vld [vmem:[%s165 + $0x4c] sm:$0xf]
      %v2546 = vld [vmem:[%s165 + $0x50] sm:$0xf]
      %v2547 = vld [vmem:[%s165 + $0x54] sm:$0xf]
      %v2548 = vld [vmem:[%s165 + $0x58] sm:$0xf]
      %v2549 = vld [vmem:[%s165 + $0x5c] sm:$0xf]
      %v2550 = vld [vmem:[%s165 + $0x60] sm:$0xf]
      %v2551 = vld [vmem:[%s165 + $0x64] sm:$0xf]
      %v2552 = vld [vmem:[%s165 + $0x68] sm:$0xf]
      %v2553 = vld [vmem:[%s165 + $0x6c] sm:$0xf]
      %v2554 = vld [vmem:[%s165 + $0x70] sm:$0xf]
      %v2555 = vld [vmem:[%s165 + $0x74] sm:$0xf]
      %v2556 = vld [vmem:[%s165 + $0x78] sm:$0xf]
      %v2557 = vld [vmem:[%s165 + $0x7c] sm:$0xf]
      %v2558 = vld [vmem:[%s165 + $0x80] sm:$0xf]
      %v2559 = vld [vmem:[%s165 + $0x84] sm:$0xf]
      %v2560 = vld [vmem:[%s165 + $0x88] sm:$0xf]
      %v2561 = vld [vmem:[%s165 + $0x8c] sm:$0xf]
      %v2562 = vld [vmem:[%s165 + $0x90] sm:$0xf]
      %v2563 = vld [vmem:[%s165 + $0x94] sm:$0xf]
      %v2564 = vld [vmem:[%s165 + $0x98] sm:$0xf]
      %v2565 = vld [vmem:[%s165 + $0x9c] sm:$0xf]
      %v2566 = vld [vmem:[%s165 + $0xa0] sm:$0x1]
      %s2567 = scalar_lea.vmem %s1, 24
      %v2568 = vld [vmem:[%s2567] sm:$0xf]
      %v2606 = vunpack.c.l.b16 %v2530
      %v2607 = vunpack.c.l.b16 %v2531
      %v2608 = vunpack.c.l.b16 %v2532
      %v2609 = vunpack.c.l.b16 %v2533
      %v2610 = vunpack.c.l.b16 %v2534
      %v2611 = vunpack.c.l.b16 %v2535
      %v2612 = vunpack.c.l.b16 %v2536
      %v2613 = vunpack.c.l.b16 %v2537
      %v2614 = vunpack.c.l.b16 %v2538
      %v2615 = vunpack.c.l.b16 %v2539
      %v2616 = vunpack.c.l.b16 %v2540
      %v2617 = vunpack.c.l.b16 %v2541
      %v2618 = vunpack.c.l.b16 %v2542
      %v2619 = vunpack.c.l.b16 %v2543
      %v2620 = vunpack.c.l.b16 %v2544
      %v2621 = vunpack.c.l.b16 %v2545
      %v2622 = vunpack.c.l.b16 %v2546
      %v2623 = vunpack.c.l.b16 %v2547
      %v2624 = vunpack.c.l.b16 %v2548
      %v2625 = vunpack.c.l.b16 %v2549
      %v2626 = vunpack.c.l.b16 %v2550
      %v2627 = vunpack.c.l.b16 %v2551
      %v2628 = vunpack.c.l.b16 %v2552
      %v2629 = vunpack.c.l.b16 %v2553
      %v2630 = vunpack.c.l.b16 %v2554
      %v2631 = vunpack.c.l.b16 %v2555
      %v2632 = vunpack.c.l.b16 %v2556
      %v2633 = vunpack.c.l.b16 %v2557
      %v2634 = vunpack.c.l.b16 %v2558
      %v2635 = vunpack.c.l.b16 %v2559
      %v2636 = vunpack.c.l.b16 %v2560
      %v2637 = vunpack.c.l.b16 %v2561
      %v2638 = vunpack.c.l.b16 %v2562
      %v2639 = vunpack.c.l.b16 %v2563
      %v2640 = vunpack.c.l.b16 %v2564
      %v2641 = vunpack.c.l.b16 %v2565
      %v2642 = vunpack.c.l.b16 %v2566
      %v2643 = vpack.c.b16 %v2607, %v2606
      %v2644 = vpack.c.b16 %v2609, %v2608
      %v2645 = vpack.c.b16 %v2611, %v2610
      %v2646 = vpack.c.b16 %v2613, %v2612
      %v2647 = vpack.c.b16 %v2615, %v2614
      %v2648 = vpack.c.b16 %v2617, %v2616
      %v2649 = vpack.c.b16 %v2619, %v2618
      %v2650 = vpack.c.b16 %v2621, %v2620
      %v2651 = vpack.c.b16 %v2623, %v2622
      %v2652 = vpack.c.b16 %v2625, %v2624
      %v2653 = vpack.c.b16 %v2627, %v2626
      %v2654 = vpack.c.b16 %v2629, %v2628
      %v2655 = vpack.c.b16 %v2631, %v2630
      %v2656 = vpack.c.b16 %v2633, %v2632
      %v2657 = vpack.c.b16 %v2635, %v2634
      %v2658 = vpack.c.b16 %v2637, %v2636
      %v2659 = vpack.c.b16 %v2639, %v2638
      %v2660 = vpack.c.b16 %v2641, %v2640
      %v2661 = vpack.c.b16 %v2642, %v2642
      %v2662 = vrot.slane %v2643, 2
      %v2663 = vrot.slane %v2644, 2
      %v2664 = vsel %vm2222, %v2662, %v2663
      %v2665 = vrot.slane %v2645, 2
      %v2666 = vsel %vm2222, %v2663, %v2665
      %v2667 = vrot.slane %v2646, 2
      %v2668 = vsel %vm2222, %v2665, %v2667
      %v2669 = vrot.slane %v2647, 2
      %v2670 = vsel %vm2222, %v2667, %v2669
      %v2671 = vrot.slane %v2648, 2
      %v2672 = vsel %vm2222, %v2669, %v2671
      %v2673 = vrot.slane %v2649, 2
      %v2674 = vsel %vm2222, %v2671, %v2673
      %v2675 = vrot.slane %v2650, 2
      %v2676 = vsel %vm2222, %v2673, %v2675
      %v2677 = vrot.slane %v2651, 2
      %v2678 = vsel %vm2222, %v2675, %v2677
      %v2679 = vrot.slane %v2652, 2
      %v2680 = vsel %vm2222, %v2677, %v2679
      %v2681 = vrot.slane %v2653, 2
      %v2682 = vsel %vm2222, %v2679, %v2681
      %v2683 = vrot.slane %v2654, 2
      %v2684 = vsel %vm2222, %v2681, %v2683
      %v2685 = vrot.slane %v2655, 2
      %v2686 = vsel %vm2222, %v2683, %v2685
      %v2687 = vrot.slane %v2656, 2
      %v2688 = vsel %vm2222, %v2685, %v2687
      %v2689 = vrot.slane %v2657, 2
      %v2690 = vsel %vm2222, %v2687, %v2689
      %v2691 = vrot.slane %v2658, 2
      %v2692 = vsel %vm2222, %v2689, %v2691
      %v2693 = vrot.slane %v2659, 2
      %v2694 = vsel %vm2222, %v2691, %v2693
      %v2695 = vrot.slane %v2660, 2
      %v2696 = vsel %vm2222, %v2693, %v2695
      %v2697 = vrot.slane %v2661, 2
      %v2698 = vsel %vm2222, %v2695, %v2697
      %v2700 = vsel %vm446, %v2664, 0
      %v2703 = vsel %vm446, %v2666, 0
      %v2706 = vsel %vm446, %v2668, 0
      %v2709 = vsel %vm446, %v2670, 0
      %v2712 = vsel %vm446, %v2672, 0
      %v2715 = vsel %vm446, %v2674, 0
      %v2718 = vsel %vm446, %v2676, 0
      %v2721 = vsel %vm446, %v2678, 0
      %v2724 = vsel %vm446, %v2680, 0
      %v2727 = vsel %vm446, %v2682, 0
      %v2730 = vsel %vm446, %v2684, 0
      %v2733 = vsel %vm446, %v2686, 0
      %v2736 = vsel %vm446, %v2688, 0
      %v2739 = vsel %vm446, %v2690, 0
      %v2742 = vsel %vm446, %v2692, 0
      %v2745 = vsel %vm446, %v2694, 0
      %v2748 = vsel %vm446, %v2696, 0
      %v2751 = vsel %vm446, %v2698, 0
      %v2754 = vsel %vm501, %v2568, 0
      %2756 = vmatprep.subr.bf16.mxu0 0
      %2757 = vmatpush1.bf16.msra.mxu0 0
      %2758 = vmatprep.subr.bf16.mxu0 0
      %2759 = vmatpush1.bf16.msra.mxu0 0
      %2760 = vmatprep.subr.bf16.mxu0 0
      %2761 = vmatpush1.bf16.msra.mxu0 0
      %2762 = vmatprep.subr.bf16.mxu0 0
      %2763 = vmatpush1.bf16.msra.mxu0 0
      %2764 = vmatprep.subr.bf16.mxu0 0
      %2765 = vmatpush1.bf16.msra.mxu0 0
      %2766 = vmatprep.subr.bf16.mxu0 0
      %2767 = vmatpush1.bf16.msra.mxu0 0
      %2768 = vmatprep.subr.bf16.mxu0 0
      %2769 = vmatpush1.bf16.msra.mxu0 0
      %2770 = vmatprep.subr.bf16.mxu0 0
      %2771 = vmatpush1.bf16.msra.mxu0 %v2754
      %2772 = vmatprep.subr.bf16.mxu0 0
      %2773 = vmatpush2.bf16.msra.mxu0 0
      %2774 = vmatprep.subr.bf16.mxu0 0
      %2775 = vmatpush2.bf16.msra.mxu0 0
      %2776 = vmatprep.subr.bf16.mxu0 0
      %2777 = vmatpush2.bf16.msra.mxu0 0
      %2778 = vmatprep.subr.bf16.mxu0 0
      %2779 = vmatpush2.bf16.msra.mxu0 0
      %2780 = vmatprep.subr.bf16.mxu0 0
      %2781 = vmatpush2.bf16.msra.mxu0 0
      %2782 = vmatprep.subr.bf16.mxu0 0
      %2783 = vmatpush2.bf16.msra.mxu0 0
      %2784 = vmatprep.subr.bf16.mxu0 0
      %2785 = vmatpush2.bf16.msra.mxu0 0
      %2786 = vmatprep.subr.bf16.mxu0 0
      %2787 = vmatpush2.bf16.msra.mxu0 0
      %2788 = vmatprep.mubr.bf16.mxu0 0
      %2789 = vmatmul.mubr.bf16.gmra.mxu0 %v2700
      %v2790 = vpop.f32.mrf.mxu0
      %v2791 = vadd.f32 0.0, %v2790
      %v2792 = vpop.f32.mrf.mxu0
      %v2793 = vpop.f32.mrf.mxu0
      %v2794 = vadd.f32 0.0, %v2793
      %v2795 = vpop.f32.mrf.mxu0
      %2796 = vmatprep.mubr.bf16.mxu0 0
      %2797 = vmatmul.mubr.bf16.gmra.mxu0 %v2703
      %v2798 = vpop.f32.mrf.mxu0
      %v2799 = vadd.f32 0.0, %v2798
      %v2800 = vpop.f32.mrf.mxu0
      %v2801 = vpop.f32.mrf.mxu0
      %v2802 = vadd.f32 0.0, %v2801
      %v2803 = vpop.f32.mrf.mxu0
      %2804 = vmatprep.mubr.bf16.mxu0 0
      %2805 = vmatmul.mubr.bf16.gmra.mxu0 %v2706
      %v2806 = vpop.f32.mrf.mxu0
      %v2807 = vadd.f32 0.0, %v2806
      %v2808 = vpop.f32.mrf.mxu0
      %v2809 = vpop.f32.mrf.mxu0
      %v2810 = vadd.f32 0.0, %v2809
      %v2811 = vpop.f32.mrf.mxu0
      %2812 = vmatprep.mubr.bf16.mxu0 0
      %2813 = vmatmul.mubr.bf16.gmra.mxu0 %v2709
      %v2814 = vpop.f32.mrf.mxu0
      %v2815 = vadd.f32 0.0, %v2814
      %v2816 = vpop.f32.mrf.mxu0
      %v2817 = vpop.f32.mrf.mxu0
      %v2818 = vadd.f32 0.0, %v2817
      %v2819 = vpop.f32.mrf.mxu0
      %2820 = vmatprep.mubr.bf16.mxu0 0
      %2821 = vmatmul.mubr.bf16.gmra.mxu0 %v2712
      %v2822 = vpop.f32.mrf.mxu0
      %v2823 = vadd.f32 0.0, %v2822
      %v2824 = vpop.f32.mrf.mxu0
      %v2825 = vpop.f32.mrf.mxu0
      %v2826 = vadd.f32 0.0, %v2825
      %v2827 = vpop.f32.mrf.mxu0
      %2828 = vmatprep.mubr.bf16.mxu0 0
      %2829 = vmatmul.mubr.bf16.gmra.mxu0 %v2715
      %v2830 = vpop.f32.mrf.mxu0
      %v2831 = vadd.f32 0.0, %v2830
      %v2832 = vpop.f32.mrf.mxu0
      %v2833 = vpop.f32.mrf.mxu0
      %v2834 = vadd.f32 0.0, %v2833
      %v2835 = vpop.f32.mrf.mxu0
      %2836 = vmatprep.mubr.bf16.mxu0 0
      %2837 = vmatmul.mubr.bf16.gmra.mxu0 %v2718
      %v2838 = vpop.f32.mrf.mxu0
      %v2839 = vadd.f32 0.0, %v2838
      %v2840 = vpop.f32.mrf.mxu0
      %v2841 = vpop.f32.mrf.mxu0
      %v2842 = vadd.f32 0.0, %v2841
      %v2843 = vpop.f32.mrf.mxu0
      %2844 = vmatprep.mubr.bf16.mxu0 0
      %2845 = vmatmul.mubr.bf16.gmra.mxu0 %v2721
      %v2846 = vpop.f32.mrf.mxu0
      %v2847 = vadd.f32 0.0, %v2846
      %v2848 = vpop.f32.mrf.mxu0
      %v2849 = vpop.f32.mrf.mxu0
      %v2850 = vadd.f32 0.0, %v2849
      %v2851 = vpop.f32.mrf.mxu0
      %2852 = vmatprep.mubr.bf16.mxu0 0
      %2853 = vmatmul.mubr.bf16.gmra.mxu0 %v2724
      %v2854 = vpop.f32.mrf.mxu0
      %v2855 = vadd.f32 0.0, %v2854
      %v2856 = vpop.f32.mrf.mxu0
      %v2857 = vpop.f32.mrf.mxu0
      %v2858 = vadd.f32 0.0, %v2857
      %v2859 = vpop.f32.mrf.mxu0
      %2860 = vmatprep.mubr.bf16.mxu0 0
      %2861 = vmatmul.mubr.bf16.gmra.mxu0 %v2727
      %v2862 = vpop.f32.mrf.mxu0
      %v2863 = vadd.f32 0.0, %v2862
      %v2864 = vpop.f32.mrf.mxu0
      %v2865 = vpop.f32.mrf.mxu0
      %v2866 = vadd.f32 0.0, %v2865
      %v2867 = vpop.f32.mrf.mxu0
      %2868 = vmatprep.mubr.bf16.mxu0 0
      %2869 = vmatmul.mubr.bf16.gmra.mxu0 %v2730
      %v2870 = vpop.f32.mrf.mxu0
      %v2871 = vadd.f32 0.0, %v2870
      %v2872 = vpop.f32.mrf.mxu0
      %v2873 = vpop.f32.mrf.mxu0
      %v2874 = vadd.f32 0.0, %v2873
      %v2875 = vpop.f32.mrf.mxu0
      %2876 = vmatprep.mubr.bf16.mxu0 0
      %2877 = vmatmul.mubr.bf16.gmra.mxu0 %v2733
      %v2878 = vpop.f32.mrf.mxu0
      %v2879 = vadd.f32 0.0, %v2878
      %v2880 = vpop.f32.mrf.mxu0
      %v2881 = vpop.f32.mrf.mxu0
      %v2882 = vadd.f32 0.0, %v2881
      %v2883 = vpop.f32.mrf.mxu0
      %2884 = vmatprep.mubr.bf16.mxu0 0
      %2885 = vmatmul.mubr.bf16.gmra.mxu0 %v2736
      %v2886 = vpop.f32.mrf.mxu0
      %v2887 = vadd.f32 0.0, %v2886
      %v2888 = vpop.f32.mrf.mxu0
      %v2889 = vpop.f32.mrf.mxu0
      %v2890 = vadd.f32 0.0, %v2889
      %v2891 = vpop.f32.mrf.mxu0
      %2892 = vmatprep.mubr.bf16.mxu0 0
      %2893 = vmatmul.mubr.bf16.gmra.mxu0 %v2739
      %v2894 = vpop.f32.mrf.mxu0
      %v2895 = vadd.f32 0.0, %v2894
      %v2896 = vpop.f32.mrf.mxu0
      %v2897 = vpop.f32.mrf.mxu0
      %v2898 = vadd.f32 0.0, %v2897
      %v2899 = vpop.f32.mrf.mxu0
      %2900 = vmatprep.mubr.bf16.mxu0 0
      %2901 = vmatmul.mubr.bf16.gmra.mxu0 %v2742
      %v2902 = vpop.f32.mrf.mxu0
      %v2903 = vadd.f32 0.0, %v2902
      %v2904 = vpop.f32.mrf.mxu0
      %v2905 = vpop.f32.mrf.mxu0
      %v2906 = vadd.f32 0.0, %v2905
      %v2907 = vpop.f32.mrf.mxu0
      %2908 = vmatprep.mubr.bf16.mxu0 0
      %2909 = vmatmul.mubr.bf16.gmra.mxu0 %v2745
      %v2910 = vpop.f32.mrf.mxu0
      %v2911 = vadd.f32 0.0, %v2910
      %v2912 = vpop.f32.mrf.mxu0
      %v2913 = vpop.f32.mrf.mxu0
      %v2914 = vadd.f32 0.0, %v2913
      %v2915 = vpop.f32.mrf.mxu0
      %2916 = vmatprep.mubr.bf16.mxu0 0
      %2917 = vmatmul.mubr.bf16.gmra.mxu0 %v2748
      %v2918 = vpop.f32.mrf.mxu0
      %v2919 = vadd.f32 0.0, %v2918
      %v2920 = vpop.f32.mrf.mxu0
      %v2921 = vpop.f32.mrf.mxu0
      %v2922 = vadd.f32 0.0, %v2921
      %v2923 = vpop.f32.mrf.mxu0
      %2924 = vmatprep.mubr.bf16.mxu0 0
      %2925 = vmatmul.mubr.bf16.gmra.mxu0 %v2751
      %v2926 = vpop.f32.mrf.mxu0
      %v2927 = vadd.f32 0.0, %v2926
      %v2928 = vpop.f32.mrf.mxu0
      %v2929 = vpop.f32.mrf.mxu0
      %v2930 = vadd.f32 0.0, %v2929
      %v2931 = vpop.f32.mrf.mxu0
      %2932 = vdwg.mxu0
      %v2933 = vadd.f32 %v2494, %v2791
      %v2934 = vadd.f32 %v2495, %v2794
      %v2935 = vadd.f32 %v2496, %v2799
      %v2936 = vadd.f32 %v2497, %v2802
      %v2937 = vadd.f32 %v2498, %v2807
      %v2938 = vadd.f32 %v2499, %v2810
      %v2939 = vadd.f32 %v2500, %v2815
      %v2940 = vadd.f32 %v2501, %v2818
      %v2941 = vadd.f32 %v2502, %v2823
      %v2942 = vadd.f32 %v2503, %v2826
      %v2943 = vadd.f32 %v2504, %v2831
      %v2944 = vadd.f32 %v2505, %v2834
      %v2945 = vadd.f32 %v2506, %v2839
      %v2946 = vadd.f32 %v2507, %v2842
      %v2947 = vadd.f32 %v2508, %v2847
      %v2948 = vadd.f32 %v2509, %v2850
      %v2949 = vadd.f32 %v2510, %v2855
      %v2950 = vadd.f32 %v2511, %v2858
      %v2951 = vadd.f32 %v2512, %v2863
      %v2952 = vadd.f32 %v2513, %v2866
      %v2953 = vadd.f32 %v2514, %v2871
      %v2954 = vadd.f32 %v2515, %v2874
      %v2955 = vadd.f32 %v2516, %v2879
      %v2956 = vadd.f32 %v2517, %v2882
      %v2957 = vadd.f32 %v2518, %v2887
      %v2958 = vadd.f32 %v2519, %v2890
      %v2959 = vadd.f32 %v2520, %v2895
      %v2960 = vadd.f32 %v2521, %v2898
      %v2961 = vadd.f32 %v2522, %v2903
      %v2962 = vadd.f32 %v2523, %v2906
      %v2963 = vadd.f32 %v2524, %v2911
      %v2964 = vadd.f32 %v2525, %v2914
      %v2965 = vadd.f32 %v2526, %v2919
      %v2966 = vadd.f32 %v2527, %v2922
      %v2967 = vadd.f32 %v2528, %v2927
      %v2968 = vadd.f32 %v2529, %v2930
      %v2969 = vld [vmem:[%s165 + $0xa0] sm:$0x3]
      %s2970 = scalar_lea.vmem %s1, 28
      %v2971 = vld [vmem:[%s2970] sm:$0xf]
      %v2973 = vunpack.c.l.b16 %v2969
      %v2974 = vpack.c.b16 %v2973, %v2973
      %vm2975 = vsmask.f32 5376
      %v2977 = vshrl.u32 %v2643, 16
      %v2979 = vrot.slane %v2977, 2
      %v2980 = vshll.u32 %v2643, 16
      %v2982 = vrot.slane %v2980, 3
      %v2983 = vor.u32 %v2979, %v2982
      %v2985 = vshrl.u32 %v2644, 16
      %v2987 = vrot.slane %v2985, 2
      %v2988 = vshll.u32 %v2644, 16
      %v2990 = vrot.slane %v2988, 3
      %v2991 = vor.u32 %v2987, %v2990
      %v2992 = vsel %vm2975, %v2983, %v2991
      %v2994 = vshrl.u32 %v2645, 16
      %v2996 = vrot.slane %v2994, 2
      %v2997 = vshll.u32 %v2645, 16
      %v2999 = vrot.slane %v2997, 3
      %v3000 = vor.u32 %v2996, %v2999
      %v3001 = vsel %vm2975, %v2991, %v3000
      %v3003 = vshrl.u32 %v2646, 16
      %v3005 = vrot.slane %v3003, 2
      %v3006 = vshll.u32 %v2646, 16
      %v3008 = vrot.slane %v3006, 3
      %v3009 = vor.u32 %v3005, %v3008
      %v3010 = vsel %vm2975, %v3000, %v3009
      %v3012 = vshrl.u32 %v2647, 16
      %v3014 = vrot.slane %v3012, 2
      %v3015 = vshll.u32 %v2647, 16
      %v3017 = vrot.slane %v3015, 3
      %v3018 = vor.u32 %v3014, %v3017
      %v3019 = vsel %vm2975, %v3009, %v3018
      %v3021 = vshrl.u32 %v2648, 16
      %v3023 = vrot.slane %v3021, 2
      %v3024 = vshll.u32 %v2648, 16
      %v3026 = vrot.slane %v3024, 3
      %v3027 = vor.u32 %v3023, %v3026
      %v3028 = vsel %vm2975, %v3018, %v3027
      %v3030 = vshrl.u32 %v2649, 16
      %v3032 = vrot.slane %v3030, 2
      %v3033 = vshll.u32 %v2649, 16
      %v3035 = vrot.slane %v3033, 3
      %v3036 = vor.u32 %v3032, %v3035
      %v3037 = vsel %vm2975, %v3027, %v3036
      %v3039 = vshrl.u32 %v2650, 16
      %v3041 = vrot.slane %v3039, 2
      %v3042 = vshll.u32 %v2650, 16
      %v3044 = vrot.slane %v3042, 3
      %v3045 = vor.u32 %v3041, %v3044
      %v3046 = vsel %vm2975, %v3036, %v3045
      %v3048 = vshrl.u32 %v2651, 16
      %v3050 = vrot.slane %v3048, 2
      %v3051 = vshll.u32 %v2651, 16
      %v3053 = vrot.slane %v3051, 3
      %v3054 = vor.u32 %v3050, %v3053
      %v3055 = vsel %vm2975, %v3045, %v3054
      %v3057 = vshrl.u32 %v2652, 16
      %v3059 = vrot.slane %v3057, 2
      %v3060 = vshll.u32 %v2652, 16
      %v3062 = vrot.slane %v3060, 3
      %v3063 = vor.u32 %v3059, %v3062
      %v3064 = vsel %vm2975, %v3054, %v3063
      %v3066 = vshrl.u32 %v2653, 16
      %v3068 = vrot.slane %v3066, 2
      %v3069 = vshll.u32 %v2653, 16
      %v3071 = vrot.slane %v3069, 3
      %v3072 = vor.u32 %v3068, %v3071
      %v3073 = vsel %vm2975, %v3063, %v3072
      %v3075 = vshrl.u32 %v2654, 16
      %v3077 = vrot.slane %v3075, 2
      %v3078 = vshll.u32 %v2654, 16
      %v3080 = vrot.slane %v3078, 3
      %v3081 = vor.u32 %v3077, %v3080
      %v3082 = vsel %vm2975, %v3072, %v3081
      %v3084 = vshrl.u32 %v2655, 16
      %v3086 = vrot.slane %v3084, 2
      %v3087 = vshll.u32 %v2655, 16
      %v3089 = vrot.slane %v3087, 3
      %v3090 = vor.u32 %v3086, %v3089
      %v3091 = vsel %vm2975, %v3081, %v3090
      %v3093 = vshrl.u32 %v2656, 16
      %v3095 = vrot.slane %v3093, 2
      %v3096 = vshll.u32 %v2656, 16
      %v3098 = vrot.slane %v3096, 3
      %v3099 = vor.u32 %v3095, %v3098
      %v3100 = vsel %vm2975, %v3090, %v3099
      %v3102 = vshrl.u32 %v2657, 16
      %v3104 = vrot.slane %v3102, 2
      %v3105 = vshll.u32 %v2657, 16
      %v3107 = vrot.slane %v3105, 3
      %v3108 = vor.u32 %v3104, %v3107
      %v3109 = vsel %vm2975, %v3099, %v3108
      %v3111 = vshrl.u32 %v2658, 16
      %v3113 = vrot.slane %v3111, 2
      %v3114 = vshll.u32 %v2658, 16
      %v3116 = vrot.slane %v3114, 3
      %v3117 = vor.u32 %v3113, %v3116
      %v3118 = vsel %vm2975, %v3108, %v3117
      %v3120 = vshrl.u32 %v2659, 16
      %v3122 = vrot.slane %v3120, 2
      %v3123 = vshll.u32 %v2659, 16
      %v3125 = vrot.slane %v3123, 3
      %v3126 = vor.u32 %v3122, %v3125
      %v3127 = vsel %vm2975, %v3117, %v3126
      %v3129 = vshrl.u32 %v2660, 16
      %v3131 = vrot.slane %v3129, 2
      %v3132 = vshll.u32 %v2660, 16
      %v3134 = vrot.slane %v3132, 3
      %v3135 = vor.u32 %v3131, %v3134
      %v3136 = vsel %vm2975, %v3126, %v3135
      %v3138 = vshrl.u32 %v2974, 16
      %v3140 = vrot.slane %v3138, 2
      %v3141 = vshll.u32 %v2974, 16
      %v3143 = vrot.slane %v3141, 3
      %v3144 = vor.u32 %v3140, %v3143
      %v3145 = vsel %vm2975, %v3135, %v3144
      %v3147 = vsel %vm446, %v2992, 0
      %v3150 = vsel %vm446, %v3001, 0
      %v3153 = vsel %vm446, %v3010, 0
      %v3156 = vsel %vm446, %v3019, 0
      %v3159 = vsel %vm446, %v3028, 0
      %v3162 = vsel %vm446, %v3037, 0
      %v3165 = vsel %vm446, %v3046, 0
      %v3168 = vsel %vm446, %v3055, 0
      %v3171 = vsel %vm446, %v3064, 0
      %v3174 = vsel %vm446, %v3073, 0
      %v3177 = vsel %vm446, %v3082, 0
      %v3180 = vsel %vm446, %v3091, 0
      %v3183 = vsel %vm446, %v3100, 0
      %v3186 = vsel %vm446, %v3109, 0
      %v3189 = vsel %vm446, %v3118, 0
      %v3192 = vsel %vm446, %v3127, 0
      %v3195 = vsel %vm446, %v3136, 0
      %v3198 = vsel %vm446, %v3145, 0
      %v3201 = vsel %vm501, %v2971, 0
      %3203 = vmatprep.subr.bf16.mxu0 0
      %3204 = vmatpush1.bf16.msra.mxu0 0
      %3205 = vmatprep.subr.bf16.mxu0 0
      %3206 = vmatpush1.bf16.msra.mxu0 0
      %3207 = vmatprep.subr.bf16.mxu0 0
      %3208 = vmatpush1.bf16.msra.mxu0 0
      %3209 = vmatprep.subr.bf16.mxu0 0
      %3210 = vmatpush1.bf16.msra.mxu0 0
      %3211 = vmatprep.subr.bf16.mxu0 0
      %3212 = vmatpush1.bf16.msra.mxu0 0
      %3213 = vmatprep.subr.bf16.mxu0 0
      %3214 = vmatpush1.bf16.msra.mxu0 0
      %3215 = vmatprep.subr.bf16.mxu0 0
      %3216 = vmatpush1.bf16.msra.mxu0 0
      %3217 = vmatprep.subr.bf16.mxu0 0
      %3218 = vmatpush1.bf16.msra.mxu0 %v3201
      %3219 = vmatprep.subr.bf16.mxu0 0
      %3220 = vmatpush2.bf16.msra.mxu0 0
      %3221 = vmatprep.subr.bf16.mxu0 0
      %3222 = vmatpush2.bf16.msra.mxu0 0
      %3223 = vmatprep.subr.bf16.mxu0 0
      %3224 = vmatpush2.bf16.msra.mxu0 0
      %3225 = vmatprep.subr.bf16.mxu0 0
      %3226 = vmatpush2.bf16.msra.mxu0 0
      %3227 = vmatprep.subr.bf16.mxu0 0
      %3228 = vmatpush2.bf16.msra.mxu0 0
      %3229 = vmatprep.subr.bf16.mxu0 0
      %3230 = vmatpush2.bf16.msra.mxu0 0
      %3231 = vmatprep.subr.bf16.mxu0 0
      %3232 = vmatpush2.bf16.msra.mxu0 0
      %3233 = vmatprep.subr.bf16.mxu0 0
      %3234 = vmatpush2.bf16.msra.mxu0 0
      %3235 = vmatprep.mubr.bf16.mxu0 0
      %3236 = vmatmul.mubr.bf16.gmra.mxu0 %v3147
      %v3237 = vpop.f32.mrf.mxu0
      %v3238 = vadd.f32 0.0, %v3237
      %v3239 = vpop.f32.mrf.mxu0
      %v3240 = vpop.f32.mrf.mxu0
      %v3241 = vadd.f32 0.0, %v3240
      %v3242 = vpop.f32.mrf.mxu0
      %3243 = vmatprep.mubr.bf16.mxu0 0
      %3244 = vmatmul.mubr.bf16.gmra.mxu0 %v3150
      %v3245 = vpop.f32.mrf.mxu0
      %v3246 = vadd.f32 0.0, %v3245
      %v3247 = vpop.f32.mrf.mxu0
      %v3248 = vpop.f32.mrf.mxu0
      %v3249 = vadd.f32 0.0, %v3248
      %v3250 = vpop.f32.mrf.mxu0
      %3251 = vmatprep.mubr.bf16.mxu0 0
      %3252 = vmatmul.mubr.bf16.gmra.mxu0 %v3153
      %v3253 = vpop.f32.mrf.mxu0
      %v3254 = vadd.f32 0.0, %v3253
      %v3255 = vpop.f32.mrf.mxu0
      %v3256 = vpop.f32.mrf.mxu0
      %v3257 = vadd.f32 0.0, %v3256
      %v3258 = vpop.f32.mrf.mxu0
      %3259 = vmatprep.mubr.bf16.mxu0 0
      %3260 = vmatmul.mubr.bf16.gmra.mxu0 %v3156
      %v3261 = vpop.f32.mrf.mxu0
      %v3262 = vadd.f32 0.0, %v3261
      %v3263 = vpop.f32.mrf.mxu0
      %v3264 = vpop.f32.mrf.mxu0
      %v3265 = vadd.f32 0.0, %v3264
      %v3266 = vpop.f32.mrf.mxu0
      %3267 = vmatprep.mubr.bf16.mxu0 0
      %3268 = vmatmul.mubr.bf16.gmra.mxu0 %v3159
      %v3269 = vpop.f32.mrf.mxu0
      %v3270 = vadd.f32 0.0, %v3269
      %v3271 = vpop.f32.mrf.mxu0
      %v3272 = vpop.f32.mrf.mxu0
      %v3273 = vadd.f32 0.0, %v3272
      %v3274 = vpop.f32.mrf.mxu0
      %3275 = vmatprep.mubr.bf16.mxu0 0
      %3276 = vmatmul.mubr.bf16.gmra.mxu0 %v3162
      %v3277 = vpop.f32.mrf.mxu0
      %v3278 = vadd.f32 0.0, %v3277
      %v3279 = vpop.f32.mrf.mxu0
      %v3280 = vpop.f32.mrf.mxu0
      %v3281 = vadd.f32 0.0, %v3280
      %v3282 = vpop.f32.mrf.mxu0
      %3283 = vmatprep.mubr.bf16.mxu0 0
      %3284 = vmatmul.mubr.bf16.gmra.mxu0 %v3165
      %v3285 = vpop.f32.mrf.mxu0
      %v3286 = vadd.f32 0.0, %v3285
      %v3287 = vpop.f32.mrf.mxu0
      %v3288 = vpop.f32.mrf.mxu0
      %v3289 = vadd.f32 0.0, %v3288
      %v3290 = vpop.f32.mrf.mxu0
      %3291 = vmatprep.mubr.bf16.mxu0 0
      %3292 = vmatmul.mubr.bf16.gmra.mxu0 %v3168
      %v3293 = vpop.f32.mrf.mxu0
      %v3294 = vadd.f32 0.0, %v3293
      %v3295 = vpop.f32.mrf.mxu0
      %v3296 = vpop.f32.mrf.mxu0
      %v3297 = vadd.f32 0.0, %v3296
      %v3298 = vpop.f32.mrf.mxu0
      %3299 = vmatprep.mubr.bf16.mxu0 0
      %3300 = vmatmul.mubr.bf16.gmra.mxu0 %v3171
      %v3301 = vpop.f32.mrf.mxu0
      %v3302 = vadd.f32 0.0, %v3301
      %v3303 = vpop.f32.mrf.mxu0
      %v3304 = vpop.f32.mrf.mxu0
      %v3305 = vadd.f32 0.0, %v3304
      %v3306 = vpop.f32.mrf.mxu0
      %3307 = vmatprep.mubr.bf16.mxu0 0
      %3308 = vmatmul.mubr.bf16.gmra.mxu0 %v3174
      %v3309 = vpop.f32.mrf.mxu0
      %v3310 = vadd.f32 0.0, %v3309
      %v3311 = vpop.f32.mrf.mxu0
      %v3312 = vpop.f32.mrf.mxu0
      %v3313 = vadd.f32 0.0, %v3312
      %v3314 = vpop.f32.mrf.mxu0
      %3315 = vmatprep.mubr.bf16.mxu0 0
      %3316 = vmatmul.mubr.bf16.gmra.mxu0 %v3177
      %v3317 = vpop.f32.mrf.mxu0
      %v3318 = vadd.f32 0.0, %v3317
      %v3319 = vpop.f32.mrf.mxu0
      %v3320 = vpop.f32.mrf.mxu0
      %v3321 = vadd.f32 0.0, %v3320
      %v3322 = vpop.f32.mrf.mxu0
      %3323 = vmatprep.mubr.bf16.mxu0 0
      %3324 = vmatmul.mubr.bf16.gmra.mxu0 %v3180
      %v3325 = vpop.f32.mrf.mxu0
      %v3326 = vadd.f32 0.0, %v3325
      %v3327 = vpop.f32.mrf.mxu0
      %v3328 = vpop.f32.mrf.mxu0
      %v3329 = vadd.f32 0.0, %v3328
      %v3330 = vpop.f32.mrf.mxu0
      %3331 = vmatprep.mubr.bf16.mxu0 0
      %3332 = vmatmul.mubr.bf16.gmra.mxu0 %v3183
      %v3333 = vpop.f32.mrf.mxu0
      %v3334 = vadd.f32 0.0, %v3333
      %v3335 = vpop.f32.mrf.mxu0
      %v3336 = vpop.f32.mrf.mxu0
      %v3337 = vadd.f32 0.0, %v3336
      %v3338 = vpop.f32.mrf.mxu0
      %3339 = vmatprep.mubr.bf16.mxu0 0
      %3340 = vmatmul.mubr.bf16.gmra.mxu0 %v3186
      %v3341 = vpop.f32.mrf.mxu0
      %v3342 = vadd.f32 0.0, %v3341
      %v3343 = vpop.f32.mrf.mxu0
      %v3344 = vpop.f32.mrf.mxu0
      %v3345 = vadd.f32 0.0, %v3344
      %v3346 = vpop.f32.mrf.mxu0
      %3347 = vmatprep.mubr.bf16.mxu0 0
      %3348 = vmatmul.mubr.bf16.gmra.mxu0 %v3189
      %v3349 = vpop.f32.mrf.mxu0
      %v3350 = vadd.f32 0.0, %v3349
      %v3351 = vpop.f32.mrf.mxu0
      %v3352 = vpop.f32.mrf.mxu0
      %v3353 = vadd.f32 0.0, %v3352
      %v3354 = vpop.f32.mrf.mxu0
      %3355 = vmatprep.mubr.bf16.mxu0 0
      %3356 = vmatmul.mubr.bf16.gmra.mxu0 %v3192
      %v3357 = vpop.f32.mrf.mxu0
      %v3358 = vadd.f32 0.0, %v3357
      %v3359 = vpop.f32.mrf.mxu0
      %v3360 = vpop.f32.mrf.mxu0
      %v3361 = vadd.f32 0.0, %v3360
      %v3362 = vpop.f32.mrf.mxu0
      %3363 = vmatprep.mubr.bf16.mxu0 0
      %3364 = vmatmul.mubr.bf16.gmra.mxu0 %v3195
      %v3365 = vpop.f32.mrf.mxu0
      %v3366 = vadd.f32 0.0, %v3365
      %v3367 = vpop.f32.mrf.mxu0
      %v3368 = vpop.f32.mrf.mxu0
      %v3369 = vadd.f32 0.0, %v3368
      %v3370 = vpop.f32.mrf.mxu0
      %3371 = vmatprep.mubr.bf16.mxu0 0
      %3372 = vmatmul.mubr.bf16.gmra.mxu0 %v3198
      %v3373 = vpop.f32.mrf.mxu0
      %v3374 = vadd.f32 0.0, %v3373
      %v3375 = vpop.f32.mrf.mxu0
      %v3376 = vpop.f32.mrf.mxu0
      %v3377 = vadd.f32 0.0, %v3376
      %v3378 = vpop.f32.mrf.mxu0
      %3379 = vdwg.mxu0
      %v3380 = vadd.f32 %v2933, %v3238
      %v3381 = vadd.f32 %v2934, %v3241
      %v3382 = vadd.f32 %v2935, %v3246
      %v3383 = vadd.f32 %v2936, %v3249
      %v3384 = vadd.f32 %v2937, %v3254
      %v3385 = vadd.f32 %v2938, %v3257
      %v3386 = vadd.f32 %v2939, %v3262
      %v3387 = vadd.f32 %v2940, %v3265
      %v3388 = vadd.f32 %v2941, %v3270
      %v3389 = vadd.f32 %v2942, %v3273
      %v3390 = vadd.f32 %v2943, %v3278
      %v3391 = vadd.f32 %v2944, %v3281
      %v3392 = vadd.f32 %v2945, %v3286
      %v3393 = vadd.f32 %v2946, %v3289
      %v3394 = vadd.f32 %v2947, %v3294
      %v3395 = vadd.f32 %v2948, %v3297
      %v3396 = vadd.f32 %v2949, %v3302
      %v3397 = vadd.f32 %v2950, %v3305
      %v3398 = vadd.f32 %v2951, %v3310
      %v3399 = vadd.f32 %v2952, %v3313
      %v3400 = vadd.f32 %v2953, %v3318
      %v3401 = vadd.f32 %v2954, %v3321
      %v3402 = vadd.f32 %v2955, %v3326
      %v3403 = vadd.f32 %v2956, %v3329
      %v3404 = vadd.f32 %v2957, %v3334
      %v3405 = vadd.f32 %v2958, %v3337
      %v3406 = vadd.f32 %v2959, %v3342
      %v3407 = vadd.f32 %v2960, %v3345
      %v3408 = vadd.f32 %v2961, %v3350
      %v3409 = vadd.f32 %v2962, %v3353
      %v3410 = vadd.f32 %v2963, %v3358
      %v3411 = vadd.f32 %v2964, %v3361
      %v3412 = vadd.f32 %v2965, %v3366
      %v3413 = vadd.f32 %v2966, %v3369
      %v3414 = vadd.f32 %v2967, %v3374
      %v3415 = vadd.f32 %v2968, %v3377
      %v3416 = vld [vmem:[%s165 + $0x10] sm:$0x8]
      %s3417 = scalar_lea.vmem %s1, 32
      %v3418 = vld [vmem:[%s3417] sm:$0xf]
      %v3420 = vunpack.c.l.b16 %v3416
      %v3421 = vpack.c.b16 %v2607, %v3420
      %vm3422 = vcmask 1044480
      %v3423 = vrot.slane %v3421, 3
      %v3424 = vrot.slane %v2644, 3
      %v3425 = vsel %vm3422, %v3423, %v3424
      %v3426 = vrot.slane %v2645, 3
      %v3427 = vsel %vm3422, %v3424, %v3426
      %v3428 = vrot.slane %v2646, 3
      %v3429 = vsel %vm3422, %v3426, %v3428
      %v3430 = vrot.slane %v2647, 3
      %v3431 = vsel %vm3422, %v3428, %v3430
      %v3432 = vrot.slane %v2648, 3
      %v3433 = vsel %vm3422, %v3430, %v3432
      %v3434 = vrot.slane %v2649, 3
      %v3435 = vsel %vm3422, %v3432, %v3434
      %v3436 = vrot.slane %v2650, 3
      %v3437 = vsel %vm3422, %v3434, %v3436
      %v3438 = vrot.slane %v2651, 3
      %v3439 = vsel %vm3422, %v3436, %v3438
      %v3440 = vrot.slane %v2652, 3
      %v3441 = vsel %vm3422, %v3438, %v3440
      %v3442 = vrot.slane %v2653, 3
      %v3443 = vsel %vm3422, %v3440, %v3442
      %v3444 = vrot.slane %v2654, 3
      %v3445 = vsel %vm3422, %v3442, %v3444
      %v3446 = vrot.slane %v2655, 3
      %v3447 = vsel %vm3422, %v3444, %v3446
      %v3448 = vrot.slane %v2656, 3
      %v3449 = vsel %vm3422, %v3446, %v3448
      %v3450 = vrot.slane %v2657, 3
      %v3451 = vsel %vm3422, %v3448, %v3450
      %v3452 = vrot.slane %v2658, 3
      %v3453 = vsel %vm3422, %v3450, %v3452
      %v3454 = vrot.slane %v2659, 3
      %v3455 = vsel %vm3422, %v3452, %v3454
      %v3456 = vrot.slane %v2660, 3
      %v3457 = vsel %vm3422, %v3454, %v3456
      %v3458 = vrot.slane %v2974, 3
      %v3459 = vsel %vm3422, %v3456, %v3458
      %v3461 = vsel %vm446, %v3425, 0
      %v3464 = vsel %vm446, %v3427, 0
      %v3467 = vsel %vm446, %v3429, 0
      %v3470 = vsel %vm446, %v3431, 0
      %v3473 = vsel %vm446, %v3433, 0
      %v3476 = vsel %vm446, %v3435, 0
      %v3479 = vsel %vm446, %v3437, 0
      %v3482 = vsel %vm446, %v3439, 0
      %v3485 = vsel %vm446, %v3441, 0
      %v3488 = vsel %vm446, %v3443, 0
      %v3491 = vsel %vm446, %v3445, 0
      %v3494 = vsel %vm446, %v3447, 0
      %v3497 = vsel %vm446, %v3449, 0
      %v3500 = vsel %vm446, %v3451, 0
      %v3503 = vsel %vm446, %v3453, 0
      %v3506 = vsel %vm446, %v3455, 0
      %v3509 = vsel %vm446, %v3457, 0
      %v3512 = vsel %vm446, %v3459, 0
      %v3515 = vsel %vm501, %v3418, 0
      %3517 = vmatprep.subr.bf16.mxu0 0
      %3518 = vmatpush1.bf16.msra.mxu0 0
      %3519 = vmatprep.subr.bf16.mxu0 0
      %3520 = vmatpush1.bf16.msra.mxu0 0
      %3521 = vmatprep.subr.bf16.mxu0 0
      %3522 = vmatpush1.bf16.msra.mxu0 0
      %3523 = vmatprep.subr.bf16.mxu0 0
      %3524 = vmatpush1.bf16.msra.mxu0 0
      %3525 = vmatprep.subr.bf16.mxu0 0
      %3526 = vmatpush1.bf16.msra.mxu0 0
      %3527 = vmatprep.subr.bf16.mxu0 0
      %3528 = vmatpush1.bf16.msra.mxu0 0
      %3529 = vmatprep.subr.bf16.mxu0 0
      %3530 = vmatpush1.bf16.msra.mxu0 0
      %3531 = vmatprep.subr.bf16.mxu0 0
      %3532 = vmatpush1.bf16.msra.mxu0 %v3515
      %3533 = vmatprep.subr.bf16.mxu0 0
      %3534 = vmatpush2.bf16.msra.mxu0 0
      %3535 = vmatprep.subr.bf16.mxu0 0
      %3536 = vmatpush2.bf16.msra.mxu0 0
      %3537 = vmatprep.subr.bf16.mxu0 0
      %3538 = vmatpush2.bf16.msra.mxu0 0
      %3539 = vmatprep.subr.bf16.mxu0 0
      %3540 = vmatpush2.bf16.msra.mxu0 0
      %3541 = vmatprep.subr.bf16.mxu0 0
      %3542 = vmatpush2.bf16.msra.mxu0 0
      %3543 = vmatprep.subr.bf16.mxu0 0
      %3544 = vmatpush2.bf16.msra.mxu0 0
      %3545 = vmatprep.subr.bf16.mxu0 0
      %3546 = vmatpush2.bf16.msra.mxu0 0
      %3547 = vmatprep.subr.bf16.mxu0 0
      %3548 = vmatpush2.bf16.msra.mxu0 0
      %3549 = vmatprep.mubr.bf16.mxu0 0
      %3550 = vmatmul.mubr.bf16.gmra.mxu0 %v3461
      %v3551 = vpop.f32.mrf.mxu0
      %v3552 = vadd.f32 0.0, %v3551
      %v3553 = vpop.f32.mrf.mxu0
      %v3554 = vpop.f32.mrf.mxu0
      %v3555 = vadd.f32 0.0, %v3554
      %v3556 = vpop.f32.mrf.mxu0
      %3557 = vmatprep.mubr.bf16.mxu0 0
      %3558 = vmatmul.mubr.bf16.gmra.mxu0 %v3464
      %v3559 = vpop.f32.mrf.mxu0
      %v3560 = vadd.f32 0.0, %v3559
      %v3561 = vpop.f32.mrf.mxu0
      %v3562 = vpop.f32.mrf.mxu0
      %v3563 = vadd.f32 0.0, %v3562
      %v3564 = vpop.f32.mrf.mxu0
      %3565 = vmatprep.mubr.bf16.mxu0 0
      %3566 = vmatmul.mubr.bf16.gmra.mxu0 %v3467
      %v3567 = vpop.f32.mrf.mxu0
      %v3568 = vadd.f32 0.0, %v3567
      %v3569 = vpop.f32.mrf.mxu0
      %v3570 = vpop.f32.mrf.mxu0
      %v3571 = vadd.f32 0.0, %v3570
      %v3572 = vpop.f32.mrf.mxu0
      %3573 = vmatprep.mubr.bf16.mxu0 0
      %3574 = vmatmul.mubr.bf16.gmra.mxu0 %v3470
      %v3575 = vpop.f32.mrf.mxu0
      %v3576 = vadd.f32 0.0, %v3575
      %v3577 = vpop.f32.mrf.mxu0
      %v3578 = vpop.f32.mrf.mxu0
      %v3579 = vadd.f32 0.0, %v3578
      %v3580 = vpop.f32.mrf.mxu0
      %3581 = vmatprep.mubr.bf16.mxu0 0
      %3582 = vmatmul.mubr.bf16.gmra.mxu0 %v3473
      %v3583 = vpop.f32.mrf.mxu0
      %v3584 = vadd.f32 0.0, %v3583
      %v3585 = vpop.f32.mrf.mxu0
      %v3586 = vpop.f32.mrf.mxu0
      %v3587 = vadd.f32 0.0, %v3586
      %v3588 = vpop.f32.mrf.mxu0
      %3589 = vmatprep.mubr.bf16.mxu0 0
      %3590 = vmatmul.mubr.bf16.gmra.mxu0 %v3476
      %v3591 = vpop.f32.mrf.mxu0
      %v3592 = vadd.f32 0.0, %v3591
      %v3593 = vpop.f32.mrf.mxu0
      %v3594 = vpop.f32.mrf.mxu0
      %v3595 = vadd.f32 0.0, %v3594
      %v3596 = vpop.f32.mrf.mxu0
      %3597 = vmatprep.mubr.bf16.mxu0 0
      %3598 = vmatmul.mubr.bf16.gmra.mxu0 %v3479
      %v3599 = vpop.f32.mrf.mxu0
      %v3600 = vadd.f32 0.0, %v3599
      %v3601 = vpop.f32.mrf.mxu0
      %v3602 = vpop.f32.mrf.mxu0
      %v3603 = vadd.f32 0.0, %v3602
      %v3604 = vpop.f32.mrf.mxu0
      %3605 = vmatprep.mubr.bf16.mxu0 0
      %3606 = vmatmul.mubr.bf16.gmra.mxu0 %v3482
      %v3607 = vpop.f32.mrf.mxu0
      %v3608 = vadd.f32 0.0, %v3607
      %v3609 = vpop.f32.mrf.mxu0
      %v3610 = vpop.f32.mrf.mxu0
      %v3611 = vadd.f32 0.0, %v3610
      %v3612 = vpop.f32.mrf.mxu0
      %3613 = vmatprep.mubr.bf16.mxu0 0
      %3614 = vmatmul.mubr.bf16.gmra.mxu0 %v3485
      %v3615 = vpop.f32.mrf.mxu0
      %v3616 = vadd.f32 0.0, %v3615
      %v3617 = vpop.f32.mrf.mxu0
      %v3618 = vpop.f32.mrf.mxu0
      %v3619 = vadd.f32 0.0, %v3618
      %v3620 = vpop.f32.mrf.mxu0
      %3621 = vmatprep.mubr.bf16.mxu0 0
      %3622 = vmatmul.mubr.bf16.gmra.mxu0 %v3488
      %v3623 = vpop.f32.mrf.mxu0
      %v3624 = vadd.f32 0.0, %v3623
      %v3625 = vpop.f32.mrf.mxu0
      %v3626 = vpop.f32.mrf.mxu0
      %v3627 = vadd.f32 0.0, %v3626
      %v3628 = vpop.f32.mrf.mxu0
      %3629 = vmatprep.mubr.bf16.mxu0 0
      %3630 = vmatmul.mubr.bf16.gmra.mxu0 %v3491
      %v3631 = vpop.f32.mrf.mxu0
      %v3632 = vadd.f32 0.0, %v3631
      %v3633 = vpop.f32.mrf.mxu0
      %v3634 = vpop.f32.mrf.mxu0
      %v3635 = vadd.f32 0.0, %v3634
      %v3636 = vpop.f32.mrf.mxu0
      %3637 = vmatprep.mubr.bf16.mxu0 0
      %3638 = vmatmul.mubr.bf16.gmra.mxu0 %v3494
      %v3639 = vpop.f32.mrf.mxu0
      %v3640 = vadd.f32 0.0, %v3639
      %v3641 = vpop.f32.mrf.mxu0
      %v3642 = vpop.f32.mrf.mxu0
      %v3643 = vadd.f32 0.0, %v3642
      %v3644 = vpop.f32.mrf.mxu0
      %3645 = vmatprep.mubr.bf16.mxu0 0
      %3646 = vmatmul.mubr.bf16.gmra.mxu0 %v3497
      %v3647 = vpop.f32.mrf.mxu0
      %v3648 = vadd.f32 0.0, %v3647
      %v3649 = vpop.f32.mrf.mxu0
      %v3650 = vpop.f32.mrf.mxu0
      %v3651 = vadd.f32 0.0, %v3650
      %v3652 = vpop.f32.mrf.mxu0
      %3653 = vmatprep.mubr.bf16.mxu0 0
      %3654 = vmatmul.mubr.bf16.gmra.mxu0 %v3500
      %v3655 = vpop.f32.mrf.mxu0
      %v3656 = vadd.f32 0.0, %v3655
      %v3657 = vpop.f32.mrf.mxu0
      %v3658 = vpop.f32.mrf.mxu0
      %v3659 = vadd.f32 0.0, %v3658
      %v3660 = vpop.f32.mrf.mxu0
      %3661 = vmatprep.mubr.bf16.mxu0 0
      %3662 = vmatmul.mubr.bf16.gmra.mxu0 %v3503
      %v3663 = vpop.f32.mrf.mxu0
      %v3664 = vadd.f32 0.0, %v3663
      %v3665 = vpop.f32.mrf.mxu0
      %v3666 = vpop.f32.mrf.mxu0
      %v3667 = vadd.f32 0.0, %v3666
      %v3668 = vpop.f32.mrf.mxu0
      %3669 = vmatprep.mubr.bf16.mxu0 0
      %3670 = vmatmul.mubr.bf16.gmra.mxu0 %v3506
      %v3671 = vpop.f32.mrf.mxu0
      %v3672 = vadd.f32 0.0, %v3671
      %v3673 = vpop.f32.mrf.mxu0
      %v3674 = vpop.f32.mrf.mxu0
      %v3675 = vadd.f32 0.0, %v3674
      %v3676 = vpop.f32.mrf.mxu0
      %3677 = vmatprep.mubr.bf16.mxu0 0
      %3678 = vmatmul.mubr.bf16.gmra.mxu0 %v3509
      %v3679 = vpop.f32.mrf.mxu0
      %v3680 = vadd.f32 0.0, %v3679
      %v3681 = vpop.f32.mrf.mxu0
      %v3682 = vpop.f32.mrf.mxu0
      %v3683 = vadd.f32 0.0, %v3682
      %v3684 = vpop.f32.mrf.mxu0
      %3685 = vmatprep.mubr.bf16.mxu0 0
      %3686 = vmatmul.mubr.bf16.gmra.mxu0 %v3512
      %v3687 = vpop.f32.mrf.mxu0
      %v3688 = vadd.f32 0.0, %v3687
      %v3689 = vpop.f32.mrf.mxu0
      %v3690 = vpop.f32.mrf.mxu0
      %v3691 = vadd.f32 0.0, %v3690
      %v3692 = vpop.f32.mrf.mxu0
      %3693 = vdwg.mxu0
      %v3694 = vadd.f32 %v3380, %v3552
      %v3695 = vadd.f32 %v3381, %v3555
      %v3696 = vadd.f32 %v3382, %v3560
      %v3697 = vadd.f32 %v3383, %v3563
      %v3698 = vadd.f32 %v3384, %v3568
      %v3699 = vadd.f32 %v3385, %v3571
      %v3700 = vadd.f32 %v3386, %v3576
      %v3701 = vadd.f32 %v3387, %v3579
      %v3702 = vadd.f32 %v3388, %v3584
      %v3703 = vadd.f32 %v3389, %v3587
      %v3704 = vadd.f32 %v3390, %v3592
      %v3705 = vadd.f32 %v3391, %v3595
      %v3706 = vadd.f32 %v3392, %v3600
      %v3707 = vadd.f32 %v3393, %v3603
      %v3708 = vadd.f32 %v3394, %v3608
      %v3709 = vadd.f32 %v3395, %v3611
      %v3710 = vadd.f32 %v3396, %v3616
      %v3711 = vadd.f32 %v3397, %v3619
      %v3712 = vadd.f32 %v3398, %v3624
      %v3713 = vadd.f32 %v3399, %v3627
      %v3714 = vadd.f32 %v3400, %v3632
      %v3715 = vadd.f32 %v3401, %v3635
      %v3716 = vadd.f32 %v3402, %v3640
      %v3717 = vadd.f32 %v3403, %v3643
      %v3718 = vadd.f32 %v3404, %v3648
      %v3719 = vadd.f32 %v3405, %v3651
      %v3720 = vadd.f32 %v3406, %v3656
      %v3721 = vadd.f32 %v3407, %v3659
      %v3722 = vadd.f32 %v3408, %v3664
      %v3723 = vadd.f32 %v3409, %v3667
      %v3724 = vadd.f32 %v3410, %v3672
      %v3725 = vadd.f32 %v3411, %v3675
      %v3726 = vadd.f32 %v3412, %v3680
      %v3727 = vadd.f32 %v3413, %v3683
      %v3728 = vadd.f32 %v3414, %v3688
      %v3729 = vadd.f32 %v3415, %v3691
      %v3730 = vld [vmem:[%s2] sm:$0x1]
      %v3732 = vlaneseq
      %v3733 = vshrl.u32 %v3732, 7
      %v3734 = vsub.s32 0, %v3733
      %v3735 = vrot.slane %v3730, %v3734
      %v3737 = vadd.f32 %v3694, %v3735
      %v3738 = vadd.f32 %v3695, %v3735
      %v3739 = vadd.f32 %v3696, %v3735
      %v3740 = vadd.f32 %v3697, %v3735
      %v3741 = vadd.f32 %v3698, %v3735
      %v3742 = vadd.f32 %v3699, %v3735
      %v3743 = vadd.f32 %v3700, %v3735
      %v3744 = vadd.f32 %v3701, %v3735
      %v3745 = vadd.f32 %v3702, %v3735
      %v3746 = vadd.f32 %v3703, %v3735
      %v3747 = vadd.f32 %v3704, %v3735
      %v3748 = vadd.f32 %v3705, %v3735
      %v3749 = vadd.f32 %v3706, %v3735
      %v3750 = vadd.f32 %v3707, %v3735
      %v3751 = vadd.f32 %v3708, %v3735
      %v3752 = vadd.f32 %v3709, %v3735
      %v3753 = vadd.f32 %v3710, %v3735
      %v3754 = vadd.f32 %v3711, %v3735
      %v3755 = vadd.f32 %v3712, %v3735
      %v3756 = vadd.f32 %v3713, %v3735
      %v3757 = vadd.f32 %v3714, %v3735
      %v3758 = vadd.f32 %v3715, %v3735
      %v3759 = vadd.f32 %v3716, %v3735
      %v3760 = vadd.f32 %v3717, %v3735
      %v3761 = vadd.f32 %v3718, %v3735
      %v3762 = vadd.f32 %v3719, %v3735
      %v3763 = vadd.f32 %v3720, %v3735
      %v3764 = vadd.f32 %v3721, %v3735
      %v3765 = vadd.f32 %v3722, %v3735
      %v3766 = vadd.f32 %v3723, %v3735
      %v3767 = vadd.f32 %v3724, %v3735
      %v3768 = vadd.f32 %v3725, %v3735
      %v3769 = vadd.f32 %v3726, %v3735
      %v3770 = vadd.f32 %v3727, %v3735
      %v3771 = vadd.f32 %v3728, %v3735
      %v3772 = vadd.f32 %v3729, %v3735
      %v3773 = vmax.f32 %v3737, 0.0
      %v3774 = vmax.f32 %v3738, 0.0
      %v3775 = vmax.f32 %v3739, 0.0
      %v3776 = vmax.f32 %v3740, 0.0
      %v3777 = vmax.f32 %v3741, 0.0
      %v3778 = vmax.f32 %v3742, 0.0
      %v3779 = vmax.f32 %v3743, 0.0
      %v3780 = vmax.f32 %v3744, 0.0
      %v3781 = vmax.f32 %v3745, 0.0
      %v3782 = vmax.f32 %v3746, 0.0
      %v3783 = vmax.f32 %v3747, 0.0
      %v3784 = vmax.f32 %v3748, 0.0
      %v3785 = vmax.f32 %v3749, 0.0
      %v3786 = vmax.f32 %v3750, 0.0
      %v3787 = vmax.f32 %v3751, 0.0
      %v3788 = vmax.f32 %v3752, 0.0
      %v3789 = vmax.f32 %v3753, 0.0
      %v3790 = vmax.f32 %v3754, 0.0
      %v3791 = vmax.f32 %v3755, 0.0
      %v3792 = vmax.f32 %v3756, 0.0
      %v3793 = vmax.f32 %v3757, 0.0
      %v3794 = vmax.f32 %v3758, 0.0
      %v3795 = vmax.f32 %v3759, 0.0
      %v3796 = vmax.f32 %v3760, 0.0
      %v3797 = vmax.f32 %v3761, 0.0
      %v3798 = vmax.f32 %v3762, 0.0
      %v3799 = vmax.f32 %v3763, 0.0
      %v3800 = vmax.f32 %v3764, 0.0
      %v3801 = vmax.f32 %v3765, 0.0
      %v3802 = vmax.f32 %v3766, 0.0
      %v3803 = vmax.f32 %v3767, 0.0
      %v3804 = vmax.f32 %v3768, 0.0
      %v3805 = vmax.f32 %v3769, 0.0
      %v3806 = vmax.f32 %v3770, 0.0
      %v3807 = vmax.f32 %v3771, 0.0
      %v3808 = vmax.f32 %v3772, 0.0
      %v3809 = vpack.c.bf16 %v3774, %v3773
      %v3810 = vpack.c.bf16 %v3776, %v3775
      %v3811 = vpack.c.bf16 %v3778, %v3777
      %v3812 = vpack.c.bf16 %v3780, %v3779
      %v3813 = vpack.c.bf16 %v3782, %v3781
      %v3814 = vpack.c.bf16 %v3784, %v3783
      %v3815 = vpack.c.bf16 %v3786, %v3785
      %v3816 = vpack.c.bf16 %v3788, %v3787
      %v3817 = vpack.c.bf16 %v3790, %v3789
      %v3818 = vpack.c.bf16 %v3792, %v3791
      %v3819 = vpack.c.bf16 %v3794, %v3793
      %v3820 = vpack.c.bf16 %v3796, %v3795
      %v3821 = vpack.c.bf16 %v3798, %v3797
      %v3822 = vpack.c.bf16 %v3800, %v3799
      %v3823 = vpack.c.bf16 %v3802, %v3801
      %v3824 = vpack.c.bf16 %v3804, %v3803
      %v3825 = vpack.c.bf16 %v3806, %v3805
      %v3826 = vpack.c.bf16 %v3808, %v3807
      %v3845 = vunpack.c.l.b16 %v3809
      %v3846 = vunpack.c.h.b16 %v3809
      %v3847 = vunpack.c.l.b16 %v3810
      %v3848 = vunpack.c.h.b16 %v3810
      %v3849 = vunpack.c.l.b16 %v3811
      %v3850 = vunpack.c.h.b16 %v3811
      %v3851 = vunpack.c.l.b16 %v3812
      %v3852 = vunpack.c.h.b16 %v3812
      %v3853 = vunpack.c.l.b16 %v3813
      %v3854 = vunpack.c.h.b16 %v3813
      %v3855 = vunpack.c.l.b16 %v3814
      %v3856 = vunpack.c.h.b16 %v3814
      %v3857 = vunpack.c.l.b16 %v3815
      %v3858 = vunpack.c.h.b16 %v3815
      %v3859 = vunpack.c.l.b16 %v3816
      %v3860 = vunpack.c.h.b16 %v3816
      %v3861 = vunpack.c.l.b16 %v3817
      %v3862 = vunpack.c.h.b16 %v3817
      %v3863 = vunpack.c.l.b16 %v3818
      %v3864 = vunpack.c.h.b16 %v3818
      %v3865 = vunpack.c.l.b16 %v3819
      %v3866 = vunpack.c.h.b16 %v3819
      %v3867 = vunpack.c.l.b16 %v3820
      %v3868 = vunpack.c.h.b16 %v3820
      %v3869 = vunpack.c.l.b16 %v3821
      %v3870 = vunpack.c.h.b16 %v3821
      %v3871 = vunpack.c.l.b16 %v3822
      %v3872 = vunpack.c.h.b16 %v3822
      %v3873 = vunpack.c.l.b16 %v3823
      %v3874 = vunpack.c.h.b16 %v3823
      %v3875 = vunpack.c.l.b16 %v3824
      %v3876 = vunpack.c.h.b16 %v3824
      %v3877 = vunpack.c.l.b16 %v3825
      %v3878 = vunpack.c.h.b16 %v3825
      %v3879 = vunpack.c.l.b16 %v3826
      %v3880 = vunpack.c.h.b16 %v3826
      %v3881 = vpack.c.b16 %v3845, %v3845
      %v3882 = vpack.c.b16 %v3846, %v3846
      %v3883 = vpack.c.b16 %v3847, %v3847
      %v3884 = vpack.c.b16 %v3848, %v3848
      %v3885 = vpack.c.b16 %v3849, %v3849
      %v3886 = vpack.c.b16 %v3850, %v3850
      %v3887 = vpack.c.b16 %v3851, %v3851
      %v3888 = vpack.c.b16 %v3852, %v3852
      %v3889 = vpack.c.b16 %v3853, %v3853
      %v3890 = vpack.c.b16 %v3854, %v3854
      %v3891 = vpack.c.b16 %v3855, %v3855
      %v3892 = vpack.c.b16 %v3856, %v3856
      %v3893 = vpack.c.b16 %v3857, %v3857
      %v3894 = vpack.c.b16 %v3858, %v3858
      %v3895 = vpack.c.b16 %v3859, %v3859
      %v3896 = vpack.c.b16 %v3860, %v3860
      %v3897 = vpack.c.b16 %v3861, %v3861
      %v3898 = vpack.c.b16 %v3862, %v3862
      %v3899 = vpack.c.b16 %v3863, %v3863
      %v3900 = vpack.c.b16 %v3864, %v3864
      %v3901 = vpack.c.b16 %v3865, %v3865
      %v3902 = vpack.c.b16 %v3866, %v3866
      %v3903 = vpack.c.b16 %v3867, %v3867
      %v3904 = vpack.c.b16 %v3868, %v3868
      %v3905 = vpack.c.b16 %v3869, %v3869
      %v3906 = vpack.c.b16 %v3870, %v3870
      %v3907 = vpack.c.b16 %v3871, %v3871
      %v3908 = vpack.c.b16 %v3872, %v3872
      %v3909 = vpack.c.b16 %v3873, %v3873
      %v3910 = vpack.c.b16 %v3874, %v3874
      %v3911 = vpack.c.b16 %v3875, %v3875
      %v3912 = vpack.c.b16 %v3876, %v3876
      %v3913 = vpack.c.b16 %v3877, %v3877
      %v3914 = vpack.c.b16 %v3878, %v3878
      %v3915 = vpack.c.b16 %v3879, %v3879
      %v3916 = vpack.c.b16 %v3880, %v3880
      %3953 = vst [vmem:[%s170] sm:$0xf] %v3881
      %3954 = vst [vmem:[%s170 + $0x4] sm:$0xf] %v3882
      %3955 = vst [vmem:[%s170 + $0x8] sm:$0xf] %v3883
      %3956 = vst [vmem:[%s170 + $0xc] sm:$0xf] %v3884
      %3957 = vst [vmem:[%s170 + $0x10] sm:$0xf] %v3885
      %3958 = vst [vmem:[%s170 + $0x14] sm:$0xf] %v3886
      %3959 = vst [vmem:[%s170 + $0x18] sm:$0xf] %v3887
      %3960 = vst [vmem:[%s170 + $0x1c] sm:$0xf] %v3888
      %3961 = vst [vmem:[%s170 + $0x20] sm:$0xf] %v3889
      %3962 = vst [vmem:[%s170 + $0x24] sm:$0xf] %v3890
      %3963 = vst [vmem:[%s170 + $0x28] sm:$0xf] %v3891
      %3964 = vst [vmem:[%s170 + $0x2c] sm:$0xf] %v3892
      %3965 = vst [vmem:[%s170 + $0x30] sm:$0xf] %v3893
      %3966 = vst [vmem:[%s170 + $0x34] sm:$0xf] %v3894
      %3967 = vst [vmem:[%s170 + $0x38] sm:$0xf] %v3895
      %3968 = vst [vmem:[%s170 + $0x3c] sm:$0xf] %v3896
      %3969 = vst [vmem:[%s170 + $0x40] sm:$0xf] %v3897
      %3970 = vst [vmem:[%s170 + $0x44] sm:$0xf] %v3898
      %3971 = vst [vmem:[%s170 + $0x48] sm:$0xf] %v3899
      %3972 = vst [vmem:[%s170 + $0x4c] sm:$0xf] %v3900
      %3973 = vst [vmem:[%s170 + $0x50] sm:$0xf] %v3901
      %3974 = vst [vmem:[%s170 + $0x54] sm:$0xf] %v3902
      %3975 = vst [vmem:[%s170 + $0x58] sm:$0xf] %v3903
      %3976 = vst [vmem:[%s170 + $0x5c] sm:$0xf] %v3904
      %3977 = vst [vmem:[%s170 + $0x60] sm:$0xf] %v3905
      %3978 = vst [vmem:[%s170 + $0x64] sm:$0xf] %v3906
      %3979 = vst [vmem:[%s170 + $0x68] sm:$0xf] %v3907
      %3980 = vst [vmem:[%s170 + $0x6c] sm:$0xf] %v3908
      %3981 = vst [vmem:[%s170 + $0x70] sm:$0xf] %v3909
      %3982 = vst [vmem:[%s170 + $0x74] sm:$0xf] %v3910
      %3983 = vst [vmem:[%s170 + $0x78] sm:$0xf] %v3911
      %3984 = vst [vmem:[%s170 + $0x7c] sm:$0xf] %v3912
      %3985 = vst [vmem:[%s170 + $0x80] sm:$0xf] %v3913
      %3986 = vst [vmem:[%s170 + $0x84] sm:$0xf] %v3914
      %3987 = vst [vmem:[%s170 + $0x88] sm:$0xf] %v3915
      %3988 = vst [vmem:[%s170 + $0x8c] sm:$0x7] %v3916
      %p3989 = scmp.lt.s32.totalorder %s14, 1
      %s3990 = scalar_select %p3989, %s14, 1
      %s3991 = smul.addr %s3990, 36
      %s3992 = smul.addr %s3991, 4
      %s3993 = scalar_lea.vmem %s3, %s3992
      // Predicated region
      $region33: #{basic_block_pallas.2} parent=31 // pred_check
        %p3994 = pneg %p100
      $region34: #{basic_block_pallas.2} parent=31 // pred_check_branch
        %3996 = sbr.rel (%p3994) target = $region36
      $region35: #{basic_block_pallas.2} parent=31 // pred_region
        _
      $region36: #{basic_block_pallas.2} parent=31 // pred_fallthru
        _
    $region32: #{basic_block_pallas.2} parent=5 // pred_fallthru
      _
    %p3997 = scmp.le.s32.totalorder 2, %s9
    // Predicated region
    $region37: #{basic_block_pallas.2} parent=5 // pred_check
      %p3998 = pneg %p3997
    $region38: #{basic_block_pallas.2} parent=5 // pred_check_branch
      %4000 = sbr.rel (%p3998) target = $region40
    $region39: #{basic_block_pallas.2} parent=5 // pred_region
      %s4001 = ssub.s32 %s9, 2
      // Predicated region
      $region41: #{basic_block_pallas.2} parent=39 // pred_check
        %p4002 = pneg %p106
      $region42: #{basic_block_pallas.2} parent=39 // pred_check_branch
        %4004 = sbr.rel (%p4002) target = $region44
      $region43: #{basic_block_pallas.2} parent=39 // pred_region
        %p4005 = scmp.lt.s32.totalorder %s15, 1
        %s4006 = scalar_select %p4005, %s15, 1
        %s4007 = smul.addr %s4006, 36
        %s4008 = smul.addr %s4007, 4
        %s4009 = scalar_lea.vmem %s3, %s4008
      $region44: #{basic_block_pallas.2} parent=39 // pred_fallthru
        _
    $region40: #{basic_block_pallas.2} parent=5 // pred_fallthru
      _
  $region6: #{basic_block_pallas.2} parent=0 // loop_footer
    %s13 = sadd.s32 1, %s9
  $region7: #{basic_block_pallas.2} parent=0 // loop_footer_branch
    %8 = sbr.rel target = $region3
  $region8: #{basic_block_pallas.2} parent=0 // loop_exit
    _

// kernel: basic_block_pallas.3
$region0: #{basic_block_pallas.3}
  #allocation0 [shape = 'u32[]', space=smem, size = 0x4, offset = 0x4, fixed_abs, tag = 'smem constant byte address 0x4 - core index']
  #allocation1 [shape = 'u32[144,128]{1,0:T(1,128)}', space=vmem, size = 0x12000, scoped, tag = 'internal scratch']
  %s0 = inlined_call_operand.vmem [shape: bf16[2,324,128], index: 0, kind: input, shape index: {}]
  %s1 = inlined_call_operand.vmem [shape: bf16[9,128,128], index: 1, kind: input, shape index: {}]
  %s2 = inlined_call_operand.vmem [shape: f32[1,128], index: 2, kind: input, shape index: {}]
  %s3 = inlined_call_operand.vmem [shape: f32[2,286,128], index: 3, kind: input, shape index: {}]
  %s4 = inlined_call_operand.vmem [shape: f32[2,286,128], index: 4, kind: output, shape index: {}]
  %s5 = sld [smem:[#allocation0]]
  $region49: #{basic_block_pallas.3} parent=0
    _
  %s7 = ssub.s32 1, %s5
  %s8 = scalar_select 0, %s7, %s5
  loop: start=0, step=1, limit=4
  $region2: #{basic_block_pallas.3} parent=0 // loop_pre_header
    _
  $region3: #{basic_block_pallas.3} parent=0 // loop_header
    %s10 = sphi 0, %s14
    %p11 = scmp.ge.s32.totalorder %s10, 4
    %s20 = sphi 0, %s22
    %s23 = sphi 0, %s20
    %s24 = sphi 0, %s23
    %s40 = sphi 0, %s24
    %s44 = sphi 0, %s44
    %s46 = sphi 0, %s44
    %s47 = sphi 0, %s46
    %s61 = sphi 0, %s47
    %s65 = sphi 0, %s65
    %s67 = sphi 0, %s65
    %s68 = sphi 0, %s67
    %s82 = sphi 0, %s68
    %s88 = sphi 0, %s90
    %s91 = sphi 0, %s88
    %s92 = sphi 0, %s91
    %s108 = sphi 0, %s92
    %s114 = sphi 0, %s116
    %s117 = sphi 0, %s114
    %s118 = sphi 0, %s117
    %s134 = sphi 0, %s118
  $region4: #{basic_block_pallas.3} parent=0 // loop_header_branch
    %13 = sbr.rel (%p11) target = $region8
  $region5: #{basic_block_pallas.3} parent=0 // loop_body
    %s15 = ssub.s32 %s10, 1
    %s16 = ssub.s32 %s10, 2
    %s17 = sadd.s32 %s10, 1
    %s18 = ssub.s32 %s10, %s17
    %p19 = scmp.eq.s32.totalorder %s18, 0
    %s21 = sadd.s32 %s20, 1
    %s22 = scalar_select %p19, %s20, %s21
    %p25 = pneg %p19
    %p26 = scmp.eq.s32.totalorder %s10, 1
    %p27 = por %p25, %p26
    %p28 = scmp.ne.s32.totalorder %s20, %s23
    %p29 = scmp.eq.s32.totalorder %s10, 0
    %p30 = por %p28, %p29
    %p31 = scmp.ne.s32.totalorder %s20, %s23
    %p32 = scmp.eq.s32.totalorder %s15, 1
    %p33 = por %p31, %p32
    %p34 = scmp.ne.s32.totalorder %s23, %s24
    %p35 = scmp.eq.s32.totalorder %s15, 0
    %p36 = por %p34, %p35
    %p37 = scmp.ne.s32.totalorder %s23, %s24
    %p38 = scmp.eq.s32.totalorder %s16, 1
    %p39 = por %p37, %p38
    %p41 = scmp.ne.s32.totalorder %s24, %s40
    %p42 = scmp.eq.s32.totalorder %s16, 0
    %p43 = por %p41, %p42
    %s45 = sadd.s32 %s44, 1
    %p48 = scmp.eq.s32.totalorder %s10, 1
    %p49 = scmp.ne.s32.totalorder %s44, %s46
    %p50 = scmp.eq.s32.totalorder %s10, 0
    %p51 = por %p49, %p50
    %p52 = scmp.ne.s32.totalorder %s44, %s46
    %p53 = scmp.eq.s32.totalorder %s15, 1
    %p54 = por %p52, %p53
    %p55 = scmp.ne.s32.totalorder %s46, %s47
    %p56 = scmp.eq.s32.totalorder %s15, 0
    %p57 = por %p55, %p56
    %p58 = scmp.ne.s32.totalorder %s46, %s47
    %p59 = scmp.eq.s32.totalorder %s16, 1
    %p60 = por %p58, %p59
    %p62 = scmp.ne.s32.totalorder %s47, %s61
    %p63 = scmp.eq.s32.totalorder %s16, 0
    %p64 = por %p62, %p63
    %s66 = sadd.s32 %s65, 1
    %p69 = scmp.eq.s32.totalorder %s10, 1
    %p70 = scmp.ne.s32.totalorder %s65, %s67
    %p71 = scmp.eq.s32.totalorder %s10, 0
    %p72 = por %p70, %p71
    %p73 = scmp.ne.s32.totalorder %s65, %s67
    %p74 = scmp.eq.s32.totalorder %s15, 1
    %p75 = por %p73, %p74
    %p76 = scmp.ne.s32.totalorder %s67, %s68
    %p77 = scmp.eq.s32.totalorder %s15, 0
    %p78 = por %p76, %p77
    %p79 = scmp.ne.s32.totalorder %s67, %s68
    %p80 = scmp.eq.s32.totalorder %s16, 1
    %p81 = por %p79, %p80
    %p83 = scmp.ne.s32.totalorder %s68, %s82
    %p84 = scmp.eq.s32.totalorder %s16, 0
    %p85 = por %p83, %p84
    %s86 = ssub.s32 %s10, %s17
    %p87 = scmp.eq.s32.totalorder %s86, 0
    %s89 = sadd.s32 %s88, 1
    %s90 = scalar_select %p87, %s88, %s89
    %p93 = pneg %p87
    %p94 = scmp.eq.s32.totalorder %s10, 1
    %p95 = por %p93, %p94
    %p96 = scmp.ne.s32.totalorder %s88, %s91
    %p97 = scmp.eq.s32.totalorder %s10, 0
    %p98 = por %p96, %p97
    %p99 = scmp.ne.s32.totalorder %s88, %s91
    %p100 = scmp.eq.s32.totalorder %s15, 1
    %p101 = por %p99, %p100
    %p102 = scmp.ne.s32.totalorder %s91, %s92
    %p103 = scmp.eq.s32.totalorder %s15, 0
    %p104 = por %p102, %p103
    %p105 = scmp.ne.s32.totalorder %s91, %s92
    %p106 = scmp.eq.s32.totalorder %s16, 1
    %p107 = por %p105, %p106
    %p109 = scmp.ne.s32.totalorder %s92, %s108
    %p110 = scmp.eq.s32.totalorder %s16, 0
    %p111 = por %p109, %p110
    %s112 = ssub.s32 %s10, %s17
    %p113 = scmp.eq.s32.totalorder %s112, 0
    %s115 = sadd.s32 %s114, 1
    %s116 = scalar_select %p113, %s114, %s115
    %p119 = pneg %p113
    %p120 = scmp.eq.s32.totalorder %s10, 1
    %p121 = por %p119, %p120
    %p122 = scmp.ne.s32.totalorder %s114, %s117
    %p123 = scmp.eq.s32.totalorder %s10, 0
    %p124 = por %p122, %p123
    %p125 = scmp.ne.s32.totalorder %s114, %s117
    %p126 = scmp.eq.s32.totalorder %s15, 1
    %p127 = por %p125, %p126
    %p128 = scmp.ne.s32.totalorder %s117, %s118
    %p129 = scmp.eq.s32.totalorder %s15, 0
    %p130 = por %p128, %p129
    %p131 = scmp.ne.s32.totalorder %s117, %s118
    %p132 = scmp.eq.s32.totalorder %s16, 1
    %p133 = por %p131, %p132
    %p135 = scmp.ne.s32.totalorder %s118, %s134
    %p136 = scmp.eq.s32.totalorder %s16, 0
    %p137 = por %p135, %p136
    %p138 = scmp.le.s32.totalorder 1, %s10
    %p139 = scmp.lt.s32.totalorder %s10, 3
    %p140 = pnand %p138, %p139
    %p141 = pneg %p140
    // Predicated region
    $region9: #{basic_block_pallas.3} parent=5 // pred_check
      _
    $region10: #{basic_block_pallas.3} parent=5 // pred_check_branch
      %143 = sbr.rel (%p140) target = $region12
    $region11: #{basic_block_pallas.3} parent=5 // pred_region
      %s144 = ssub.s32 %s10, 1
      // Predicated region
      $region13: #{basic_block_pallas.3} parent=11 // pred_check
        %p145 = pneg %p57
      $region14: #{basic_block_pallas.3} parent=11 // pred_check_branch
        %147 = sbr.rel (%p145) target = $region16
      $region15: #{basic_block_pallas.3} parent=11 // pred_region
        _
      $region16: #{basic_block_pallas.3} parent=11 // pred_fallthru
        _
      // Predicated region
      $region17: #{basic_block_pallas.3} parent=11 // pred_check
        %p148 = pneg %p78
      $region18: #{basic_block_pallas.3} parent=11 // pred_check_branch
        %150 = sbr.rel (%p148) target = $region20
      $region19: #{basic_block_pallas.3} parent=11 // pred_region
        _
      $region20: #{basic_block_pallas.3} parent=11 // pred_fallthru
        _
    $region12: #{basic_block_pallas.3} parent=5 // pred_fallthru
      _
    %p151 = scmp.lt.s32.totalorder %s10, 2
    // Predicated region
    $region21: #{basic_block_pallas.3} parent=5 // pred_check
      %p152 = pneg %p151
    $region22: #{basic_block_pallas.3} parent=5 // pred_check_branch
      %154 = sbr.rel (%p152) target = $region24
    $region23: #{basic_block_pallas.3} parent=5 // pred_region
      // Predicated region
      $region25: #{basic_block_pallas.3} parent=23 // pred_check
        %p155 = pneg %p30
      $region26: #{basic_block_pallas.3} parent=23 // pred_check_branch
        %157 = sbr.rel (%p155) target = $region28
      $region27: #{basic_block_pallas.3} parent=23 // pred_region
        %p158 = scmp.lt.s32.totalorder %s10, 1
        %s159 = scalar_select %p158, %s10, 1
        %s160 = smul.addr %s159, 41
        %s161 = smul.addr %s160, 4
        %s162 = scalar_lea.vmem %s0, %s161
      $region28: #{basic_block_pallas.3} parent=23 // pred_fallthru
        _
      // Predicated region
      $region29: #{basic_block_pallas.3} parent=23 // pred_check
        %p163 = pneg %p98
      $region30: #{basic_block_pallas.3} parent=23 // pred_check_branch
        %165 = sbr.rel (%p163) target = $region32
      $region31: #{basic_block_pallas.3} parent=23 // pred_region
        %p166 = scmp.lt.s32.totalorder %s10, 1
        %s167 = scalar_select %p166, %s10, 1
        %s168 = smul.addr %s167, 36
        %s169 = smul.addr %s168, 8
        %s170 = scalar_lea.vmem %s3, %s169
      $region32: #{basic_block_pallas.3} parent=23 // pred_fallthru
        _
    $region24: #{basic_block_pallas.3} parent=5 // pred_fallthru
      _
    %p171 = scmp.le.s32.totalorder 1, %s10
    %p172 = scmp.lt.s32.totalorder %s10, 3
    %p173 = pnand %p171, %p172
    %p174 = pneg %p173
    // Predicated region
    $region33: #{basic_block_pallas.3} parent=5 // pred_check
      _
    $region34: #{basic_block_pallas.3} parent=5 // pred_check_branch
      %176 = sbr.rel (%p173) target = $region36
    $region35: #{basic_block_pallas.3} parent=5 // pred_region
      %s177 = ssub.s32 %s10, 1
      %p178 = scmp.lt.s32.totalorder %s15, 1
      %s179 = scalar_select %p178, %s15, 1
      %s180 = smul.addr %s179, 41
      %s181 = smul.addr %s180, 4
      %s182 = scalar_lea.vmem %s0, %s181
      %p183 = pneg %p36
      %p184 = pneg %p33
      %p185 = pneg %p57
      %p186 = pneg %p54
      %p187 = pneg %p78
      %p188 = pneg %p75
      %p189 = scmp.lt.s32.totalorder %s15, 1
      %s190 = scalar_select %p189, %s15, 1
      %s191 = smul.addr %s190, 36
      %s192 = smul.addr %s191, 8
      %s193 = scalar_lea.vmem %s3, %s192
      %p194 = pneg %p104
      %p195 = pneg %p101
      %p196 = pneg %p130
      %p197 = pneg %p127
      %p198 = scmp.lt.s32.totalorder %s15, 1
      %s199 = scalar_select %p198, %s15, 1
      %s200 = smul.addr %s199, 36
      %s201 = smul.addr %s200, 8
      %s202 = scalar_lea.vmem %s4, %s201
      %p203 = scmp.lt.s32.totalorder %s15, 1
      %s204 = scalar_select %p203, %s15, 1
      %s205 = smul.addr %s204, 41
      %s206 = smul.addr %s205, 4
      %s207 = scalar_lea.vmem %s0, %s206
      %p208 = scmp.lt.s32.totalorder %s15, 1
      %s209 = scalar_select %p208, %s15, 1
      %s210 = smul.addr %s209, 36
      %s211 = smul.addr %s210, 8
      %s212 = scalar_lea.vmem %s3, %s211
      %p213 = scmp.lt.s32.totalorder %s15, 1
      %s214 = scalar_select %p213, %s15, 1
      %s215 = smul.addr %s214, 36
      %s216 = smul.addr %s215, 8
      %s217 = scalar_lea.vmem %s4, %s216
      %v219 = vld [vmem:[%s207] sm:$0xf]
      %v220 = vld [vmem:[%s207 + $0x4] sm:$0xf]
      %v221 = vld [vmem:[%s207 + $0x8] sm:$0xf]
      %v222 = vld [vmem:[%s207 + $0xc] sm:$0xf]
      %v223 = vld [vmem:[%s207 + $0x10] sm:$0xf]
      %v224 = vld [vmem:[%s207 + $0x14] sm:$0xf]
      %v225 = vld [vmem:[%s207 + $0x18] sm:$0xf]
      %v226 = vld [vmem:[%s207 + $0x1c] sm:$0xf]
      %v227 = vld [vmem:[%s207 + $0x20] sm:$0xf]
      %v228 = vld [vmem:[%s207 + $0x24] sm:$0xf]
      %v229 = vld [vmem:[%s207 + $0x28] sm:$0xf]
      %v230 = vld [vmem:[%s207 + $0x2c] sm:$0xf]
      %v231 = vld [vmem:[%s207 + $0x30] sm:$0xf]
      %v232 = vld [vmem:[%s207 + $0x34] sm:$0xf]
      %v233 = vld [vmem:[%s207 + $0x38] sm:$0xf]
      %v234 = vld [vmem:[%s207 + $0x3c] sm:$0xf]
      %v235 = vld [vmem:[%s207 + $0x40] sm:$0xf]
      %v236 = vld [vmem:[%s207 + $0x44] sm:$0xf]
      %v237 = vld [vmem:[%s207 + $0x48] sm:$0xf]
      %v238 = vld [vmem:[%s207 + $0x4c] sm:$0xf]
      %v239 = vld [vmem:[%s207 + $0x50] sm:$0xf]
      %v240 = vld [vmem:[%s207 + $0x54] sm:$0xf]
      %v241 = vld [vmem:[%s207 + $0x58] sm:$0xf]
      %v242 = vld [vmem:[%s207 + $0x5c] sm:$0xf]
      %v243 = vld [vmem:[%s207 + $0x60] sm:$0xf]
      %v244 = vld [vmem:[%s207 + $0x64] sm:$0xf]
      %v245 = vld [vmem:[%s207 + $0x68] sm:$0xf]
      %v246 = vld [vmem:[%s207 + $0x6c] sm:$0xf]
      %v247 = vld [vmem:[%s207 + $0x70] sm:$0xf]
      %v248 = vld [vmem:[%s207 + $0x74] sm:$0xf]
      %v249 = vld [vmem:[%s207 + $0x78] sm:$0xf]
      %v250 = vld [vmem:[%s207 + $0x7c] sm:$0xf]
      %v251 = vld [vmem:[%s207 + $0x80] sm:$0xf]
      %v252 = vld [vmem:[%s207 + $0x84] sm:$0xf]
      %v253 = vld [vmem:[%s207 + $0x88] sm:$0xf]
      %v254 = vld [vmem:[%s207 + $0x8c] sm:$0x7]
      %v255 = vld [vmem:[%s1] sm:$0xf]
      %v256 = vld [vmem:[%s1 + $0x4] sm:$0xf]
      %v257 = vld [vmem:[%s1 + $0x8] sm:$0xf]
      %v258 = vld [vmem:[%s1 + $0xc] sm:$0xf]
      %v259 = vld [vmem:[%s1 + $0x10] sm:$0xf]
      %v260 = vld [vmem:[%s1 + $0x14] sm:$0xf]
      %v261 = vld [vmem:[%s1 + $0x18] sm:$0xf]
      %v262 = vld [vmem:[%s1 + $0x1c] sm:$0xf]
      %v263 = vld [vmem:[%s1 + $0x20] sm:$0xf]
      %v264 = vld [vmem:[%s1 + $0x24] sm:$0xf]
      %v265 = vld [vmem:[%s1 + $0x28] sm:$0xf]
      %v266 = vld [vmem:[%s1 + $0x2c] sm:$0xf]
      %v267 = vld [vmem:[%s1 + $0x30] sm:$0xf]
      %v268 = vld [vmem:[%s1 + $0x34] sm:$0xf]
      %v269 = vld [vmem:[%s1 + $0x38] sm:$0xf]
      %v270 = vld [vmem:[%s1 + $0x3c] sm:$0xf]
      %v271 = vld [vmem:[%s207 + $0x8c] sm:$0xf]
      %s272 = scalar_lea.vmem %s1, 64
      %v273 = vld [vmem:[%s272] sm:$0xf]
      %v274 = vld [vmem:[%s272 + $0x4] sm:$0xf]
      %v275 = vld [vmem:[%s272 + $0x8] sm:$0xf]
      %v276 = vld [vmem:[%s272 + $0xc] sm:$0xf]
      %v277 = vld [vmem:[%s272 + $0x10] sm:$0xf]
      %v278 = vld [vmem:[%s272 + $0x14] sm:$0xf]
      %v279 = vld [vmem:[%s272 + $0x18] sm:$0xf]
      %v280 = vld [vmem:[%s272 + $0x1c] sm:$0xf]
      %v281 = vld [vmem:[%s272 + $0x20] sm:$0xf]
      %v282 = vld [vmem:[%s272 + $0x24] sm:$0xf]
      %v283 = vld [vmem:[%s272 + $0x28] sm:$0xf]
      %v284 = vld [vmem:[%s272 + $0x2c] sm:$0xf]
      %v285 = vld [vmem:[%s272 + $0x30] sm:$0xf]
      %v286 = vld [vmem:[%s272 + $0x34] sm:$0xf]
      %v287 = vld [vmem:[%s272 + $0x38] sm:$0xf]
      %v288 = vld [vmem:[%s272 + $0x3c] sm:$0xf]
      %v325 = vunpack.c.l.b16 %v219
      %v326 = vunpack.c.l.b16 %v220
      %v327 = vunpack.c.l.b16 %v221
      %v328 = vunpack.c.l.b16 %v222
      %v329 = vunpack.c.l.b16 %v223
      %v330 = vunpack.c.l.b16 %v224
      %v331 = vunpack.c.l.b16 %v225
      %v332 = vunpack.c.l.b16 %v226
      %v333 = vunpack.c.l.b16 %v227
      %v334 = vunpack.c.l.b16 %v228
      %v335 = vunpack.c.l.b16 %v229
      %v336 = vunpack.c.l.b16 %v230
      %v337 = vunpack.c.l.b16 %v231
      %v338 = vunpack.c.l.b16 %v232
      %v339 = vunpack.c.l.b16 %v233
      %v340 = vunpack.c.l.b16 %v234
      %v341 = vunpack.c.l.b16 %v235
      %v342 = vunpack.c.l.b16 %v236
      %v343 = vunpack.c.l.b16 %v237
      %v344 = vunpack.c.l.b16 %v238
      %v345 = vunpack.c.l.b16 %v239
      %v346 = vunpack.c.l.b16 %v240
      %v347 = vunpack.c.l.b16 %v241
      %v348 = vunpack.c.l.b16 %v242
      %v349 = vunpack.c.l.b16 %v243
      %v350 = vunpack.c.l.b16 %v244
      %v351 = vunpack.c.l.b16 %v245
      %v352 = vunpack.c.l.b16 %v246
      %v353 = vunpack.c.l.b16 %v247
      %v354 = vunpack.c.l.b16 %v248
      %v355 = vunpack.c.l.b16 %v249
      %v356 = vunpack.c.l.b16 %v250
      %v357 = vunpack.c.l.b16 %v251
      %v358 = vunpack.c.l.b16 %v252
      %v359 = vunpack.c.l.b16 %v253
      %v360 = vunpack.c.l.b16 %v271
      %v361 = vpack.c.b16 %v326, %v325
      %v362 = vpack.c.b16 %v328, %v327
      %v363 = vpack.c.b16 %v330, %v329
      %v364 = vpack.c.b16 %v332, %v331
      %v365 = vpack.c.b16 %v334, %v333
      %v366 = vpack.c.b16 %v336, %v335
      %v367 = vpack.c.b16 %v338, %v337
      %v368 = vpack.c.b16 %v340, %v339
      %v369 = vpack.c.b16 %v342, %v341
      %v370 = vpack.c.b16 %v344, %v343
      %v371 = vpack.c.b16 %v346, %v345
      %v372 = vpack.c.b16 %v348, %v347
      %v373 = vpack.c.b16 %v350, %v349
      %v374 = vpack.c.b16 %v352, %v351
      %v375 = vpack.c.b16 %v354, %v353
      %v376 = vpack.c.b16 %v356, %v355
      %v377 = vpack.c.b16 %v358, %v357
      %v378 = vpack.c.b16 %v360, %v359
      %vm379 = vsmask.f32 7424
      %v381 = vshrl.u32 %v361, 16
      %v383 = vshll.u32 %v361, 16
      %v385 = vrot.slane %v383, 1
      %v386 = vor.u32 %v381, %v385
      %v388 = vshll.u32 %v362, 16
      %v390 = vrot.slane %v388, 1
      %v391 = vsel %vm379, %v386, %v390
      %v392 = vshrl.u32 %v362, 16
      %v394 = vor.u32 %v392, %v390
      %v396 = vshll.u32 %v363, 16
      %v398 = vrot.slane %v396, 1
      %v399 = vsel %vm379, %v394, %v398
      %v400 = vshrl.u32 %v363, 16
      %v402 = vor.u32 %v400, %v398
      %v404 = vshll.u32 %v364, 16
      %v406 = vrot.slane %v404, 1
      %v407 = vsel %vm379, %v402, %v406
      %v408 = vshrl.u32 %v364, 16
      %v410 = vor.u32 %v408, %v406
      %v412 = vshll.u32 %v365, 16
      %v414 = vrot.slane %v412, 1
      %v415 = vsel %vm379, %v410, %v414
      %v416 = vshrl.u32 %v365, 16
      %v418 = vor.u32 %v416, %v414
      %v420 = vshll.u32 %v366, 16
      %v422 = vrot.slane %v420, 1
      %v423 = vsel %vm379, %v418, %v422
      %v424 = vshrl.u32 %v366, 16
      %v426 = vor.u32 %v424, %v422
      %v428 = vshll.u32 %v367, 16
      %v430 = vrot.slane %v428, 1
      %v431 = vsel %vm379, %v426, %v430
      %v432 = vshrl.u32 %v367, 16
      %v434 = vor.u32 %v432, %v430
      %v436 = vshll.u32 %v368, 16
      %v438 = vrot.slane %v436, 1
      %v439 = vsel %vm379, %v434, %v438
      %v440 = vshrl.u32 %v368, 16
      %v442 = vor.u32 %v440, %v438
      %v444 = vshll.u32 %v369, 16
      %v446 = vrot.slane %v444, 1
      %v447 = vsel %vm379, %v442, %v446
      %v448 = vshrl.u32 %v369, 16
      %v450 = vor.u32 %v448, %v446
      %v452 = vshll.u32 %v370, 16
      %v454 = vrot.slane %v452, 1
      %v455 = vsel %vm379, %v450, %v454
      %v456 = vshrl.u32 %v370, 16
      %v458 = vor.u32 %v456, %v454
      %v460 = vshll.u32 %v371, 16
      %v462 = vrot.slane %v460, 1
      %v463 = vsel %vm379, %v458, %v462
      %v464 = vshrl.u32 %v371, 16
      %v466 = vor.u32 %v464, %v462
      %v468 = vshll.u32 %v372, 16
      %v470 = vrot.slane %v468, 1
      %v471 = vsel %vm379, %v466, %v470
      %v472 = vshrl.u32 %v372, 16
      %v474 = vor.u32 %v472, %v470
      %v476 = vshll.u32 %v373, 16
      %v478 = vrot.slane %v476, 1
      %v479 = vsel %vm379, %v474, %v478
      %v480 = vshrl.u32 %v373, 16
      %v482 = vor.u32 %v480, %v478
      %v484 = vshll.u32 %v374, 16
      %v486 = vrot.slane %v484, 1
      %v487 = vsel %vm379, %v482, %v486
      %v488 = vshrl.u32 %v374, 16
      %v490 = vor.u32 %v488, %v486
      %v492 = vshll.u32 %v375, 16
      %v494 = vrot.slane %v492, 1
      %v495 = vsel %vm379, %v490, %v494
      %v496 = vshrl.u32 %v375, 16
      %v498 = vor.u32 %v496, %v494
      %v500 = vshll.u32 %v376, 16
      %v502 = vrot.slane %v500, 1
      %v503 = vsel %vm379, %v498, %v502
      %v504 = vshrl.u32 %v376, 16
      %v506 = vor.u32 %v504, %v502
      %v508 = vshll.u32 %v377, 16
      %v510 = vrot.slane %v508, 1
      %v511 = vsel %vm379, %v506, %v510
      %v512 = vshrl.u32 %v377, 16
      %v514 = vor.u32 %v512, %v510
      %v516 = vshll.u32 %v378, 16
      %v518 = vrot.slane %v516, 1
      %v519 = vsel %vm379, %v514, %v518
      %v520 = vshrl.u32 %v378, 16
      %v522 = vor.u32 %v520, %v518
      %v557 = vunpack.c.l.b16 %v273
      %v558 = vunpack.c.l.b16 %v274
      %v559 = vunpack.c.l.b16 %v275
      %v560 = vunpack.c.l.b16 %v276
      %v561 = vunpack.c.l.b16 %v277
      %v562 = vunpack.c.l.b16 %v278
      %v563 = vunpack.c.l.b16 %v279
      %v564 = vunpack.c.l.b16 %v280
      %v565 = vunpack.c.l.b16 %v281
      %v566 = vunpack.c.l.b16 %v282
      %v567 = vunpack.c.l.b16 %v283
      %v568 = vunpack.c.l.b16 %v284
      %v569 = vunpack.c.l.b16 %v285
      %v570 = vunpack.c.l.b16 %v286
      %v571 = vunpack.c.l.b16 %v287
      %v572 = vunpack.c.l.b16 %v288
      %v573 = vpack.c.b16 %v558, %v557
      %v574 = vpack.c.b16 %v560, %v559
      %v575 = vpack.c.b16 %v562, %v561
      %v576 = vpack.c.b16 %v564, %v563
      %v577 = vpack.c.b16 %v566, %v565
      %v578 = vpack.c.b16 %v568, %v567
      %v579 = vpack.c.b16 %v570, %v569
      %v580 = vpack.c.b16 %v572, %v571
      %589 = vmatprep.subr.bf16.mxu0 0
      %590 = vmatpush1.bf16.msra.mxu0 %v580
      %591 = vmatprep.subr.bf16.mxu0 0
      %592 = vmatpush1.bf16.msra.mxu0 %v579
      %593 = vmatprep.subr.bf16.mxu0 0
      %594 = vmatpush1.bf16.msra.mxu0 %v578
      %595 = vmatprep.subr.bf16.mxu0 0
      %596 = vmatpush1.bf16.msra.mxu0 %v577
      %597 = vmatprep.subr.bf16.mxu0 0
      %598 = vmatpush1.bf16.msra.mxu0 %v576
      %599 = vmatprep.subr.bf16.mxu0 0
      %600 = vmatpush1.bf16.msra.mxu0 %v575
      %601 = vmatprep.subr.bf16.mxu0 0
      %602 = vmatpush1.bf16.msra.mxu0 %v574
      %603 = vmatprep.subr.bf16.mxu0 0
      %604 = vmatpush1.bf16.msra.mxu0 %v573
      %605 = vmatprep.subr.bf16.mxu0 0
      %606 = vmatpush2.bf16.msra.mxu0 0
      %607 = vmatprep.subr.bf16.mxu0 0
      %608 = vmatpush2.bf16.msra.mxu0 0
      %609 = vmatprep.subr.bf16.mxu0 0
      %610 = vmatpush2.bf16.msra.mxu0 0
      %611 = vmatprep.subr.bf16.mxu0 0
      %612 = vmatpush2.bf16.msra.mxu0 0
      %613 = vmatprep.subr.bf16.mxu0 0
      %614 = vmatpush2.bf16.msra.mxu0 0
      %615 = vmatprep.subr.bf16.mxu0 0
      %616 = vmatpush2.bf16.msra.mxu0 0
      %617 = vmatprep.subr.bf16.mxu0 0
      %618 = vmatpush2.bf16.msra.mxu0 0
      %619 = vmatprep.subr.bf16.mxu0 0
      %620 = vmatpush2.bf16.msra.mxu0 0
      %621 = vmatprep.mubr.bf16.mxu0 0
      %622 = vmatmul.mubr.bf16.gmra.mxu0 %v391
      %v623 = vpop.f32.mrf.mxu0
      %v624 = vadd.f32 0.0, %v623
      %v625 = vpop.f32.mrf.mxu0
      %v626 = vpop.f32.mrf.mxu0
      %v627 = vadd.f32 0.0, %v626
      %v628 = vpop.f32.mrf.mxu0
      %629 = vmatprep.mubr.bf16.mxu0 0
      %630 = vmatmul.mubr.bf16.gmra.mxu0 %v399
      %v631 = vpop.f32.mrf.mxu0
      %v632 = vadd.f32 0.0, %v631
      %v633 = vpop.f32.mrf.mxu0
      %v634 = vpop.f32.mrf.mxu0
      %v635 = vadd.f32 0.0, %v634
      %v636 = vpop.f32.mrf.mxu0
      %637 = vmatprep.mubr.bf16.mxu0 0
      %638 = vmatmul.mubr.bf16.gmra.mxu0 %v407
      %v639 = vpop.f32.mrf.mxu0
      %v640 = vadd.f32 0.0, %v639
      %v641 = vpop.f32.mrf.mxu0
      %v642 = vpop.f32.mrf.mxu0
      %v643 = vadd.f32 0.0, %v642
      %v644 = vpop.f32.mrf.mxu0
      %645 = vmatprep.mubr.bf16.mxu0 0
      %646 = vmatmul.mubr.bf16.gmra.mxu0 %v415
      %v647 = vpop.f32.mrf.mxu0
      %v648 = vadd.f32 0.0, %v647
      %v649 = vpop.f32.mrf.mxu0
      %v650 = vpop.f32.mrf.mxu0
      %v651 = vadd.f32 0.0, %v650
      %v652 = vpop.f32.mrf.mxu0
      %653 = vmatprep.mubr.bf16.mxu0 0
      %654 = vmatmul.mubr.bf16.gmra.mxu0 %v423
      %v655 = vpop.f32.mrf.mxu0
      %v656 = vadd.f32 0.0, %v655
      %v657 = vpop.f32.mrf.mxu0
      %v658 = vpop.f32.mrf.mxu0
      %v659 = vadd.f32 0.0, %v658
      %v660 = vpop.f32.mrf.mxu0
      %661 = vmatprep.mubr.bf16.mxu0 0
      %662 = vmatmul.mubr.bf16.gmra.mxu0 %v431
      %v663 = vpop.f32.mrf.mxu0
      %v664 = vadd.f32 0.0, %v663
      %v665 = vpop.f32.mrf.mxu0
      %v666 = vpop.f32.mrf.mxu0
      %v667 = vadd.f32 0.0, %v666
      %v668 = vpop.f32.mrf.mxu0
      %669 = vmatprep.mubr.bf16.mxu0 0
      %670 = vmatmul.mubr.bf16.gmra.mxu0 %v439
      %v671 = vpop.f32.mrf.mxu0
      %v672 = vadd.f32 0.0, %v671
      %v673 = vpop.f32.mrf.mxu0
      %v674 = vpop.f32.mrf.mxu0
      %v675 = vadd.f32 0.0, %v674
      %v676 = vpop.f32.mrf.mxu0
      %677 = vmatprep.mubr.bf16.mxu0 0
      %678 = vmatmul.mubr.bf16.gmra.mxu0 %v447
      %v679 = vpop.f32.mrf.mxu0
      %v680 = vadd.f32 0.0, %v679
      %v681 = vpop.f32.mrf.mxu0
      %v682 = vpop.f32.mrf.mxu0
      %v683 = vadd.f32 0.0, %v682
      %v684 = vpop.f32.mrf.mxu0
      %685 = vmatprep.mubr.bf16.mxu0 0
      %686 = vmatmul.mubr.bf16.gmra.mxu0 %v455
      %v687 = vpop.f32.mrf.mxu0
      %v688 = vadd.f32 0.0, %v687
      %v689 = vpop.f32.mrf.mxu0
      %v690 = vpop.f32.mrf.mxu0
      %v691 = vadd.f32 0.0, %v690
      %v692 = vpop.f32.mrf.mxu0
      %693 = vmatprep.mubr.bf16.mxu0 0
      %694 = vmatmul.mubr.bf16.gmra.mxu0 %v463
      %v695 = vpop.f32.mrf.mxu0
      %v696 = vadd.f32 0.0, %v695
      %v697 = vpop.f32.mrf.mxu0
      %v698 = vpop.f32.mrf.mxu0
      %v699 = vadd.f32 0.0, %v698
      %v700 = vpop.f32.mrf.mxu0
      %701 = vmatprep.mubr.bf16.mxu0 0
      %702 = vmatmul.mubr.bf16.gmra.mxu0 %v471
      %v703 = vpop.f32.mrf.mxu0
      %v704 = vadd.f32 0.0, %v703
      %v705 = vpop.f32.mrf.mxu0
      %v706 = vpop.f32.mrf.mxu0
      %v707 = vadd.f32 0.0, %v706
      %v708 = vpop.f32.mrf.mxu0
      %709 = vmatprep.mubr.bf16.mxu0 0
      %710 = vmatmul.mubr.bf16.gmra.mxu0 %v479
      %v711 = vpop.f32.mrf.mxu0
      %v712 = vadd.f32 0.0, %v711
      %v713 = vpop.f32.mrf.mxu0
      %v714 = vpop.f32.mrf.mxu0
      %v715 = vadd.f32 0.0, %v714
      %v716 = vpop.f32.mrf.mxu0
      %717 = vmatprep.mubr.bf16.mxu0 0
      %718 = vmatmul.mubr.bf16.gmra.mxu0 %v487
      %v719 = vpop.f32.mrf.mxu0
      %v720 = vadd.f32 0.0, %v719
      %v721 = vpop.f32.mrf.mxu0
      %v722 = vpop.f32.mrf.mxu0
      %v723 = vadd.f32 0.0, %v722
      %v724 = vpop.f32.mrf.mxu0
      %725 = vmatprep.mubr.bf16.mxu0 0
      %726 = vmatmul.mubr.bf16.gmra.mxu0 %v495
      %v727 = vpop.f32.mrf.mxu0
      %v728 = vadd.f32 0.0, %v727
      %v729 = vpop.f32.mrf.mxu0
      %v730 = vpop.f32.mrf.mxu0
      %v731 = vadd.f32 0.0, %v730
      %v732 = vpop.f32.mrf.mxu0
      %733 = vmatprep.mubr.bf16.mxu0 0
      %734 = vmatmul.mubr.bf16.gmra.mxu0 %v503
      %v735 = vpop.f32.mrf.mxu0
      %v736 = vadd.f32 0.0, %v735
      %v737 = vpop.f32.mrf.mxu0
      %v738 = vpop.f32.mrf.mxu0
      %v739 = vadd.f32 0.0, %v738
      %v740 = vpop.f32.mrf.mxu0
      %741 = vmatprep.mubr.bf16.mxu0 0
      %742 = vmatmul.mubr.bf16.gmra.mxu0 %v511
      %v743 = vpop.f32.mrf.mxu0
      %v744 = vadd.f32 0.0, %v743
      %v745 = vpop.f32.mrf.mxu0
      %v746 = vpop.f32.mrf.mxu0
      %v747 = vadd.f32 0.0, %v746
      %v748 = vpop.f32.mrf.mxu0
      %749 = vmatprep.mubr.bf16.mxu0 0
      %750 = vmatmul.mubr.bf16.gmra.mxu0 %v519
      %v751 = vpop.f32.mrf.mxu0
      %v752 = vadd.f32 0.0, %v751
      %v753 = vpop.f32.mrf.mxu0
      %v754 = vpop.f32.mrf.mxu0
      %v755 = vadd.f32 0.0, %v754
      %v756 = vpop.f32.mrf.mxu0
      %757 = vmatprep.mubr.bf16.mxu0 0
      %758 = vmatmul.mubr.bf16.gmra.mxu0 %v522
      %v759 = vpop.f32.mrf.mxu0
      %v760 = vadd.f32 0.0, %v759
      %v761 = vpop.f32.mrf.mxu0
      %v762 = vpop.f32.mrf.mxu0
      %v763 = vadd.f32 0.0, %v762
      %v764 = vpop.f32.mrf.mxu0
      %765 = vdwg.mxu0
      %v767 = vunpack.c.l.b16 %v254
      %v768 = vpack.c.b16 %v767, %v359
      %v803 = vunpack.c.l.b16 %v255
      %v804 = vunpack.c.l.b16 %v256
      %v805 = vunpack.c.l.b16 %v257
      %v806 = vunpack.c.l.b16 %v258
      %v807 = vunpack.c.l.b16 %v259
      %v808 = vunpack.c.l.b16 %v260
      %v809 = vunpack.c.l.b16 %v261
      %v810 = vunpack.c.l.b16 %v262
      %v811 = vunpack.c.l.b16 %v263
      %v812 = vunpack.c.l.b16 %v264
      %v813 = vunpack.c.l.b16 %v265
      %v814 = vunpack.c.l.b16 %v266
      %v815 = vunpack.c.l.b16 %v267
      %v816 = vunpack.c.l.b16 %v268
      %v817 = vunpack.c.l.b16 %v269
      %v818 = vunpack.c.l.b16 %v270
      %v819 = vpack.c.b16 %v804, %v803
      %v820 = vpack.c.b16 %v806, %v805
      %v821 = vpack.c.b16 %v808, %v807
      %v822 = vpack.c.b16 %v810, %v809
      %v823 = vpack.c.b16 %v812, %v811
      %v824 = vpack.c.b16 %v814, %v813
      %v825 = vpack.c.b16 %v816, %v815
      %v826 = vpack.c.b16 %v818, %v817
      %835 = vmatprep.subr.bf16.mxu0 0
      %836 = vmatpush1.bf16.msra.mxu0 %v826
      %837 = vmatprep.subr.bf16.mxu0 0
      %838 = vmatpush1.bf16.msra.mxu0 %v825
      %839 = vmatprep.subr.bf16.mxu0 0
      %840 = vmatpush1.bf16.msra.mxu0 %v824
      %841 = vmatprep.subr.bf16.mxu0 0
      %842 = vmatpush1.bf16.msra.mxu0 %v823
      %843 = vmatprep.subr.bf16.mxu0 0
      %844 = vmatpush1.bf16.msra.mxu0 %v822
      %845 = vmatprep.subr.bf16.mxu0 0
      %846 = vmatpush1.bf16.msra.mxu0 %v821
      %847 = vmatprep.subr.bf16.mxu0 0
      %848 = vmatpush1.bf16.msra.mxu0 %v820
      %849 = vmatprep.subr.bf16.mxu0 0
      %850 = vmatpush1.bf16.msra.mxu0 %v819
      %851 = vmatprep.subr.bf16.mxu0 0
      %852 = vmatpush2.bf16.msra.mxu0 0
      %853 = vmatprep.subr.bf16.mxu0 0
      %854 = vmatpush2.bf16.msra.mxu0 0
      %855 = vmatprep.subr.bf16.mxu0 0
      %856 = vmatpush2.bf16.msra.mxu0 0
      %857 = vmatprep.subr.bf16.mxu0 0
      %858 = vmatpush2.bf16.msra.mxu0 0
      %859 = vmatprep.subr.bf16.mxu0 0
      %860 = vmatpush2.bf16.msra.mxu0 0
      %861 = vmatprep.subr.bf16.mxu0 0
      %862 = vmatpush2.bf16.msra.mxu0 0
      %863 = vmatprep.subr.bf16.mxu0 0
      %864 = vmatpush2.bf16.msra.mxu0 0
      %865 = vmatprep.subr.bf16.mxu0 0
      %866 = vmatpush2.bf16.msra.mxu0 0
      %867 = vmatprep.mubr.bf16.mxu0 0
      %868 = vmatmul.mubr.bf16.gmra.mxu0 %v361
      %v869 = vpop.f32.mrf.mxu0
      %v870 = vadd.f32 %v624, %v869
      %v871 = vpop.f32.mrf.mxu0
      %v872 = vpop.f32.mrf.mxu0
      %v873 = vadd.f32 %v627, %v872
      %v874 = vpop.f32.mrf.mxu0
      %875 = vmatprep.mubr.bf16.mxu0 0
      %876 = vmatmul.mubr.bf16.gmra.mxu0 %v362
      %v877 = vpop.f32.mrf.mxu0
      %v878 = vadd.f32 %v632, %v877
      %v879 = vpop.f32.mrf.mxu0
      %v880 = vpop.f32.mrf.mxu0
      %v881 = vadd.f32 %v635, %v880
      %v882 = vpop.f32.mrf.mxu0
      %883 = vmatprep.mubr.bf16.mxu0 0
      %884 = vmatmul.mubr.bf16.gmra.mxu0 %v363
      %v885 = vpop.f32.mrf.mxu0
      %v886 = vadd.f32 %v640, %v885
      %v887 = vpop.f32.mrf.mxu0
      %v888 = vpop.f32.mrf.mxu0
      %v889 = vadd.f32 %v643, %v888
      %v890 = vpop.f32.mrf.mxu0
      %891 = vmatprep.mubr.bf16.mxu0 0
      %892 = vmatmul.mubr.bf16.gmra.mxu0 %v364
      %v893 = vpop.f32.mrf.mxu0
      %v894 = vadd.f32 %v648, %v893
      %v895 = vpop.f32.mrf.mxu0
      %v896 = vpop.f32.mrf.mxu0
      %v897 = vadd.f32 %v651, %v896
      %v898 = vpop.f32.mrf.mxu0
      %899 = vmatprep.mubr.bf16.mxu0 0
      %900 = vmatmul.mubr.bf16.gmra.mxu0 %v365
      %v901 = vpop.f32.mrf.mxu0
      %v902 = vadd.f32 %v656, %v901
      %v903 = vpop.f32.mrf.mxu0
      %v904 = vpop.f32.mrf.mxu0
      %v905 = vadd.f32 %v659, %v904
      %v906 = vpop.f32.mrf.mxu0
      %907 = vmatprep.mubr.bf16.mxu0 0
      %908 = vmatmul.mubr.bf16.gmra.mxu0 %v366
      %v909 = vpop.f32.mrf.mxu0
      %v910 = vadd.f32 %v664, %v909
      %v911 = vpop.f32.mrf.mxu0
      %v912 = vpop.f32.mrf.mxu0
      %v913 = vadd.f32 %v667, %v912
      %v914 = vpop.f32.mrf.mxu0
      %915 = vmatprep.mubr.bf16.mxu0 0
      %916 = vmatmul.mubr.bf16.gmra.mxu0 %v367
      %v917 = vpop.f32.mrf.mxu0
      %v918 = vadd.f32 %v672, %v917
      %v919 = vpop.f32.mrf.mxu0
      %v920 = vpop.f32.mrf.mxu0
      %v921 = vadd.f32 %v675, %v920
      %v922 = vpop.f32.mrf.mxu0
      %923 = vmatprep.mubr.bf16.mxu0 0
      %924 = vmatmul.mubr.bf16.gmra.mxu0 %v368
      %v925 = vpop.f32.mrf.mxu0
      %v926 = vadd.f32 %v680, %v925
      %v927 = vpop.f32.mrf.mxu0
      %v928 = vpop.f32.mrf.mxu0
      %v929 = vadd.f32 %v683, %v928
      %v930 = vpop.f32.mrf.mxu0
      %931 = vmatprep.mubr.bf16.mxu0 0
      %932 = vmatmul.mubr.bf16.gmra.mxu0 %v369
      %v933 = vpop.f32.mrf.mxu0
      %v934 = vadd.f32 %v688, %v933
      %v935 = vpop.f32.mrf.mxu0
      %v936 = vpop.f32.mrf.mxu0
      %v937 = vadd.f32 %v691, %v936
      %v938 = vpop.f32.mrf.mxu0
      %939 = vmatprep.mubr.bf16.mxu0 0
      %940 = vmatmul.mubr.bf16.gmra.mxu0 %v370
      %v941 = vpop.f32.mrf.mxu0
      %v942 = vadd.f32 %v696, %v941
      %v943 = vpop.f32.mrf.mxu0
      %v944 = vpop.f32.mrf.mxu0
      %v945 = vadd.f32 %v699, %v944
      %v946 = vpop.f32.mrf.mxu0
      %947 = vmatprep.mubr.bf16.mxu0 0
      %948 = vmatmul.mubr.bf16.gmra.mxu0 %v371
      %v949 = vpop.f32.mrf.mxu0
      %v950 = vadd.f32 %v704, %v949
      %v951 = vpop.f32.mrf.mxu0
      %v952 = vpop.f32.mrf.mxu0
      %v953 = vadd.f32 %v707, %v952
      %v954 = vpop.f32.mrf.mxu0
      %955 = vmatprep.mubr.bf16.mxu0 0
      %956 = vmatmul.mubr.bf16.gmra.mxu0 %v372
      %v957 = vpop.f32.mrf.mxu0
      %v958 = vadd.f32 %v712, %v957
      %v959 = vpop.f32.mrf.mxu0
      %v960 = vpop.f32.mrf.mxu0
      %v961 = vadd.f32 %v715, %v960
      %v962 = vpop.f32.mrf.mxu0
      %963 = vmatprep.mubr.bf16.mxu0 0
      %964 = vmatmul.mubr.bf16.gmra.mxu0 %v373
      %v965 = vpop.f32.mrf.mxu0
      %v966 = vadd.f32 %v720, %v965
      %v967 = vpop.f32.mrf.mxu0
      %v968 = vpop.f32.mrf.mxu0
      %v969 = vadd.f32 %v723, %v968
      %v970 = vpop.f32.mrf.mxu0
      %971 = vmatprep.mubr.bf16.mxu0 0
      %972 = vmatmul.mubr.bf16.gmra.mxu0 %v374
      %v973 = vpop.f32.mrf.mxu0
      %v974 = vadd.f32 %v728, %v973
      %v975 = vpop.f32.mrf.mxu0
      %v976 = vpop.f32.mrf.mxu0
      %v977 = vadd.f32 %v731, %v976
      %v978 = vpop.f32.mrf.mxu0
      %979 = vmatprep.mubr.bf16.mxu0 0
      %980 = vmatmul.mubr.bf16.gmra.mxu0 %v375
      %v981 = vpop.f32.mrf.mxu0
      %v982 = vadd.f32 %v736, %v981
      %v983 = vpop.f32.mrf.mxu0
      %v984 = vpop.f32.mrf.mxu0
      %v985 = vadd.f32 %v739, %v984
      %v986 = vpop.f32.mrf.mxu0
      %987 = vmatprep.mubr.bf16.mxu0 0
      %988 = vmatmul.mubr.bf16.gmra.mxu0 %v376
      %v989 = vpop.f32.mrf.mxu0
      %v990 = vadd.f32 %v744, %v989
      %v991 = vpop.f32.mrf.mxu0
      %v992 = vpop.f32.mrf.mxu0
      %v993 = vadd.f32 %v747, %v992
      %v994 = vpop.f32.mrf.mxu0
      %995 = vmatprep.mubr.bf16.mxu0 0
      %996 = vmatmul.mubr.bf16.gmra.mxu0 %v377
      %v997 = vpop.f32.mrf.mxu0
      %v998 = vadd.f32 %v752, %v997
      %v999 = vpop.f32.mrf.mxu0
      %v1000 = vpop.f32.mrf.mxu0
      %v1001 = vadd.f32 %v755, %v1000
      %v1002 = vpop.f32.mrf.mxu0
      %1003 = vmatprep.mubr.bf16.mxu0 0
      %1004 = vmatmul.mubr.bf16.gmra.mxu0 %v768
      %v1005 = vpop.f32.mrf.mxu0
      %v1006 = vadd.f32 %v760, %v1005
      %v1007 = vpop.f32.mrf.mxu0
      %v1008 = vpop.f32.mrf.mxu0
      %v1009 = vadd.f32 %v763, %v1008
      %v1010 = vpop.f32.mrf.mxu0
      %1011 = vdwg.mxu0
      %v1012 = vld [vmem:[%s207] sm:$0xe]
      %s1013 = scalar_lea.vmem %s1, 128
      %v1014 = vld [vmem:[%s1013] sm:$0xf]
      %v1015 = vld [vmem:[%s1013 + $0x4] sm:$0xf]
      %v1016 = vld [vmem:[%s1013 + $0x8] sm:$0xf]
      %v1017 = vld [vmem:[%s1013 + $0xc] sm:$0xf]
      %v1018 = vld [vmem:[%s1013 + $0x10] sm:$0xf]
      %v1019 = vld [vmem:[%s1013 + $0x14] sm:$0xf]
      %v1020 = vld [vmem:[%s1013 + $0x18] sm:$0xf]
      %v1021 = vld [vmem:[%s1013 + $0x1c] sm:$0xf]
      %v1022 = vld [vmem:[%s1013 + $0x20] sm:$0xf]
      %v1023 = vld [vmem:[%s1013 + $0x24] sm:$0xf]
      %v1024 = vld [vmem:[%s1013 + $0x28] sm:$0xf]
      %v1025 = vld [vmem:[%s1013 + $0x2c] sm:$0xf]
      %v1026 = vld [vmem:[%s1013 + $0x30] sm:$0xf]
      %v1027 = vld [vmem:[%s1013 + $0x34] sm:$0xf]
      %v1028 = vld [vmem:[%s1013 + $0x38] sm:$0xf]
      %v1029 = vld [vmem:[%s1013 + $0x3c] sm:$0xf]
      %v1031 = vunpack.c.l.b16 %v1012
      %v1032 = vpack.c.b16 %v326, %v1031
      %vm1033 = vcmask 1046528
      %v1034 = vrot.slane %v1032, 1
      %v1035 = vrot.slane %v362, 1
      %v1036 = vsel %vm1033, %v1034, %v1035
      %v1037 = vrot.slane %v363, 1
      %v1038 = vsel %vm1033, %v1035, %v1037
      %v1039 = vrot.slane %v364, 1
      %v1040 = vsel %vm1033, %v1037, %v1039
      %v1041 = vrot.slane %v365, 1
      %v1042 = vsel %vm1033, %v1039, %v1041
      %v1043 = vrot.slane %v366, 1
      %v1044 = vsel %vm1033, %v1041, %v1043
      %v1045 = vrot.slane %v367, 1
      %v1046 = vsel %vm1033, %v1043, %v1045
      %v1047 = vrot.slane %v368, 1
      %v1048 = vsel %vm1033, %v1045, %v1047
      %v1049 = vrot.slane %v369, 1
      %v1050 = vsel %vm1033, %v1047, %v1049
      %v1051 = vrot.slane %v370, 1
      %v1052 = vsel %vm1033, %v1049, %v1051
      %v1053 = vrot.slane %v371, 1
      %v1054 = vsel %vm1033, %v1051, %v1053
      %v1055 = vrot.slane %v372, 1
      %v1056 = vsel %vm1033, %v1053, %v1055
      %v1057 = vrot.slane %v373, 1
      %v1058 = vsel %vm1033, %v1055, %v1057
      %v1059 = vrot.slane %v374, 1
      %v1060 = vsel %vm1033, %v1057, %v1059
      %v1061 = vrot.slane %v375, 1
      %v1062 = vsel %vm1033, %v1059, %v1061
      %v1063 = vrot.slane %v376, 1
      %v1064 = vsel %vm1033, %v1061, %v1063
      %v1065 = vrot.slane %v377, 1
      %v1066 = vsel %vm1033, %v1063, %v1065
      %v1067 = vrot.slane %v378, 1
      %v1068 = vsel %vm1033, %v1065, %v1067
      %v1103 = vunpack.c.l.b16 %v1014
      %v1104 = vunpack.c.l.b16 %v1015
      %v1105 = vunpack.c.l.b16 %v1016
      %v1106 = vunpack.c.l.b16 %v1017
      %v1107 = vunpack.c.l.b16 %v1018
      %v1108 = vunpack.c.l.b16 %v1019
      %v1109 = vunpack.c.l.b16 %v1020
      %v1110 = vunpack.c.l.b16 %v1021
      %v1111 = vunpack.c.l.b16 %v1022
      %v1112 = vunpack.c.l.b16 %v1023
      %v1113 = vunpack.c.l.b16 %v1024
      %v1114 = vunpack.c.l.b16 %v1025
      %v1115 = vunpack.c.l.b16 %v1026
      %v1116 = vunpack.c.l.b16 %v1027
      %v1117 = vunpack.c.l.b16 %v1028
      %v1118 = vunpack.c.l.b16 %v1029
      %v1119 = vpack.c.b16 %v1104, %v1103
      %v1120 = vpack.c.b16 %v1106, %v1105
      %v1121 = vpack.c.b16 %v1108, %v1107
      %v1122 = vpack.c.b16 %v1110, %v1109
      %v1123 = vpack.c.b16 %v1112, %v1111
      %v1124 = vpack.c.b16 %v1114, %v1113
      %v1125 = vpack.c.b16 %v1116, %v1115
      %v1126 = vpack.c.b16 %v1118, %v1117
      %1135 = vmatprep.subr.bf16.mxu0 0
      %1136 = vmatpush1.bf16.msra.mxu0 %v1126
      %1137 = vmatprep.subr.bf16.mxu0 0
      %1138 = vmatpush1.bf16.msra.mxu0 %v1125
      %1139 = vmatprep.subr.bf16.mxu0 0
      %1140 = vmatpush1.bf16.msra.mxu0 %v1124
      %1141 = vmatprep.subr.bf16.mxu0 0
      %1142 = vmatpush1.bf16.msra.mxu0 %v1123
      %1143 = vmatprep.subr.bf16.mxu0 0
      %1144 = vmatpush1.bf16.msra.mxu0 %v1122
      %1145 = vmatprep.subr.bf16.mxu0 0
      %1146 = vmatpush1.bf16.msra.mxu0 %v1121
      %1147 = vmatprep.subr.bf16.mxu0 0
      %1148 = vmatpush1.bf16.msra.mxu0 %v1120
      %1149 = vmatprep.subr.bf16.mxu0 0
      %1150 = vmatpush1.bf16.msra.mxu0 %v1119
      %1151 = vmatprep.subr.bf16.mxu0 0
      %1152 = vmatpush2.bf16.msra.mxu0 0
      %1153 = vmatprep.subr.bf16.mxu0 0
      %1154 = vmatpush2.bf16.msra.mxu0 0
      %1155 = vmatprep.subr.bf16.mxu0 0
      %1156 = vmatpush2.bf16.msra.mxu0 0
      %1157 = vmatprep.subr.bf16.mxu0 0
      %1158 = vmatpush2.bf16.msra.mxu0 0
      %1159 = vmatprep.subr.bf16.mxu0 0
      %1160 = vmatpush2.bf16.msra.mxu0 0
      %1161 = vmatprep.subr.bf16.mxu0 0
      %1162 = vmatpush2.bf16.msra.mxu0 0
      %1163 = vmatprep.subr.bf16.mxu0 0
      %1164 = vmatpush2.bf16.msra.mxu0 0
      %1165 = vmatprep.subr.bf16.mxu0 0
      %1166 = vmatpush2.bf16.msra.mxu0 0
      %1167 = vmatprep.mubr.bf16.mxu0 0
      %1168 = vmatmul.mubr.bf16.gmra.mxu0 %v1036
      %v1169 = vpop.f32.mrf.mxu0
      %v1170 = vadd.f32 0.0, %v1169
      %v1171 = vpop.f32.mrf.mxu0
      %v1172 = vpop.f32.mrf.mxu0
      %v1173 = vadd.f32 0.0, %v1172
      %v1174 = vpop.f32.mrf.mxu0
      %1175 = vmatprep.mubr.bf16.mxu0 0
      %1176 = vmatmul.mubr.bf16.gmra.mxu0 %v1038
      %v1177 = vpop.f32.mrf.mxu0
      %v1178 = vadd.f32 0.0, %v1177
      %v1179 = vpop.f32.mrf.mxu0
      %v1180 = vpop.f32.mrf.mxu0
      %v1181 = vadd.f32 0.0, %v1180
      %v1182 = vpop.f32.mrf.mxu0
      %1183 = vmatprep.mubr.bf16.mxu0 0
      %1184 = vmatmul.mubr.bf16.gmra.mxu0 %v1040
      %v1185 = vpop.f32.mrf.mxu0
      %v1186 = vadd.f32 0.0, %v1185
      %v1187 = vpop.f32.mrf.mxu0
      %v1188 = vpop.f32.mrf.mxu0
      %v1189 = vadd.f32 0.0, %v1188
      %v1190 = vpop.f32.mrf.mxu0
      %1191 = vmatprep.mubr.bf16.mxu0 0
      %1192 = vmatmul.mubr.bf16.gmra.mxu0 %v1042
      %v1193 = vpop.f32.mrf.mxu0
      %v1194 = vadd.f32 0.0, %v1193
      %v1195 = vpop.f32.mrf.mxu0
      %v1196 = vpop.f32.mrf.mxu0
      %v1197 = vadd.f32 0.0, %v1196
      %v1198 = vpop.f32.mrf.mxu0
      %1199 = vmatprep.mubr.bf16.mxu0 0
      %1200 = vmatmul.mubr.bf16.gmra.mxu0 %v1044
      %v1201 = vpop.f32.mrf.mxu0
      %v1202 = vadd.f32 0.0, %v1201
      %v1203 = vpop.f32.mrf.mxu0
      %v1204 = vpop.f32.mrf.mxu0
      %v1205 = vadd.f32 0.0, %v1204
      %v1206 = vpop.f32.mrf.mxu0
      %1207 = vmatprep.mubr.bf16.mxu0 0
      %1208 = vmatmul.mubr.bf16.gmra.mxu0 %v1046
      %v1209 = vpop.f32.mrf.mxu0
      %v1210 = vadd.f32 0.0, %v1209
      %v1211 = vpop.f32.mrf.mxu0
      %v1212 = vpop.f32.mrf.mxu0
      %v1213 = vadd.f32 0.0, %v1212
      %v1214 = vpop.f32.mrf.mxu0
      %1215 = vmatprep.mubr.bf16.mxu0 0
      %1216 = vmatmul.mubr.bf16.gmra.mxu0 %v1048
      %v1217 = vpop.f32.mrf.mxu0
      %v1218 = vadd.f32 0.0, %v1217
      %v1219 = vpop.f32.mrf.mxu0
      %v1220 = vpop.f32.mrf.mxu0
      %v1221 = vadd.f32 0.0, %v1220
      %v1222 = vpop.f32.mrf.mxu0
      %1223 = vmatprep.mubr.bf16.mxu0 0
      %1224 = vmatmul.mubr.bf16.gmra.mxu0 %v1050
      %v1225 = vpop.f32.mrf.mxu0
      %v1226 = vadd.f32 0.0, %v1225
      %v1227 = vpop.f32.mrf.mxu0
      %v1228 = vpop.f32.mrf.mxu0
      %v1229 = vadd.f32 0.0, %v1228
      %v1230 = vpop.f32.mrf.mxu0
      %1231 = vmatprep.mubr.bf16.mxu0 0
      %1232 = vmatmul.mubr.bf16.gmra.mxu0 %v1052
      %v1233 = vpop.f32.mrf.mxu0
      %v1234 = vadd.f32 0.0, %v1233
      %v1235 = vpop.f32.mrf.mxu0
      %v1236 = vpop.f32.mrf.mxu0
      %v1237 = vadd.f32 0.0, %v1236
      %v1238 = vpop.f32.mrf.mxu0
      %1239 = vmatprep.mubr.bf16.mxu0 0
      %1240 = vmatmul.mubr.bf16.gmra.mxu0 %v1054
      %v1241 = vpop.f32.mrf.mxu0
      %v1242 = vadd.f32 0.0, %v1241
      %v1243 = vpop.f32.mrf.mxu0
      %v1244 = vpop.f32.mrf.mxu0
      %v1245 = vadd.f32 0.0, %v1244
      %v1246 = vpop.f32.mrf.mxu0
      %1247 = vmatprep.mubr.bf16.mxu0 0
      %1248 = vmatmul.mubr.bf16.gmra.mxu0 %v1056
      %v1249 = vpop.f32.mrf.mxu0
      %v1250 = vadd.f32 0.0, %v1249
      %v1251 = vpop.f32.mrf.mxu0
      %v1252 = vpop.f32.mrf.mxu0
      %v1253 = vadd.f32 0.0, %v1252
      %v1254 = vpop.f32.mrf.mxu0
      %1255 = vmatprep.mubr.bf16.mxu0 0
      %1256 = vmatmul.mubr.bf16.gmra.mxu0 %v1058
      %v1257 = vpop.f32.mrf.mxu0
      %v1258 = vadd.f32 0.0, %v1257
      %v1259 = vpop.f32.mrf.mxu0
      %v1260 = vpop.f32.mrf.mxu0
      %v1261 = vadd.f32 0.0, %v1260
      %v1262 = vpop.f32.mrf.mxu0
      %1263 = vmatprep.mubr.bf16.mxu0 0
      %1264 = vmatmul.mubr.bf16.gmra.mxu0 %v1060
      %v1265 = vpop.f32.mrf.mxu0
      %v1266 = vadd.f32 0.0, %v1265
      %v1267 = vpop.f32.mrf.mxu0
      %v1268 = vpop.f32.mrf.mxu0
      %v1269 = vadd.f32 0.0, %v1268
      %v1270 = vpop.f32.mrf.mxu0
      %1271 = vmatprep.mubr.bf16.mxu0 0
      %1272 = vmatmul.mubr.bf16.gmra.mxu0 %v1062
      %v1273 = vpop.f32.mrf.mxu0
      %v1274 = vadd.f32 0.0, %v1273
      %v1275 = vpop.f32.mrf.mxu0
      %v1276 = vpop.f32.mrf.mxu0
      %v1277 = vadd.f32 0.0, %v1276
      %v1278 = vpop.f32.mrf.mxu0
      %1279 = vmatprep.mubr.bf16.mxu0 0
      %1280 = vmatmul.mubr.bf16.gmra.mxu0 %v1064
      %v1281 = vpop.f32.mrf.mxu0
      %v1282 = vadd.f32 0.0, %v1281
      %v1283 = vpop.f32.mrf.mxu0
      %v1284 = vpop.f32.mrf.mxu0
      %v1285 = vadd.f32 0.0, %v1284
      %v1286 = vpop.f32.mrf.mxu0
      %1287 = vmatprep.mubr.bf16.mxu0 0
      %1288 = vmatmul.mubr.bf16.gmra.mxu0 %v1066
      %v1289 = vpop.f32.mrf.mxu0
      %v1290 = vadd.f32 0.0, %v1289
      %v1291 = vpop.f32.mrf.mxu0
      %v1292 = vpop.f32.mrf.mxu0
      %v1293 = vadd.f32 0.0, %v1292
      %v1294 = vpop.f32.mrf.mxu0
      %1295 = vmatprep.mubr.bf16.mxu0 0
      %1296 = vmatmul.mubr.bf16.gmra.mxu0 %v1068
      %v1297 = vpop.f32.mrf.mxu0
      %v1298 = vadd.f32 0.0, %v1297
      %v1299 = vpop.f32.mrf.mxu0
      %v1300 = vpop.f32.mrf.mxu0
      %v1301 = vadd.f32 0.0, %v1300
      %v1302 = vpop.f32.mrf.mxu0
      %1303 = vmatprep.mubr.bf16.mxu0 0
      %1304 = vmatmul.mubr.bf16.gmra.mxu0 %v1067
      %v1305 = vpop.f32.mrf.mxu0
      %v1306 = vadd.f32 0.0, %v1305
      %v1307 = vpop.f32.mrf.mxu0
      %v1308 = vpop.f32.mrf.mxu0
      %v1309 = vadd.f32 0.0, %v1308
      %v1310 = vpop.f32.mrf.mxu0
      %1311 = vdwg.mxu0
      %v1312 = vadd.f32 %v870, %v1170
      %v1313 = vadd.f32 %v873, %v1173
      %v1314 = vadd.f32 %v878, %v1178
      %v1315 = vadd.f32 %v881, %v1181
      %v1316 = vadd.f32 %v886, %v1186
      %v1317 = vadd.f32 %v889, %v1189
      %v1318 = vadd.f32 %v894, %v1194
      %v1319 = vadd.f32 %v897, %v1197
      %v1320 = vadd.f32 %v902, %v1202
      %v1321 = vadd.f32 %v905, %v1205
      %v1322 = vadd.f32 %v910, %v1210
      %v1323 = vadd.f32 %v913, %v1213
      %v1324 = vadd.f32 %v918, %v1218
      %v1325 = vadd.f32 %v921, %v1221
      %v1326 = vadd.f32 %v926, %v1226
      %v1327 = vadd.f32 %v929, %v1229
      %v1328 = vadd.f32 %v934, %v1234
      %v1329 = vadd.f32 %v937, %v1237
      %v1330 = vadd.f32 %v942, %v1242
      %v1331 = vadd.f32 %v945, %v1245
      %v1332 = vadd.f32 %v950, %v1250
      %v1333 = vadd.f32 %v953, %v1253
      %v1334 = vadd.f32 %v958, %v1258
      %v1335 = vadd.f32 %v961, %v1261
      %v1336 = vadd.f32 %v966, %v1266
      %v1337 = vadd.f32 %v969, %v1269
      %v1338 = vadd.f32 %v974, %v1274
      %v1339 = vadd.f32 %v977, %v1277
      %v1340 = vadd.f32 %v982, %v1282
      %v1341 = vadd.f32 %v985, %v1285
      %v1342 = vadd.f32 %v990, %v1290
      %v1343 = vadd.f32 %v993, %v1293
      %v1344 = vadd.f32 %v998, %v1298
      %v1345 = vadd.f32 %v1001, %v1301
      %v1346 = vadd.f32 %v1006, %v1306
      %v1347 = vadd.f32 %v1009, %v1309
      %v1348 = vld [vmem:[%s207 + $0x8] sm:$0xe]
      %v1349 = vld [vmem:[%s207 + $0xc] sm:$0xf]
      %v1350 = vld [vmem:[%s207 + $0x10] sm:$0xf]
      %v1351 = vld [vmem:[%s207 + $0x14] sm:$0xf]
      %v1352 = vld [vmem:[%s207 + $0x18] sm:$0xf]
      %v1353 = vld [vmem:[%s207 + $0x1c] sm:$0xf]
      %v1354 = vld [vmem:[%s207 + $0x20] sm:$0xf]
      %v1355 = vld [vmem:[%s207 + $0x24] sm:$0xf]
      %v1356 = vld [vmem:[%s207 + $0x28] sm:$0xf]
      %v1357 = vld [vmem:[%s207 + $0x2c] sm:$0xf]
      %v1358 = vld [vmem:[%s207 + $0x30] sm:$0xf]
      %v1359 = vld [vmem:[%s207 + $0x34] sm:$0xf]
      %v1360 = vld [vmem:[%s207 + $0x38] sm:$0xf]
      %v1361 = vld [vmem:[%s207 + $0x3c] sm:$0xf]
      %v1362 = vld [vmem:[%s207 + $0x40] sm:$0xf]
      %v1363 = vld [vmem:[%s207 + $0x44] sm:$0xf]
      %v1364 = vld [vmem:[%s207 + $0x48] sm:$0xf]
      %v1365 = vld [vmem:[%s207 + $0x4c] sm:$0xf]
      %v1366 = vld [vmem:[%s207 + $0x50] sm:$0xf]
      %v1367 = vld [vmem:[%s207 + $0x54] sm:$0xf]
      %v1368 = vld [vmem:[%s207 + $0x58] sm:$0xf]
      %v1369 = vld [vmem:[%s207 + $0x5c] sm:$0xf]
      %v1370 = vld [vmem:[%s207 + $0x60] sm:$0xf]
      %v1371 = vld [vmem:[%s207 + $0x64] sm:$0xf]
      %v1372 = vld [vmem:[%s207 + $0x68] sm:$0xf]
      %v1373 = vld [vmem:[%s207 + $0x6c] sm:$0xf]
      %v1374 = vld [vmem:[%s207 + $0x70] sm:$0xf]
      %v1375 = vld [vmem:[%s207 + $0x74] sm:$0xf]
      %v1376 = vld [vmem:[%s207 + $0x78] sm:$0xf]
      %v1377 = vld [vmem:[%s207 + $0x7c] sm:$0xf]
      %v1378 = vld [vmem:[%s207 + $0x80] sm:$0xf]
      %v1379 = vld [vmem:[%s207 + $0x84] sm:$0xf]
      %v1380 = vld [vmem:[%s207 + $0x88] sm:$0xf]
      %v1381 = vld [vmem:[%s207 + $0x8c] sm:$0xf]
      %v1382 = vld [vmem:[%s207 + $0x90] sm:$0xf]
      %v1383 = vld [vmem:[%s207 + $0x94] sm:$0xf]
      %s1384 = scalar_lea.vmem %s1, 192
      %v1385 = vld [vmem:[%s1384] sm:$0xf]
      %v1386 = vld [vmem:[%s1384 + $0x4] sm:$0xf]
      %v1387 = vld [vmem:[%s1384 + $0x8] sm:$0xf]
      %v1388 = vld [vmem:[%s1384 + $0xc] sm:$0xf]
      %v1389 = vld [vmem:[%s1384 + $0x10] sm:$0xf]
      %v1390 = vld [vmem:[%s1384 + $0x14] sm:$0xf]
      %v1391 = vld [vmem:[%s1384 + $0x18] sm:$0xf]
      %v1392 = vld [vmem:[%s1384 + $0x1c] sm:$0xf]
      %v1393 = vld [vmem:[%s1384 + $0x20] sm:$0xf]
      %v1394 = vld [vmem:[%s1384 + $0x24] sm:$0xf]
      %v1395 = vld [vmem:[%s1384 + $0x28] sm:$0xf]
      %v1396 = vld [vmem:[%s1384 + $0x2c] sm:$0xf]
      %v1397 = vld [vmem:[%s1384 + $0x30] sm:$0xf]
      %v1398 = vld [vmem:[%s1384 + $0x34] sm:$0xf]
      %v1399 = vld [vmem:[%s1384 + $0x38] sm:$0xf]
      %v1400 = vld [vmem:[%s1384 + $0x3c] sm:$0xf]
      %v1437 = vunpack.c.l.b16 %v1348
      %v1438 = vunpack.c.l.b16 %v1349
      %v1439 = vunpack.c.l.b16 %v1350
      %v1440 = vunpack.c.l.b16 %v1351
      %v1441 = vunpack.c.l.b16 %v1352
      %v1442 = vunpack.c.l.b16 %v1353
      %v1443 = vunpack.c.l.b16 %v1354
      %v1444 = vunpack.c.l.b16 %v1355
      %v1445 = vunpack.c.l.b16 %v1356
      %v1446 = vunpack.c.l.b16 %v1357
      %v1447 = vunpack.c.l.b16 %v1358
      %v1448 = vunpack.c.l.b16 %v1359
      %v1449 = vunpack.c.l.b16 %v1360
      %v1450 = vunpack.c.l.b16 %v1361
      %v1451 = vunpack.c.l.b16 %v1362
      %v1452 = vunpack.c.l.b16 %v1363
      %v1453 = vunpack.c.l.b16 %v1364
      %v1454 = vunpack.c.l.b16 %v1365
      %v1455 = vunpack.c.l.b16 %v1366
      %v1456 = vunpack.c.l.b16 %v1367
      %v1457 = vunpack.c.l.b16 %v1368
      %v1458 = vunpack.c.l.b16 %v1369
      %v1459 = vunpack.c.l.b16 %v1370
      %v1460 = vunpack.c.l.b16 %v1371
      %v1461 = vunpack.c.l.b16 %v1372
      %v1462 = vunpack.c.l.b16 %v1373
      %v1463 = vunpack.c.l.b16 %v1374
      %v1464 = vunpack.c.l.b16 %v1375
      %v1465 = vunpack.c.l.b16 %v1376
      %v1466 = vunpack.c.l.b16 %v1377
      %v1467 = vunpack.c.l.b16 %v1378
      %v1468 = vunpack.c.l.b16 %v1379
      %v1469 = vunpack.c.l.b16 %v1380
      %v1470 = vunpack.c.l.b16 %v1381
      %v1471 = vunpack.c.l.b16 %v1382
      %v1472 = vunpack.c.l.b16 %v1383
      %v1473 = vpack.c.b16 %v1438, %v1437
      %v1474 = vpack.c.b16 %v1440, %v1439
      %v1475 = vpack.c.b16 %v1442, %v1441
      %v1476 = vpack.c.b16 %v1444, %v1443
      %v1477 = vpack.c.b16 %v1446, %v1445
      %v1478 = vpack.c.b16 %v1448, %v1447
      %v1479 = vpack.c.b16 %v1450, %v1449
      %v1480 = vpack.c.b16 %v1452, %v1451
      %v1481 = vpack.c.b16 %v1454, %v1453
      %v1482 = vpack.c.b16 %v1456, %v1455
      %v1483 = vpack.c.b16 %v1458, %v1457
      %v1484 = vpack.c.b16 %v1460, %v1459
      %v1485 = vpack.c.b16 %v1462, %v1461
      %v1486 = vpack.c.b16 %v1464, %v1463
      %v1487 = vpack.c.b16 %v1466, %v1465
      %v1488 = vpack.c.b16 %v1468, %v1467
      %v1489 = vpack.c.b16 %v1470, %v1469
      %v1490 = vpack.c.b16 %v1472, %v1471
      %v1491 = vrot.slane %v1473, 1
      %v1492 = vrot.slane %v1474, 1
      %v1493 = vsel %vm1033, %v1491, %v1492
      %v1494 = vrot.slane %v1475, 1
      %v1495 = vsel %vm1033, %v1492, %v1494
      %v1496 = vrot.slane %v1476, 1
      %v1497 = vsel %vm1033, %v1494, %v1496
      %v1498 = vrot.slane %v1477, 1
      %v1499 = vsel %vm1033, %v1496, %v1498
      %v1500 = vrot.slane %v1478, 1
      %v1501 = vsel %vm1033, %v1498, %v1500
      %v1502 = vrot.slane %v1479, 1
      %v1503 = vsel %vm1033, %v1500, %v1502
      %v1504 = vrot.slane %v1480, 1
      %v1505 = vsel %vm1033, %v1502, %v1504
      %v1506 = vrot.slane %v1481, 1
      %v1507 = vsel %vm1033, %v1504, %v1506
      %v1508 = vrot.slane %v1482, 1
      %v1509 = vsel %vm1033, %v1506, %v1508
      %v1510 = vrot.slane %v1483, 1
      %v1511 = vsel %vm1033, %v1508, %v1510
      %v1512 = vrot.slane %v1484, 1
      %v1513 = vsel %vm1033, %v1510, %v1512
      %v1514 = vrot.slane %v1485, 1
      %v1515 = vsel %vm1033, %v1512, %v1514
      %v1516 = vrot.slane %v1486, 1
      %v1517 = vsel %vm1033, %v1514, %v1516
      %v1518 = vrot.slane %v1487, 1
      %v1519 = vsel %vm1033, %v1516, %v1518
      %v1520 = vrot.slane %v1488, 1
      %v1521 = vsel %vm1033, %v1518, %v1520
      %v1522 = vrot.slane %v1489, 1
      %v1523 = vsel %vm1033, %v1520, %v1522
      %v1524 = vrot.slane %v1490, 1
      %v1525 = vsel %vm1033, %v1522, %v1524
      %v1560 = vunpack.c.l.b16 %v1385
      %v1561 = vunpack.c.l.b16 %v1386
      %v1562 = vunpack.c.l.b16 %v1387
      %v1563 = vunpack.c.l.b16 %v1388
      %v1564 = vunpack.c.l.b16 %v1389
      %v1565 = vunpack.c.l.b16 %v1390
      %v1566 = vunpack.c.l.b16 %v1391
      %v1567 = vunpack.c.l.b16 %v1392
      %v1568 = vunpack.c.l.b16 %v1393
      %v1569 = vunpack.c.l.b16 %v1394
      %v1570 = vunpack.c.l.b16 %v1395
      %v1571 = vunpack.c.l.b16 %v1396
      %v1572 = vunpack.c.l.b16 %v1397
      %v1573 = vunpack.c.l.b16 %v1398
      %v1574 = vunpack.c.l.b16 %v1399
      %v1575 = vunpack.c.l.b16 %v1400
      %v1576 = vpack.c.b16 %v1561, %v1560
      %v1577 = vpack.c.b16 %v1563, %v1562
      %v1578 = vpack.c.b16 %v1565, %v1564
      %v1579 = vpack.c.b16 %v1567, %v1566
      %v1580 = vpack.c.b16 %v1569, %v1568
      %v1581 = vpack.c.b16 %v1571, %v1570
      %v1582 = vpack.c.b16 %v1573, %v1572
      %v1583 = vpack.c.b16 %v1575, %v1574
      %1592 = vmatprep.subr.bf16.mxu0 0
      %1593 = vmatpush1.bf16.msra.mxu0 %v1583
      %1594 = vmatprep.subr.bf16.mxu0 0
      %1595 = vmatpush1.bf16.msra.mxu0 %v1582
      %1596 = vmatprep.subr.bf16.mxu0 0
      %1597 = vmatpush1.bf16.msra.mxu0 %v1581
      %1598 = vmatprep.subr.bf16.mxu0 0
      %1599 = vmatpush1.bf16.msra.mxu0 %v1580
      %1600 = vmatprep.subr.bf16.mxu0 0
      %1601 = vmatpush1.bf16.msra.mxu0 %v1579
      %1602 = vmatprep.subr.bf16.mxu0 0
      %1603 = vmatpush1.bf16.msra.mxu0 %v1578
      %1604 = vmatprep.subr.bf16.mxu0 0
      %1605 = vmatpush1.bf16.msra.mxu0 %v1577
      %1606 = vmatprep.subr.bf16.mxu0 0
      %1607 = vmatpush1.bf16.msra.mxu0 %v1576
      %1608 = vmatprep.subr.bf16.mxu0 0
      %1609 = vmatpush2.bf16.msra.mxu0 0
      %1610 = vmatprep.subr.bf16.mxu0 0
      %1611 = vmatpush2.bf16.msra.mxu0 0
      %1612 = vmatprep.subr.bf16.mxu0 0
      %1613 = vmatpush2.bf16.msra.mxu0 0
      %1614 = vmatprep.subr.bf16.mxu0 0
      %1615 = vmatpush2.bf16.msra.mxu0 0
      %1616 = vmatprep.subr.bf16.mxu0 0
      %1617 = vmatpush2.bf16.msra.mxu0 0
      %1618 = vmatprep.subr.bf16.mxu0 0
      %1619 = vmatpush2.bf16.msra.mxu0 0
      %1620 = vmatprep.subr.bf16.mxu0 0
      %1621 = vmatpush2.bf16.msra.mxu0 0
      %1622 = vmatprep.subr.bf16.mxu0 0
      %1623 = vmatpush2.bf16.msra.mxu0 0
      %1624 = vmatprep.mubr.bf16.mxu0 0
      %1625 = vmatmul.mubr.bf16.gmra.mxu0 %v1493
      %v1626 = vpop.f32.mrf.mxu0
      %v1627 = vadd.f32 0.0, %v1626
      %v1628 = vpop.f32.mrf.mxu0
      %v1629 = vpop.f32.mrf.mxu0
      %v1630 = vadd.f32 0.0, %v1629
      %v1631 = vpop.f32.mrf.mxu0
      %1632 = vmatprep.mubr.bf16.mxu0 0
      %1633 = vmatmul.mubr.bf16.gmra.mxu0 %v1495
      %v1634 = vpop.f32.mrf.mxu0
      %v1635 = vadd.f32 0.0, %v1634
      %v1636 = vpop.f32.mrf.mxu0
      %v1637 = vpop.f32.mrf.mxu0
      %v1638 = vadd.f32 0.0, %v1637
      %v1639 = vpop.f32.mrf.mxu0
      %1640 = vmatprep.mubr.bf16.mxu0 0
      %1641 = vmatmul.mubr.bf16.gmra.mxu0 %v1497
      %v1642 = vpop.f32.mrf.mxu0
      %v1643 = vadd.f32 0.0, %v1642
      %v1644 = vpop.f32.mrf.mxu0
      %v1645 = vpop.f32.mrf.mxu0
      %v1646 = vadd.f32 0.0, %v1645
      %v1647 = vpop.f32.mrf.mxu0
      %1648 = vmatprep.mubr.bf16.mxu0 0
      %1649 = vmatmul.mubr.bf16.gmra.mxu0 %v1499
      %v1650 = vpop.f32.mrf.mxu0
      %v1651 = vadd.f32 0.0, %v1650
      %v1652 = vpop.f32.mrf.mxu0
      %v1653 = vpop.f32.mrf.mxu0
      %v1654 = vadd.f32 0.0, %v1653
      %v1655 = vpop.f32.mrf.mxu0
      %1656 = vmatprep.mubr.bf16.mxu0 0
      %1657 = vmatmul.mubr.bf16.gmra.mxu0 %v1501
      %v1658 = vpop.f32.mrf.mxu0
      %v1659 = vadd.f32 0.0, %v1658
      %v1660 = vpop.f32.mrf.mxu0
      %v1661 = vpop.f32.mrf.mxu0
      %v1662 = vadd.f32 0.0, %v1661
      %v1663 = vpop.f32.mrf.mxu0
      %1664 = vmatprep.mubr.bf16.mxu0 0
      %1665 = vmatmul.mubr.bf16.gmra.mxu0 %v1503
      %v1666 = vpop.f32.mrf.mxu0
      %v1667 = vadd.f32 0.0, %v1666
      %v1668 = vpop.f32.mrf.mxu0
      %v1669 = vpop.f32.mrf.mxu0
      %v1670 = vadd.f32 0.0, %v1669
      %v1671 = vpop.f32.mrf.mxu0
      %1672 = vmatprep.mubr.bf16.mxu0 0
      %1673 = vmatmul.mubr.bf16.gmra.mxu0 %v1505
      %v1674 = vpop.f32.mrf.mxu0
      %v1675 = vadd.f32 0.0, %v1674
      %v1676 = vpop.f32.mrf.mxu0
      %v1677 = vpop.f32.mrf.mxu0
      %v1678 = vadd.f32 0.0, %v1677
      %v1679 = vpop.f32.mrf.mxu0
      %1680 = vmatprep.mubr.bf16.mxu0 0
      %1681 = vmatmul.mubr.bf16.gmra.mxu0 %v1507
      %v1682 = vpop.f32.mrf.mxu0
      %v1683 = vadd.f32 0.0, %v1682
      %v1684 = vpop.f32.mrf.mxu0
      %v1685 = vpop.f32.mrf.mxu0
      %v1686 = vadd.f32 0.0, %v1685
      %v1687 = vpop.f32.mrf.mxu0
      %1688 = vmatprep.mubr.bf16.mxu0 0
      %1689 = vmatmul.mubr.bf16.gmra.mxu0 %v1509
      %v1690 = vpop.f32.mrf.mxu0
      %v1691 = vadd.f32 0.0, %v1690
      %v1692 = vpop.f32.mrf.mxu0
      %v1693 = vpop.f32.mrf.mxu0
      %v1694 = vadd.f32 0.0, %v1693
      %v1695 = vpop.f32.mrf.mxu0
      %1696 = vmatprep.mubr.bf16.mxu0 0
      %1697 = vmatmul.mubr.bf16.gmra.mxu0 %v1511
      %v1698 = vpop.f32.mrf.mxu0
      %v1699 = vadd.f32 0.0, %v1698
      %v1700 = vpop.f32.mrf.mxu0
      %v1701 = vpop.f32.mrf.mxu0
      %v1702 = vadd.f32 0.0, %v1701
      %v1703 = vpop.f32.mrf.mxu0
      %1704 = vmatprep.mubr.bf16.mxu0 0
      %1705 = vmatmul.mubr.bf16.gmra.mxu0 %v1513
      %v1706 = vpop.f32.mrf.mxu0
      %v1707 = vadd.f32 0.0, %v1706
      %v1708 = vpop.f32.mrf.mxu0
      %v1709 = vpop.f32.mrf.mxu0
      %v1710 = vadd.f32 0.0, %v1709
      %v1711 = vpop.f32.mrf.mxu0
      %1712 = vmatprep.mubr.bf16.mxu0 0
      %1713 = vmatmul.mubr.bf16.gmra.mxu0 %v1515
      %v1714 = vpop.f32.mrf.mxu0
      %v1715 = vadd.f32 0.0, %v1714
      %v1716 = vpop.f32.mrf.mxu0
      %v1717 = vpop.f32.mrf.mxu0
      %v1718 = vadd.f32 0.0, %v1717
      %v1719 = vpop.f32.mrf.mxu0
      %1720 = vmatprep.mubr.bf16.mxu0 0
      %1721 = vmatmul.mubr.bf16.gmra.mxu0 %v1517
      %v1722 = vpop.f32.mrf.mxu0
      %v1723 = vadd.f32 0.0, %v1722
      %v1724 = vpop.f32.mrf.mxu0
      %v1725 = vpop.f32.mrf.mxu0
      %v1726 = vadd.f32 0.0, %v1725
      %v1727 = vpop.f32.mrf.mxu0
      %1728 = vmatprep.mubr.bf16.mxu0 0
      %1729 = vmatmul.mubr.bf16.gmra.mxu0 %v1519
      %v1730 = vpop.f32.mrf.mxu0
      %v1731 = vadd.f32 0.0, %v1730
      %v1732 = vpop.f32.mrf.mxu0
      %v1733 = vpop.f32.mrf.mxu0
      %v1734 = vadd.f32 0.0, %v1733
      %v1735 = vpop.f32.mrf.mxu0
      %1736 = vmatprep.mubr.bf16.mxu0 0
      %1737 = vmatmul.mubr.bf16.gmra.mxu0 %v1521
      %v1738 = vpop.f32.mrf.mxu0
      %v1739 = vadd.f32 0.0, %v1738
      %v1740 = vpop.f32.mrf.mxu0
      %v1741 = vpop.f32.mrf.mxu0
      %v1742 = vadd.f32 0.0, %v1741
      %v1743 = vpop.f32.mrf.mxu0
      %1744 = vmatprep.mubr.bf16.mxu0 0
      %1745 = vmatmul.mubr.bf16.gmra.mxu0 %v1523
      %v1746 = vpop.f32.mrf.mxu0
      %v1747 = vadd.f32 0.0, %v1746
      %v1748 = vpop.f32.mrf.mxu0
      %v1749 = vpop.f32.mrf.mxu0
      %v1750 = vadd.f32 0.0, %v1749
      %v1751 = vpop.f32.mrf.mxu0
      %1752 = vmatprep.mubr.bf16.mxu0 0
      %1753 = vmatmul.mubr.bf16.gmra.mxu0 %v1525
      %v1754 = vpop.f32.mrf.mxu0
      %v1755 = vadd.f32 0.0, %v1754
      %v1756 = vpop.f32.mrf.mxu0
      %v1757 = vpop.f32.mrf.mxu0
      %v1758 = vadd.f32 0.0, %v1757
      %v1759 = vpop.f32.mrf.mxu0
      %1760 = vmatprep.mubr.bf16.mxu0 0
      %1761 = vmatmul.mubr.bf16.gmra.mxu0 %v1524
      %v1762 = vpop.f32.mrf.mxu0
      %v1763 = vadd.f32 0.0, %v1762
      %v1764 = vpop.f32.mrf.mxu0
      %v1765 = vpop.f32.mrf.mxu0
      %v1766 = vadd.f32 0.0, %v1765
      %v1767 = vpop.f32.mrf.mxu0
      %1768 = vdwg.mxu0
      %v1769 = vadd.f32 %v1312, %v1627
      %v1770 = vadd.f32 %v1313, %v1630
      %v1771 = vadd.f32 %v1314, %v1635
      %v1772 = vadd.f32 %v1315, %v1638
      %v1773 = vadd.f32 %v1316, %v1643
      %v1774 = vadd.f32 %v1317, %v1646
      %v1775 = vadd.f32 %v1318, %v1651
      %v1776 = vadd.f32 %v1319, %v1654
      %v1777 = vadd.f32 %v1320, %v1659
      %v1778 = vadd.f32 %v1321, %v1662
      %v1779 = vadd.f32 %v1322, %v1667
      %v1780 = vadd.f32 %v1323, %v1670
      %v1781 = vadd.f32 %v1324, %v1675
      %v1782 = vadd.f32 %v1325, %v1678
      %v1783 = vadd.f32 %v1326, %v1683
      %v1784 = vadd.f32 %v1327, %v1686
      %v1785 = vadd.f32 %v1328, %v1691
      %v1786 = vadd.f32 %v1329, %v1694
      %v1787 = vadd.f32 %v1330, %v1699
      %v1788 = vadd.f32 %v1331, %v1702
      %v1789 = vadd.f32 %v1332, %v1707
      %v1790 = vadd.f32 %v1333, %v1710
      %v1791 = vadd.f32 %v1334, %v1715
      %v1792 = vadd.f32 %v1335, %v1718
      %v1793 = vadd.f32 %v1336, %v1723
      %v1794 = vadd.f32 %v1337, %v1726
      %v1795 = vadd.f32 %v1338, %v1731
      %v1796 = vadd.f32 %v1339, %v1734
      %v1797 = vadd.f32 %v1340, %v1739
      %v1798 = vadd.f32 %v1341, %v1742
      %v1799 = vadd.f32 %v1342, %v1747
      %v1800 = vadd.f32 %v1343, %v1750
      %v1801 = vadd.f32 %v1344, %v1755
      %v1802 = vadd.f32 %v1345, %v1758
      %v1803 = vadd.f32 %v1346, %v1763
      %v1804 = vadd.f32 %v1347, %v1766
      %v1805 = vld [vmem:[%s207 + $0x8] sm:$0xe]
      %v1806 = vld [vmem:[%s207 + $0xc] sm:$0xf]
      %v1807 = vld [vmem:[%s207 + $0x10] sm:$0xf]
      %v1808 = vld [vmem:[%s207 + $0x14] sm:$0xf]
      %v1809 = vld [vmem:[%s207 + $0x18] sm:$0xf]
      %v1810 = vld [vmem:[%s207 + $0x1c] sm:$0xf]
      %v1811 = vld [vmem:[%s207 + $0x20] sm:$0xf]
      %v1812 = vld [vmem:[%s207 + $0x24] sm:$0xf]
      %v1813 = vld [vmem:[%s207 + $0x28] sm:$0xf]
      %v1814 = vld [vmem:[%s207 + $0x2c] sm:$0xf]
      %v1815 = vld [vmem:[%s207 + $0x30] sm:$0xf]
      %v1816 = vld [vmem:[%s207 + $0x34] sm:$0xf]
      %v1817 = vld [vmem:[%s207 + $0x38] sm:$0xf]
      %v1818 = vld [vmem:[%s207 + $0x3c] sm:$0xf]
      %v1819 = vld [vmem:[%s207 + $0x40] sm:$0xf]
      %v1820 = vld [vmem:[%s207 + $0x44] sm:$0xf]
      %v1821 = vld [vmem:[%s207 + $0x48] sm:$0xf]
      %v1822 = vld [vmem:[%s207 + $0x4c] sm:$0xf]
      %v1823 = vld [vmem:[%s207 + $0x50] sm:$0xf]
      %v1824 = vld [vmem:[%s207 + $0x54] sm:$0xf]
      %v1825 = vld [vmem:[%s207 + $0x58] sm:$0xf]
      %v1826 = vld [vmem:[%s207 + $0x5c] sm:$0xf]
      %v1827 = vld [vmem:[%s207 + $0x60] sm:$0xf]
      %v1828 = vld [vmem:[%s207 + $0x64] sm:$0xf]
      %v1829 = vld [vmem:[%s207 + $0x68] sm:$0xf]
      %v1830 = vld [vmem:[%s207 + $0x6c] sm:$0xf]
      %v1831 = vld [vmem:[%s207 + $0x70] sm:$0xf]
      %v1832 = vld [vmem:[%s207 + $0x74] sm:$0xf]
      %v1833 = vld [vmem:[%s207 + $0x78] sm:$0xf]
      %v1834 = vld [vmem:[%s207 + $0x7c] sm:$0xf]
      %v1835 = vld [vmem:[%s207 + $0x80] sm:$0xf]
      %v1836 = vld [vmem:[%s207 + $0x84] sm:$0xf]
      %v1837 = vld [vmem:[%s207 + $0x88] sm:$0xf]
      %v1838 = vld [vmem:[%s207 + $0x8c] sm:$0xf]
      %v1839 = vld [vmem:[%s207 + $0x90] sm:$0xf]
      %v1840 = vld [vmem:[%s207 + $0x94] sm:$0xf]
      %v1841 = vld [vmem:[%s207 + $0x98] sm:$0x1]
      %s1842 = scalar_lea.vmem %s1, 256
      %v1843 = vld [vmem:[%s1842] sm:$0xf]
      %v1844 = vld [vmem:[%s1842 + $0x4] sm:$0xf]
      %v1845 = vld [vmem:[%s1842 + $0x8] sm:$0xf]
      %v1846 = vld [vmem:[%s1842 + $0xc] sm:$0xf]
      %v1847 = vld [vmem:[%s1842 + $0x10] sm:$0xf]
      %v1848 = vld [vmem:[%s1842 + $0x14] sm:$0xf]
      %v1849 = vld [vmem:[%s1842 + $0x18] sm:$0xf]
      %v1850 = vld [vmem:[%s1842 + $0x1c] sm:$0xf]
      %v1851 = vld [vmem:[%s1842 + $0x20] sm:$0xf]
      %v1852 = vld [vmem:[%s1842 + $0x24] sm:$0xf]
      %v1853 = vld [vmem:[%s1842 + $0x28] sm:$0xf]
      %v1854 = vld [vmem:[%s1842 + $0x2c] sm:$0xf]
      %v1855 = vld [vmem:[%s1842 + $0x30] sm:$0xf]
      %v1856 = vld [vmem:[%s1842 + $0x34] sm:$0xf]
      %v1857 = vld [vmem:[%s1842 + $0x38] sm:$0xf]
      %v1858 = vld [vmem:[%s1842 + $0x3c] sm:$0xf]
      %v1896 = vunpack.c.l.b16 %v1805
      %v1897 = vunpack.c.l.b16 %v1806
      %v1898 = vunpack.c.l.b16 %v1807
      %v1899 = vunpack.c.l.b16 %v1808
      %v1900 = vunpack.c.l.b16 %v1809
      %v1901 = vunpack.c.l.b16 %v1810
      %v1902 = vunpack.c.l.b16 %v1811
      %v1903 = vunpack.c.l.b16 %v1812
      %v1904 = vunpack.c.l.b16 %v1813
      %v1905 = vunpack.c.l.b16 %v1814
      %v1906 = vunpack.c.l.b16 %v1815
      %v1907 = vunpack.c.l.b16 %v1816
      %v1908 = vunpack.c.l.b16 %v1817
      %v1909 = vunpack.c.l.b16 %v1818
      %v1910 = vunpack.c.l.b16 %v1819
      %v1911 = vunpack.c.l.b16 %v1820
      %v1912 = vunpack.c.l.b16 %v1821
      %v1913 = vunpack.c.l.b16 %v1822
      %v1914 = vunpack.c.l.b16 %v1823
      %v1915 = vunpack.c.l.b16 %v1824
      %v1916 = vunpack.c.l.b16 %v1825
      %v1917 = vunpack.c.l.b16 %v1826
      %v1918 = vunpack.c.l.b16 %v1827
      %v1919 = vunpack.c.l.b16 %v1828
      %v1920 = vunpack.c.l.b16 %v1829
      %v1921 = vunpack.c.l.b16 %v1830
      %v1922 = vunpack.c.l.b16 %v1831
      %v1923 = vunpack.c.l.b16 %v1832
      %v1924 = vunpack.c.l.b16 %v1833
      %v1925 = vunpack.c.l.b16 %v1834
      %v1926 = vunpack.c.l.b16 %v1835
      %v1927 = vunpack.c.l.b16 %v1836
      %v1928 = vunpack.c.l.b16 %v1837
      %v1929 = vunpack.c.l.b16 %v1838
      %v1930 = vunpack.c.l.b16 %v1839
      %v1931 = vunpack.c.l.b16 %v1840
      %v1932 = vunpack.c.l.b16 %v1841
      %v1933 = vpack.c.b16 %v1897, %v1896
      %v1934 = vpack.c.b16 %v1899, %v1898
      %v1935 = vpack.c.b16 %v1901, %v1900
      %v1936 = vpack.c.b16 %v1903, %v1902
      %v1937 = vpack.c.b16 %v1905, %v1904
      %v1938 = vpack.c.b16 %v1907, %v1906
      %v1939 = vpack.c.b16 %v1909, %v1908
      %v1940 = vpack.c.b16 %v1911, %v1910
      %v1941 = vpack.c.b16 %v1913, %v1912
      %v1942 = vpack.c.b16 %v1915, %v1914
      %v1943 = vpack.c.b16 %v1917, %v1916
      %v1944 = vpack.c.b16 %v1919, %v1918
      %v1945 = vpack.c.b16 %v1921, %v1920
      %v1946 = vpack.c.b16 %v1923, %v1922
      %v1947 = vpack.c.b16 %v1925, %v1924
      %v1948 = vpack.c.b16 %v1927, %v1926
      %v1949 = vpack.c.b16 %v1929, %v1928
      %v1950 = vpack.c.b16 %v1931, %v1930
      %v1951 = vpack.c.b16 %v1932, %v1932
      %vm1952 = vsmask.f32 6400
      %v1954 = vshrl.u32 %v1933, 16
      %v1956 = vrot.slane %v1954, 1
      %v1957 = vshll.u32 %v1933, 16
      %v1959 = vrot.slane %v1957, 2
      %v1960 = vor.u32 %v1956, %v1959
      %v1962 = vshrl.u32 %v1934, 16
      %v1964 = vrot.slane %v1962, 1
      %v1965 = vshll.u32 %v1934, 16
      %v1967 = vrot.slane %v1965, 2
      %v1968 = vor.u32 %v1964, %v1967
      %v1969 = vsel %vm1952, %v1960, %v1968
      %v1971 = vshrl.u32 %v1935, 16
      %v1973 = vrot.slane %v1971, 1
      %v1974 = vshll.u32 %v1935, 16
      %v1976 = vrot.slane %v1974, 2
      %v1977 = vor.u32 %v1973, %v1976
      %v1978 = vsel %vm1952, %v1968, %v1977
      %v1980 = vshrl.u32 %v1936, 16
      %v1982 = vrot.slane %v1980, 1
      %v1983 = vshll.u32 %v1936, 16
      %v1985 = vrot.slane %v1983, 2
      %v1986 = vor.u32 %v1982, %v1985
      %v1987 = vsel %vm1952, %v1977, %v1986
      %v1989 = vshrl.u32 %v1937, 16
      %v1991 = vrot.slane %v1989, 1
      %v1992 = vshll.u32 %v1937, 16
      %v1994 = vrot.slane %v1992, 2
      %v1995 = vor.u32 %v1991, %v1994
      %v1996 = vsel %vm1952, %v1986, %v1995
      %v1998 = vshrl.u32 %v1938, 16
      %v2000 = vrot.slane %v1998, 1
      %v2001 = vshll.u32 %v1938, 16
      %v2003 = vrot.slane %v2001, 2
      %v2004 = vor.u32 %v2000, %v2003
      %v2005 = vsel %vm1952, %v1995, %v2004
      %v2007 = vshrl.u32 %v1939, 16
      %v2009 = vrot.slane %v2007, 1
      %v2010 = vshll.u32 %v1939, 16
      %v2012 = vrot.slane %v2010, 2
      %v2013 = vor.u32 %v2009, %v2012
      %v2014 = vsel %vm1952, %v2004, %v2013
      %v2016 = vshrl.u32 %v1940, 16
      %v2018 = vrot.slane %v2016, 1
      %v2019 = vshll.u32 %v1940, 16
      %v2021 = vrot.slane %v2019, 2
      %v2022 = vor.u32 %v2018, %v2021
      %v2023 = vsel %vm1952, %v2013, %v2022
      %v2025 = vshrl.u32 %v1941, 16
      %v2027 = vrot.slane %v2025, 1
      %v2028 = vshll.u32 %v1941, 16
      %v2030 = vrot.slane %v2028, 2
      %v2031 = vor.u32 %v2027, %v2030
      %v2032 = vsel %vm1952, %v2022, %v2031
      %v2034 = vshrl.u32 %v1942, 16
      %v2036 = vrot.slane %v2034, 1
      %v2037 = vshll.u32 %v1942, 16
      %v2039 = vrot.slane %v2037, 2
      %v2040 = vor.u32 %v2036, %v2039
      %v2041 = vsel %vm1952, %v2031, %v2040
      %v2043 = vshrl.u32 %v1943, 16
      %v2045 = vrot.slane %v2043, 1
      %v2046 = vshll.u32 %v1943, 16
      %v2048 = vrot.slane %v2046, 2
      %v2049 = vor.u32 %v2045, %v2048
      %v2050 = vsel %vm1952, %v2040, %v2049
      %v2052 = vshrl.u32 %v1944, 16
      %v2054 = vrot.slane %v2052, 1
      %v2055 = vshll.u32 %v1944, 16
      %v2057 = vrot.slane %v2055, 2
      %v2058 = vor.u32 %v2054, %v2057
      %v2059 = vsel %vm1952, %v2049, %v2058
      %v2061 = vshrl.u32 %v1945, 16
      %v2063 = vrot.slane %v2061, 1
      %v2064 = vshll.u32 %v1945, 16
      %v2066 = vrot.slane %v2064, 2
      %v2067 = vor.u32 %v2063, %v2066
      %v2068 = vsel %vm1952, %v2058, %v2067
      %v2070 = vshrl.u32 %v1946, 16
      %v2072 = vrot.slane %v2070, 1
      %v2073 = vshll.u32 %v1946, 16
      %v2075 = vrot.slane %v2073, 2
      %v2076 = vor.u32 %v2072, %v2075
      %v2077 = vsel %vm1952, %v2067, %v2076
      %v2079 = vshrl.u32 %v1947, 16
      %v2081 = vrot.slane %v2079, 1
      %v2082 = vshll.u32 %v1947, 16
      %v2084 = vrot.slane %v2082, 2
      %v2085 = vor.u32 %v2081, %v2084
      %v2086 = vsel %vm1952, %v2076, %v2085
      %v2088 = vshrl.u32 %v1948, 16
      %v2090 = vrot.slane %v2088, 1
      %v2091 = vshll.u32 %v1948, 16
      %v2093 = vrot.slane %v2091, 2
      %v2094 = vor.u32 %v2090, %v2093
      %v2095 = vsel %vm1952, %v2085, %v2094
      %v2097 = vshrl.u32 %v1949, 16
      %v2099 = vrot.slane %v2097, 1
      %v2100 = vshll.u32 %v1949, 16
      %v2102 = vrot.slane %v2100, 2
      %v2103 = vor.u32 %v2099, %v2102
      %v2104 = vsel %vm1952, %v2094, %v2103
      %v2106 = vshrl.u32 %v1950, 16
      %v2108 = vrot.slane %v2106, 1
      %v2109 = vshll.u32 %v1950, 16
      %v2111 = vrot.slane %v2109, 2
      %v2112 = vor.u32 %v2108, %v2111
      %v2113 = vsel %vm1952, %v2103, %v2112
      %v2115 = vshll.u32 %v1951, 16
      %v2117 = vrot.slane %v2115, 2
      %v2118 = vsel %vm1952, %v2112, %v2117
      %v2153 = vunpack.c.l.b16 %v1843
      %v2154 = vunpack.c.l.b16 %v1844
      %v2155 = vunpack.c.l.b16 %v1845
      %v2156 = vunpack.c.l.b16 %v1846
      %v2157 = vunpack.c.l.b16 %v1847
      %v2158 = vunpack.c.l.b16 %v1848
      %v2159 = vunpack.c.l.b16 %v1849
      %v2160 = vunpack.c.l.b16 %v1850
      %v2161 = vunpack.c.l.b16 %v1851
      %v2162 = vunpack.c.l.b16 %v1852
      %v2163 = vunpack.c.l.b16 %v1853
      %v2164 = vunpack.c.l.b16 %v1854
      %v2165 = vunpack.c.l.b16 %v1855
      %v2166 = vunpack.c.l.b16 %v1856
      %v2167 = vunpack.c.l.b16 %v1857
      %v2168 = vunpack.c.l.b16 %v1858
      %v2169 = vpack.c.b16 %v2154, %v2153
      %v2170 = vpack.c.b16 %v2156, %v2155
      %v2171 = vpack.c.b16 %v2158, %v2157
      %v2172 = vpack.c.b16 %v2160, %v2159
      %v2173 = vpack.c.b16 %v2162, %v2161
      %v2174 = vpack.c.b16 %v2164, %v2163
      %v2175 = vpack.c.b16 %v2166, %v2165
      %v2176 = vpack.c.b16 %v2168, %v2167
      %2185 = vmatprep.subr.bf16.mxu0 0
      %2186 = vmatpush1.bf16.msra.mxu0 %v2176
      %2187 = vmatprep.subr.bf16.mxu0 0
      %2188 = vmatpush1.bf16.msra.mxu0 %v2175
      %2189 = vmatprep.subr.bf16.mxu0 0
      %2190 = vmatpush1.bf16.msra.mxu0 %v2174
      %2191 = vmatprep.subr.bf16.mxu0 0
      %2192 = vmatpush1.bf16.msra.mxu0 %v2173
      %2193 = vmatprep.subr.bf16.mxu0 0
      %2194 = vmatpush1.bf16.msra.mxu0 %v2172
      %2195 = vmatprep.subr.bf16.mxu0 0
      %2196 = vmatpush1.bf16.msra.mxu0 %v2171
      %2197 = vmatprep.subr.bf16.mxu0 0
      %2198 = vmatpush1.bf16.msra.mxu0 %v2170
      %2199 = vmatprep.subr.bf16.mxu0 0
      %2200 = vmatpush1.bf16.msra.mxu0 %v2169
      %2201 = vmatprep.subr.bf16.mxu0 0
      %2202 = vmatpush2.bf16.msra.mxu0 0
      %2203 = vmatprep.subr.bf16.mxu0 0
      %2204 = vmatpush2.bf16.msra.mxu0 0
      %2205 = vmatprep.subr.bf16.mxu0 0
      %2206 = vmatpush2.bf16.msra.mxu0 0
      %2207 = vmatprep.subr.bf16.mxu0 0
      %2208 = vmatpush2.bf16.msra.mxu0 0
      %2209 = vmatprep.subr.bf16.mxu0 0
      %2210 = vmatpush2.bf16.msra.mxu0 0
      %2211 = vmatprep.subr.bf16.mxu0 0
      %2212 = vmatpush2.bf16.msra.mxu0 0
      %2213 = vmatprep.subr.bf16.mxu0 0
      %2214 = vmatpush2.bf16.msra.mxu0 0
      %2215 = vmatprep.subr.bf16.mxu0 0
      %2216 = vmatpush2.bf16.msra.mxu0 0
      %2217 = vmatprep.mubr.bf16.mxu0 0
      %2218 = vmatmul.mubr.bf16.gmra.mxu0 %v1969
      %v2219 = vpop.f32.mrf.mxu0
      %v2220 = vadd.f32 0.0, %v2219
      %v2221 = vpop.f32.mrf.mxu0
      %v2222 = vpop.f32.mrf.mxu0
      %v2223 = vadd.f32 0.0, %v2222
      %v2224 = vpop.f32.mrf.mxu0
      %2225 = vmatprep.mubr.bf16.mxu0 0
      %2226 = vmatmul.mubr.bf16.gmra.mxu0 %v1978
      %v2227 = vpop.f32.mrf.mxu0
      %v2228 = vadd.f32 0.0, %v2227
      %v2229 = vpop.f32.mrf.mxu0
      %v2230 = vpop.f32.mrf.mxu0
      %v2231 = vadd.f32 0.0, %v2230
      %v2232 = vpop.f32.mrf.mxu0
      %2233 = vmatprep.mubr.bf16.mxu0 0
      %2234 = vmatmul.mubr.bf16.gmra.mxu0 %v1987
      %v2235 = vpop.f32.mrf.mxu0
      %v2236 = vadd.f32 0.0, %v2235
      %v2237 = vpop.f32.mrf.mxu0
      %v2238 = vpop.f32.mrf.mxu0
      %v2239 = vadd.f32 0.0, %v2238
      %v2240 = vpop.f32.mrf.mxu0
      %2241 = vmatprep.mubr.bf16.mxu0 0
      %2242 = vmatmul.mubr.bf16.gmra.mxu0 %v1996
      %v2243 = vpop.f32.mrf.mxu0
      %v2244 = vadd.f32 0.0, %v2243
      %v2245 = vpop.f32.mrf.mxu0
      %v2246 = vpop.f32.mrf.mxu0
      %v2247 = vadd.f32 0.0, %v2246
      %v2248 = vpop.f32.mrf.mxu0
      %2249 = vmatprep.mubr.bf16.mxu0 0
      %2250 = vmatmul.mubr.bf16.gmra.mxu0 %v2005
      %v2251 = vpop.f32.mrf.mxu0
      %v2252 = vadd.f32 0.0, %v2251
      %v2253 = vpop.f32.mrf.mxu0
      %v2254 = vpop.f32.mrf.mxu0
      %v2255 = vadd.f32 0.0, %v2254
      %v2256 = vpop.f32.mrf.mxu0
      %2257 = vmatprep.mubr.bf16.mxu0 0
      %2258 = vmatmul.mubr.bf16.gmra.mxu0 %v2014
      %v2259 = vpop.f32.mrf.mxu0
      %v2260 = vadd.f32 0.0, %v2259
      %v2261 = vpop.f32.mrf.mxu0
      %v2262 = vpop.f32.mrf.mxu0
      %v2263 = vadd.f32 0.0, %v2262
      %v2264 = vpop.f32.mrf.mxu0
      %2265 = vmatprep.mubr.bf16.mxu0 0
      %2266 = vmatmul.mubr.bf16.gmra.mxu0 %v2023
      %v2267 = vpop.f32.mrf.mxu0
      %v2268 = vadd.f32 0.0, %v2267
      %v2269 = vpop.f32.mrf.mxu0
      %v2270 = vpop.f32.mrf.mxu0
      %v2271 = vadd.f32 0.0, %v2270
      %v2272 = vpop.f32.mrf.mxu0
      %2273 = vmatprep.mubr.bf16.mxu0 0
      %2274 = vmatmul.mubr.bf16.gmra.mxu0 %v2032
      %v2275 = vpop.f32.mrf.mxu0
      %v2276 = vadd.f32 0.0, %v2275
      %v2277 = vpop.f32.mrf.mxu0
      %v2278 = vpop.f32.mrf.mxu0
      %v2279 = vadd.f32 0.0, %v2278
      %v2280 = vpop.f32.mrf.mxu0
      %2281 = vmatprep.mubr.bf16.mxu0 0
      %2282 = vmatmul.mubr.bf16.gmra.mxu0 %v2041
      %v2283 = vpop.f32.mrf.mxu0
      %v2284 = vadd.f32 0.0, %v2283
      %v2285 = vpop.f32.mrf.mxu0
      %v2286 = vpop.f32.mrf.mxu0
      %v2287 = vadd.f32 0.0, %v2286
      %v2288 = vpop.f32.mrf.mxu0
      %2289 = vmatprep.mubr.bf16.mxu0 0
      %2290 = vmatmul.mubr.bf16.gmra.mxu0 %v2050
      %v2291 = vpop.f32.mrf.mxu0
      %v2292 = vadd.f32 0.0, %v2291
      %v2293 = vpop.f32.mrf.mxu0
      %v2294 = vpop.f32.mrf.mxu0
      %v2295 = vadd.f32 0.0, %v2294
      %v2296 = vpop.f32.mrf.mxu0
      %2297 = vmatprep.mubr.bf16.mxu0 0
      %2298 = vmatmul.mubr.bf16.gmra.mxu0 %v2059
      %v2299 = vpop.f32.mrf.mxu0
      %v2300 = vadd.f32 0.0, %v2299
      %v2301 = vpop.f32.mrf.mxu0
      %v2302 = vpop.f32.mrf.mxu0
      %v2303 = vadd.f32 0.0, %v2302
      %v2304 = vpop.f32.mrf.mxu0
      %2305 = vmatprep.mubr.bf16.mxu0 0
      %2306 = vmatmul.mubr.bf16.gmra.mxu0 %v2068
      %v2307 = vpop.f32.mrf.mxu0
      %v2308 = vadd.f32 0.0, %v2307
      %v2309 = vpop.f32.mrf.mxu0
      %v2310 = vpop.f32.mrf.mxu0
      %v2311 = vadd.f32 0.0, %v2310
      %v2312 = vpop.f32.mrf.mxu0
      %2313 = vmatprep.mubr.bf16.mxu0 0
      %2314 = vmatmul.mubr.bf16.gmra.mxu0 %v2077
      %v2315 = vpop.f32.mrf.mxu0
      %v2316 = vadd.f32 0.0, %v2315
      %v2317 = vpop.f32.mrf.mxu0
      %v2318 = vpop.f32.mrf.mxu0
      %v2319 = vadd.f32 0.0, %v2318
      %v2320 = vpop.f32.mrf.mxu0
      %2321 = vmatprep.mubr.bf16.mxu0 0
      %2322 = vmatmul.mubr.bf16.gmra.mxu0 %v2086
      %v2323 = vpop.f32.mrf.mxu0
      %v2324 = vadd.f32 0.0, %v2323
      %v2325 = vpop.f32.mrf.mxu0
      %v2326 = vpop.f32.mrf.mxu0
      %v2327 = vadd.f32 0.0, %v2326
      %v2328 = vpop.f32.mrf.mxu0
      %2329 = vmatprep.mubr.bf16.mxu0 0
      %2330 = vmatmul.mubr.bf16.gmra.mxu0 %v2095
      %v2331 = vpop.f32.mrf.mxu0
      %v2332 = vadd.f32 0.0, %v2331
      %v2333 = vpop.f32.mrf.mxu0
      %v2334 = vpop.f32.mrf.mxu0
      %v2335 = vadd.f32 0.0, %v2334
      %v2336 = vpop.f32.mrf.mxu0
      %2337 = vmatprep.mubr.bf16.mxu0 0
      %2338 = vmatmul.mubr.bf16.gmra.mxu0 %v2104
      %v2339 = vpop.f32.mrf.mxu0
      %v2340 = vadd.f32 0.0, %v2339
      %v2341 = vpop.f32.mrf.mxu0
      %v2342 = vpop.f32.mrf.mxu0
      %v2343 = vadd.f32 0.0, %v2342
      %v2344 = vpop.f32.mrf.mxu0
      %2345 = vmatprep.mubr.bf16.mxu0 0
      %2346 = vmatmul.mubr.bf16.gmra.mxu0 %v2113
      %v2347 = vpop.f32.mrf.mxu0
      %v2348 = vadd.f32 0.0, %v2347
      %v2349 = vpop.f32.mrf.mxu0
      %v2350 = vpop.f32.mrf.mxu0
      %v2351 = vadd.f32 0.0, %v2350
      %v2352 = vpop.f32.mrf.mxu0
      %2353 = vmatprep.mubr.bf16.mxu0 0
      %2354 = vmatmul.mubr.bf16.gmra.mxu0 %v2118
      %v2355 = vpop.f32.mrf.mxu0
      %v2356 = vadd.f32 0.0, %v2355
      %v2357 = vpop.f32.mrf.mxu0
      %v2358 = vpop.f32.mrf.mxu0
      %v2359 = vadd.f32 0.0, %v2358
      %v2360 = vpop.f32.mrf.mxu0
      %2361 = vdwg.mxu0
      %v2362 = vadd.f32 %v1769, %v2220
      %v2363 = vadd.f32 %v1770, %v2223
      %v2364 = vadd.f32 %v1771, %v2228
      %v2365 = vadd.f32 %v1772, %v2231
      %v2366 = vadd.f32 %v1773, %v2236
      %v2367 = vadd.f32 %v1774, %v2239
      %v2368 = vadd.f32 %v1775, %v2244
      %v2369 = vadd.f32 %v1776, %v2247
      %v2370 = vadd.f32 %v1777, %v2252
      %v2371 = vadd.f32 %v1778, %v2255
      %v2372 = vadd.f32 %v1779, %v2260
      %v2373 = vadd.f32 %v1780, %v2263
      %v2374 = vadd.f32 %v1781, %v2268
      %v2375 = vadd.f32 %v1782, %v2271
      %v2376 = vadd.f32 %v1783, %v2276
      %v2377 = vadd.f32 %v1784, %v2279
      %v2378 = vadd.f32 %v1785, %v2284
      %v2379 = vadd.f32 %v1786, %v2287
      %v2380 = vadd.f32 %v1787, %v2292
      %v2381 = vadd.f32 %v1788, %v2295
      %v2382 = vadd.f32 %v1789, %v2300
      %v2383 = vadd.f32 %v1790, %v2303
      %v2384 = vadd.f32 %v1791, %v2308
      %v2385 = vadd.f32 %v1792, %v2311
      %v2386 = vadd.f32 %v1793, %v2316
      %v2387 = vadd.f32 %v1794, %v2319
      %v2388 = vadd.f32 %v1795, %v2324
      %v2389 = vadd.f32 %v1796, %v2327
      %v2390 = vadd.f32 %v1797, %v2332
      %v2391 = vadd.f32 %v1798, %v2335
      %v2392 = vadd.f32 %v1799, %v2340
      %v2393 = vadd.f32 %v1800, %v2343
      %v2394 = vadd.f32 %v1801, %v2348
      %v2395 = vadd.f32 %v1802, %v2351
      %v2396 = vadd.f32 %v1803, %v2356
      %v2397 = vadd.f32 %v1804, %v2359
      %v2398 = vld [vmem:[%s207 + $0x8] sm:$0xc]
      %s2399 = scalar_lea.vmem %s1, 320
      %v2400 = vld [vmem:[%s2399] sm:$0xf]
      %v2401 = vld [vmem:[%s2399 + $0x4] sm:$0xf]
      %v2402 = vld [vmem:[%s2399 + $0x8] sm:$0xf]
      %v2403 = vld [vmem:[%s2399 + $0xc] sm:$0xf]
      %v2404 = vld [vmem:[%s2399 + $0x10] sm:$0xf]
      %v2405 = vld [vmem:[%s2399 + $0x14] sm:$0xf]
      %v2406 = vld [vmem:[%s2399 + $0x18] sm:$0xf]
      %v2407 = vld [vmem:[%s2399 + $0x1c] sm:$0xf]
      %v2408 = vld [vmem:[%s2399 + $0x20] sm:$0xf]
      %v2409 = vld [vmem:[%s2399 + $0x24] sm:$0xf]
      %v2410 = vld [vmem:[%s2399 + $0x28] sm:$0xf]
      %v2411 = vld [vmem:[%s2399 + $0x2c] sm:$0xf]
      %v2412 = vld [vmem:[%s2399 + $0x30] sm:$0xf]
      %v2413 = vld [vmem:[%s2399 + $0x34] sm:$0xf]
      %v2414 = vld [vmem:[%s2399 + $0x38] sm:$0xf]
      %v2415 = vld [vmem:[%s2399 + $0x3c] sm:$0xf]
      %v2417 = vunpack.c.l.b16 %v2398
      %v2418 = vpack.c.b16 %v1897, %v2417
      %vm2419 = vcmask 1045504
      %v2420 = vrot.slane %v2418, 2
      %v2421 = vrot.slane %v1934, 2
      %v2422 = vsel %vm2419, %v2420, %v2421
      %v2423 = vrot.slane %v1935, 2
      %v2424 = vsel %vm2419, %v2421, %v2423
      %v2425 = vrot.slane %v1936, 2
      %v2426 = vsel %vm2419, %v2423, %v2425
      %v2427 = vrot.slane %v1937, 2
      %v2428 = vsel %vm2419, %v2425, %v2427
      %v2429 = vrot.slane %v1938, 2
      %v2430 = vsel %vm2419, %v2427, %v2429
      %v2431 = vrot.slane %v1939, 2
      %v2432 = vsel %vm2419, %v2429, %v2431
      %v2433 = vrot.slane %v1940, 2
      %v2434 = vsel %vm2419, %v2431, %v2433
      %v2435 = vrot.slane %v1941, 2
      %v2436 = vsel %vm2419, %v2433, %v2435
      %v2437 = vrot.slane %v1942, 2
      %v2438 = vsel %vm2419, %v2435, %v2437
      %v2439 = vrot.slane %v1943, 2
      %v2440 = vsel %vm2419, %v2437, %v2439
      %v2441 = vrot.slane %v1944, 2
      %v2442 = vsel %vm2419, %v2439, %v2441
      %v2443 = vrot.slane %v1945, 2
      %v2444 = vsel %vm2419, %v2441, %v2443
      %v2445 = vrot.slane %v1946, 2
      %v2446 = vsel %vm2419, %v2443, %v2445
      %v2447 = vrot.slane %v1947, 2
      %v2448 = vsel %vm2419, %v2445, %v2447
      %v2449 = vrot.slane %v1948, 2
      %v2450 = vsel %vm2419, %v2447, %v2449
      %v2451 = vrot.slane %v1949, 2
      %v2452 = vsel %vm2419, %v2449, %v2451
      %v2453 = vrot.slane %v1950, 2
      %v2454 = vsel %vm2419, %v2451, %v2453
      %v2455 = vrot.slane %v1951, 2
      %v2456 = vsel %vm2419, %v2453, %v2455
      %v2491 = vunpack.c.l.b16 %v2400
      %v2492 = vunpack.c.l.b16 %v2401
      %v2493 = vunpack.c.l.b16 %v2402
      %v2494 = vunpack.c.l.b16 %v2403
      %v2495 = vunpack.c.l.b16 %v2404
      %v2496 = vunpack.c.l.b16 %v2405
      %v2497 = vunpack.c.l.b16 %v2406
      %v2498 = vunpack.c.l.b16 %v2407
      %v2499 = vunpack.c.l.b16 %v2408
      %v2500 = vunpack.c.l.b16 %v2409
      %v2501 = vunpack.c.l.b16 %v2410
      %v2502 = vunpack.c.l.b16 %v2411
      %v2503 = vunpack.c.l.b16 %v2412
      %v2504 = vunpack.c.l.b16 %v2413
      %v2505 = vunpack.c.l.b16 %v2414
      %v2506 = vunpack.c.l.b16 %v2415
      %v2507 = vpack.c.b16 %v2492, %v2491
      %v2508 = vpack.c.b16 %v2494, %v2493
      %v2509 = vpack.c.b16 %v2496, %v2495
      %v2510 = vpack.c.b16 %v2498, %v2497
      %v2511 = vpack.c.b16 %v2500, %v2499
      %v2512 = vpack.c.b16 %v2502, %v2501
      %v2513 = vpack.c.b16 %v2504, %v2503
      %v2514 = vpack.c.b16 %v2506, %v2505
      %2523 = vmatprep.subr.bf16.mxu0 0
      %2524 = vmatpush1.bf16.msra.mxu0 %v2514
      %2525 = vmatprep.subr.bf16.mxu0 0
      %2526 = vmatpush1.bf16.msra.mxu0 %v2513
      %2527 = vmatprep.subr.bf16.mxu0 0
      %2528 = vmatpush1.bf16.msra.mxu0 %v2512
      %2529 = vmatprep.subr.bf16.mxu0 0
      %2530 = vmatpush1.bf16.msra.mxu0 %v2511
      %2531 = vmatprep.subr.bf16.mxu0 0
      %2532 = vmatpush1.bf16.msra.mxu0 %v2510
      %2533 = vmatprep.subr.bf16.mxu0 0
      %2534 = vmatpush1.bf16.msra.mxu0 %v2509
      %2535 = vmatprep.subr.bf16.mxu0 0
      %2536 = vmatpush1.bf16.msra.mxu0 %v2508
      %2537 = vmatprep.subr.bf16.mxu0 0
      %2538 = vmatpush1.bf16.msra.mxu0 %v2507
      %2539 = vmatprep.subr.bf16.mxu0 0
      %2540 = vmatpush2.bf16.msra.mxu0 0
      %2541 = vmatprep.subr.bf16.mxu0 0
      %2542 = vmatpush2.bf16.msra.mxu0 0
      %2543 = vmatprep.subr.bf16.mxu0 0
      %2544 = vmatpush2.bf16.msra.mxu0 0
      %2545 = vmatprep.subr.bf16.mxu0 0
      %2546 = vmatpush2.bf16.msra.mxu0 0
      %2547 = vmatprep.subr.bf16.mxu0 0
      %2548 = vmatpush2.bf16.msra.mxu0 0
      %2549 = vmatprep.subr.bf16.mxu0 0
      %2550 = vmatpush2.bf16.msra.mxu0 0
      %2551 = vmatprep.subr.bf16.mxu0 0
      %2552 = vmatpush2.bf16.msra.mxu0 0
      %2553 = vmatprep.subr.bf16.mxu0 0
      %2554 = vmatpush2.bf16.msra.mxu0 0
      %2555 = vmatprep.mubr.bf16.mxu0 0
      %2556 = vmatmul.mubr.bf16.gmra.mxu0 %v2422
      %v2557 = vpop.f32.mrf.mxu0
      %v2558 = vadd.f32 0.0, %v2557
      %v2559 = vpop.f32.mrf.mxu0
      %v2560 = vpop.f32.mrf.mxu0
      %v2561 = vadd.f32 0.0, %v2560
      %v2562 = vpop.f32.mrf.mxu0
      %2563 = vmatprep.mubr.bf16.mxu0 0
      %2564 = vmatmul.mubr.bf16.gmra.mxu0 %v2424
      %v2565 = vpop.f32.mrf.mxu0
      %v2566 = vadd.f32 0.0, %v2565
      %v2567 = vpop.f32.mrf.mxu0
      %v2568 = vpop.f32.mrf.mxu0
      %v2569 = vadd.f32 0.0, %v2568
      %v2570 = vpop.f32.mrf.mxu0
      %2571 = vmatprep.mubr.bf16.mxu0 0
      %2572 = vmatmul.mubr.bf16.gmra.mxu0 %v2426
      %v2573 = vpop.f32.mrf.mxu0
      %v2574 = vadd.f32 0.0, %v2573
      %v2575 = vpop.f32.mrf.mxu0
      %v2576 = vpop.f32.mrf.mxu0
      %v2577 = vadd.f32 0.0, %v2576
      %v2578 = vpop.f32.mrf.mxu0
      %2579 = vmatprep.mubr.bf16.mxu0 0
      %2580 = vmatmul.mubr.bf16.gmra.mxu0 %v2428
      %v2581 = vpop.f32.mrf.mxu0
      %v2582 = vadd.f32 0.0, %v2581
      %v2583 = vpop.f32.mrf.mxu0
      %v2584 = vpop.f32.mrf.mxu0
      %v2585 = vadd.f32 0.0, %v2584
      %v2586 = vpop.f32.mrf.mxu0
      %2587 = vmatprep.mubr.bf16.mxu0 0
      %2588 = vmatmul.mubr.bf16.gmra.mxu0 %v2430
      %v2589 = vpop.f32.mrf.mxu0
      %v2590 = vadd.f32 0.0, %v2589
      %v2591 = vpop.f32.mrf.mxu0
      %v2592 = vpop.f32.mrf.mxu0
      %v2593 = vadd.f32 0.0, %v2592
      %v2594 = vpop.f32.mrf.mxu0
      %2595 = vmatprep.mubr.bf16.mxu0 0
      %2596 = vmatmul.mubr.bf16.gmra.mxu0 %v2432
      %v2597 = vpop.f32.mrf.mxu0
      %v2598 = vadd.f32 0.0, %v2597
      %v2599 = vpop.f32.mrf.mxu0
      %v2600 = vpop.f32.mrf.mxu0
      %v2601 = vadd.f32 0.0, %v2600
      %v2602 = vpop.f32.mrf.mxu0
      %2603 = vmatprep.mubr.bf16.mxu0 0
      %2604 = vmatmul.mubr.bf16.gmra.mxu0 %v2434
      %v2605 = vpop.f32.mrf.mxu0
      %v2606 = vadd.f32 0.0, %v2605
      %v2607 = vpop.f32.mrf.mxu0
      %v2608 = vpop.f32.mrf.mxu0
      %v2609 = vadd.f32 0.0, %v2608
      %v2610 = vpop.f32.mrf.mxu0
      %2611 = vmatprep.mubr.bf16.mxu0 0
      %2612 = vmatmul.mubr.bf16.gmra.mxu0 %v2436
      %v2613 = vpop.f32.mrf.mxu0
      %v2614 = vadd.f32 0.0, %v2613
      %v2615 = vpop.f32.mrf.mxu0
      %v2616 = vpop.f32.mrf.mxu0
      %v2617 = vadd.f32 0.0, %v2616
      %v2618 = vpop.f32.mrf.mxu0
      %2619 = vmatprep.mubr.bf16.mxu0 0
      %2620 = vmatmul.mubr.bf16.gmra.mxu0 %v2438
      %v2621 = vpop.f32.mrf.mxu0
      %v2622 = vadd.f32 0.0, %v2621
      %v2623 = vpop.f32.mrf.mxu0
      %v2624 = vpop.f32.mrf.mxu0
      %v2625 = vadd.f32 0.0, %v2624
      %v2626 = vpop.f32.mrf.mxu0
      %2627 = vmatprep.mubr.bf16.mxu0 0
      %2628 = vmatmul.mubr.bf16.gmra.mxu0 %v2440
      %v2629 = vpop.f32.mrf.mxu0
      %v2630 = vadd.f32 0.0, %v2629
      %v2631 = vpop.f32.mrf.mxu0
      %v2632 = vpop.f32.mrf.mxu0
      %v2633 = vadd.f32 0.0, %v2632
      %v2634 = vpop.f32.mrf.mxu0
      %2635 = vmatprep.mubr.bf16.mxu0 0
      %2636 = vmatmul.mubr.bf16.gmra.mxu0 %v2442
      %v2637 = vpop.f32.mrf.mxu0
      %v2638 = vadd.f32 0.0, %v2637
      %v2639 = vpop.f32.mrf.mxu0
      %v2640 = vpop.f32.mrf.mxu0
      %v2641 = vadd.f32 0.0, %v2640
      %v2642 = vpop.f32.mrf.mxu0
      %2643 = vmatprep.mubr.bf16.mxu0 0
      %2644 = vmatmul.mubr.bf16.gmra.mxu0 %v2444
      %v2645 = vpop.f32.mrf.mxu0
      %v2646 = vadd.f32 0.0, %v2645
      %v2647 = vpop.f32.mrf.mxu0
      %v2648 = vpop.f32.mrf.mxu0
      %v2649 = vadd.f32 0.0, %v2648
      %v2650 = vpop.f32.mrf.mxu0
      %2651 = vmatprep.mubr.bf16.mxu0 0
      %2652 = vmatmul.mubr.bf16.gmra.mxu0 %v2446
      %v2653 = vpop.f32.mrf.mxu0
      %v2654 = vadd.f32 0.0, %v2653
      %v2655 = vpop.f32.mrf.mxu0
      %v2656 = vpop.f32.mrf.mxu0
      %v2657 = vadd.f32 0.0, %v2656
      %v2658 = vpop.f32.mrf.mxu0
      %2659 = vmatprep.mubr.bf16.mxu0 0
      %2660 = vmatmul.mubr.bf16.gmra.mxu0 %v2448
      %v2661 = vpop.f32.mrf.mxu0
      %v2662 = vadd.f32 0.0, %v2661
      %v2663 = vpop.f32.mrf.mxu0
      %v2664 = vpop.f32.mrf.mxu0
      %v2665 = vadd.f32 0.0, %v2664
      %v2666 = vpop.f32.mrf.mxu0
      %2667 = vmatprep.mubr.bf16.mxu0 0
      %2668 = vmatmul.mubr.bf16.gmra.mxu0 %v2450
      %v2669 = vpop.f32.mrf.mxu0
      %v2670 = vadd.f32 0.0, %v2669
      %v2671 = vpop.f32.mrf.mxu0
      %v2672 = vpop.f32.mrf.mxu0
      %v2673 = vadd.f32 0.0, %v2672
      %v2674 = vpop.f32.mrf.mxu0
      %2675 = vmatprep.mubr.bf16.mxu0 0
      %2676 = vmatmul.mubr.bf16.gmra.mxu0 %v2452
      %v2677 = vpop.f32.mrf.mxu0
      %v2678 = vadd.f32 0.0, %v2677
      %v2679 = vpop.f32.mrf.mxu0
      %v2680 = vpop.f32.mrf.mxu0
      %v2681 = vadd.f32 0.0, %v2680
      %v2682 = vpop.f32.mrf.mxu0
      %2683 = vmatprep.mubr.bf16.mxu0 0
      %2684 = vmatmul.mubr.bf16.gmra.mxu0 %v2454
      %v2685 = vpop.f32.mrf.mxu0
      %v2686 = vadd.f32 0.0, %v2685
      %v2687 = vpop.f32.mrf.mxu0
      %v2688 = vpop.f32.mrf.mxu0
      %v2689 = vadd.f32 0.0, %v2688
      %v2690 = vpop.f32.mrf.mxu0
      %2691 = vmatprep.mubr.bf16.mxu0 0
      %2692 = vmatmul.mubr.bf16.gmra.mxu0 %v2456
      %v2693 = vpop.f32.mrf.mxu0
      %v2694 = vadd.f32 0.0, %v2693
      %v2695 = vpop.f32.mrf.mxu0
      %v2696 = vpop.f32.mrf.mxu0
      %v2697 = vadd.f32 0.0, %v2696
      %v2698 = vpop.f32.mrf.mxu0
      %2699 = vdwg.mxu0
      %v2700 = vadd.f32 %v2362, %v2558
      %v2701 = vadd.f32 %v2363, %v2561
      %v2702 = vadd.f32 %v2364, %v2566
      %v2703 = vadd.f32 %v2365, %v2569
      %v2704 = vadd.f32 %v2366, %v2574
      %v2705 = vadd.f32 %v2367, %v2577
      %v2706 = vadd.f32 %v2368, %v2582
      %v2707 = vadd.f32 %v2369, %v2585
      %v2708 = vadd.f32 %v2370, %v2590
      %v2709 = vadd.f32 %v2371, %v2593
      %v2710 = vadd.f32 %v2372, %v2598
      %v2711 = vadd.f32 %v2373, %v2601
      %v2712 = vadd.f32 %v2374, %v2606
      %v2713 = vadd.f32 %v2375, %v2609
      %v2714 = vadd.f32 %v2376, %v2614
      %v2715 = vadd.f32 %v2377, %v2617
      %v2716 = vadd.f32 %v2378, %v2622
      %v2717 = vadd.f32 %v2379, %v2625
      %v2718 = vadd.f32 %v2380, %v2630
      %v2719 = vadd.f32 %v2381, %v2633
      %v2720 = vadd.f32 %v2382, %v2638
      %v2721 = vadd.f32 %v2383, %v2641
      %v2722 = vadd.f32 %v2384, %v2646
      %v2723 = vadd.f32 %v2385, %v2649
      %v2724 = vadd.f32 %v2386, %v2654
      %v2725 = vadd.f32 %v2387, %v2657
      %v2726 = vadd.f32 %v2388, %v2662
      %v2727 = vadd.f32 %v2389, %v2665
      %v2728 = vadd.f32 %v2390, %v2670
      %v2729 = vadd.f32 %v2391, %v2673
      %v2730 = vadd.f32 %v2392, %v2678
      %v2731 = vadd.f32 %v2393, %v2681
      %v2732 = vadd.f32 %v2394, %v2686
      %v2733 = vadd.f32 %v2395, %v2689
      %v2734 = vadd.f32 %v2396, %v2694
      %v2735 = vadd.f32 %v2397, %v2697
      %v2736 = vld [vmem:[%s207 + $0x10] sm:$0xc]
      %v2737 = vld [vmem:[%s207 + $0x14] sm:$0xf]
      %v2738 = vld [vmem:[%s207 + $0x18] sm:$0xf]
      %v2739 = vld [vmem:[%s207 + $0x1c] sm:$0xf]
      %v2740 = vld [vmem:[%s207 + $0x20] sm:$0xf]
      %v2741 = vld [vmem:[%s207 + $0x24] sm:$0xf]
      %v2742 = vld [vmem:[%s207 + $0x28] sm:$0xf]
      %v2743 = vld [vmem:[%s207 + $0x2c] sm:$0xf]
      %v2744 = vld [vmem:[%s207 + $0x30] sm:$0xf]
      %v2745 = vld [vmem:[%s207 + $0x34] sm:$0xf]
      %v2746 = vld [vmem:[%s207 + $0x38] sm:$0xf]
      %v2747 = vld [vmem:[%s207 + $0x3c] sm:$0xf]
      %v2748 = vld [vmem:[%s207 + $0x40] sm:$0xf]
      %v2749 = vld [vmem:[%s207 + $0x44] sm:$0xf]
      %v2750 = vld [vmem:[%s207 + $0x48] sm:$0xf]
      %v2751 = vld [vmem:[%s207 + $0x4c] sm:$0xf]
      %v2752 = vld [vmem:[%s207 + $0x50] sm:$0xf]
      %v2753 = vld [vmem:[%s207 + $0x54] sm:$0xf]
      %v2754 = vld [vmem:[%s207 + $0x58] sm:$0xf]
      %v2755 = vld [vmem:[%s207 + $0x5c] sm:$0xf]
      %v2756 = vld [vmem:[%s207 + $0x60] sm:$0xf]
      %v2757 = vld [vmem:[%s207 + $0x64] sm:$0xf]
      %v2758 = vld [vmem:[%s207 + $0x68] sm:$0xf]
      %v2759 = vld [vmem:[%s207 + $0x6c] sm:$0xf]
      %v2760 = vld [vmem:[%s207 + $0x70] sm:$0xf]
      %v2761 = vld [vmem:[%s207 + $0x74] sm:$0xf]
      %v2762 = vld [vmem:[%s207 + $0x78] sm:$0xf]
      %v2763 = vld [vmem:[%s207 + $0x7c] sm:$0xf]
      %v2764 = vld [vmem:[%s207 + $0x80] sm:$0xf]
      %v2765 = vld [vmem:[%s207 + $0x84] sm:$0xf]
      %v2766 = vld [vmem:[%s207 + $0x88] sm:$0xf]
      %v2767 = vld [vmem:[%s207 + $0x8c] sm:$0xf]
      %v2768 = vld [vmem:[%s207 + $0x90] sm:$0xf]
      %v2769 = vld [vmem:[%s207 + $0x94] sm:$0xf]
      %v2770 = vld [vmem:[%s207 + $0x98] sm:$0xf]
      %v2771 = vld [vmem:[%s207 + $0x9c] sm:$0xf]
      %v2772 = vld [vmem:[%s207 + $0xa0] sm:$0x1]
      %s2773 = scalar_lea.vmem %s1, 384
      %v2774 = vld [vmem:[%s2773] sm:$0xf]
      %v2775 = vld [vmem:[%s2773 + $0x4] sm:$0xf]
      %v2776 = vld [vmem:[%s2773 + $0x8] sm:$0xf]
      %v2777 = vld [vmem:[%s2773 + $0xc] sm:$0xf]
      %v2778 = vld [vmem:[%s2773 + $0x10] sm:$0xf]
      %v2779 = vld [vmem:[%s2773 + $0x14] sm:$0xf]
      %v2780 = vld [vmem:[%s2773 + $0x18] sm:$0xf]
      %v2781 = vld [vmem:[%s2773 + $0x1c] sm:$0xf]
      %v2782 = vld [vmem:[%s2773 + $0x20] sm:$0xf]
      %v2783 = vld [vmem:[%s2773 + $0x24] sm:$0xf]
      %v2784 = vld [vmem:[%s2773 + $0x28] sm:$0xf]
      %v2785 = vld [vmem:[%s2773 + $0x2c] sm:$0xf]
      %v2786 = vld [vmem:[%s2773 + $0x30] sm:$0xf]
      %v2787 = vld [vmem:[%s2773 + $0x34] sm:$0xf]
      %v2788 = vld [vmem:[%s2773 + $0x38] sm:$0xf]
      %v2789 = vld [vmem:[%s2773 + $0x3c] sm:$0xf]
      %v2827 = vunpack.c.l.b16 %v2736
      %v2828 = vunpack.c.l.b16 %v2737
      %v2829 = vunpack.c.l.b16 %v2738
      %v2830 = vunpack.c.l.b16 %v2739
      %v2831 = vunpack.c.l.b16 %v2740
      %v2832 = vunpack.c.l.b16 %v2741
      %v2833 = vunpack.c.l.b16 %v2742
      %v2834 = vunpack.c.l.b16 %v2743
      %v2835 = vunpack.c.l.b16 %v2744
      %v2836 = vunpack.c.l.b16 %v2745
      %v2837 = vunpack.c.l.b16 %v2746
      %v2838 = vunpack.c.l.b16 %v2747
      %v2839 = vunpack.c.l.b16 %v2748
      %v2840 = vunpack.c.l.b16 %v2749
      %v2841 = vunpack.c.l.b16 %v2750
      %v2842 = vunpack.c.l.b16 %v2751
      %v2843 = vunpack.c.l.b16 %v2752
      %v2844 = vunpack.c.l.b16 %v2753
      %v2845 = vunpack.c.l.b16 %v2754
      %v2846 = vunpack.c.l.b16 %v2755
      %v2847 = vunpack.c.l.b16 %v2756
      %v2848 = vunpack.c.l.b16 %v2757
      %v2849 = vunpack.c.l.b16 %v2758
      %v2850 = vunpack.c.l.b16 %v2759
      %v2851 = vunpack.c.l.b16 %v2760
      %v2852 = vunpack.c.l.b16 %v2761
      %v2853 = vunpack.c.l.b16 %v2762
      %v2854 = vunpack.c.l.b16 %v2763
      %v2855 = vunpack.c.l.b16 %v2764
      %v2856 = vunpack.c.l.b16 %v2765
      %v2857 = vunpack.c.l.b16 %v2766
      %v2858 = vunpack.c.l.b16 %v2767
      %v2859 = vunpack.c.l.b16 %v2768
      %v2860 = vunpack.c.l.b16 %v2769
      %v2861 = vunpack.c.l.b16 %v2770
      %v2862 = vunpack.c.l.b16 %v2771
      %v2863 = vunpack.c.l.b16 %v2772
      %v2864 = vpack.c.b16 %v2828, %v2827
      %v2865 = vpack.c.b16 %v2830, %v2829
      %v2866 = vpack.c.b16 %v2832, %v2831
      %v2867 = vpack.c.b16 %v2834, %v2833
      %v2868 = vpack.c.b16 %v2836, %v2835
      %v2869 = vpack.c.b16 %v2838, %v2837
      %v2870 = vpack.c.b16 %v2840, %v2839
      %v2871 = vpack.c.b16 %v2842, %v2841
      %v2872 = vpack.c.b16 %v2844, %v2843
      %v2873 = vpack.c.b16 %v2846, %v2845
      %v2874 = vpack.c.b16 %v2848, %v2847
      %v2875 = vpack.c.b16 %v2850, %v2849
      %v2876 = vpack.c.b16 %v2852, %v2851
      %v2877 = vpack.c.b16 %v2854, %v2853
      %v2878 = vpack.c.b16 %v2856, %v2855
      %v2879 = vpack.c.b16 %v2858, %v2857
      %v2880 = vpack.c.b16 %v2860, %v2859
      %v2881 = vpack.c.b16 %v2862, %v2861
      %v2882 = vpack.c.b16 %v2863, %v2863
      %v2883 = vrot.slane %v2864, 2
      %v2884 = vrot.slane %v2865, 2
      %v2885 = vsel %vm2419, %v2883, %v2884
      %v2886 = vrot.slane %v2866, 2
      %v2887 = vsel %vm2419, %v2884, %v2886
      %v2888 = vrot.slane %v2867, 2
      %v2889 = vsel %vm2419, %v2886, %v2888
      %v2890 = vrot.slane %v2868, 2
      %v2891 = vsel %vm2419, %v2888, %v2890
      %v2892 = vrot.slane %v2869, 2
      %v2893 = vsel %vm2419, %v2890, %v2892
      %v2894 = vrot.slane %v2870, 2
      %v2895 = vsel %vm2419, %v2892, %v2894
      %v2896 = vrot.slane %v2871, 2
      %v2897 = vsel %vm2419, %v2894, %v2896
      %v2898 = vrot.slane %v2872, 2
      %v2899 = vsel %vm2419, %v2896, %v2898
      %v2900 = vrot.slane %v2873, 2
      %v2901 = vsel %vm2419, %v2898, %v2900
      %v2902 = vrot.slane %v2874, 2
      %v2903 = vsel %vm2419, %v2900, %v2902
      %v2904 = vrot.slane %v2875, 2
      %v2905 = vsel %vm2419, %v2902, %v2904
      %v2906 = vrot.slane %v2876, 2
      %v2907 = vsel %vm2419, %v2904, %v2906
      %v2908 = vrot.slane %v2877, 2
      %v2909 = vsel %vm2419, %v2906, %v2908
      %v2910 = vrot.slane %v2878, 2
      %v2911 = vsel %vm2419, %v2908, %v2910
      %v2912 = vrot.slane %v2879, 2
      %v2913 = vsel %vm2419, %v2910, %v2912
      %v2914 = vrot.slane %v2880, 2
      %v2915 = vsel %vm2419, %v2912, %v2914
      %v2916 = vrot.slane %v2881, 2
      %v2917 = vsel %vm2419, %v2914, %v2916
      %v2918 = vrot.slane %v2882, 2
      %v2919 = vsel %vm2419, %v2916, %v2918
      %v2954 = vunpack.c.l.b16 %v2774
      %v2955 = vunpack.c.l.b16 %v2775
      %v2956 = vunpack.c.l.b16 %v2776
      %v2957 = vunpack.c.l.b16 %v2777
      %v2958 = vunpack.c.l.b16 %v2778
      %v2959 = vunpack.c.l.b16 %v2779
      %v2960 = vunpack.c.l.b16 %v2780
      %v2961 = vunpack.c.l.b16 %v2781
      %v2962 = vunpack.c.l.b16 %v2782
      %v2963 = vunpack.c.l.b16 %v2783
      %v2964 = vunpack.c.l.b16 %v2784
      %v2965 = vunpack.c.l.b16 %v2785
      %v2966 = vunpack.c.l.b16 %v2786
      %v2967 = vunpack.c.l.b16 %v2787
      %v2968 = vunpack.c.l.b16 %v2788
      %v2969 = vunpack.c.l.b16 %v2789
      %v2970 = vpack.c.b16 %v2955, %v2954
      %v2971 = vpack.c.b16 %v2957, %v2956
      %v2972 = vpack.c.b16 %v2959, %v2958
      %v2973 = vpack.c.b16 %v2961, %v2960
      %v2974 = vpack.c.b16 %v2963, %v2962
      %v2975 = vpack.c.b16 %v2965, %v2964
      %v2976 = vpack.c.b16 %v2967, %v2966
      %v2977 = vpack.c.b16 %v2969, %v2968
      %2986 = vmatprep.subr.bf16.mxu0 0
      %2987 = vmatpush1.bf16.msra.mxu0 %v2977
      %2988 = vmatprep.subr.bf16.mxu0 0
      %2989 = vmatpush1.bf16.msra.mxu0 %v2976
      %2990 = vmatprep.subr.bf16.mxu0 0
      %2991 = vmatpush1.bf16.msra.mxu0 %v2975
      %2992 = vmatprep.subr.bf16.mxu0 0
      %2993 = vmatpush1.bf16.msra.mxu0 %v2974
      %2994 = vmatprep.subr.bf16.mxu0 0
      %2995 = vmatpush1.bf16.msra.mxu0 %v2973
      %2996 = vmatprep.subr.bf16.mxu0 0
      %2997 = vmatpush1.bf16.msra.mxu0 %v2972
      %2998 = vmatprep.subr.bf16.mxu0 0
      %2999 = vmatpush1.bf16.msra.mxu0 %v2971
      %3000 = vmatprep.subr.bf16.mxu0 0
      %3001 = vmatpush1.bf16.msra.mxu0 %v2970
      %3002 = vmatprep.subr.bf16.mxu0 0
      %3003 = vmatpush2.bf16.msra.mxu0 0
      %3004 = vmatprep.subr.bf16.mxu0 0
      %3005 = vmatpush2.bf16.msra.mxu0 0
      %3006 = vmatprep.subr.bf16.mxu0 0
      %3007 = vmatpush2.bf16.msra.mxu0 0
      %3008 = vmatprep.subr.bf16.mxu0 0
      %3009 = vmatpush2.bf16.msra.mxu0 0
      %3010 = vmatprep.subr.bf16.mxu0 0
      %3011 = vmatpush2.bf16.msra.mxu0 0
      %3012 = vmatprep.subr.bf16.mxu0 0
      %3013 = vmatpush2.bf16.msra.mxu0 0
      %3014 = vmatprep.subr.bf16.mxu0 0
      %3015 = vmatpush2.bf16.msra.mxu0 0
      %3016 = vmatprep.subr.bf16.mxu0 0
      %3017 = vmatpush2.bf16.msra.mxu0 0
      %3018 = vmatprep.mubr.bf16.mxu0 0
      %3019 = vmatmul.mubr.bf16.gmra.mxu0 %v2885
      %v3020 = vpop.f32.mrf.mxu0
      %v3021 = vadd.f32 0.0, %v3020
      %v3022 = vpop.f32.mrf.mxu0
      %v3023 = vpop.f32.mrf.mxu0
      %v3024 = vadd.f32 0.0, %v3023
      %v3025 = vpop.f32.mrf.mxu0
      %3026 = vmatprep.mubr.bf16.mxu0 0
      %3027 = vmatmul.mubr.bf16.gmra.mxu0 %v2887
      %v3028 = vpop.f32.mrf.mxu0
      %v3029 = vadd.f32 0.0, %v3028
      %v3030 = vpop.f32.mrf.mxu0
      %v3031 = vpop.f32.mrf.mxu0
      %v3032 = vadd.f32 0.0, %v3031
      %v3033 = vpop.f32.mrf.mxu0
      %3034 = vmatprep.mubr.bf16.mxu0 0
      %3035 = vmatmul.mubr.bf16.gmra.mxu0 %v2889
      %v3036 = vpop.f32.mrf.mxu0
      %v3037 = vadd.f32 0.0, %v3036
      %v3038 = vpop.f32.mrf.mxu0
      %v3039 = vpop.f32.mrf.mxu0
      %v3040 = vadd.f32 0.0, %v3039
      %v3041 = vpop.f32.mrf.mxu0
      %3042 = vmatprep.mubr.bf16.mxu0 0
      %3043 = vmatmul.mubr.bf16.gmra.mxu0 %v2891
      %v3044 = vpop.f32.mrf.mxu0
      %v3045 = vadd.f32 0.0, %v3044
      %v3046 = vpop.f32.mrf.mxu0
      %v3047 = vpop.f32.mrf.mxu0
      %v3048 = vadd.f32 0.0, %v3047
      %v3049 = vpop.f32.mrf.mxu0
      %3050 = vmatprep.mubr.bf16.mxu0 0
      %3051 = vmatmul.mubr.bf16.gmra.mxu0 %v2893
      %v3052 = vpop.f32.mrf.mxu0
      %v3053 = vadd.f32 0.0, %v3052
      %v3054 = vpop.f32.mrf.mxu0
      %v3055 = vpop.f32.mrf.mxu0
      %v3056 = vadd.f32 0.0, %v3055
      %v3057 = vpop.f32.mrf.mxu0
      %3058 = vmatprep.mubr.bf16.mxu0 0
      %3059 = vmatmul.mubr.bf16.gmra.mxu0 %v2895
      %v3060 = vpop.f32.mrf.mxu0
      %v3061 = vadd.f32 0.0, %v3060
      %v3062 = vpop.f32.mrf.mxu0
      %v3063 = vpop.f32.mrf.mxu0
      %v3064 = vadd.f32 0.0, %v3063
      %v3065 = vpop.f32.mrf.mxu0
      %3066 = vmatprep.mubr.bf16.mxu0 0
      %3067 = vmatmul.mubr.bf16.gmra.mxu0 %v2897
      %v3068 = vpop.f32.mrf.mxu0
      %v3069 = vadd.f32 0.0, %v3068
      %v3070 = vpop.f32.mrf.mxu0
      %v3071 = vpop.f32.mrf.mxu0
      %v3072 = vadd.f32 0.0, %v3071
      %v3073 = vpop.f32.mrf.mxu0
      %3074 = vmatprep.mubr.bf16.mxu0 0
      %3075 = vmatmul.mubr.bf16.gmra.mxu0 %v2899
      %v3076 = vpop.f32.mrf.mxu0
      %v3077 = vadd.f32 0.0, %v3076
      %v3078 = vpop.f32.mrf.mxu0
      %v3079 = vpop.f32.mrf.mxu0
      %v3080 = vadd.f32 0.0, %v3079
      %v3081 = vpop.f32.mrf.mxu0
      %3082 = vmatprep.mubr.bf16.mxu0 0
      %3083 = vmatmul.mubr.bf16.gmra.mxu0 %v2901
      %v3084 = vpop.f32.mrf.mxu0
      %v3085 = vadd.f32 0.0, %v3084
      %v3086 = vpop.f32.mrf.mxu0
      %v3087 = vpop.f32.mrf.mxu0
      %v3088 = vadd.f32 0.0, %v3087
      %v3089 = vpop.f32.mrf.mxu0
      %3090 = vmatprep.mubr.bf16.mxu0 0
      %3091 = vmatmul.mubr.bf16.gmra.mxu0 %v2903
      %v3092 = vpop.f32.mrf.mxu0
      %v3093 = vadd.f32 0.0, %v3092
      %v3094 = vpop.f32.mrf.mxu0
      %v3095 = vpop.f32.mrf.mxu0
      %v3096 = vadd.f32 0.0, %v3095
      %v3097 = vpop.f32.mrf.mxu0
      %3098 = vmatprep.mubr.bf16.mxu0 0
      %3099 = vmatmul.mubr.bf16.gmra.mxu0 %v2905
      %v3100 = vpop.f32.mrf.mxu0
      %v3101 = vadd.f32 0.0, %v3100
      %v3102 = vpop.f32.mrf.mxu0
      %v3103 = vpop.f32.mrf.mxu0
      %v3104 = vadd.f32 0.0, %v3103
      %v3105 = vpop.f32.mrf.mxu0
      %3106 = vmatprep.mubr.bf16.mxu0 0
      %3107 = vmatmul.mubr.bf16.gmra.mxu0 %v2907
      %v3108 = vpop.f32.mrf.mxu0
      %v3109 = vadd.f32 0.0, %v3108
      %v3110 = vpop.f32.mrf.mxu0
      %v3111 = vpop.f32.mrf.mxu0
      %v3112 = vadd.f32 0.0, %v3111
      %v3113 = vpop.f32.mrf.mxu0
      %3114 = vmatprep.mubr.bf16.mxu0 0
      %3115 = vmatmul.mubr.bf16.gmra.mxu0 %v2909
      %v3116 = vpop.f32.mrf.mxu0
      %v3117 = vadd.f32 0.0, %v3116
      %v3118 = vpop.f32.mrf.mxu0
      %v3119 = vpop.f32.mrf.mxu0
      %v3120 = vadd.f32 0.0, %v3119
      %v3121 = vpop.f32.mrf.mxu0
      %3122 = vmatprep.mubr.bf16.mxu0 0
      %3123 = vmatmul.mubr.bf16.gmra.mxu0 %v2911
      %v3124 = vpop.f32.mrf.mxu0
      %v3125 = vadd.f32 0.0, %v3124
      %v3126 = vpop.f32.mrf.mxu0
      %v3127 = vpop.f32.mrf.mxu0
      %v3128 = vadd.f32 0.0, %v3127
      %v3129 = vpop.f32.mrf.mxu0
      %3130 = vmatprep.mubr.bf16.mxu0 0
      %3131 = vmatmul.mubr.bf16.gmra.mxu0 %v2913
      %v3132 = vpop.f32.mrf.mxu0
      %v3133 = vadd.f32 0.0, %v3132
      %v3134 = vpop.f32.mrf.mxu0
      %v3135 = vpop.f32.mrf.mxu0
      %v3136 = vadd.f32 0.0, %v3135
      %v3137 = vpop.f32.mrf.mxu0
      %3138 = vmatprep.mubr.bf16.mxu0 0
      %3139 = vmatmul.mubr.bf16.gmra.mxu0 %v2915
      %v3140 = vpop.f32.mrf.mxu0
      %v3141 = vadd.f32 0.0, %v3140
      %v3142 = vpop.f32.mrf.mxu0
      %v3143 = vpop.f32.mrf.mxu0
      %v3144 = vadd.f32 0.0, %v3143
      %v3145 = vpop.f32.mrf.mxu0
      %3146 = vmatprep.mubr.bf16.mxu0 0
      %3147 = vmatmul.mubr.bf16.gmra.mxu0 %v2917
      %v3148 = vpop.f32.mrf.mxu0
      %v3149 = vadd.f32 0.0, %v3148
      %v3150 = vpop.f32.mrf.mxu0
      %v3151 = vpop.f32.mrf.mxu0
      %v3152 = vadd.f32 0.0, %v3151
      %v3153 = vpop.f32.mrf.mxu0
      %3154 = vmatprep.mubr.bf16.mxu0 0
      %3155 = vmatmul.mubr.bf16.gmra.mxu0 %v2919
      %v3156 = vpop.f32.mrf.mxu0
      %v3157 = vadd.f32 0.0, %v3156
      %v3158 = vpop.f32.mrf.mxu0
      %v3159 = vpop.f32.mrf.mxu0
      %v3160 = vadd.f32 0.0, %v3159
      %v3161 = vpop.f32.mrf.mxu0
      %3162 = vdwg.mxu0
      %v3163 = vadd.f32 %v2700, %v3021
      %v3164 = vadd.f32 %v2701, %v3024
      %v3165 = vadd.f32 %v2702, %v3029
      %v3166 = vadd.f32 %v2703, %v3032
      %v3167 = vadd.f32 %v2704, %v3037
      %v3168 = vadd.f32 %v2705, %v3040
      %v3169 = vadd.f32 %v2706, %v3045
      %v3170 = vadd.f32 %v2707, %v3048
      %v3171 = vadd.f32 %v2708, %v3053
      %v3172 = vadd.f32 %v2709, %v3056
      %v3173 = vadd.f32 %v2710, %v3061
      %v3174 = vadd.f32 %v2711, %v3064
      %v3175 = vadd.f32 %v2712, %v3069
      %v3176 = vadd.f32 %v2713, %v3072
      %v3177 = vadd.f32 %v2714, %v3077
      %v3178 = vadd.f32 %v2715, %v3080
      %v3179 = vadd.f32 %v2716, %v3085
      %v3180 = vadd.f32 %v2717, %v3088
      %v3181 = vadd.f32 %v2718, %v3093
      %v3182 = vadd.f32 %v2719, %v3096
      %v3183 = vadd.f32 %v2720, %v3101
      %v3184 = vadd.f32 %v2721, %v3104
      %v3185 = vadd.f32 %v2722, %v3109
      %v3186 = vadd.f32 %v2723, %v3112
      %v3187 = vadd.f32 %v2724, %v3117
      %v3188 = vadd.f32 %v2725, %v3120
      %v3189 = vadd.f32 %v2726, %v3125
      %v3190 = vadd.f32 %v2727, %v3128
      %v3191 = vadd.f32 %v2728, %v3133
      %v3192 = vadd.f32 %v2729, %v3136
      %v3193 = vadd.f32 %v2730, %v3141
      %v3194 = vadd.f32 %v2731, %v3144
      %v3195 = vadd.f32 %v2732, %v3149
      %v3196 = vadd.f32 %v2733, %v3152
      %v3197 = vadd.f32 %v2734, %v3157
      %v3198 = vadd.f32 %v2735, %v3160
      %v3199 = vld [vmem:[%s207 + $0xa0] sm:$0x3]
      %s3200 = scalar_lea.vmem %s1, 448
      %v3201 = vld [vmem:[%s3200] sm:$0xf]
      %v3202 = vld [vmem:[%s3200 + $0x4] sm:$0xf]
      %v3203 = vld [vmem:[%s3200 + $0x8] sm:$0xf]
      %v3204 = vld [vmem:[%s3200 + $0xc] sm:$0xf]
      %v3205 = vld [vmem:[%s3200 + $0x10] sm:$0xf]
      %v3206 = vld [vmem:[%s3200 + $0x14] sm:$0xf]
      %v3207 = vld [vmem:[%s3200 + $0x18] sm:$0xf]
      %v3208 = vld [vmem:[%s3200 + $0x1c] sm:$0xf]
      %v3209 = vld [vmem:[%s3200 + $0x20] sm:$0xf]
      %v3210 = vld [vmem:[%s3200 + $0x24] sm:$0xf]
      %v3211 = vld [vmem:[%s3200 + $0x28] sm:$0xf]
      %v3212 = vld [vmem:[%s3200 + $0x2c] sm:$0xf]
      %v3213 = vld [vmem:[%s3200 + $0x30] sm:$0xf]
      %v3214 = vld [vmem:[%s3200 + $0x34] sm:$0xf]
      %v3215 = vld [vmem:[%s3200 + $0x38] sm:$0xf]
      %v3216 = vld [vmem:[%s3200 + $0x3c] sm:$0xf]
      %v3218 = vunpack.c.l.b16 %v3199
      %v3219 = vpack.c.b16 %v3218, %v3218
      %vm3220 = vsmask.f32 5376
      %v3222 = vshrl.u32 %v2864, 16
      %v3224 = vrot.slane %v3222, 2
      %v3225 = vshll.u32 %v2864, 16
      %v3227 = vrot.slane %v3225, 3
      %v3228 = vor.u32 %v3224, %v3227
      %v3230 = vshrl.u32 %v2865, 16
      %v3232 = vrot.slane %v3230, 2
      %v3233 = vshll.u32 %v2865, 16
      %v3235 = vrot.slane %v3233, 3
      %v3236 = vor.u32 %v3232, %v3235
      %v3237 = vsel %vm3220, %v3228, %v3236
      %v3239 = vshrl.u32 %v2866, 16
      %v3241 = vrot.slane %v3239, 2
      %v3242 = vshll.u32 %v2866, 16
      %v3244 = vrot.slane %v3242, 3
      %v3245 = vor.u32 %v3241, %v3244
      %v3246 = vsel %vm3220, %v3236, %v3245
      %v3248 = vshrl.u32 %v2867, 16
      %v3250 = vrot.slane %v3248, 2
      %v3251 = vshll.u32 %v2867, 16
      %v3253 = vrot.slane %v3251, 3
      %v3254 = vor.u32 %v3250, %v3253
      %v3255 = vsel %vm3220, %v3245, %v3254
      %v3257 = vshrl.u32 %v2868, 16
      %v3259 = vrot.slane %v3257, 2
      %v3260 = vshll.u32 %v2868, 16
      %v3262 = vrot.slane %v3260, 3
      %v3263 = vor.u32 %v3259, %v3262
      %v3264 = vsel %vm3220, %v3254, %v3263
      %v3266 = vshrl.u32 %v2869, 16
      %v3268 = vrot.slane %v3266, 2
      %v3269 = vshll.u32 %v2869, 16
      %v3271 = vrot.slane %v3269, 3
      %v3272 = vor.u32 %v3268, %v3271
      %v3273 = vsel %vm3220, %v3263, %v3272
      %v3275 = vshrl.u32 %v2870, 16
      %v3277 = vrot.slane %v3275, 2
      %v3278 = vshll.u32 %v2870, 16
      %v3280 = vrot.slane %v3278, 3
      %v3281 = vor.u32 %v3277, %v3280
      %v3282 = vsel %vm3220, %v3272, %v3281
      %v3284 = vshrl.u32 %v2871, 16
      %v3286 = vrot.slane %v3284, 2
      %v3287 = vshll.u32 %v2871, 16
      %v3289 = vrot.slane %v3287, 3
      %v3290 = vor.u32 %v3286, %v3289
      %v3291 = vsel %vm3220, %v3281, %v3290
      %v3293 = vshrl.u32 %v2872, 16
      %v3295 = vrot.slane %v3293, 2
      %v3296 = vshll.u32 %v2872, 16
      %v3298 = vrot.slane %v3296, 3
      %v3299 = vor.u32 %v3295, %v3298
      %v3300 = vsel %vm3220, %v3290, %v3299
      %v3302 = vshrl.u32 %v2873, 16
      %v3304 = vrot.slane %v3302, 2
      %v3305 = vshll.u32 %v2873, 16
      %v3307 = vrot.slane %v3305, 3
      %v3308 = vor.u32 %v3304, %v3307
      %v3309 = vsel %vm3220, %v3299, %v3308
      %v3311 = vshrl.u32 %v2874, 16
      %v3313 = vrot.slane %v3311, 2
      %v3314 = vshll.u32 %v2874, 16
      %v3316 = vrot.slane %v3314, 3
      %v3317 = vor.u32 %v3313, %v3316
      %v3318 = vsel %vm3220, %v3308, %v3317
      %v3320 = vshrl.u32 %v2875, 16
      %v3322 = vrot.slane %v3320, 2
      %v3323 = vshll.u32 %v2875, 16
      %v3325 = vrot.slane %v3323, 3
      %v3326 = vor.u32 %v3322, %v3325
      %v3327 = vsel %vm3220, %v3317, %v3326
      %v3329 = vshrl.u32 %v2876, 16
      %v3331 = vrot.slane %v3329, 2
      %v3332 = vshll.u32 %v2876, 16
      %v3334 = vrot.slane %v3332, 3
      %v3335 = vor.u32 %v3331, %v3334
      %v3336 = vsel %vm3220, %v3326, %v3335
      %v3338 = vshrl.u32 %v2877, 16
      %v3340 = vrot.slane %v3338, 2
      %v3341 = vshll.u32 %v2877, 16
      %v3343 = vrot.slane %v3341, 3
      %v3344 = vor.u32 %v3340, %v3343
      %v3345 = vsel %vm3220, %v3335, %v3344
      %v3347 = vshrl.u32 %v2878, 16
      %v3349 = vrot.slane %v3347, 2
      %v3350 = vshll.u32 %v2878, 16
      %v3352 = vrot.slane %v3350, 3
      %v3353 = vor.u32 %v3349, %v3352
      %v3354 = vsel %vm3220, %v3344, %v3353
      %v3356 = vshrl.u32 %v2879, 16
      %v3358 = vrot.slane %v3356, 2
      %v3359 = vshll.u32 %v2879, 16
      %v3361 = vrot.slane %v3359, 3
      %v3362 = vor.u32 %v3358, %v3361
      %v3363 = vsel %vm3220, %v3353, %v3362
      %v3365 = vshrl.u32 %v2880, 16
      %v3367 = vrot.slane %v3365, 2
      %v3368 = vshll.u32 %v2880, 16
      %v3370 = vrot.slane %v3368, 3
      %v3371 = vor.u32 %v3367, %v3370
      %v3372 = vsel %vm3220, %v3362, %v3371
      %v3374 = vshrl.u32 %v2881, 16
      %v3376 = vrot.slane %v3374, 2
      %v3377 = vshll.u32 %v2881, 16
      %v3379 = vrot.slane %v3377, 3
      %v3380 = vor.u32 %v3376, %v3379
      %v3381 = vsel %vm3220, %v3371, %v3380
      %v3383 = vshrl.u32 %v3219, 16
      %v3385 = vrot.slane %v3383, 2
      %v3386 = vshll.u32 %v3219, 16
      %v3388 = vrot.slane %v3386, 3
      %v3389 = vor.u32 %v3385, %v3388
      %v3390 = vsel %vm3220, %v3380, %v3389
      %v3425 = vunpack.c.l.b16 %v3201
      %v3426 = vunpack.c.l.b16 %v3202
      %v3427 = vunpack.c.l.b16 %v3203
      %v3428 = vunpack.c.l.b16 %v3204
      %v3429 = vunpack.c.l.b16 %v3205
      %v3430 = vunpack.c.l.b16 %v3206
      %v3431 = vunpack.c.l.b16 %v3207
      %v3432 = vunpack.c.l.b16 %v3208
      %v3433 = vunpack.c.l.b16 %v3209
      %v3434 = vunpack.c.l.b16 %v3210
      %v3435 = vunpack.c.l.b16 %v3211
      %v3436 = vunpack.c.l.b16 %v3212
      %v3437 = vunpack.c.l.b16 %v3213
      %v3438 = vunpack.c.l.b16 %v3214
      %v3439 = vunpack.c.l.b16 %v3215
      %v3440 = vunpack.c.l.b16 %v3216
      %v3441 = vpack.c.b16 %v3426, %v3425
      %v3442 = vpack.c.b16 %v3428, %v3427
      %v3443 = vpack.c.b16 %v3430, %v3429
      %v3444 = vpack.c.b16 %v3432, %v3431
      %v3445 = vpack.c.b16 %v3434, %v3433
      %v3446 = vpack.c.b16 %v3436, %v3435
      %v3447 = vpack.c.b16 %v3438, %v3437
      %v3448 = vpack.c.b16 %v3440, %v3439
      %3457 = vmatprep.subr.bf16.mxu0 0
      %3458 = vmatpush1.bf16.msra.mxu0 %v3448
      %3459 = vmatprep.subr.bf16.mxu0 0
      %3460 = vmatpush1.bf16.msra.mxu0 %v3447
      %3461 = vmatprep.subr.bf16.mxu0 0
      %3462 = vmatpush1.bf16.msra.mxu0 %v3446
      %3463 = vmatprep.subr.bf16.mxu0 0
      %3464 = vmatpush1.bf16.msra.mxu0 %v3445
      %3465 = vmatprep.subr.bf16.mxu0 0
      %3466 = vmatpush1.bf16.msra.mxu0 %v3444
      %3467 = vmatprep.subr.bf16.mxu0 0
      %3468 = vmatpush1.bf16.msra.mxu0 %v3443
      %3469 = vmatprep.subr.bf16.mxu0 0
      %3470 = vmatpush1.bf16.msra.mxu0 %v3442
      %3471 = vmatprep.subr.bf16.mxu0 0
      %3472 = vmatpush1.bf16.msra.mxu0 %v3441
      %3473 = vmatprep.subr.bf16.mxu0 0
      %3474 = vmatpush2.bf16.msra.mxu0 0
      %3475 = vmatprep.subr.bf16.mxu0 0
      %3476 = vmatpush2.bf16.msra.mxu0 0
      %3477 = vmatprep.subr.bf16.mxu0 0
      %3478 = vmatpush2.bf16.msra.mxu0 0
      %3479 = vmatprep.subr.bf16.mxu0 0
      %3480 = vmatpush2.bf16.msra.mxu0 0
      %3481 = vmatprep.subr.bf16.mxu0 0
      %3482 = vmatpush2.bf16.msra.mxu0 0
      %3483 = vmatprep.subr.bf16.mxu0 0
      %3484 = vmatpush2.bf16.msra.mxu0 0
      %3485 = vmatprep.subr.bf16.mxu0 0
      %3486 = vmatpush2.bf16.msra.mxu0 0
      %3487 = vmatprep.subr.bf16.mxu0 0
      %3488 = vmatpush2.bf16.msra.mxu0 0
      %3489 = vmatprep.mubr.bf16.mxu0 0
      %3490 = vmatmul.mubr.bf16.gmra.mxu0 %v3237
      %v3491 = vpop.f32.mrf.mxu0
      %v3492 = vadd.f32 0.0, %v3491
      %v3493 = vpop.f32.mrf.mxu0
      %v3494 = vpop.f32.mrf.mxu0
      %v3495 = vadd.f32 0.0, %v3494
      %v3496 = vpop.f32.mrf.mxu0
      %3497 = vmatprep.mubr.bf16.mxu0 0
      %3498 = vmatmul.mubr.bf16.gmra.mxu0 %v3246
      %v3499 = vpop.f32.mrf.mxu0
      %v3500 = vadd.f32 0.0, %v3499
      %v3501 = vpop.f32.mrf.mxu0
      %v3502 = vpop.f32.mrf.mxu0
      %v3503 = vadd.f32 0.0, %v3502
      %v3504 = vpop.f32.mrf.mxu0
      %3505 = vmatprep.mubr.bf16.mxu0 0
      %3506 = vmatmul.mubr.bf16.gmra.mxu0 %v3255
      %v3507 = vpop.f32.mrf.mxu0
      %v3508 = vadd.f32 0.0, %v3507
      %v3509 = vpop.f32.mrf.mxu0
      %v3510 = vpop.f32.mrf.mxu0
      %v3511 = vadd.f32 0.0, %v3510
      %v3512 = vpop.f32.mrf.mxu0
      %3513 = vmatprep.mubr.bf16.mxu0 0
      %3514 = vmatmul.mubr.bf16.gmra.mxu0 %v3264
      %v3515 = vpop.f32.mrf.mxu0
      %v3516 = vadd.f32 0.0, %v3515
      %v3517 = vpop.f32.mrf.mxu0
      %v3518 = vpop.f32.mrf.mxu0
      %v3519 = vadd.f32 0.0, %v3518
      %v3520 = vpop.f32.mrf.mxu0
      %3521 = vmatprep.mubr.bf16.mxu0 0
      %3522 = vmatmul.mubr.bf16.gmra.mxu0 %v3273
      %v3523 = vpop.f32.mrf.mxu0
      %v3524 = vadd.f32 0.0, %v3523
      %v3525 = vpop.f32.mrf.mxu0
      %v3526 = vpop.f32.mrf.mxu0
      %v3527 = vadd.f32 0.0, %v3526
      %v3528 = vpop.f32.mrf.mxu0
      %3529 = vmatprep.mubr.bf16.mxu0 0
      %3530 = vmatmul.mubr.bf16.gmra.mxu0 %v3282
      %v3531 = vpop.f32.mrf.mxu0
      %v3532 = vadd.f32 0.0, %v3531
      %v3533 = vpop.f32.mrf.mxu0
      %v3534 = vpop.f32.mrf.mxu0
      %v3535 = vadd.f32 0.0, %v3534
      %v3536 = vpop.f32.mrf.mxu0
      %3537 = vmatprep.mubr.bf16.mxu0 0
      %3538 = vmatmul.mubr.bf16.gmra.mxu0 %v3291
      %v3539 = vpop.f32.mrf.mxu0
      %v3540 = vadd.f32 0.0, %v3539
      %v3541 = vpop.f32.mrf.mxu0
      %v3542 = vpop.f32.mrf.mxu0
      %v3543 = vadd.f32 0.0, %v3542
      %v3544 = vpop.f32.mrf.mxu0
      %3545 = vmatprep.mubr.bf16.mxu0 0
      %3546 = vmatmul.mubr.bf16.gmra.mxu0 %v3300
      %v3547 = vpop.f32.mrf.mxu0
      %v3548 = vadd.f32 0.0, %v3547
      %v3549 = vpop.f32.mrf.mxu0
      %v3550 = vpop.f32.mrf.mxu0
      %v3551 = vadd.f32 0.0, %v3550
      %v3552 = vpop.f32.mrf.mxu0
      %3553 = vmatprep.mubr.bf16.mxu0 0
      %3554 = vmatmul.mubr.bf16.gmra.mxu0 %v3309
      %v3555 = vpop.f32.mrf.mxu0
      %v3556 = vadd.f32 0.0, %v3555
      %v3557 = vpop.f32.mrf.mxu0
      %v3558 = vpop.f32.mrf.mxu0
      %v3559 = vadd.f32 0.0, %v3558
      %v3560 = vpop.f32.mrf.mxu0
      %3561 = vmatprep.mubr.bf16.mxu0 0
      %3562 = vmatmul.mubr.bf16.gmra.mxu0 %v3318
      %v3563 = vpop.f32.mrf.mxu0
      %v3564 = vadd.f32 0.0, %v3563
      %v3565 = vpop.f32.mrf.mxu0
      %v3566 = vpop.f32.mrf.mxu0
      %v3567 = vadd.f32 0.0, %v3566
      %v3568 = vpop.f32.mrf.mxu0
      %3569 = vmatprep.mubr.bf16.mxu0 0
      %3570 = vmatmul.mubr.bf16.gmra.mxu0 %v3327
      %v3571 = vpop.f32.mrf.mxu0
      %v3572 = vadd.f32 0.0, %v3571
      %v3573 = vpop.f32.mrf.mxu0
      %v3574 = vpop.f32.mrf.mxu0
      %v3575 = vadd.f32 0.0, %v3574
      %v3576 = vpop.f32.mrf.mxu0
      %3577 = vmatprep.mubr.bf16.mxu0 0
      %3578 = vmatmul.mubr.bf16.gmra.mxu0 %v3336
      %v3579 = vpop.f32.mrf.mxu0
      %v3580 = vadd.f32 0.0, %v3579
      %v3581 = vpop.f32.mrf.mxu0
      %v3582 = vpop.f32.mrf.mxu0
      %v3583 = vadd.f32 0.0, %v3582
      %v3584 = vpop.f32.mrf.mxu0
      %3585 = vmatprep.mubr.bf16.mxu0 0
      %3586 = vmatmul.mubr.bf16.gmra.mxu0 %v3345
      %v3587 = vpop.f32.mrf.mxu0
      %v3588 = vadd.f32 0.0, %v3587
      %v3589 = vpop.f32.mrf.mxu0
      %v3590 = vpop.f32.mrf.mxu0
      %v3591 = vadd.f32 0.0, %v3590
      %v3592 = vpop.f32.mrf.mxu0
      %3593 = vmatprep.mubr.bf16.mxu0 0
      %3594 = vmatmul.mubr.bf16.gmra.mxu0 %v3354
      %v3595 = vpop.f32.mrf.mxu0
      %v3596 = vadd.f32 0.0, %v3595
      %v3597 = vpop.f32.mrf.mxu0
      %v3598 = vpop.f32.mrf.mxu0
      %v3599 = vadd.f32 0.0, %v3598
      %v3600 = vpop.f32.mrf.mxu0
      %3601 = vmatprep.mubr.bf16.mxu0 0
      %3602 = vmatmul.mubr.bf16.gmra.mxu0 %v3363
      %v3603 = vpop.f32.mrf.mxu0
      %v3604 = vadd.f32 0.0, %v3603
      %v3605 = vpop.f32.mrf.mxu0
      %v3606 = vpop.f32.mrf.mxu0
      %v3607 = vadd.f32 0.0, %v3606
      %v3608 = vpop.f32.mrf.mxu0
      %3609 = vmatprep.mubr.bf16.mxu0 0
      %3610 = vmatmul.mubr.bf16.gmra.mxu0 %v3372
      %v3611 = vpop.f32.mrf.mxu0
      %v3612 = vadd.f32 0.0, %v3611
      %v3613 = vpop.f32.mrf.mxu0
      %v3614 = vpop.f32.mrf.mxu0
      %v3615 = vadd.f32 0.0, %v3614
      %v3616 = vpop.f32.mrf.mxu0
      %3617 = vmatprep.mubr.bf16.mxu0 0
      %3618 = vmatmul.mubr.bf16.gmra.mxu0 %v3381
      %v3619 = vpop.f32.mrf.mxu0
      %v3620 = vadd.f32 0.0, %v3619
      %v3621 = vpop.f32.mrf.mxu0
      %v3622 = vpop.f32.mrf.mxu0
      %v3623 = vadd.f32 0.0, %v3622
      %v3624 = vpop.f32.mrf.mxu0
      %3625 = vmatprep.mubr.bf16.mxu0 0
      %3626 = vmatmul.mubr.bf16.gmra.mxu0 %v3390
      %v3627 = vpop.f32.mrf.mxu0
      %v3628 = vadd.f32 0.0, %v3627
      %v3629 = vpop.f32.mrf.mxu0
      %v3630 = vpop.f32.mrf.mxu0
      %v3631 = vadd.f32 0.0, %v3630
      %v3632 = vpop.f32.mrf.mxu0
      %3633 = vdwg.mxu0
      %v3634 = vadd.f32 %v3163, %v3492
      %v3635 = vadd.f32 %v3164, %v3495
      %v3636 = vadd.f32 %v3165, %v3500
      %v3637 = vadd.f32 %v3166, %v3503
      %v3638 = vadd.f32 %v3167, %v3508
      %v3639 = vadd.f32 %v3168, %v3511
      %v3640 = vadd.f32 %v3169, %v3516
      %v3641 = vadd.f32 %v3170, %v3519
      %v3642 = vadd.f32 %v3171, %v3524
      %v3643 = vadd.f32 %v3172, %v3527
      %v3644 = vadd.f32 %v3173, %v3532
      %v3645 = vadd.f32 %v3174, %v3535
      %v3646 = vadd.f32 %v3175, %v3540
      %v3647 = vadd.f32 %v3176, %v3543
      %v3648 = vadd.f32 %v3177, %v3548
      %v3649 = vadd.f32 %v3178, %v3551
      %v3650 = vadd.f32 %v3179, %v3556
      %v3651 = vadd.f32 %v3180, %v3559
      %v3652 = vadd.f32 %v3181, %v3564
      %v3653 = vadd.f32 %v3182, %v3567
      %v3654 = vadd.f32 %v3183, %v3572
      %v3655 = vadd.f32 %v3184, %v3575
      %v3656 = vadd.f32 %v3185, %v3580
      %v3657 = vadd.f32 %v3186, %v3583
      %v3658 = vadd.f32 %v3187, %v3588
      %v3659 = vadd.f32 %v3188, %v3591
      %v3660 = vadd.f32 %v3189, %v3596
      %v3661 = vadd.f32 %v3190, %v3599
      %v3662 = vadd.f32 %v3191, %v3604
      %v3663 = vadd.f32 %v3192, %v3607
      %v3664 = vadd.f32 %v3193, %v3612
      %v3665 = vadd.f32 %v3194, %v3615
      %v3666 = vadd.f32 %v3195, %v3620
      %v3667 = vadd.f32 %v3196, %v3623
      %v3668 = vadd.f32 %v3197, %v3628
      %v3669 = vadd.f32 %v3198, %v3631
      %v3670 = vld [vmem:[%s207 + $0x10] sm:$0x8]
      %s3671 = scalar_lea.vmem %s1, 512
      %v3672 = vld [vmem:[%s3671] sm:$0xf]
      %v3673 = vld [vmem:[%s3671 + $0x4] sm:$0xf]
      %v3674 = vld [vmem:[%s3671 + $0x8] sm:$0xf]
      %v3675 = vld [vmem:[%s3671 + $0xc] sm:$0xf]
      %v3676 = vld [vmem:[%s3671 + $0x10] sm:$0xf]
      %v3677 = vld [vmem:[%s3671 + $0x14] sm:$0xf]
      %v3678 = vld [vmem:[%s3671 + $0x18] sm:$0xf]
      %v3679 = vld [vmem:[%s3671 + $0x1c] sm:$0xf]
      %v3680 = vld [vmem:[%s3671 + $0x20] sm:$0xf]
      %v3681 = vld [vmem:[%s3671 + $0x24] sm:$0xf]
      %v3682 = vld [vmem:[%s3671 + $0x28] sm:$0xf]
      %v3683 = vld [vmem:[%s3671 + $0x2c] sm:$0xf]
      %v3684 = vld [vmem:[%s3671 + $0x30] sm:$0xf]
      %v3685 = vld [vmem:[%s3671 + $0x34] sm:$0xf]
      %v3686 = vld [vmem:[%s3671 + $0x38] sm:$0xf]
      %v3687 = vld [vmem:[%s3671 + $0x3c] sm:$0xf]
      %v3689 = vunpack.c.l.b16 %v3670
      %v3690 = vpack.c.b16 %v2828, %v3689
      %vm3691 = vcmask 1044480
      %v3692 = vrot.slane %v3690, 3
      %v3693 = vrot.slane %v2865, 3
      %v3694 = vsel %vm3691, %v3692, %v3693
      %v3695 = vrot.slane %v2866, 3
      %v3696 = vsel %vm3691, %v3693, %v3695
      %v3697 = vrot.slane %v2867, 3
      %v3698 = vsel %vm3691, %v3695, %v3697
      %v3699 = vrot.slane %v2868, 3
      %v3700 = vsel %vm3691, %v3697, %v3699
      %v3701 = vrot.slane %v2869, 3
      %v3702 = vsel %vm3691, %v3699, %v3701
      %v3703 = vrot.slane %v2870, 3
      %v3704 = vsel %vm3691, %v3701, %v3703
      %v3705 = vrot.slane %v2871, 3
      %v3706 = vsel %vm3691, %v3703, %v3705
      %v3707 = vrot.slane %v2872, 3
      %v3708 = vsel %vm3691, %v3705, %v3707
      %v3709 = vrot.slane %v2873, 3
      %v3710 = vsel %vm3691, %v3707, %v3709
      %v3711 = vrot.slane %v2874, 3
      %v3712 = vsel %vm3691, %v3709, %v3711
      %v3713 = vrot.slane %v2875, 3
      %v3714 = vsel %vm3691, %v3711, %v3713
      %v3715 = vrot.slane %v2876, 3
      %v3716 = vsel %vm3691, %v3713, %v3715
      %v3717 = vrot.slane %v2877, 3
      %v3718 = vsel %vm3691, %v3715, %v3717
      %v3719 = vrot.slane %v2878, 3
      %v3720 = vsel %vm3691, %v3717, %v3719
      %v3721 = vrot.slane %v2879, 3
      %v3722 = vsel %vm3691, %v3719, %v3721
      %v3723 = vrot.slane %v2880, 3
      %v3724 = vsel %vm3691, %v3721, %v3723
      %v3725 = vrot.slane %v2881, 3
      %v3726 = vsel %vm3691, %v3723, %v3725
      %v3727 = vrot.slane %v3219, 3
      %v3728 = vsel %vm3691, %v3725, %v3727
      %v3763 = vunpack.c.l.b16 %v3672
      %v3764 = vunpack.c.l.b16 %v3673
      %v3765 = vunpack.c.l.b16 %v3674
      %v3766 = vunpack.c.l.b16 %v3675
      %v3767 = vunpack.c.l.b16 %v3676
      %v3768 = vunpack.c.l.b16 %v3677
      %v3769 = vunpack.c.l.b16 %v3678
      %v3770 = vunpack.c.l.b16 %v3679
      %v3771 = vunpack.c.l.b16 %v3680
      %v3772 = vunpack.c.l.b16 %v3681
      %v3773 = vunpack.c.l.b16 %v3682
      %v3774 = vunpack.c.l.b16 %v3683
      %v3775 = vunpack.c.l.b16 %v3684
      %v3776 = vunpack.c.l.b16 %v3685
      %v3777 = vunpack.c.l.b16 %v3686
      %v3778 = vunpack.c.l.b16 %v3687
      %v3779 = vpack.c.b16 %v3764, %v3763
      %v3780 = vpack.c.b16 %v3766, %v3765
      %v3781 = vpack.c.b16 %v3768, %v3767
      %v3782 = vpack.c.b16 %v3770, %v3769
      %v3783 = vpack.c.b16 %v3772, %v3771
      %v3784 = vpack.c.b16 %v3774, %v3773
      %v3785 = vpack.c.b16 %v3776, %v3775
      %v3786 = vpack.c.b16 %v3778, %v3777
      %3795 = vmatprep.subr.bf16.mxu0 0
      %3796 = vmatpush1.bf16.msra.mxu0 %v3786
      %3797 = vmatprep.subr.bf16.mxu0 0
      %3798 = vmatpush1.bf16.msra.mxu0 %v3785
      %3799 = vmatprep.subr.bf16.mxu0 0
      %3800 = vmatpush1.bf16.msra.mxu0 %v3784
      %3801 = vmatprep.subr.bf16.mxu0 0
      %3802 = vmatpush1.bf16.msra.mxu0 %v3783
      %3803 = vmatprep.subr.bf16.mxu0 0
      %3804 = vmatpush1.bf16.msra.mxu0 %v3782
      %3805 = vmatprep.subr.bf16.mxu0 0
      %3806 = vmatpush1.bf16.msra.mxu0 %v3781
      %3807 = vmatprep.subr.bf16.mxu0 0
      %3808 = vmatpush1.bf16.msra.mxu0 %v3780
      %3809 = vmatprep.subr.bf16.mxu0 0
      %3810 = vmatpush1.bf16.msra.mxu0 %v3779
      %3811 = vmatprep.subr.bf16.mxu0 0
      %3812 = vmatpush2.bf16.msra.mxu0 0
      %3813 = vmatprep.subr.bf16.mxu0 0
      %3814 = vmatpush2.bf16.msra.mxu0 0
      %3815 = vmatprep.subr.bf16.mxu0 0
      %3816 = vmatpush2.bf16.msra.mxu0 0
      %3817 = vmatprep.subr.bf16.mxu0 0
      %3818 = vmatpush2.bf16.msra.mxu0 0
      %3819 = vmatprep.subr.bf16.mxu0 0
      %3820 = vmatpush2.bf16.msra.mxu0 0
      %3821 = vmatprep.subr.bf16.mxu0 0
      %3822 = vmatpush2.bf16.msra.mxu0 0
      %3823 = vmatprep.subr.bf16.mxu0 0
      %3824 = vmatpush2.bf16.msra.mxu0 0
      %3825 = vmatprep.subr.bf16.mxu0 0
      %3826 = vmatpush2.bf16.msra.mxu0 0
      %3827 = vmatprep.mubr.bf16.mxu0 0
      %3828 = vmatmul.mubr.bf16.gmra.mxu0 %v3694
      %v3829 = vpop.f32.mrf.mxu0
      %v3830 = vadd.f32 0.0, %v3829
      %v3831 = vpop.f32.mrf.mxu0
      %v3832 = vpop.f32.mrf.mxu0
      %v3833 = vadd.f32 0.0, %v3832
      %v3834 = vpop.f32.mrf.mxu0
      %3835 = vmatprep.mubr.bf16.mxu0 0
      %3836 = vmatmul.mubr.bf16.gmra.mxu0 %v3696
      %v3837 = vpop.f32.mrf.mxu0
      %v3838 = vadd.f32 0.0, %v3837
      %v3839 = vpop.f32.mrf.mxu0
      %v3840 = vpop.f32.mrf.mxu0
      %v3841 = vadd.f32 0.0, %v3840
      %v3842 = vpop.f32.mrf.mxu0
      %3843 = vmatprep.mubr.bf16.mxu0 0
      %3844 = vmatmul.mubr.bf16.gmra.mxu0 %v3698
      %v3845 = vpop.f32.mrf.mxu0
      %v3846 = vadd.f32 0.0, %v3845
      %v3847 = vpop.f32.mrf.mxu0
      %v3848 = vpop.f32.mrf.mxu0
      %v3849 = vadd.f32 0.0, %v3848
      %v3850 = vpop.f32.mrf.mxu0
      %3851 = vmatprep.mubr.bf16.mxu0 0
      %3852 = vmatmul.mubr.bf16.gmra.mxu0 %v3700
      %v3853 = vpop.f32.mrf.mxu0
      %v3854 = vadd.f32 0.0, %v3853
      %v3855 = vpop.f32.mrf.mxu0
      %v3856 = vpop.f32.mrf.mxu0
      %v3857 = vadd.f32 0.0, %v3856
      %v3858 = vpop.f32.mrf.mxu0
      %3859 = vmatprep.mubr.bf16.mxu0 0
      %3860 = vmatmul.mubr.bf16.gmra.mxu0 %v3702
      %v3861 = vpop.f32.mrf.mxu0
      %v3862 = vadd.f32 0.0, %v3861
      %v3863 = vpop.f32.mrf.mxu0
      %v3864 = vpop.f32.mrf.mxu0
      %v3865 = vadd.f32 0.0, %v3864
      %v3866 = vpop.f32.mrf.mxu0
      %3867 = vmatprep.mubr.bf16.mxu0 0
      %3868 = vmatmul.mubr.bf16.gmra.mxu0 %v3704
      %v3869 = vpop.f32.mrf.mxu0
      %v3870 = vadd.f32 0.0, %v3869
      %v3871 = vpop.f32.mrf.mxu0
      %v3872 = vpop.f32.mrf.mxu0
      %v3873 = vadd.f32 0.0, %v3872
      %v3874 = vpop.f32.mrf.mxu0
      %3875 = vmatprep.mubr.bf16.mxu0 0
      %3876 = vmatmul.mubr.bf16.gmra.mxu0 %v3706
      %v3877 = vpop.f32.mrf.mxu0
      %v3878 = vadd.f32 0.0, %v3877
      %v3879 = vpop.f32.mrf.mxu0
      %v3880 = vpop.f32.mrf.mxu0
      %v3881 = vadd.f32 0.0, %v3880
      %v3882 = vpop.f32.mrf.mxu0
      %3883 = vmatprep.mubr.bf16.mxu0 0
      %3884 = vmatmul.mubr.bf16.gmra.mxu0 %v3708
      %v3885 = vpop.f32.mrf.mxu0
      %v3886 = vadd.f32 0.0, %v3885
      %v3887 = vpop.f32.mrf.mxu0
      %v3888 = vpop.f32.mrf.mxu0
      %v3889 = vadd.f32 0.0, %v3888
      %v3890 = vpop.f32.mrf.mxu0
      %3891 = vmatprep.mubr.bf16.mxu0 0
      %3892 = vmatmul.mubr.bf16.gmra.mxu0 %v3710
      %v3893 = vpop.f32.mrf.mxu0
      %v3894 = vadd.f32 0.0, %v3893
      %v3895 = vpop.f32.mrf.mxu0
      %v3896 = vpop.f32.mrf.mxu0
      %v3897 = vadd.f32 0.0, %v3896
      %v3898 = vpop.f32.mrf.mxu0
      %3899 = vmatprep.mubr.bf16.mxu0 0
      %3900 = vmatmul.mubr.bf16.gmra.mxu0 %v3712
      %v3901 = vpop.f32.mrf.mxu0
      %v3902 = vadd.f32 0.0, %v3901
      %v3903 = vpop.f32.mrf.mxu0
      %v3904 = vpop.f32.mrf.mxu0
      %v3905 = vadd.f32 0.0, %v3904
      %v3906 = vpop.f32.mrf.mxu0
      %3907 = vmatprep.mubr.bf16.mxu0 0
      %3908 = vmatmul.mubr.bf16.gmra.mxu0 %v3714
      %v3909 = vpop.f32.mrf.mxu0
      %v3910 = vadd.f32 0.0, %v3909
      %v3911 = vpop.f32.mrf.mxu0
      %v3912 = vpop.f32.mrf.mxu0
      %v3913 = vadd.f32 0.0, %v3912
      %v3914 = vpop.f32.mrf.mxu0
      %3915 = vmatprep.mubr.bf16.mxu0 0
      %3916 = vmatmul.mubr.bf16.gmra.mxu0 %v3716
      %v3917 = vpop.f32.mrf.mxu0
      %v3918 = vadd.f32 0.0, %v3917
      %v3919 = vpop.f32.mrf.mxu0
      %v3920 = vpop.f32.mrf.mxu0
      %v3921 = vadd.f32 0.0, %v3920
      %v3922 = vpop.f32.mrf.mxu0
      %3923 = vmatprep.mubr.bf16.mxu0 0
      %3924 = vmatmul.mubr.bf16.gmra.mxu0 %v3718
      %v3925 = vpop.f32.mrf.mxu0
      %v3926 = vadd.f32 0.0, %v3925
      %v3927 = vpop.f32.mrf.mxu0
      %v3928 = vpop.f32.mrf.mxu0
      %v3929 = vadd.f32 0.0, %v3928
      %v3930 = vpop.f32.mrf.mxu0
      %3931 = vmatprep.mubr.bf16.mxu0 0
      %3932 = vmatmul.mubr.bf16.gmra.mxu0 %v3720
      %v3933 = vpop.f32.mrf.mxu0
      %v3934 = vadd.f32 0.0, %v3933
      %v3935 = vpop.f32.mrf.mxu0
      %v3936 = vpop.f32.mrf.mxu0
      %v3937 = vadd.f32 0.0, %v3936
      %v3938 = vpop.f32.mrf.mxu0
      %3939 = vmatprep.mubr.bf16.mxu0 0
      %3940 = vmatmul.mubr.bf16.gmra.mxu0 %v3722
      %v3941 = vpop.f32.mrf.mxu0
      %v3942 = vadd.f32 0.0, %v3941
      %v3943 = vpop.f32.mrf.mxu0
      %v3944 = vpop.f32.mrf.mxu0
      %v3945 = vadd.f32 0.0, %v3944
      %v3946 = vpop.f32.mrf.mxu0
      %3947 = vmatprep.mubr.bf16.mxu0 0
      %3948 = vmatmul.mubr.bf16.gmra.mxu0 %v3724
      %v3949 = vpop.f32.mrf.mxu0
      %v3950 = vadd.f32 0.0, %v3949
      %v3951 = vpop.f32.mrf.mxu0
      %v3952 = vpop.f32.mrf.mxu0
      %v3953 = vadd.f32 0.0, %v3952
      %v3954 = vpop.f32.mrf.mxu0
      %3955 = vmatprep.mubr.bf16.mxu0 0
      %3956 = vmatmul.mubr.bf16.gmra.mxu0 %v3726
      %v3957 = vpop.f32.mrf.mxu0
      %v3958 = vadd.f32 0.0, %v3957
      %v3959 = vpop.f32.mrf.mxu0
      %v3960 = vpop.f32.mrf.mxu0
      %v3961 = vadd.f32 0.0, %v3960
      %v3962 = vpop.f32.mrf.mxu0
      %3963 = vmatprep.mubr.bf16.mxu0 0
      %3964 = vmatmul.mubr.bf16.gmra.mxu0 %v3728
      %v3965 = vpop.f32.mrf.mxu0
      %v3966 = vadd.f32 0.0, %v3965
      %v3967 = vpop.f32.mrf.mxu0
      %v3968 = vpop.f32.mrf.mxu0
      %v3969 = vadd.f32 0.0, %v3968
      %v3970 = vpop.f32.mrf.mxu0
      %3971 = vdwg.mxu0
      %v3972 = vadd.f32 %v3634, %v3830
      %v3973 = vadd.f32 %v3635, %v3833
      %v3974 = vadd.f32 %v3636, %v3838
      %v3975 = vadd.f32 %v3637, %v3841
      %v3976 = vadd.f32 %v3638, %v3846
      %v3977 = vadd.f32 %v3639, %v3849
      %v3978 = vadd.f32 %v3640, %v3854
      %v3979 = vadd.f32 %v3641, %v3857
      %v3980 = vadd.f32 %v3642, %v3862
      %v3981 = vadd.f32 %v3643, %v3865
      %v3982 = vadd.f32 %v3644, %v3870
      %v3983 = vadd.f32 %v3645, %v3873
      %v3984 = vadd.f32 %v3646, %v3878
      %v3985 = vadd.f32 %v3647, %v3881
      %v3986 = vadd.f32 %v3648, %v3886
      %v3987 = vadd.f32 %v3649, %v3889
      %v3988 = vadd.f32 %v3650, %v3894
      %v3989 = vadd.f32 %v3651, %v3897
      %v3990 = vadd.f32 %v3652, %v3902
      %v3991 = vadd.f32 %v3653, %v3905
      %v3992 = vadd.f32 %v3654, %v3910
      %v3993 = vadd.f32 %v3655, %v3913
      %v3994 = vadd.f32 %v3656, %v3918
      %v3995 = vadd.f32 %v3657, %v3921
      %v3996 = vadd.f32 %v3658, %v3926
      %v3997 = vadd.f32 %v3659, %v3929
      %v3998 = vadd.f32 %v3660, %v3934
      %v3999 = vadd.f32 %v3661, %v3937
      %v4000 = vadd.f32 %v3662, %v3942
      %v4001 = vadd.f32 %v3663, %v3945
      %v4002 = vadd.f32 %v3664, %v3950
      %v4003 = vadd.f32 %v3665, %v3953
      %v4004 = vadd.f32 %v3666, %v3958
      %v4005 = vadd.f32 %v3667, %v3961
      %v4006 = vadd.f32 %v3668, %v3966
      %v4007 = vadd.f32 %v3669, %v3969
      %v4008 = vld [vmem:[%s2] sm:$0x1]
      %v4010 = vlaneseq
      %v4011 = vshrl.u32 %v4010, 7
      %v4012 = vsub.s32 0, %v4011
      %v4013 = vrot.slane %v4008, %v4012
      %v4015 = vadd.f32 %v3972, %v4013
      %v4016 = vadd.f32 %v3973, %v4013
      %v4017 = vadd.f32 %v3974, %v4013
      %v4018 = vadd.f32 %v3975, %v4013
      %v4019 = vadd.f32 %v3976, %v4013
      %v4020 = vadd.f32 %v3977, %v4013
      %v4021 = vadd.f32 %v3978, %v4013
      %v4022 = vadd.f32 %v3979, %v4013
      %v4023 = vadd.f32 %v3980, %v4013
      %v4024 = vadd.f32 %v3981, %v4013
      %v4025 = vadd.f32 %v3982, %v4013
      %v4026 = vadd.f32 %v3983, %v4013
      %v4027 = vadd.f32 %v3984, %v4013
      %v4028 = vadd.f32 %v3985, %v4013
      %v4029 = vadd.f32 %v3986, %v4013
      %v4030 = vadd.f32 %v3987, %v4013
      %v4031 = vadd.f32 %v3988, %v4013
      %v4032 = vadd.f32 %v3989, %v4013
      %v4033 = vadd.f32 %v3990, %v4013
      %v4034 = vadd.f32 %v3991, %v4013
      %v4035 = vadd.f32 %v3992, %v4013
      %v4036 = vadd.f32 %v3993, %v4013
      %v4037 = vadd.f32 %v3994, %v4013
      %v4038 = vadd.f32 %v3995, %v4013
      %v4039 = vadd.f32 %v3996, %v4013
      %v4040 = vadd.f32 %v3997, %v4013
      %v4041 = vadd.f32 %v3998, %v4013
      %v4042 = vadd.f32 %v3999, %v4013
      %v4043 = vadd.f32 %v4000, %v4013
      %v4044 = vadd.f32 %v4001, %v4013
      %v4045 = vadd.f32 %v4002, %v4013
      %v4046 = vadd.f32 %v4003, %v4013
      %v4047 = vadd.f32 %v4004, %v4013
      %v4048 = vadd.f32 %v4005, %v4013
      %v4049 = vadd.f32 %v4006, %v4013
      %v4050 = vadd.f32 %v4007, %v4013
      %v4051 = vld [vmem:[%s212] sm:$0xff]
      %v4052 = vld [vmem:[%s212 + $0x8] sm:$0xff]
      %v4053 = vld [vmem:[%s212 + $0x10] sm:$0xff]
      %v4054 = vld [vmem:[%s212 + $0x18] sm:$0xff]
      %v4055 = vld [vmem:[%s212 + $0x20] sm:$0xff]
      %v4056 = vld [vmem:[%s212 + $0x28] sm:$0xff]
      %v4057 = vld [vmem:[%s212 + $0x30] sm:$0xff]
      %v4058 = vld [vmem:[%s212 + $0x38] sm:$0xff]
      %v4059 = vld [vmem:[%s212 + $0x40] sm:$0xff]
      %v4060 = vld [vmem:[%s212 + $0x48] sm:$0xff]
      %v4061 = vld [vmem:[%s212 + $0x50] sm:$0xff]
      %v4062 = vld [vmem:[%s212 + $0x58] sm:$0xff]
      %v4063 = vld [vmem:[%s212 + $0x60] sm:$0xff]
      %v4064 = vld [vmem:[%s212 + $0x68] sm:$0xff]
      %v4065 = vld [vmem:[%s212 + $0x70] sm:$0xff]
      %v4066 = vld [vmem:[%s212 + $0x78] sm:$0xff]
      %v4067 = vld [vmem:[%s212 + $0x80] sm:$0xff]
      %v4068 = vld [vmem:[%s212 + $0x88] sm:$0xff]
      %v4069 = vld [vmem:[%s212 + $0x90] sm:$0xff]
      %v4070 = vld [vmem:[%s212 + $0x98] sm:$0xff]
      %v4071 = vld [vmem:[%s212 + $0xa0] sm:$0xff]
      %v4072 = vld [vmem:[%s212 + $0xa8] sm:$0xff]
      %v4073 = vld [vmem:[%s212 + $0xb0] sm:$0xff]
      %v4074 = vld [vmem:[%s212 + $0xb8] sm:$0xff]
      %v4075 = vld [vmem:[%s212 + $0xc0] sm:$0xff]
      %v4076 = vld [vmem:[%s212 + $0xc8] sm:$0xff]
      %v4077 = vld [vmem:[%s212 + $0xd0] sm:$0xff]
      %v4078 = vld [vmem:[%s212 + $0xd8] sm:$0xff]
      %v4079 = vld [vmem:[%s212 + $0xe0] sm:$0xff]
      %v4080 = vld [vmem:[%s212 + $0xe8] sm:$0xff]
      %v4081 = vld [vmem:[%s212 + $0xf0] sm:$0xff]
      %v4082 = vld [vmem:[%s212 + $0xf8] sm:$0xff]
      %v4083 = vld [vmem:[%s212 + $0x100] sm:$0xff]
      %v4084 = vld [vmem:[%s212 + $0x108] sm:$0xff]
      %v4085 = vld [vmem:[%s212 + $0x110] sm:$0xff]
      %v4086 = vld [vmem:[%s212 + $0x118] sm:$0x3f]
      %v4087 = vadd.f32 %v4015, %v4051
      %v4088 = vadd.f32 %v4016, %v4052
      %v4089 = vadd.f32 %v4017, %v4053
      %v4090 = vadd.f32 %v4018, %v4054
      %v4091 = vadd.f32 %v4019, %v4055
      %v4092 = vadd.f32 %v4020, %v4056
      %v4093 = vadd.f32 %v4021, %v4057
      %v4094 = vadd.f32 %v4022, %v4058
      %v4095 = vadd.f32 %v4023, %v4059
      %v4096 = vadd.f32 %v4024, %v4060
      %v4097 = vadd.f32 %v4025, %v4061
      %v4098 = vadd.f32 %v4026, %v4062
      %v4099 = vadd.f32 %v4027, %v4063
      %v4100 = vadd.f32 %v4028, %v4064
      %v4101 = vadd.f32 %v4029, %v4065
      %v4102 = vadd.f32 %v4030, %v4066
      %v4103 = vadd.f32 %v4031, %v4067
      %v4104 = vadd.f32 %v4032, %v4068
      %v4105 = vadd.f32 %v4033, %v4069
      %v4106 = vadd.f32 %v4034, %v4070
      %v4107 = vadd.f32 %v4035, %v4071
      %v4108 = vadd.f32 %v4036, %v4072
      %v4109 = vadd.f32 %v4037, %v4073
      %v4110 = vadd.f32 %v4038, %v4074
      %v4111 = vadd.f32 %v4039, %v4075
      %v4112 = vadd.f32 %v4040, %v4076
      %v4113 = vadd.f32 %v4041, %v4077
      %v4114 = vadd.f32 %v4042, %v4078
      %v4115 = vadd.f32 %v4043, %v4079
      %v4116 = vadd.f32 %v4044, %v4080
      %v4117 = vadd.f32 %v4045, %v4081
      %v4118 = vadd.f32 %v4046, %v4082
      %v4119 = vadd.f32 %v4047, %v4083
      %v4120 = vadd.f32 %v4048, %v4084
      %v4121 = vadd.f32 %v4049, %v4085
      %v4122 = vadd.f32 %v4050, %v4086
      %v4123 = vmax.f32 %v4087, 0.0
      %v4124 = vmax.f32 %v4088, 0.0
      %v4125 = vmax.f32 %v4089, 0.0
      %v4126 = vmax.f32 %v4090, 0.0
      %v4127 = vmax.f32 %v4091, 0.0
      %v4128 = vmax.f32 %v4092, 0.0
      %v4129 = vmax.f32 %v4093, 0.0
      %v4130 = vmax.f32 %v4094, 0.0
      %v4131 = vmax.f32 %v4095, 0.0
      %v4132 = vmax.f32 %v4096, 0.0
      %v4133 = vmax.f32 %v4097, 0.0
      %v4134 = vmax.f32 %v4098, 0.0
      %v4135 = vmax.f32 %v4099, 0.0
      %v4136 = vmax.f32 %v4100, 0.0
      %v4137 = vmax.f32 %v4101, 0.0
      %v4138 = vmax.f32 %v4102, 0.0
      %v4139 = vmax.f32 %v4103, 0.0
      %v4140 = vmax.f32 %v4104, 0.0
      %v4141 = vmax.f32 %v4105, 0.0
      %v4142 = vmax.f32 %v4106, 0.0
      %v4143 = vmax.f32 %v4107, 0.0
      %v4144 = vmax.f32 %v4108, 0.0
      %v4145 = vmax.f32 %v4109, 0.0
      %v4146 = vmax.f32 %v4110, 0.0
      %v4147 = vmax.f32 %v4111, 0.0
      %v4148 = vmax.f32 %v4112, 0.0
      %v4149 = vmax.f32 %v4113, 0.0
      %v4150 = vmax.f32 %v4114, 0.0
      %v4151 = vmax.f32 %v4115, 0.0
      %v4152 = vmax.f32 %v4116, 0.0
      %v4153 = vmax.f32 %v4117, 0.0
      %v4154 = vmax.f32 %v4118, 0.0
      %v4155 = vmax.f32 %v4119, 0.0
      %v4156 = vmax.f32 %v4120, 0.0
      %v4157 = vmax.f32 %v4121, 0.0
      %v4158 = vmax.f32 %v4122, 0.0
      %4159 = vst [vmem:[%s217] sm:$0xff] %v4123
      %4160 = vst [vmem:[%s217 + $0x8] sm:$0xff] %v4124
      %4161 = vst [vmem:[%s217 + $0x10] sm:$0xff] %v4125
      %4162 = vst [vmem:[%s217 + $0x18] sm:$0xff] %v4126
      %4163 = vst [vmem:[%s217 + $0x20] sm:$0xff] %v4127
      %4164 = vst [vmem:[%s217 + $0x28] sm:$0xff] %v4128
      %4165 = vst [vmem:[%s217 + $0x30] sm:$0xff] %v4129
      %4166 = vst [vmem:[%s217 + $0x38] sm:$0xff] %v4130
      %4167 = vst [vmem:[%s217 + $0x40] sm:$0xff] %v4131
      %4168 = vst [vmem:[%s217 + $0x48] sm:$0xff] %v4132
      %4169 = vst [vmem:[%s217 + $0x50] sm:$0xff] %v4133
      %4170 = vst [vmem:[%s217 + $0x58] sm:$0xff] %v4134
      %4171 = vst [vmem:[%s217 + $0x60] sm:$0xff] %v4135
      %4172 = vst [vmem:[%s217 + $0x68] sm:$0xff] %v4136
      %4173 = vst [vmem:[%s217 + $0x70] sm:$0xff] %v4137
      %4174 = vst [vmem:[%s217 + $0x78] sm:$0xff] %v4138
      %4175 = vst [vmem:[%s217 + $0x80] sm:$0xff] %v4139
      %4176 = vst [vmem:[%s217 + $0x88] sm:$0xff] %v4140
      %4177 = vst [vmem:[%s217 + $0x90] sm:$0xff] %v4141
      %4178 = vst [vmem:[%s217 + $0x98] sm:$0xff] %v4142
      %4179 = vst [vmem:[%s217 + $0xa0] sm:$0xff] %v4143
      %4180 = vst [vmem:[%s217 + $0xa8] sm:$0xff] %v4144
      %4181 = vst [vmem:[%s217 + $0xb0] sm:$0xff] %v4145
      %4182 = vst [vmem:[%s217 + $0xb8] sm:$0xff] %v4146
      %4183 = vst [vmem:[%s217 + $0xc0] sm:$0xff] %v4147
      %4184 = vst [vmem:[%s217 + $0xc8] sm:$0xff] %v4148
      %4185 = vst [vmem:[%s217 + $0xd0] sm:$0xff] %v4149
      %4186 = vst [vmem:[%s217 + $0xd8] sm:$0xff] %v4150
      %4187 = vst [vmem:[%s217 + $0xe0] sm:$0xff] %v4151
      %4188 = vst [vmem:[%s217 + $0xe8] sm:$0xff] %v4152
      %4189 = vst [vmem:[%s217 + $0xf0] sm:$0xff] %v4153
      %4190 = vst [vmem:[%s217 + $0xf8] sm:$0xff] %v4154
      %4191 = vst [vmem:[%s217 + $0x100] sm:$0xff] %v4155
      %4192 = vst [vmem:[%s217 + $0x108] sm:$0xff] %v4156
      %4193 = vst [vmem:[%s217 + $0x110] sm:$0xff] %v4157
      %4194 = vst [vmem:[%s217 + $0x118] sm:$0x3f] %v4158
      %p4195 = scmp.lt.s32.totalorder %s15, 1
      %s4196 = scalar_select %p4195, %s15, 1
      %s4197 = smul.addr %s4196, 36
      %s4198 = smul.addr %s4197, 8
      %s4199 = scalar_lea.vmem %s4, %s4198
      // Predicated region
      $region37: #{basic_block_pallas.3} parent=35 // pred_check
        %p4200 = pneg %p127
      $region38: #{basic_block_pallas.3} parent=35 // pred_check_branch
        %4202 = sbr.rel (%p4200) target = $region40
      $region39: #{basic_block_pallas.3} parent=35 // pred_region
        _
      $region40: #{basic_block_pallas.3} parent=35 // pred_fallthru
        _
    $region36: #{basic_block_pallas.3} parent=5 // pred_fallthru
      _
    %p4203 = scmp.le.s32.totalorder 2, %s10
    // Predicated region
    $region41: #{basic_block_pallas.3} parent=5 // pred_check
      %p4204 = pneg %p4203
    $region42: #{basic_block_pallas.3} parent=5 // pred_check_branch
      %4206 = sbr.rel (%p4204) target = $region44
    $region43: #{basic_block_pallas.3} parent=5 // pred_region
      %s4207 = ssub.s32 %s10, 2
      // Predicated region
      $region45: #{basic_block_pallas.3} parent=43 // pred_check
        %p4208 = pneg %p133
      $region46: #{basic_block_pallas.3} parent=43 // pred_check_branch
        %4210 = sbr.rel (%p4208) target = $region48
      $region47: #{basic_block_pallas.3} parent=43 // pred_region
        %p4211 = scmp.lt.s32.totalorder %s16, 1
        %s4212 = scalar_select %p4211, %s16, 1
        %s4213 = smul.addr %s4212, 36
        %s4214 = smul.addr %s4213, 8
        %s4215 = scalar_lea.vmem %s4, %s4214
      $region48: #{basic_block_pallas.3} parent=43 // pred_fallthru
        _
    $region44: #{basic_block_pallas.3} parent=5 // pred_fallthru
      _
  $region6: #{basic_block_pallas.3} parent=0 // loop_footer
    %s14 = sadd.s32 1, %s10
  $region7: #{basic_block_pallas.3} parent=0 // loop_footer_branch
    %9 = sbr.rel target = $region3
  $region8: #{basic_block_pallas.3} parent=0 // loop_exit
    _

</llo_original>
